<compile_context>
chip_gen: v7x
topology: tpu7x:2x2x1
jax: 0.10.0
libtpu: 0.0.40
codegen_flags: <defaults>
</compile_context>

<pallas_src>
import jax
import jax.numpy as jnp
from jax import lax
from jax.experimental import pallas as pl
from jax.experimental.pallas import tpu as pltpu


def _round_up(x, m):
    return ((x + m - 1) // m) * m


def _encoder_kernel(frames_ref, w_ref, out_ref):
    # frames_ref: (NB, K, TL)   w_ref: (F, K)   out_ref: (NB, F, TL)
    w = w_ref[...]
    for n in range(frames_ref.shape[0]):          # NB is a small static int
        acc = jnp.dot(w, frames_ref[n],
                      preferred_element_type=jnp.float32,
                      precision=jax.lax.Precision.HIGHEST)
        out_ref[n] = jnp.maximum(acc, 0.0).astype(out_ref.dtype)


def encoder_forward(x, weight, stride=8, *, l_tile=2048, out_dtype=jnp.float32):
    """Conv1d(1, F, K, stride=stride, bias=False) + ReLU.

    x: (B, 1, T) f32, weight: (F, 1, K) f32  ->  (B, F, L) out_dtype.
    """
    B, Cin, T = x.shape
    assert Cin == 1, "Encoder conv has in_channels == 1"
    F, _, K = weight.shape
    assert l_tile % 128 == 0 and l_tile > 0
    L = (T - K) // stride + 1
    assert L >= 1

    # im2col in (B, K, L) layout without an advanced-index gather:
    # frames[b, k, l] = x[b, 0, l*stride + k]   (valid because Cin == 1).
    frames = lax.conv_general_dilated_patches(
        x, filter_shape=(K,), window_strides=(stride,), padding="VALID",
        dimension_numbers=("NCH", "OIH", "NCH"))           # (B, K, L)
    W = weight[:, 0, :]                                     # (F, K)

    # Lane tile over frames (multiple of 128).  When L is small, fold batch
    # rows into the block so each grid step still amortizes fixed overhead.
    # Partial boundary tiles (along L or B) are masked by Pallas.
    tl = min(l_tile, _round_up(L, 128))
    nb = 1
    if tl < l_tile:
        nb = max(1, min(B, l_tile // tl, 8))
    grid = (pl.cdiv(B, nb), pl.cdiv(L, tl))

    # Double-buffered out + frames blocks, plus resident filter bank.
    vmem_need = 2 * nb * (F + K) * tl * 4 + 2 * F * K * 4
    vmem_limit = None
    if vmem_need > 14 * 1024 * 1024:   # beyond v5e's default scoped budget
        vmem_limit = vmem_need + (4 << 20)

    out = pl.pallas_call(
        _encoder_kernel,
        out_shape=jax.ShapeDtypeStruct((B, F, L), out_dtype),
        grid=grid,
        in_specs=[
            # per-step frame tile: full K contraction dim, lane-dense L tile
            pl.BlockSpec((nb, K, tl), lambda ib, jl: (ib, 0, jl)),
            # full filter bank, constant index -> stays VMEM resident
            pl.BlockSpec((F, K), lambda ib, jl: (0, 0)),
        ],
        # kernel emits PyTorch's (B, F, L) layout directly
        out_specs=pl.BlockSpec((nb, F, tl), lambda ib, jl: (ib, 0, jl)),
        compiler_params=pltpu.CompilerParams(
            dimension_semantics=("parallel", "parallel"),
            vmem_limit_bytes=vmem_limit),
    )(frames, W)
    return out


def reference_forward(x, weight, stride=8):
    """Pure-JAX reference of the PyTorch forward (Conv1d no-bias + ReLU)."""
    B, _, T = x.shape
    F, _, K = weight.shape
    L = (T - K) // stride + 1
    idx = jnp.arange(L)[:, None] * stride + jnp.arange(K)[None, :]
    frames = x[:, 0, :][:, idx]                                  # (B, L, K)
    y = jnp.einsum("blk,fk->bfl", frames, weight[:, 0, :],
                   precision=jax.lax.Precision.HIGHEST)
    return jnp.maximum(y, 0.0)


if __name__ == "__main__":
    kernel_size, stride, num_filters = 16, 8, 512

    key = jax.random.PRNGKey(0)
    kx, kw, kx2 = jax.random.split(key, 3)

    fan_in = 1 * kernel_size
    bound = (1.0 / fan_in) ** 0.5
    weight = jax.random.uniform(
        kw, (num_filters, 1, kernel_size),
        minval=-bound, maxval=bound, dtype=jnp.float32)

    enc = jax.jit(lambda xx, ww: encoder_forward(xx, ww, stride=stride))

    # Case 1: tiny waveform (L = 15 < 128 -> batch-folded block, masked lanes).
    batch, T = 2, 128
    x = jax.random.normal(kx, (batch, 1, T), dtype=jnp.float32)
    y = jax.block_until_ready(enc(x, weight))
    y_ref = reference_forward(x, weight, stride=stride)
    L = (T - kernel_size) // stride + 1
    assert y.shape == (batch, num_filters, L), y.shape
    assert jnp.allclose(y, y_ref, atol=1e-5, rtol=1e-5), \
        float(jnp.max(jnp.abs(y - y_ref)))

    # Case 2: L = 200 (not a multiple of 128) exercises the masked boundary tile.
    T2 = (200 - 1) * stride + kernel_size
    x2 = jax.random.normal(kx2, (batch, 1, T2), dtype=jnp.float32)
    y2 = jax.block_until_ready(enc(x2, weight))
    y2_ref = reference_forward(x2, weight, stride=stride)
    assert y2.shape == (batch, num_filters, 200), y2.shape
    assert jnp.allclose(y2, y2_ref, atol=1e-5, rtol=1e-5), \
        float(jnp.max(jnp.abs(y2 - y2_ref)))

    print("KERNEL_OK")
</pallas_src>

<mosaic_0001>
module attributes {stable_mosaic.version = 11 : i64} {
  func.func @_encoder_kernel(%arg0: i32, %arg1: i32, %arg2: memref<2x16x128xf32, #tpu.memory_space<vmem>>, %arg3: memref<512x16xf32, #tpu.memory_space<vmem>>, %arg4: memref<2x512x128xf32, #tpu.memory_space<vmem>>) attributes {dimension_semantics = [#tpu.dimension_semantics<parallel>, #tpu.dimension_semantics<parallel>], iteration_bounds = array<i64: 1, 1>, scalar_prefetch = 0 : i64, scratch_operands = 0 : i64, tpu.core_type = #tpu.core_type<tc>, window_params = [{transform_indices = @transform_0, window_bounds = array<i64: 2, 16, 128>}, {pipeline_mode = #tpu.pipeline_mode<synchronous>, transform_indices = @transform_1, window_bounds = array<i64: 512, 16>}, {transform_indices = @transform_2, window_bounds = array<i64: 2, 512, 128>}]} {
    %c0 = arith.constant 0 : index
    %c0_0 = arith.constant 0 : index
    %0 = vector.load %arg3[%c0, %c0_0] : memref<512x16xf32, #tpu.memory_space<vmem>>, vector<512x16xf32>
    %c0_1 = arith.constant 0 : index
    %c0_2 = arith.constant 0 : index
    %c0_3 = arith.constant 0 : index
    %1 = vector.load %arg2[%c0_1, %c0_2, %c0_3] : memref<2x16x128xf32, #tpu.memory_space<vmem>>, vector<1x16x128xf32>
    %2 = vector.shape_cast %1 : vector<1x16x128xf32> to vector<16x128xf32>
    %cst = arith.constant dense<0.000000e+00> : vector<512x128xf32>
    %3 = tpu.matmul %0, %2, %cst {dimension_numbers = #tpu.dot_dimension_numbers<[1], [0], [0], [1], [0, 0, 1, 1], [], []>, precision = #tpu.contract_precision<fp32>} : vector<512x16xf32>, vector<16x128xf32>, vector<512x128xf32> -> vector<512x128xf32>
    %cst_4 = arith.constant 0.000000e+00 : f32
    %4 = vector.broadcast %cst_4 : f32 to vector<512x128xf32>
    %5 = arith.maximumf %3, %4 : vector<512x128xf32>
    %c0_5 = arith.constant 0 : index
    %c0_6 = arith.constant 0 : index
    %c0_7 = arith.constant 0 : index
    %6 = vector.load %arg4[%c0_5, %c0_6, %c0_7] : memref<2x512x128xf32, #tpu.memory_space<vmem>>, vector<1x512x128xf32>
    %7 = vector.shape_cast %6 : vector<1x512x128xf32> to vector<512x128xf32>
    %8 = vector.shape_cast %5 : vector<512x128xf32> to vector<1x512x128xf32>
    tpu.vector_store %arg4[%c0_5, %c0_6, %c0_7], %8 {strides = array<i32>} : memref<2x512x128xf32, #tpu.memory_space<vmem>>, vector<1x512x128xf32>,
    %c1 = arith.constant 1 : index
    %c0_8 = arith.constant 0 : index
    %c0_9 = arith.constant 0 : index
    %9 = vector.load %arg2[%c1, %c0_8, %c0_9] : memref<2x16x128xf32, #tpu.memory_space<vmem>>, vector<1x16x128xf32>
    %10 = vector.shape_cast %9 : vector<1x16x128xf32> to vector<16x128xf32>
    %cst_10 = arith.constant dense<0.000000e+00> : vector<512x128xf32>
    %11 = tpu.matmul %0, %10, %cst_10 {dimension_numbers = #tpu.dot_dimension_numbers<[1], [0], [0], [1], [0, 0, 1, 1], [], []>, precision = #tpu.contract_precision<fp32>} : vector<512x16xf32>, vector<16x128xf32>, vector<512x128xf32> -> vector<512x128xf32>
    %cst_11 = arith.constant 0.000000e+00 : f32
    %12 = vector.broadcast %cst_11 : f32 to vector<512x128xf32>
    %13 = arith.maximumf %11, %12 : vector<512x128xf32>
    %c1_12 = arith.constant 1 : index
    %c0_13 = arith.constant 0 : index
    %c0_14 = arith.constant 0 : index
    %14 = vector.load %arg4[%c1_12, %c0_13, %c0_14] : memref<2x512x128xf32, #tpu.memory_space<vmem>>, vector<1x512x128xf32>
    %15 = vector.shape_cast %14 : vector<1x512x128xf32> to vector<512x128xf32>
    %16 = vector.shape_cast %13 : vector<512x128xf32> to vector<1x512x128xf32>
    tpu.vector_store %arg4[%c1_12, %c0_13, %c0_14], %16 {strides = array<i32>} : memref<2x512x128xf32, #tpu.memory_space<vmem>>, vector<1x512x128xf32>,
    return
  }
  func.func @transform_0(%arg0: i32, %arg1: i32) -> (i32, i32, i32) {
    %c0_i32 = arith.constant 0 : i32
    %c0_i32_0 = arith.constant 0 : i32
    return %arg0, %c0_i32, %arg1 : i32, i32, i32
  }
  func.func @transform_1(%arg0: i32, %arg1: i32) -> (i32, i32) {
    %c0_i32 = arith.constant 0 : i32
    %c0_i32_0 = arith.constant 0 : i32
    %c0_i32_1 = arith.constant 0 : i32
    return %c0_i32, %c0_i32_0 : i32, i32
  }
  func.func @transform_2(%arg0: i32, %arg1: i32) -> (i32, i32, i32) {
    %c0_i32 = arith.constant 0 : i32
    %c0_i32_0 = arith.constant 0 : i32
    return %arg0, %c0_i32, %arg1 : i32, i32, i32
  }
}

</mosaic_0001>

<llo_original>
// kernel: _lambda_.1
$region0: #{_lambda_.1}
  #allocation0 [shape = 'u32[]', space=smem, size = 0x4, offset = 0x4, fixed_abs, tag = 'smem constant byte address 0x4 - core index']
  #allocation1 [shape = 'u32[144,128]{1,0:T(1,128)}', space=vmem, size = 0x12000, scoped, tag = 'internal scratch']
  %s0 = inlined_call_operand.vmem [shape: f32[2,16,15], index: 0, kind: input, shape index: {}]
  %s1 = inlined_call_operand.vmem [shape: f32[512,16], index: 1, kind: input, shape index: {}]
  %s2 = inlined_call_operand.vmem [shape: f32[2,512,15], index: 2, kind: output, shape index: {}]
  %s3 = sld [smem:[#allocation0]]
  $region18: #{_lambda_.1} parent=0
    _
  %s5 = ssub.s32 1, %s3
  %s6 = scalar_select 0, %s5, %s3
  // Predicated region
  $region2: #{_lambda_.1} parent=0 // pred_check
    _
  $region3: #{_lambda_.1} parent=0 // pred_check_branch
    %8 = sbr.rel (0) target = $region5
  $region4: #{_lambda_.1} parent=0 // pred_region
    _
  $region5: #{_lambda_.1} parent=0 // pred_fallthru
    _
  // Predicated region
  $region6: #{_lambda_.1} parent=0 // pred_check
    _
  $region7: #{_lambda_.1} parent=0 // pred_check_branch
    %10 = sbr.rel (0) target = $region9
  $region8: #{_lambda_.1} parent=0 // pred_region
    _
  $region9: #{_lambda_.1} parent=0 // pred_fallthru
    _
  %v11 = vld [vmem:[%s1] sm:$0xff]
  %v12 = vld [vmem:[%s1 + $0x8] sm:$0xff]
  %v13 = vld [vmem:[%s1 + $0x10] sm:$0xff]
  %v14 = vld [vmem:[%s1 + $0x18] sm:$0xff]
  %v15 = vld [vmem:[%s1 + $0x20] sm:$0xff]
  %v16 = vld [vmem:[%s1 + $0x28] sm:$0xff]
  %v17 = vld [vmem:[%s1 + $0x30] sm:$0xff]
  %v18 = vld [vmem:[%s1 + $0x38] sm:$0xff]
  %v19 = vld [vmem:[%s1 + $0x40] sm:$0xff]
  %v20 = vld [vmem:[%s1 + $0x48] sm:$0xff]
  %v21 = vld [vmem:[%s1 + $0x50] sm:$0xff]
  %v22 = vld [vmem:[%s1 + $0x58] sm:$0xff]
  %v23 = vld [vmem:[%s1 + $0x60] sm:$0xff]
  %v24 = vld [vmem:[%s1 + $0x68] sm:$0xff]
  %v25 = vld [vmem:[%s1 + $0x70] sm:$0xff]
  %v26 = vld [vmem:[%s1 + $0x78] sm:$0xff]
  %v27 = vld [vmem:[%s1 + $0x80] sm:$0xff]
  %v28 = vld [vmem:[%s1 + $0x88] sm:$0xff]
  %v29 = vld [vmem:[%s1 + $0x90] sm:$0xff]
  %v30 = vld [vmem:[%s1 + $0x98] sm:$0xff]
  %v31 = vld [vmem:[%s1 + $0xa0] sm:$0xff]
  %v32 = vld [vmem:[%s1 + $0xa8] sm:$0xff]
  %v33 = vld [vmem:[%s1 + $0xb0] sm:$0xff]
  %v34 = vld [vmem:[%s1 + $0xb8] sm:$0xff]
  %v35 = vld [vmem:[%s1 + $0xc0] sm:$0xff]
  %v36 = vld [vmem:[%s1 + $0xc8] sm:$0xff]
  %v37 = vld [vmem:[%s1 + $0xd0] sm:$0xff]
  %v38 = vld [vmem:[%s1 + $0xd8] sm:$0xff]
  %v39 = vld [vmem:[%s1 + $0xe0] sm:$0xff]
  %v40 = vld [vmem:[%s1 + $0xe8] sm:$0xff]
  %v41 = vld [vmem:[%s1 + $0xf0] sm:$0xff]
  %v42 = vld [vmem:[%s1 + $0xf8] sm:$0xff]
  %v43 = vld [vmem:[%s1 + $0x100] sm:$0xff]
  %v44 = vld [vmem:[%s1 + $0x108] sm:$0xff]
  %v45 = vld [vmem:[%s1 + $0x110] sm:$0xff]
  %v46 = vld [vmem:[%s1 + $0x118] sm:$0xff]
  %v47 = vld [vmem:[%s1 + $0x120] sm:$0xff]
  %v48 = vld [vmem:[%s1 + $0x128] sm:$0xff]
  %v49 = vld [vmem:[%s1 + $0x130] sm:$0xff]
  %v50 = vld [vmem:[%s1 + $0x138] sm:$0xff]
  %v51 = vld [vmem:[%s1 + $0x140] sm:$0xff]
  %v52 = vld [vmem:[%s1 + $0x148] sm:$0xff]
  %v53 = vld [vmem:[%s1 + $0x150] sm:$0xff]
  %v54 = vld [vmem:[%s1 + $0x158] sm:$0xff]
  %v55 = vld [vmem:[%s1 + $0x160] sm:$0xff]
  %v56 = vld [vmem:[%s1 + $0x168] sm:$0xff]
  %v57 = vld [vmem:[%s1 + $0x170] sm:$0xff]
  %v58 = vld [vmem:[%s1 + $0x178] sm:$0xff]
  %v59 = vld [vmem:[%s1 + $0x180] sm:$0xff]
  %v60 = vld [vmem:[%s1 + $0x188] sm:$0xff]
  %v61 = vld [vmem:[%s1 + $0x190] sm:$0xff]
  %v62 = vld [vmem:[%s1 + $0x198] sm:$0xff]
  %v63 = vld [vmem:[%s1 + $0x1a0] sm:$0xff]
  %v64 = vld [vmem:[%s1 + $0x1a8] sm:$0xff]
  %v65 = vld [vmem:[%s1 + $0x1b0] sm:$0xff]
  %v66 = vld [vmem:[%s1 + $0x1b8] sm:$0xff]
  %v67 = vld [vmem:[%s1 + $0x1c0] sm:$0xff]
  %v68 = vld [vmem:[%s1 + $0x1c8] sm:$0xff]
  %v69 = vld [vmem:[%s1 + $0x1d0] sm:$0xff]
  %v70 = vld [vmem:[%s1 + $0x1d8] sm:$0xff]
  %v71 = vld [vmem:[%s1 + $0x1e0] sm:$0xff]
  %v72 = vld [vmem:[%s1 + $0x1e8] sm:$0xff]
  %v73 = vld [vmem:[%s1 + $0x1f0] sm:$0xff]
  %v74 = vld [vmem:[%s1 + $0x1f8] sm:$0xff]
  %v75 = vld [vmem:[%s0] sm:$0xff]
  %v76 = vld [vmem:[%s0 + $0x8] sm:$0xff]
  %vm77 = vcmask 130048
  %v79 = vsel %vm77, %v11, 0
  %v82 = vsel %vm77, %v12, 0
  %v85 = vsel %vm77, %v13, 0
  %v88 = vsel %vm77, %v14, 0
  %v91 = vsel %vm77, %v15, 0
  %v94 = vsel %vm77, %v16, 0
  %v97 = vsel %vm77, %v17, 0
  %v100 = vsel %vm77, %v18, 0
  %v103 = vsel %vm77, %v19, 0
  %v106 = vsel %vm77, %v20, 0
  %v109 = vsel %vm77, %v21, 0
  %v112 = vsel %vm77, %v22, 0
  %v115 = vsel %vm77, %v23, 0
  %v118 = vsel %vm77, %v24, 0
  %v121 = vsel %vm77, %v25, 0
  %v124 = vsel %vm77, %v26, 0
  %v127 = vsel %vm77, %v27, 0
  %v130 = vsel %vm77, %v28, 0
  %v133 = vsel %vm77, %v29, 0
  %v136 = vsel %vm77, %v30, 0
  %v139 = vsel %vm77, %v31, 0
  %v142 = vsel %vm77, %v32, 0
  %v145 = vsel %vm77, %v33, 0
  %v148 = vsel %vm77, %v34, 0
  %v151 = vsel %vm77, %v35, 0
  %v154 = vsel %vm77, %v36, 0
  %v157 = vsel %vm77, %v37, 0
  %v160 = vsel %vm77, %v38, 0
  %v163 = vsel %vm77, %v39, 0
  %v166 = vsel %vm77, %v40, 0
  %v169 = vsel %vm77, %v41, 0
  %v172 = vsel %vm77, %v42, 0
  %v175 = vsel %vm77, %v43, 0
  %v178 = vsel %vm77, %v44, 0
  %v181 = vsel %vm77, %v45, 0
  %v184 = vsel %vm77, %v46, 0
  %v187 = vsel %vm77, %v47, 0
  %v190 = vsel %vm77, %v48, 0
  %v193 = vsel %vm77, %v49, 0
  %v196 = vsel %vm77, %v50, 0
  %v199 = vsel %vm77, %v51, 0
  %v202 = vsel %vm77, %v52, 0
  %v205 = vsel %vm77, %v53, 0
  %v208 = vsel %vm77, %v54, 0
  %v211 = vsel %vm77, %v55, 0
  %v214 = vsel %vm77, %v56, 0
  %v217 = vsel %vm77, %v57, 0
  %v220 = vsel %vm77, %v58, 0
  %v223 = vsel %vm77, %v59, 0
  %v226 = vsel %vm77, %v60, 0
  %v229 = vsel %vm77, %v61, 0
  %v232 = vsel %vm77, %v62, 0
  %v235 = vsel %vm77, %v63, 0
  %v238 = vsel %vm77, %v64, 0
  %v241 = vsel %vm77, %v65, 0
  %v244 = vsel %vm77, %v66, 0
  %v247 = vsel %vm77, %v67, 0
  %v250 = vsel %vm77, %v68, 0
  %v253 = vsel %vm77, %v69, 0
  %v256 = vsel %vm77, %v70, 0
  %v259 = vsel %vm77, %v71, 0
  %v262 = vsel %vm77, %v72, 0
  %v265 = vsel %vm77, %v73, 0
  %v268 = vsel %vm77, %v74, 0
  %270 = vmatprep.subr.mxu0 0.0
  %v271 = vand.u32 %v75, 4294901760
  %272 = vmatpush1.msra.mxu0 %v271
  %273 = vmatprep.subr.mxu0 0.0
  %v274 = vand.u32 %v76, 4294901760
  %275 = vmatpush1.msra.mxu0 %v274
  %276 = vmatprep.subr.mxu0 0.0
  %277 = vmatpush1.msra.mxu0 0.0
  %278 = vmatprep.subr.mxu0 0.0
  %279 = vmatpush1.msra.mxu0 0.0
  %280 = vmatprep.subr.mxu0 0.0
  %281 = vmatpush1.msra.mxu0 0.0
  %282 = vmatprep.subr.mxu0 0.0
  %283 = vmatpush1.msra.mxu0 0.0
  %284 = vmatprep.subr.mxu0 0.0
  %285 = vmatpush1.msra.mxu0 0.0
  %286 = vmatprep.subr.mxu0 0.0
  %287 = vmatpush1.msra.mxu0 0.0
  %288 = vmatprep.subr.mxu0 0.0
  %289 = vmatpush1.msra.mxu0 0.0
  %290 = vmatprep.subr.mxu0 0.0
  %291 = vmatpush1.msra.mxu0 0.0
  %292 = vmatprep.subr.mxu0 0.0
  %293 = vmatpush1.msra.mxu0 0.0
  %294 = vmatprep.subr.mxu0 0.0
  %295 = vmatpush1.msra.mxu0 0.0
  %296 = vmatprep.subr.mxu0 0.0
  %297 = vmatpush1.msra.mxu0 0.0
  %298 = vmatprep.subr.mxu0 0.0
  %299 = vmatpush1.msra.mxu0 0.0
  %300 = vmatprep.subr.mxu0 0.0
  %301 = vmatpush1.msra.mxu0 0.0
  %302 = vmatprep.subr.mxu0 0.0
  %303 = vmatpush1.msra.mxu0 0.0
  %304 = vmatprep.subr.mxu0 0.0
  %305 = vmatpush1.msra.mxu0 0.0
  %306 = vmatprep.subr.mxu0 0.0
  %307 = vmatpush1.msra.mxu0 0.0
  %308 = vmatprep.subr.mxu0 0.0
  %309 = vmatpush1.msra.mxu0 0.0
  %310 = vmatprep.subr.mxu0 0.0
  %311 = vmatpush1.msra.mxu0 0.0
  %312 = vmatprep.subr.mxu0 0.0
  %313 = vmatpush1.msra.mxu0 0.0
  %314 = vmatprep.subr.mxu0 0.0
  %315 = vmatpush1.msra.mxu0 0.0
  %316 = vmatprep.subr.mxu0 0.0
  %317 = vmatpush1.msra.mxu0 0.0
  %318 = vmatprep.subr.mxu0 0.0
  %319 = vmatpush1.msra.mxu0 0.0
  %320 = vmatprep.subr.mxu0 0.0
  %321 = vmatpush1.msra.mxu0 0.0
  %322 = vmatprep.subr.mxu0 0.0
  %323 = vmatpush1.msra.mxu0 0.0
  %324 = vmatprep.subr.mxu0 0.0
  %325 = vmatpush1.msra.mxu0 0.0
  %326 = vmatprep.subr.mxu0 0.0
  %327 = vmatpush1.msra.mxu0 0.0
  %328 = vmatprep.subr.mxu0 0.0
  %329 = vmatpush1.msra.mxu0 0.0
  %330 = vmatprep.subr.mxu0 0.0
  %331 = vmatpush1.msra.mxu0 0.0
  %332 = vmatprep.subr.mxu0 0.0
  %333 = vmatpush1.msra.mxu0 0.0
  %334 = vmatprep.subr.mxu0 0.0
  %335 = vmatpush1.msra.mxu0 0.0
  %336 = vmatprep.mubr.f32.mxu0 0.0
  %v337 = vand.u32 %v79, 4294901760
  %v338 = vsub.f32 %v79, %v337
  %v339 = vand.u32 %v338, 4294901760
  %v340 = vsub.f32 %v338, %v339
  %v341 = vand.u32 %v340, 4294901760
  %342 = vmatmul.mubr.f32.gmra.mrb[0].mxu0 %v341
  %v343 = vpop.f32.mrb[0].mxu0
  %v344 = vadd.f32 0.0, %v343
  %v345 = vpop.f32.mrb[0].mxu0
  %346 = vmatprep.mubr.f32.mxu0 0.0
  %v347 = vand.u32 %v82, 4294901760
  %v348 = vsub.f32 %v82, %v347
  %v349 = vand.u32 %v348, 4294901760
  %v350 = vsub.f32 %v348, %v349
  %v351 = vand.u32 %v350, 4294901760
  %352 = vmatmul.mubr.f32.gmra.mrb[0].mxu0 %v351
  %v353 = vpop.f32.mrb[0].mxu0
  %v354 = vadd.f32 0.0, %v353
  %v355 = vpop.f32.mrb[0].mxu0
  %356 = vmatprep.mubr.f32.mxu0 0.0
  %v357 = vand.u32 %v85, 4294901760
  %v358 = vsub.f32 %v85, %v357
  %v359 = vand.u32 %v358, 4294901760
  %v360 = vsub.f32 %v358, %v359
  %v361 = vand.u32 %v360, 4294901760
  %362 = vmatmul.mubr.f32.gmra.mrb[0].mxu0 %v361
  %v363 = vpop.f32.mrb[0].mxu0
  %v364 = vadd.f32 0.0, %v363
  %v365 = vpop.f32.mrb[0].mxu0
  %366 = vmatprep.mubr.f32.mxu0 0.0
  %v367 = vand.u32 %v88, 4294901760
  %v368 = vsub.f32 %v88, %v367
  %v369 = vand.u32 %v368, 4294901760
  %v370 = vsub.f32 %v368, %v369
  %v371 = vand.u32 %v370, 4294901760
  %372 = vmatmul.mubr.f32.gmra.mrb[0].mxu0 %v371
  %v373 = vpop.f32.mrb[0].mxu0
  %v374 = vadd.f32 0.0, %v373
  %v375 = vpop.f32.mrb[0].mxu0
  %376 = vmatprep.mubr.f32.mxu0 0.0
  %v377 = vand.u32 %v91, 4294901760
  %v378 = vsub.f32 %v91, %v377
  %v379 = vand.u32 %v378, 4294901760
  %v380 = vsub.f32 %v378, %v379
  %v381 = vand.u32 %v380, 4294901760
  %382 = vmatmul.mubr.f32.gmra.mrb[0].mxu0 %v381
  %v383 = vpop.f32.mrb[0].mxu0
  %v384 = vadd.f32 0.0, %v383
  %v385 = vpop.f32.mrb[0].mxu0
  %386 = vmatprep.mubr.f32.mxu0 0.0
  %v387 = vand.u32 %v94, 4294901760
  %v388 = vsub.f32 %v94, %v387
  %v389 = vand.u32 %v388, 4294901760
  %v390 = vsub.f32 %v388, %v389
  %v391 = vand.u32 %v390, 4294901760
  %392 = vmatmul.mubr.f32.gmra.mrb[0].mxu0 %v391
  %v393 = vpop.f32.mrb[0].mxu0
  %v394 = vadd.f32 0.0, %v393
  %v395 = vpop.f32.mrb[0].mxu0
  %396 = vmatprep.mubr.f32.mxu0 0.0
  %v397 = vand.u32 %v97, 4294901760
  %v398 = vsub.f32 %v97, %v397
  %v399 = vand.u32 %v398, 4294901760
  %v400 = vsub.f32 %v398, %v399
  %v401 = vand.u32 %v400, 4294901760
  %402 = vmatmul.mubr.f32.gmra.mrb[0].mxu0 %v401
  %v403 = vpop.f32.mrb[0].mxu0
  %v404 = vadd.f32 0.0, %v403
  %v405 = vpop.f32.mrb[0].mxu0
  %406 = vmatprep.mubr.f32.mxu0 0.0
  %v407 = vand.u32 %v100, 4294901760
  %v408 = vsub.f32 %v100, %v407
  %v409 = vand.u32 %v408, 4294901760
  %v410 = vsub.f32 %v408, %v409
  %v411 = vand.u32 %v410, 4294901760
  %412 = vmatmul.mubr.f32.gmra.mrb[0].mxu0 %v411
  %v413 = vpop.f32.mrb[0].mxu0
  %v414 = vadd.f32 0.0, %v413
  %v415 = vpop.f32.mrb[0].mxu0
  %416 = vmatprep.mubr.f32.mxu0 0.0
  %v417 = vand.u32 %v103, 4294901760
  %v418 = vsub.f32 %v103, %v417
  %v419 = vand.u32 %v418, 4294901760
  %v420 = vsub.f32 %v418, %v419
  %v421 = vand.u32 %v420, 4294901760
  %422 = vmatmul.mubr.f32.gmra.mrb[0].mxu0 %v421
  %v423 = vpop.f32.mrb[0].mxu0
  %v424 = vadd.f32 0.0, %v423
  %v425 = vpop.f32.mrb[0].mxu0
  %426 = vmatprep.mubr.f32.mxu0 0.0
  %v427 = vand.u32 %v106, 4294901760
  %v428 = vsub.f32 %v106, %v427
  %v429 = vand.u32 %v428, 4294901760
  %v430 = vsub.f32 %v428, %v429
  %v431 = vand.u32 %v430, 4294901760
  %432 = vmatmul.mubr.f32.gmra.mrb[0].mxu0 %v431
  %v433 = vpop.f32.mrb[0].mxu0
  %v434 = vadd.f32 0.0, %v433
  %v435 = vpop.f32.mrb[0].mxu0
  %436 = vmatprep.mubr.f32.mxu0 0.0
  %v437 = vand.u32 %v109, 4294901760
  %v438 = vsub.f32 %v109, %v437
  %v439 = vand.u32 %v438, 4294901760
  %v440 = vsub.f32 %v438, %v439
  %v441 = vand.u32 %v440, 4294901760
  %442 = vmatmul.mubr.f32.gmra.mrb[0].mxu0 %v441
  %v443 = vpop.f32.mrb[0].mxu0
  %v444 = vadd.f32 0.0, %v443
  %v445 = vpop.f32.mrb[0].mxu0
  %446 = vmatprep.mubr.f32.mxu0 0.0
  %v447 = vand.u32 %v112, 4294901760
  %v448 = vsub.f32 %v112, %v447
  %v449 = vand.u32 %v448, 4294901760
  %v450 = vsub.f32 %v448, %v449
  %v451 = vand.u32 %v450, 4294901760
  %452 = vmatmul.mubr.f32.gmra.mrb[0].mxu0 %v451
  %v453 = vpop.f32.mrb[0].mxu0
  %v454 = vadd.f32 0.0, %v453
  %v455 = vpop.f32.mrb[0].mxu0
  %456 = vmatprep.mubr.f32.mxu0 0.0
  %v457 = vand.u32 %v115, 4294901760
  %v458 = vsub.f32 %v115, %v457
  %v459 = vand.u32 %v458, 4294901760
  %v460 = vsub.f32 %v458, %v459
  %v461 = vand.u32 %v460, 4294901760
  %462 = vmatmul.mubr.f32.gmra.mrb[0].mxu0 %v461
  %v463 = vpop.f32.mrb[0].mxu0
  %v464 = vadd.f32 0.0, %v463
  %v465 = vpop.f32.mrb[0].mxu0
  %466 = vmatprep.mubr.f32.mxu0 0.0
  %v467 = vand.u32 %v118, 4294901760
  %v468 = vsub.f32 %v118, %v467
  %v469 = vand.u32 %v468, 4294901760
  %v470 = vsub.f32 %v468, %v469
  %v471 = vand.u32 %v470, 4294901760
  %472 = vmatmul.mubr.f32.gmra.mrb[0].mxu0 %v471
  %v473 = vpop.f32.mrb[0].mxu0
  %v474 = vadd.f32 0.0, %v473
  %v475 = vpop.f32.mrb[0].mxu0
  %476 = vmatprep.mubr.f32.mxu0 0.0
  %v477 = vand.u32 %v121, 4294901760
  %v478 = vsub.f32 %v121, %v477
  %v479 = vand.u32 %v478, 4294901760
  %v480 = vsub.f32 %v478, %v479
  %v481 = vand.u32 %v480, 4294901760
  %482 = vmatmul.mubr.f32.gmra.mrb[0].mxu0 %v481
  %v483 = vpop.f32.mrb[0].mxu0
  %v484 = vadd.f32 0.0, %v483
  %v485 = vpop.f32.mrb[0].mxu0
  %486 = vmatprep.mubr.f32.mxu0 0.0
  %v487 = vand.u32 %v124, 4294901760
  %v488 = vsub.f32 %v124, %v487
  %v489 = vand.u32 %v488, 4294901760
  %v490 = vsub.f32 %v488, %v489
  %v491 = vand.u32 %v490, 4294901760
  %492 = vmatmul.mubr.f32.gmra.mrb[0].mxu0 %v491
  %v493 = vpop.f32.mrb[0].mxu0
  %v494 = vadd.f32 0.0, %v493
  %v495 = vpop.f32.mrb[0].mxu0
  %496 = vmatprep.mubr.f32.mxu0 0.0
  %v497 = vand.u32 %v127, 4294901760
  %v498 = vsub.f32 %v127, %v497
  %v499 = vand.u32 %v498, 4294901760
  %v500 = vsub.f32 %v498, %v499
  %v501 = vand.u32 %v500, 4294901760
  %502 = vmatmul.mubr.f32.gmra.mrb[0].mxu0 %v501
  %v503 = vpop.f32.mrb[0].mxu0
  %v504 = vadd.f32 0.0, %v503
  %v505 = vpop.f32.mrb[0].mxu0
  %506 = vmatprep.mubr.f32.mxu0 0.0
  %v507 = vand.u32 %v130, 4294901760
  %v508 = vsub.f32 %v130, %v507
  %v509 = vand.u32 %v508, 4294901760
  %v510 = vsub.f32 %v508, %v509
  %v511 = vand.u32 %v510, 4294901760
  %512 = vmatmul.mubr.f32.gmra.mrb[0].mxu0 %v511
  %v513 = vpop.f32.mrb[0].mxu0
  %v514 = vadd.f32 0.0, %v513
  %v515 = vpop.f32.mrb[0].mxu0
  %516 = vmatprep.mubr.f32.mxu0 0.0
  %v517 = vand.u32 %v133, 4294901760
  %v518 = vsub.f32 %v133, %v517
  %v519 = vand.u32 %v518, 4294901760
  %v520 = vsub.f32 %v518, %v519
  %v521 = vand.u32 %v520, 4294901760
  %522 = vmatmul.mubr.f32.gmra.mrb[0].mxu0 %v521
  %v523 = vpop.f32.mrb[0].mxu0
  %v524 = vadd.f32 0.0, %v523
  %v525 = vpop.f32.mrb[0].mxu0
  %526 = vmatprep.mubr.f32.mxu0 0.0
  %v527 = vand.u32 %v136, 4294901760
  %v528 = vsub.f32 %v136, %v527
  %v529 = vand.u32 %v528, 4294901760
  %v530 = vsub.f32 %v528, %v529
  %v531 = vand.u32 %v530, 4294901760
  %532 = vmatmul.mubr.f32.gmra.mrb[0].mxu0 %v531
  %v533 = vpop.f32.mrb[0].mxu0
  %v534 = vadd.f32 0.0, %v533
  %v535 = vpop.f32.mrb[0].mxu0
  %536 = vmatprep.mubr.f32.mxu0 0.0
  %v537 = vand.u32 %v139, 4294901760
  %v538 = vsub.f32 %v139, %v537
  %v539 = vand.u32 %v538, 4294901760
  %v540 = vsub.f32 %v538, %v539
  %v541 = vand.u32 %v540, 4294901760
  %542 = vmatmul.mubr.f32.gmra.mrb[0].mxu0 %v541
  %v543 = vpop.f32.mrb[0].mxu0
  %v544 = vadd.f32 0.0, %v543
  %v545 = vpop.f32.mrb[0].mxu0
  %546 = vmatprep.mubr.f32.mxu0 0.0
  %v547 = vand.u32 %v142, 4294901760
  %v548 = vsub.f32 %v142, %v547
  %v549 = vand.u32 %v548, 4294901760
  %v550 = vsub.f32 %v548, %v549
  %v551 = vand.u32 %v550, 4294901760
  %552 = vmatmul.mubr.f32.gmra.mrb[0].mxu0 %v551
  %v553 = vpop.f32.mrb[0].mxu0
  %v554 = vadd.f32 0.0, %v553
  %v555 = vpop.f32.mrb[0].mxu0
  %556 = vmatprep.mubr.f32.mxu0 0.0
  %v557 = vand.u32 %v145, 4294901760
  %v558 = vsub.f32 %v145, %v557
  %v559 = vand.u32 %v558, 4294901760
  %v560 = vsub.f32 %v558, %v559
  %v561 = vand.u32 %v560, 4294901760
  %562 = vmatmul.mubr.f32.gmra.mrb[0].mxu0 %v561
  %v563 = vpop.f32.mrb[0].mxu0
  %v564 = vadd.f32 0.0, %v563
  %v565 = vpop.f32.mrb[0].mxu0
  %566 = vmatprep.mubr.f32.mxu0 0.0
  %v567 = vand.u32 %v148, 4294901760
  %v568 = vsub.f32 %v148, %v567
  %v569 = vand.u32 %v568, 4294901760
  %v570 = vsub.f32 %v568, %v569
  %v571 = vand.u32 %v570, 4294901760
  %572 = vmatmul.mubr.f32.gmra.mrb[0].mxu0 %v571
  %v573 = vpop.f32.mrb[0].mxu0
  %v574 = vadd.f32 0.0, %v573
  %v575 = vpop.f32.mrb[0].mxu0
  %576 = vmatprep.mubr.f32.mxu0 0.0
  %v577 = vand.u32 %v151, 4294901760
  %v578 = vsub.f32 %v151, %v577
  %v579 = vand.u32 %v578, 4294901760
  %v580 = vsub.f32 %v578, %v579
  %v581 = vand.u32 %v580, 4294901760
  %582 = vmatmul.mubr.f32.gmra.mrb[0].mxu0 %v581
  %v583 = vpop.f32.mrb[0].mxu0
  %v584 = vadd.f32 0.0, %v583
  %v585 = vpop.f32.mrb[0].mxu0
  %586 = vmatprep.mubr.f32.mxu0 0.0
  %v587 = vand.u32 %v154, 4294901760
  %v588 = vsub.f32 %v154, %v587
  %v589 = vand.u32 %v588, 4294901760
  %v590 = vsub.f32 %v588, %v589
  %v591 = vand.u32 %v590, 4294901760
  %592 = vmatmul.mubr.f32.gmra.mrb[0].mxu0 %v591
  %v593 = vpop.f32.mrb[0].mxu0
  %v594 = vadd.f32 0.0, %v593
  %v595 = vpop.f32.mrb[0].mxu0
  %596 = vmatprep.mubr.f32.mxu0 0.0
  %v597 = vand.u32 %v157, 4294901760
  %v598 = vsub.f32 %v157, %v597
  %v599 = vand.u32 %v598, 4294901760
  %v600 = vsub.f32 %v598, %v599
  %v601 = vand.u32 %v600, 4294901760
  %602 = vmatmul.mubr.f32.gmra.mrb[0].mxu0 %v601
  %v603 = vpop.f32.mrb[0].mxu0
  %v604 = vadd.f32 0.0, %v603
  %v605 = vpop.f32.mrb[0].mxu0
  %606 = vmatprep.mubr.f32.mxu0 0.0
  %v607 = vand.u32 %v160, 4294901760
  %v608 = vsub.f32 %v160, %v607
  %v609 = vand.u32 %v608, 4294901760
  %v610 = vsub.f32 %v608, %v609
  %v611 = vand.u32 %v610, 4294901760
  %612 = vmatmul.mubr.f32.gmra.mrb[0].mxu0 %v611
  %v613 = vpop.f32.mrb[0].mxu0
  %v614 = vadd.f32 0.0, %v613
  %v615 = vpop.f32.mrb[0].mxu0
  %616 = vmatprep.mubr.f32.mxu0 0.0
  %v617 = vand.u32 %v163, 4294901760
  %v618 = vsub.f32 %v163, %v617
  %v619 = vand.u32 %v618, 4294901760
  %v620 = vsub.f32 %v618, %v619
  %v621 = vand.u32 %v620, 4294901760
  %622 = vmatmul.mubr.f32.gmra.mrb[0].mxu0 %v621
  %v623 = vpop.f32.mrb[0].mxu0
  %v624 = vadd.f32 0.0, %v623
  %v625 = vpop.f32.mrb[0].mxu0
  %626 = vmatprep.mubr.f32.mxu0 0.0
  %v627 = vand.u32 %v166, 4294901760
  %v628 = vsub.f32 %v166, %v627
  %v629 = vand.u32 %v628, 4294901760
  %v630 = vsub.f32 %v628, %v629
  %v631 = vand.u32 %v630, 4294901760
  %632 = vmatmul.mubr.f32.gmra.mrb[0].mxu0 %v631
  %v633 = vpop.f32.mrb[0].mxu0
  %v634 = vadd.f32 0.0, %v633
  %v635 = vpop.f32.mrb[0].mxu0
  %636 = vmatprep.mubr.f32.mxu0 0.0
  %v637 = vand.u32 %v169, 4294901760
  %v638 = vsub.f32 %v169, %v637
  %v639 = vand.u32 %v638, 4294901760
  %v640 = vsub.f32 %v638, %v639
  %v641 = vand.u32 %v640, 4294901760
  %642 = vmatmul.mubr.f32.gmra.mrb[0].mxu0 %v641
  %v643 = vpop.f32.mrb[0].mxu0
  %v644 = vadd.f32 0.0, %v643
  %v645 = vpop.f32.mrb[0].mxu0
  %646 = vmatprep.mubr.f32.mxu0 0.0
  %v647 = vand.u32 %v172, 4294901760
  %v648 = vsub.f32 %v172, %v647
  %v649 = vand.u32 %v648, 4294901760
  %v650 = vsub.f32 %v648, %v649
  %v651 = vand.u32 %v650, 4294901760
  %652 = vmatmul.mubr.f32.gmra.mrb[0].mxu0 %v651
  %v653 = vpop.f32.mrb[0].mxu0
  %v654 = vadd.f32 0.0, %v653
  %v655 = vpop.f32.mrb[0].mxu0
  %656 = vmatprep.mubr.f32.mxu0 0.0
  %v657 = vand.u32 %v175, 4294901760
  %v658 = vsub.f32 %v175, %v657
  %v659 = vand.u32 %v658, 4294901760
  %v660 = vsub.f32 %v658, %v659
  %v661 = vand.u32 %v660, 4294901760
  %662 = vmatmul.mubr.f32.gmra.mrb[0].mxu0 %v661
  %v663 = vpop.f32.mrb[0].mxu0
  %v664 = vadd.f32 0.0, %v663
  %v665 = vpop.f32.mrb[0].mxu0
  %666 = vmatprep.mubr.f32.mxu0 0.0
  %v667 = vand.u32 %v178, 4294901760
  %v668 = vsub.f32 %v178, %v667
  %v669 = vand.u32 %v668, 4294901760
  %v670 = vsub.f32 %v668, %v669
  %v671 = vand.u32 %v670, 4294901760
  %672 = vmatmul.mubr.f32.gmra.mrb[0].mxu0 %v671
  %v673 = vpop.f32.mrb[0].mxu0
  %v674 = vadd.f32 0.0, %v673
  %v675 = vpop.f32.mrb[0].mxu0
  %676 = vmatprep.mubr.f32.mxu0 0.0
  %v677 = vand.u32 %v181, 4294901760
  %v678 = vsub.f32 %v181, %v677
  %v679 = vand.u32 %v678, 4294901760
  %v680 = vsub.f32 %v678, %v679
  %v681 = vand.u32 %v680, 4294901760
  %682 = vmatmul.mubr.f32.gmra.mrb[0].mxu0 %v681
  %v683 = vpop.f32.mrb[0].mxu0
  %v684 = vadd.f32 0.0, %v683
  %v685 = vpop.f32.mrb[0].mxu0
  %686 = vmatprep.mubr.f32.mxu0 0.0
  %v687 = vand.u32 %v184, 4294901760
  %v688 = vsub.f32 %v184, %v687
  %v689 = vand.u32 %v688, 4294901760
  %v690 = vsub.f32 %v688, %v689
  %v691 = vand.u32 %v690, 4294901760
  %692 = vmatmul.mubr.f32.gmra.mrb[0].mxu0 %v691
  %v693 = vpop.f32.mrb[0].mxu0
  %v694 = vadd.f32 0.0, %v693
  %v695 = vpop.f32.mrb[0].mxu0
  %696 = vmatprep.mubr.f32.mxu0 0.0
  %v697 = vand.u32 %v187, 4294901760
  %v698 = vsub.f32 %v187, %v697
  %v699 = vand.u32 %v698, 4294901760
  %v700 = vsub.f32 %v698, %v699
  %v701 = vand.u32 %v700, 4294901760
  %702 = vmatmul.mubr.f32.gmra.mrb[0].mxu0 %v701
  %v703 = vpop.f32.mrb[0].mxu0
  %v704 = vadd.f32 0.0, %v703
  %v705 = vpop.f32.mrb[0].mxu0
  %706 = vmatprep.mubr.f32.mxu0 0.0
  %v707 = vand.u32 %v190, 4294901760
  %v708 = vsub.f32 %v190, %v707
  %v709 = vand.u32 %v708, 4294901760
  %v710 = vsub.f32 %v708, %v709
  %v711 = vand.u32 %v710, 4294901760
  %712 = vmatmul.mubr.f32.gmra.mrb[0].mxu0 %v711
  %v713 = vpop.f32.mrb[0].mxu0
  %v714 = vadd.f32 0.0, %v713
  %v715 = vpop.f32.mrb[0].mxu0
  %716 = vmatprep.mubr.f32.mxu0 0.0
  %v717 = vand.u32 %v193, 4294901760
  %v718 = vsub.f32 %v193, %v717
  %v719 = vand.u32 %v718, 4294901760
  %v720 = vsub.f32 %v718, %v719
  %v721 = vand.u32 %v720, 4294901760
  %722 = vmatmul.mubr.f32.gmra.mrb[0].mxu0 %v721
  %v723 = vpop.f32.mrb[0].mxu0
  %v724 = vadd.f32 0.0, %v723
  %v725 = vpop.f32.mrb[0].mxu0
  %726 = vmatprep.mubr.f32.mxu0 0.0
  %v727 = vand.u32 %v196, 4294901760
  %v728 = vsub.f32 %v196, %v727
  %v729 = vand.u32 %v728, 4294901760
  %v730 = vsub.f32 %v728, %v729
  %v731 = vand.u32 %v730, 4294901760
  %732 = vmatmul.mubr.f32.gmra.mrb[0].mxu0 %v731
  %v733 = vpop.f32.mrb[0].mxu0
  %v734 = vadd.f32 0.0, %v733
  %v735 = vpop.f32.mrb[0].mxu0
  %736 = vmatprep.mubr.f32.mxu0 0.0
  %v737 = vand.u32 %v199, 4294901760
  %v738 = vsub.f32 %v199, %v737
  %v739 = vand.u32 %v738, 4294901760
  %v740 = vsub.f32 %v738, %v739
  %v741 = vand.u32 %v740, 4294901760
  %742 = vmatmul.mubr.f32.gmra.mrb[0].mxu0 %v741
  %v743 = vpop.f32.mrb[0].mxu0
  %v744 = vadd.f32 0.0, %v743
  %v745 = vpop.f32.mrb[0].mxu0
  %746 = vmatprep.mubr.f32.mxu0 0.0
  %v747 = vand.u32 %v202, 4294901760
  %v748 = vsub.f32 %v202, %v747
  %v749 = vand.u32 %v748, 4294901760
  %v750 = vsub.f32 %v748, %v749
  %v751 = vand.u32 %v750, 4294901760
  %752 = vmatmul.mubr.f32.gmra.mrb[0].mxu0 %v751
  %v753 = vpop.f32.mrb[0].mxu0
  %v754 = vadd.f32 0.0, %v753
  %v755 = vpop.f32.mrb[0].mxu0
  %756 = vmatprep.mubr.f32.mxu0 0.0
  %v757 = vand.u32 %v205, 4294901760
  %v758 = vsub.f32 %v205, %v757
  %v759 = vand.u32 %v758, 4294901760
  %v760 = vsub.f32 %v758, %v759
  %v761 = vand.u32 %v760, 4294901760
  %762 = vmatmul.mubr.f32.gmra.mrb[0].mxu0 %v761
  %v763 = vpop.f32.mrb[0].mxu0
  %v764 = vadd.f32 0.0, %v763
  %v765 = vpop.f32.mrb[0].mxu0
  %766 = vmatprep.mubr.f32.mxu0 0.0
  %v767 = vand.u32 %v208, 4294901760
  %v768 = vsub.f32 %v208, %v767
  %v769 = vand.u32 %v768, 4294901760
  %v770 = vsub.f32 %v768, %v769
  %v771 = vand.u32 %v770, 4294901760
  %772 = vmatmul.mubr.f32.gmra.mrb[0].mxu0 %v771
  %v773 = vpop.f32.mrb[0].mxu0
  %v774 = vadd.f32 0.0, %v773
  %v775 = vpop.f32.mrb[0].mxu0
  %776 = vmatprep.mubr.f32.mxu0 0.0
  %v777 = vand.u32 %v211, 4294901760
  %v778 = vsub.f32 %v211, %v777
  %v779 = vand.u32 %v778, 4294901760
  %v780 = vsub.f32 %v778, %v779
  %v781 = vand.u32 %v780, 4294901760
  %782 = vmatmul.mubr.f32.gmra.mrb[0].mxu0 %v781
  %v783 = vpop.f32.mrb[0].mxu0
  %v784 = vadd.f32 0.0, %v783
  %v785 = vpop.f32.mrb[0].mxu0
  %786 = vmatprep.mubr.f32.mxu0 0.0
  %v787 = vand.u32 %v214, 4294901760
  %v788 = vsub.f32 %v214, %v787
  %v789 = vand.u32 %v788, 4294901760
  %v790 = vsub.f32 %v788, %v789
  %v791 = vand.u32 %v790, 4294901760
  %792 = vmatmul.mubr.f32.gmra.mrb[0].mxu0 %v791
  %v793 = vpop.f32.mrb[0].mxu0
  %v794 = vadd.f32 0.0, %v793
  %v795 = vpop.f32.mrb[0].mxu0
  %796 = vmatprep.mubr.f32.mxu0 0.0
  %v797 = vand.u32 %v217, 4294901760
  %v798 = vsub.f32 %v217, %v797
  %v799 = vand.u32 %v798, 4294901760
  %v800 = vsub.f32 %v798, %v799
  %v801 = vand.u32 %v800, 4294901760
  %802 = vmatmul.mubr.f32.gmra.mrb[0].mxu0 %v801
  %v803 = vpop.f32.mrb[0].mxu0
  %v804 = vadd.f32 0.0, %v803
  %v805 = vpop.f32.mrb[0].mxu0
  %806 = vmatprep.mubr.f32.mxu0 0.0
  %v807 = vand.u32 %v220, 4294901760
  %v808 = vsub.f32 %v220, %v807
  %v809 = vand.u32 %v808, 4294901760
  %v810 = vsub.f32 %v808, %v809
  %v811 = vand.u32 %v810, 4294901760
  %812 = vmatmul.mubr.f32.gmra.mrb[0].mxu0 %v811
  %v813 = vpop.f32.mrb[0].mxu0
  %v814 = vadd.f32 0.0, %v813
  %v815 = vpop.f32.mrb[0].mxu0
  %816 = vmatprep.mubr.f32.mxu0 0.0
  %v817 = vand.u32 %v223, 4294901760
  %v818 = vsub.f32 %v223, %v817
  %v819 = vand.u32 %v818, 4294901760
  %v820 = vsub.f32 %v818, %v819
  %v821 = vand.u32 %v820, 4294901760
  %822 = vmatmul.mubr.f32.gmra.mrb[0].mxu0 %v821
  %v823 = vpop.f32.mrb[0].mxu0
  %v824 = vadd.f32 0.0, %v823
  %v825 = vpop.f32.mrb[0].mxu0
  %826 = vmatprep.mubr.f32.mxu0 0.0
  %v827 = vand.u32 %v226, 4294901760
  %v828 = vsub.f32 %v226, %v827
  %v829 = vand.u32 %v828, 4294901760
  %v830 = vsub.f32 %v828, %v829
  %v831 = vand.u32 %v830, 4294901760
  %832 = vmatmul.mubr.f32.gmra.mrb[0].mxu0 %v831
  %v833 = vpop.f32.mrb[0].mxu0
  %v834 = vadd.f32 0.0, %v833
  %v835 = vpop.f32.mrb[0].mxu0
  %836 = vmatprep.mubr.f32.mxu0 0.0
  %v837 = vand.u32 %v229, 4294901760
  %v838 = vsub.f32 %v229, %v837
  %v839 = vand.u32 %v838, 4294901760
  %v840 = vsub.f32 %v838, %v839
  %v841 = vand.u32 %v840, 4294901760
  %842 = vmatmul.mubr.f32.gmra.mrb[0].mxu0 %v841
  %v843 = vpop.f32.mrb[0].mxu0
  %v844 = vadd.f32 0.0, %v843
  %v845 = vpop.f32.mrb[0].mxu0
  %846 = vmatprep.mubr.f32.mxu0 0.0
  %v847 = vand.u32 %v232, 4294901760
  %v848 = vsub.f32 %v232, %v847
  %v849 = vand.u32 %v848, 4294901760
  %v850 = vsub.f32 %v848, %v849
  %v851 = vand.u32 %v850, 4294901760
  %852 = vmatmul.mubr.f32.gmra.mrb[0].mxu0 %v851
  %v853 = vpop.f32.mrb[0].mxu0
  %v854 = vadd.f32 0.0, %v853
  %v855 = vpop.f32.mrb[0].mxu0
  %856 = vmatprep.mubr.f32.mxu0 0.0
  %v857 = vand.u32 %v235, 4294901760
  %v858 = vsub.f32 %v235, %v857
  %v859 = vand.u32 %v858, 4294901760
  %v860 = vsub.f32 %v858, %v859
  %v861 = vand.u32 %v860, 4294901760
  %862 = vmatmul.mubr.f32.gmra.mrb[0].mxu0 %v861
  %v863 = vpop.f32.mrb[0].mxu0
  %v864 = vadd.f32 0.0, %v863
  %v865 = vpop.f32.mrb[0].mxu0
  %866 = vmatprep.mubr.f32.mxu0 0.0
  %v867 = vand.u32 %v238, 4294901760
  %v868 = vsub.f32 %v238, %v867
  %v869 = vand.u32 %v868, 4294901760
  %v870 = vsub.f32 %v868, %v869
  %v871 = vand.u32 %v870, 4294901760
  %872 = vmatmul.mubr.f32.gmra.mrb[0].mxu0 %v871
  %v873 = vpop.f32.mrb[0].mxu0
  %v874 = vadd.f32 0.0, %v873
  %v875 = vpop.f32.mrb[0].mxu0
  %876 = vmatprep.mubr.f32.mxu0 0.0
  %v877 = vand.u32 %v241, 4294901760
  %v878 = vsub.f32 %v241, %v877
  %v879 = vand.u32 %v878, 4294901760
  %v880 = vsub.f32 %v878, %v879
  %v881 = vand.u32 %v880, 4294901760
  %882 = vmatmul.mubr.f32.gmra.mrb[0].mxu0 %v881
  %v883 = vpop.f32.mrb[0].mxu0
  %v884 = vadd.f32 0.0, %v883
  %v885 = vpop.f32.mrb[0].mxu0
  %886 = vmatprep.mubr.f32.mxu0 0.0
  %v887 = vand.u32 %v244, 4294901760
  %v888 = vsub.f32 %v244, %v887
  %v889 = vand.u32 %v888, 4294901760
  %v890 = vsub.f32 %v888, %v889
  %v891 = vand.u32 %v890, 4294901760
  %892 = vmatmul.mubr.f32.gmra.mrb[0].mxu0 %v891
  %v893 = vpop.f32.mrb[0].mxu0
  %v894 = vadd.f32 0.0, %v893
  %v895 = vpop.f32.mrb[0].mxu0
  %896 = vmatprep.mubr.f32.mxu0 0.0
  %v897 = vand.u32 %v247, 4294901760
  %v898 = vsub.f32 %v247, %v897
  %v899 = vand.u32 %v898, 4294901760
  %v900 = vsub.f32 %v898, %v899
  %v901 = vand.u32 %v900, 4294901760
  %902 = vmatmul.mubr.f32.gmra.mrb[0].mxu0 %v901
  %v903 = vpop.f32.mrb[0].mxu0
  %v904 = vadd.f32 0.0, %v903
  %v905 = vpop.f32.mrb[0].mxu0
  %906 = vmatprep.mubr.f32.mxu0 0.0
  %v907 = vand.u32 %v250, 4294901760
  %v908 = vsub.f32 %v250, %v907
  %v909 = vand.u32 %v908, 4294901760
  %v910 = vsub.f32 %v908, %v909
  %v911 = vand.u32 %v910, 4294901760
  %912 = vmatmul.mubr.f32.gmra.mrb[0].mxu0 %v911
  %v913 = vpop.f32.mrb[0].mxu0
  %v914 = vadd.f32 0.0, %v913
  %v915 = vpop.f32.mrb[0].mxu0
  %916 = vmatprep.mubr.f32.mxu0 0.0
  %v917 = vand.u32 %v253, 4294901760
  %v918 = vsub.f32 %v253, %v917
  %v919 = vand.u32 %v918, 4294901760
  %v920 = vsub.f32 %v918, %v919
  %v921 = vand.u32 %v920, 4294901760
  %922 = vmatmul.mubr.f32.gmra.mrb[0].mxu0 %v921
  %v923 = vpop.f32.mrb[0].mxu0
  %v924 = vadd.f32 0.0, %v923
  %v925 = vpop.f32.mrb[0].mxu0
  %926 = vmatprep.mubr.f32.mxu0 0.0
  %v927 = vand.u32 %v256, 4294901760
  %v928 = vsub.f32 %v256, %v927
  %v929 = vand.u32 %v928, 4294901760
  %v930 = vsub.f32 %v928, %v929
  %v931 = vand.u32 %v930, 4294901760
  %932 = vmatmul.mubr.f32.gmra.mrb[0].mxu0 %v931
  %v933 = vpop.f32.mrb[0].mxu0
  %v934 = vadd.f32 0.0, %v933
  %v935 = vpop.f32.mrb[0].mxu0
  %936 = vmatprep.mubr.f32.mxu0 0.0
  %v937 = vand.u32 %v259, 4294901760
  %v938 = vsub.f32 %v259, %v937
  %v939 = vand.u32 %v938, 4294901760
  %v940 = vsub.f32 %v938, %v939
  %v941 = vand.u32 %v940, 4294901760
  %942 = vmatmul.mubr.f32.gmra.mrb[0].mxu0 %v941
  %v943 = vpop.f32.mrb[0].mxu0
  %v944 = vadd.f32 0.0, %v943
  %v945 = vpop.f32.mrb[0].mxu0
  %946 = vmatprep.mubr.f32.mxu0 0.0
  %v947 = vand.u32 %v262, 4294901760
  %v948 = vsub.f32 %v262, %v947
  %v949 = vand.u32 %v948, 4294901760
  %v950 = vsub.f32 %v948, %v949
  %v951 = vand.u32 %v950, 4294901760
  %952 = vmatmul.mubr.f32.gmra.mrb[0].mxu0 %v951
  %v953 = vpop.f32.mrb[0].mxu0
  %v954 = vadd.f32 0.0, %v953
  %v955 = vpop.f32.mrb[0].mxu0
  %956 = vmatprep.mubr.f32.mxu0 0.0
  %v957 = vand.u32 %v265, 4294901760
  %v958 = vsub.f32 %v265, %v957
  %v959 = vand.u32 %v958, 4294901760
  %v960 = vsub.f32 %v958, %v959
  %v961 = vand.u32 %v960, 4294901760
  %962 = vmatmul.mubr.f32.gmra.mrb[0].mxu0 %v961
  %v963 = vpop.f32.mrb[0].mxu0
  %v964 = vadd.f32 0.0, %v963
  %v965 = vpop.f32.mrb[0].mxu0
  %966 = vmatprep.mubr.f32.mxu0 0.0
  %v967 = vand.u32 %v268, 4294901760
  %v968 = vsub.f32 %v268, %v967
  %v969 = vand.u32 %v968, 4294901760
  %v970 = vsub.f32 %v968, %v969
  %v971 = vand.u32 %v970, 4294901760
  %972 = vmatmul.mubr.f32.gmra.mrb[0].mxu0 %v971
  %v973 = vpop.f32.mrb[0].mxu0
  %v974 = vadd.f32 0.0, %v973
  %v975 = vpop.f32.mrb[0].mxu0
  %976 = vdwg.mxu0
  %977 = vmatprep.subr.mxu0 0.0
  %v978 = vand.u32 %v75, 4294901760
  %v979 = vsub.f32 %v75, %v978
  %v980 = vand.u32 %v979, 4294901760
  %v981 = vsub.f32 %v979, %v980
  %v982 = vand.u32 %v981, 4294901760
  %983 = vmatpush1.msra.mxu0 %v982
  %984 = vmatprep.subr.mxu0 0.0
  %v985 = vand.u32 %v76, 4294901760
  %v986 = vsub.f32 %v76, %v985
  %v987 = vand.u32 %v986, 4294901760
  %v988 = vsub.f32 %v986, %v987
  %v989 = vand.u32 %v988, 4294901760
  %990 = vmatpush1.msra.mxu0 %v989
  %991 = vmatprep.subr.mxu0 0.0
  %992 = vmatpush1.msra.mxu0 0.0
  %993 = vmatprep.subr.mxu0 0.0
  %994 = vmatpush1.msra.mxu0 0.0
  %995 = vmatprep.subr.mxu0 0.0
  %996 = vmatpush1.msra.mxu0 0.0
  %997 = vmatprep.subr.mxu0 0.0
  %998 = vmatpush1.msra.mxu0 0.0
  %999 = vmatprep.subr.mxu0 0.0
  %1000 = vmatpush1.msra.mxu0 0.0
  %1001 = vmatprep.subr.mxu0 0.0
  %1002 = vmatpush1.msra.mxu0 0.0
  %1003 = vmatprep.subr.mxu0 0.0
  %1004 = vmatpush1.msra.mxu0 0.0
  %1005 = vmatprep.subr.mxu0 0.0
  %1006 = vmatpush1.msra.mxu0 0.0
  %1007 = vmatprep.subr.mxu0 0.0
  %1008 = vmatpush1.msra.mxu0 0.0
  %1009 = vmatprep.subr.mxu0 0.0
  %1010 = vmatpush1.msra.mxu0 0.0
  %1011 = vmatprep.subr.mxu0 0.0
  %1012 = vmatpush1.msra.mxu0 0.0
  %1013 = vmatprep.subr.mxu0 0.0
  %1014 = vmatpush1.msra.mxu0 0.0
  %1015 = vmatprep.subr.mxu0 0.0
  %1016 = vmatpush1.msra.mxu0 0.0
  %1017 = vmatprep.subr.mxu0 0.0
  %1018 = vmatpush1.msra.mxu0 0.0
  %1019 = vmatprep.subr.mxu0 0.0
  %1020 = vmatpush1.msra.mxu0 0.0
  %1021 = vmatprep.subr.mxu0 0.0
  %1022 = vmatpush1.msra.mxu0 0.0
  %1023 = vmatprep.subr.mxu0 0.0
  %1024 = vmatpush1.msra.mxu0 0.0
  %1025 = vmatprep.subr.mxu0 0.0
  %1026 = vmatpush1.msra.mxu0 0.0
  %1027 = vmatprep.subr.mxu0 0.0
  %1028 = vmatpush1.msra.mxu0 0.0
  %1029 = vmatprep.subr.mxu0 0.0
  %1030 = vmatpush1.msra.mxu0 0.0
  %1031 = vmatprep.subr.mxu0 0.0
  %1032 = vmatpush1.msra.mxu0 0.0
  %1033 = vmatprep.subr.mxu0 0.0
  %1034 = vmatpush1.msra.mxu0 0.0
  %1035 = vmatprep.subr.mxu0 0.0
  %1036 = vmatpush1.msra.mxu0 0.0
  %1037 = vmatprep.subr.mxu0 0.0
  %1038 = vmatpush1.msra.mxu0 0.0
  %1039 = vmatprep.subr.mxu0 0.0
  %1040 = vmatpush1.msra.mxu0 0.0
  %1041 = vmatprep.subr.mxu0 0.0
  %1042 = vmatpush1.msra.mxu0 0.0
  %1043 = vmatprep.subr.mxu0 0.0
  %1044 = vmatpush1.msra.mxu0 0.0
  %1045 = vmatprep.subr.mxu0 0.0
  %1046 = vmatpush1.msra.mxu0 0.0
  %1047 = vmatprep.subr.mxu0 0.0
  %1048 = vmatpush1.msra.mxu0 0.0
  %1049 = vmatprep.subr.mxu0 0.0
  %1050 = vmatpush1.msra.mxu0 0.0
  %1051 = vmatprep.mubr.f32.mxu0 0.0
  %v1052 = vand.u32 %v79, 4294901760
  %1053 = vmatmul.mubr.f32.gmra.mrb[0].mxu0 %v1052
  %v1054 = vpop.f32.mrb[0].mxu0
  %v1055 = vadd.f32 %v344, %v1054
  %v1056 = vpop.f32.mrb[0].mxu0
  %1057 = vmatprep.mubr.f32.mxu0 0.0
  %v1058 = vand.u32 %v82, 4294901760
  %1059 = vmatmul.mubr.f32.gmra.mrb[0].mxu0 %v1058
  %v1060 = vpop.f32.mrb[0].mxu0
  %v1061 = vadd.f32 %v354, %v1060
  %v1062 = vpop.f32.mrb[0].mxu0
  %1063 = vmatprep.mubr.f32.mxu0 0.0
  %v1064 = vand.u32 %v85, 4294901760
  %1065 = vmatmul.mubr.f32.gmra.mrb[0].mxu0 %v1064
  %v1066 = vpop.f32.mrb[0].mxu0
  %v1067 = vadd.f32 %v364, %v1066
  %v1068 = vpop.f32.mrb[0].mxu0
  %1069 = vmatprep.mubr.f32.mxu0 0.0
  %v1070 = vand.u32 %v88, 4294901760
  %1071 = vmatmul.mubr.f32.gmra.mrb[0].mxu0 %v1070
  %v1072 = vpop.f32.mrb[0].mxu0
  %v1073 = vadd.f32 %v374, %v1072
  %v1074 = vpop.f32.mrb[0].mxu0
  %1075 = vmatprep.mubr.f32.mxu0 0.0
  %v1076 = vand.u32 %v91, 4294901760
  %1077 = vmatmul.mubr.f32.gmra.mrb[0].mxu0 %v1076
  %v1078 = vpop.f32.mrb[0].mxu0
  %v1079 = vadd.f32 %v384, %v1078
  %v1080 = vpop.f32.mrb[0].mxu0
  %1081 = vmatprep.mubr.f32.mxu0 0.0
  %v1082 = vand.u32 %v94, 4294901760
  %1083 = vmatmul.mubr.f32.gmra.mrb[0].mxu0 %v1082
  %v1084 = vpop.f32.mrb[0].mxu0
  %v1085 = vadd.f32 %v394, %v1084
  %v1086 = vpop.f32.mrb[0].mxu0
  %1087 = vmatprep.mubr.f32.mxu0 0.0
  %v1088 = vand.u32 %v97, 4294901760
  %1089 = vmatmul.mubr.f32.gmra.mrb[0].mxu0 %v1088
  %v1090 = vpop.f32.mrb[0].mxu0
  %v1091 = vadd.f32 %v404, %v1090
  %v1092 = vpop.f32.mrb[0].mxu0
  %1093 = vmatprep.mubr.f32.mxu0 0.0
  %v1094 = vand.u32 %v100, 4294901760
  %1095 = vmatmul.mubr.f32.gmra.mrb[0].mxu0 %v1094
  %v1096 = vpop.f32.mrb[0].mxu0
  %v1097 = vadd.f32 %v414, %v1096
  %v1098 = vpop.f32.mrb[0].mxu0
  %1099 = vmatprep.mubr.f32.mxu0 0.0
  %v1100 = vand.u32 %v103, 4294901760
  %1101 = vmatmul.mubr.f32.gmra.mrb[0].mxu0 %v1100
  %v1102 = vpop.f32.mrb[0].mxu0
  %v1103 = vadd.f32 %v424, %v1102
  %v1104 = vpop.f32.mrb[0].mxu0
  %1105 = vmatprep.mubr.f32.mxu0 0.0
  %v1106 = vand.u32 %v106, 4294901760
  %1107 = vmatmul.mubr.f32.gmra.mrb[0].mxu0 %v1106
  %v1108 = vpop.f32.mrb[0].mxu0
  %v1109 = vadd.f32 %v434, %v1108
  %v1110 = vpop.f32.mrb[0].mxu0
  %1111 = vmatprep.mubr.f32.mxu0 0.0
  %v1112 = vand.u32 %v109, 4294901760
  %1113 = vmatmul.mubr.f32.gmra.mrb[0].mxu0 %v1112
  %v1114 = vpop.f32.mrb[0].mxu0
  %v1115 = vadd.f32 %v444, %v1114
  %v1116 = vpop.f32.mrb[0].mxu0
  %1117 = vmatprep.mubr.f32.mxu0 0.0
  %v1118 = vand.u32 %v112, 4294901760
  %1119 = vmatmul.mubr.f32.gmra.mrb[0].mxu0 %v1118
  %v1120 = vpop.f32.mrb[0].mxu0
  %v1121 = vadd.f32 %v454, %v1120
  %v1122 = vpop.f32.mrb[0].mxu0
  %1123 = vmatprep.mubr.f32.mxu0 0.0
  %v1124 = vand.u32 %v115, 4294901760
  %1125 = vmatmul.mubr.f32.gmra.mrb[0].mxu0 %v1124
  %v1126 = vpop.f32.mrb[0].mxu0
  %v1127 = vadd.f32 %v464, %v1126
  %v1128 = vpop.f32.mrb[0].mxu0
  %1129 = vmatprep.mubr.f32.mxu0 0.0
  %v1130 = vand.u32 %v118, 4294901760
  %1131 = vmatmul.mubr.f32.gmra.mrb[0].mxu0 %v1130
  %v1132 = vpop.f32.mrb[0].mxu0
  %v1133 = vadd.f32 %v474, %v1132
  %v1134 = vpop.f32.mrb[0].mxu0
  %1135 = vmatprep.mubr.f32.mxu0 0.0
  %v1136 = vand.u32 %v121, 4294901760
  %1137 = vmatmul.mubr.f32.gmra.mrb[0].mxu0 %v1136
  %v1138 = vpop.f32.mrb[0].mxu0
  %v1139 = vadd.f32 %v484, %v1138
  %v1140 = vpop.f32.mrb[0].mxu0
  %1141 = vmatprep.mubr.f32.mxu0 0.0
  %v1142 = vand.u32 %v124, 4294901760
  %1143 = vmatmul.mubr.f32.gmra.mrb[0].mxu0 %v1142
  %v1144 = vpop.f32.mrb[0].mxu0
  %v1145 = vadd.f32 %v494, %v1144
  %v1146 = vpop.f32.mrb[0].mxu0
  %1147 = vmatprep.mubr.f32.mxu0 0.0
  %v1148 = vand.u32 %v127, 4294901760
  %1149 = vmatmul.mubr.f32.gmra.mrb[0].mxu0 %v1148
  %v1150 = vpop.f32.mrb[0].mxu0
  %v1151 = vadd.f32 %v504, %v1150
  %v1152 = vpop.f32.mrb[0].mxu0
  %1153 = vmatprep.mubr.f32.mxu0 0.0
  %v1154 = vand.u32 %v130, 4294901760
  %1155 = vmatmul.mubr.f32.gmra.mrb[0].mxu0 %v1154
  %v1156 = vpop.f32.mrb[0].mxu0
  %v1157 = vadd.f32 %v514, %v1156
  %v1158 = vpop.f32.mrb[0].mxu0
  %1159 = vmatprep.mubr.f32.mxu0 0.0
  %v1160 = vand.u32 %v133, 4294901760
  %1161 = vmatmul.mubr.f32.gmra.mrb[0].mxu0 %v1160
  %v1162 = vpop.f32.mrb[0].mxu0
  %v1163 = vadd.f32 %v524, %v1162
  %v1164 = vpop.f32.mrb[0].mxu0
  %1165 = vmatprep.mubr.f32.mxu0 0.0
  %v1166 = vand.u32 %v136, 4294901760
  %1167 = vmatmul.mubr.f32.gmra.mrb[0].mxu0 %v1166
  %v1168 = vpop.f32.mrb[0].mxu0
  %v1169 = vadd.f32 %v534, %v1168
  %v1170 = vpop.f32.mrb[0].mxu0
  %1171 = vmatprep.mubr.f32.mxu0 0.0
  %v1172 = vand.u32 %v139, 4294901760
  %1173 = vmatmul.mubr.f32.gmra.mrb[0].mxu0 %v1172
  %v1174 = vpop.f32.mrb[0].mxu0
  %v1175 = vadd.f32 %v544, %v1174
  %v1176 = vpop.f32.mrb[0].mxu0
  %1177 = vmatprep.mubr.f32.mxu0 0.0
  %v1178 = vand.u32 %v142, 4294901760
  %1179 = vmatmul.mubr.f32.gmra.mrb[0].mxu0 %v1178
  %v1180 = vpop.f32.mrb[0].mxu0
  %v1181 = vadd.f32 %v554, %v1180
  %v1182 = vpop.f32.mrb[0].mxu0
  %1183 = vmatprep.mubr.f32.mxu0 0.0
  %v1184 = vand.u32 %v145, 4294901760
  %1185 = vmatmul.mubr.f32.gmra.mrb[0].mxu0 %v1184
  %v1186 = vpop.f32.mrb[0].mxu0
  %v1187 = vadd.f32 %v564, %v1186
  %v1188 = vpop.f32.mrb[0].mxu0
  %1189 = vmatprep.mubr.f32.mxu0 0.0
  %v1190 = vand.u32 %v148, 4294901760
  %1191 = vmatmul.mubr.f32.gmra.mrb[0].mxu0 %v1190
  %v1192 = vpop.f32.mrb[0].mxu0
  %v1193 = vadd.f32 %v574, %v1192
  %v1194 = vpop.f32.mrb[0].mxu0
  %1195 = vmatprep.mubr.f32.mxu0 0.0
  %v1196 = vand.u32 %v151, 4294901760
  %1197 = vmatmul.mubr.f32.gmra.mrb[0].mxu0 %v1196
  %v1198 = vpop.f32.mrb[0].mxu0
  %v1199 = vadd.f32 %v584, %v1198
  %v1200 = vpop.f32.mrb[0].mxu0
  %1201 = vmatprep.mubr.f32.mxu0 0.0
  %v1202 = vand.u32 %v154, 4294901760
  %1203 = vmatmul.mubr.f32.gmra.mrb[0].mxu0 %v1202
  %v1204 = vpop.f32.mrb[0].mxu0
  %v1205 = vadd.f32 %v594, %v1204
  %v1206 = vpop.f32.mrb[0].mxu0
  %1207 = vmatprep.mubr.f32.mxu0 0.0
  %v1208 = vand.u32 %v157, 4294901760
  %1209 = vmatmul.mubr.f32.gmra.mrb[0].mxu0 %v1208
  %v1210 = vpop.f32.mrb[0].mxu0
  %v1211 = vadd.f32 %v604, %v1210
  %v1212 = vpop.f32.mrb[0].mxu0
  %1213 = vmatprep.mubr.f32.mxu0 0.0
  %v1214 = vand.u32 %v160, 4294901760
  %1215 = vmatmul.mubr.f32.gmra.mrb[0].mxu0 %v1214
  %v1216 = vpop.f32.mrb[0].mxu0
  %v1217 = vadd.f32 %v614, %v1216
  %v1218 = vpop.f32.mrb[0].mxu0
  %1219 = vmatprep.mubr.f32.mxu0 0.0
  %v1220 = vand.u32 %v163, 4294901760
  %1221 = vmatmul.mubr.f32.gmra.mrb[0].mxu0 %v1220
  %v1222 = vpop.f32.mrb[0].mxu0
  %v1223 = vadd.f32 %v624, %v1222
  %v1224 = vpop.f32.mrb[0].mxu0
  %1225 = vmatprep.mubr.f32.mxu0 0.0
  %v1226 = vand.u32 %v166, 4294901760
  %1227 = vmatmul.mubr.f32.gmra.mrb[0].mxu0 %v1226
  %v1228 = vpop.f32.mrb[0].mxu0
  %v1229 = vadd.f32 %v634, %v1228
  %v1230 = vpop.f32.mrb[0].mxu0
  %1231 = vmatprep.mubr.f32.mxu0 0.0
  %v1232 = vand.u32 %v169, 4294901760
  %1233 = vmatmul.mubr.f32.gmra.mrb[0].mxu0 %v1232
  %v1234 = vpop.f32.mrb[0].mxu0
  %v1235 = vadd.f32 %v644, %v1234
  %v1236 = vpop.f32.mrb[0].mxu0
  %1237 = vmatprep.mubr.f32.mxu0 0.0
  %v1238 = vand.u32 %v172, 4294901760
  %1239 = vmatmul.mubr.f32.gmra.mrb[0].mxu0 %v1238
  %v1240 = vpop.f32.mrb[0].mxu0
  %v1241 = vadd.f32 %v654, %v1240
  %v1242 = vpop.f32.mrb[0].mxu0
  %1243 = vmatprep.mubr.f32.mxu0 0.0
  %v1244 = vand.u32 %v175, 4294901760
  %1245 = vmatmul.mubr.f32.gmra.mrb[0].mxu0 %v1244
  %v1246 = vpop.f32.mrb[0].mxu0
  %v1247 = vadd.f32 %v664, %v1246
  %v1248 = vpop.f32.mrb[0].mxu0
  %1249 = vmatprep.mubr.f32.mxu0 0.0
  %v1250 = vand.u32 %v178, 4294901760
  %1251 = vmatmul.mubr.f32.gmra.mrb[0].mxu0 %v1250
  %v1252 = vpop.f32.mrb[0].mxu0
  %v1253 = vadd.f32 %v674, %v1252
  %v1254 = vpop.f32.mrb[0].mxu0
  %1255 = vmatprep.mubr.f32.mxu0 0.0
  %v1256 = vand.u32 %v181, 4294901760
  %1257 = vmatmul.mubr.f32.gmra.mrb[0].mxu0 %v1256
  %v1258 = vpop.f32.mrb[0].mxu0
  %v1259 = vadd.f32 %v684, %v1258
  %v1260 = vpop.f32.mrb[0].mxu0
  %1261 = vmatprep.mubr.f32.mxu0 0.0
  %v1262 = vand.u32 %v184, 4294901760
  %1263 = vmatmul.mubr.f32.gmra.mrb[0].mxu0 %v1262
  %v1264 = vpop.f32.mrb[0].mxu0
  %v1265 = vadd.f32 %v694, %v1264
  %v1266 = vpop.f32.mrb[0].mxu0
  %1267 = vmatprep.mubr.f32.mxu0 0.0
  %v1268 = vand.u32 %v187, 4294901760
  %1269 = vmatmul.mubr.f32.gmra.mrb[0].mxu0 %v1268
  %v1270 = vpop.f32.mrb[0].mxu0
  %v1271 = vadd.f32 %v704, %v1270
  %v1272 = vpop.f32.mrb[0].mxu0
  %1273 = vmatprep.mubr.f32.mxu0 0.0
  %v1274 = vand.u32 %v190, 4294901760
  %1275 = vmatmul.mubr.f32.gmra.mrb[0].mxu0 %v1274
  %v1276 = vpop.f32.mrb[0].mxu0
  %v1277 = vadd.f32 %v714, %v1276
  %v1278 = vpop.f32.mrb[0].mxu0
  %1279 = vmatprep.mubr.f32.mxu0 0.0
  %v1280 = vand.u32 %v193, 4294901760
  %1281 = vmatmul.mubr.f32.gmra.mrb[0].mxu0 %v1280
  %v1282 = vpop.f32.mrb[0].mxu0
  %v1283 = vadd.f32 %v724, %v1282
  %v1284 = vpop.f32.mrb[0].mxu0
  %1285 = vmatprep.mubr.f32.mxu0 0.0
  %v1286 = vand.u32 %v196, 4294901760
  %1287 = vmatmul.mubr.f32.gmra.mrb[0].mxu0 %v1286
  %v1288 = vpop.f32.mrb[0].mxu0
  %v1289 = vadd.f32 %v734, %v1288
  %v1290 = vpop.f32.mrb[0].mxu0
  %1291 = vmatprep.mubr.f32.mxu0 0.0
  %v1292 = vand.u32 %v199, 4294901760
  %1293 = vmatmul.mubr.f32.gmra.mrb[0].mxu0 %v1292
  %v1294 = vpop.f32.mrb[0].mxu0
  %v1295 = vadd.f32 %v744, %v1294
  %v1296 = vpop.f32.mrb[0].mxu0
  %1297 = vmatprep.mubr.f32.mxu0 0.0
  %v1298 = vand.u32 %v202, 4294901760
  %1299 = vmatmul.mubr.f32.gmra.mrb[0].mxu0 %v1298
  %v1300 = vpop.f32.mrb[0].mxu0
  %v1301 = vadd.f32 %v754, %v1300
  %v1302 = vpop.f32.mrb[0].mxu0
  %1303 = vmatprep.mubr.f32.mxu0 0.0
  %v1304 = vand.u32 %v205, 4294901760
  %1305 = vmatmul.mubr.f32.gmra.mrb[0].mxu0 %v1304
  %v1306 = vpop.f32.mrb[0].mxu0
  %v1307 = vadd.f32 %v764, %v1306
  %v1308 = vpop.f32.mrb[0].mxu0
  %1309 = vmatprep.mubr.f32.mxu0 0.0
  %v1310 = vand.u32 %v208, 4294901760
  %1311 = vmatmul.mubr.f32.gmra.mrb[0].mxu0 %v1310
  %v1312 = vpop.f32.mrb[0].mxu0
  %v1313 = vadd.f32 %v774, %v1312
  %v1314 = vpop.f32.mrb[0].mxu0
  %1315 = vmatprep.mubr.f32.mxu0 0.0
  %v1316 = vand.u32 %v211, 4294901760
  %1317 = vmatmul.mubr.f32.gmra.mrb[0].mxu0 %v1316
  %v1318 = vpop.f32.mrb[0].mxu0
  %v1319 = vadd.f32 %v784, %v1318
  %v1320 = vpop.f32.mrb[0].mxu0
  %1321 = vmatprep.mubr.f32.mxu0 0.0
  %v1322 = vand.u32 %v214, 4294901760
  %1323 = vmatmul.mubr.f32.gmra.mrb[0].mxu0 %v1322
  %v1324 = vpop.f32.mrb[0].mxu0
  %v1325 = vadd.f32 %v794, %v1324
  %v1326 = vpop.f32.mrb[0].mxu0
  %1327 = vmatprep.mubr.f32.mxu0 0.0
  %v1328 = vand.u32 %v217, 4294901760
  %1329 = vmatmul.mubr.f32.gmra.mrb[0].mxu0 %v1328
  %v1330 = vpop.f32.mrb[0].mxu0
  %v1331 = vadd.f32 %v804, %v1330
  %v1332 = vpop.f32.mrb[0].mxu0
  %1333 = vmatprep.mubr.f32.mxu0 0.0
  %v1334 = vand.u32 %v220, 4294901760
  %1335 = vmatmul.mubr.f32.gmra.mrb[0].mxu0 %v1334
  %v1336 = vpop.f32.mrb[0].mxu0
  %v1337 = vadd.f32 %v814, %v1336
  %v1338 = vpop.f32.mrb[0].mxu0
  %1339 = vmatprep.mubr.f32.mxu0 0.0
  %v1340 = vand.u32 %v223, 4294901760
  %1341 = vmatmul.mubr.f32.gmra.mrb[0].mxu0 %v1340
  %v1342 = vpop.f32.mrb[0].mxu0
  %v1343 = vadd.f32 %v824, %v1342
  %v1344 = vpop.f32.mrb[0].mxu0
  %1345 = vmatprep.mubr.f32.mxu0 0.0
  %v1346 = vand.u32 %v226, 4294901760
  %1347 = vmatmul.mubr.f32.gmra.mrb[0].mxu0 %v1346
  %v1348 = vpop.f32.mrb[0].mxu0
  %v1349 = vadd.f32 %v834, %v1348
  %v1350 = vpop.f32.mrb[0].mxu0
  %1351 = vmatprep.mubr.f32.mxu0 0.0
  %v1352 = vand.u32 %v229, 4294901760
  %1353 = vmatmul.mubr.f32.gmra.mrb[0].mxu0 %v1352
  %v1354 = vpop.f32.mrb[0].mxu0
  %v1355 = vadd.f32 %v844, %v1354
  %v1356 = vpop.f32.mrb[0].mxu0
  %1357 = vmatprep.mubr.f32.mxu0 0.0
  %v1358 = vand.u32 %v232, 4294901760
  %1359 = vmatmul.mubr.f32.gmra.mrb[0].mxu0 %v1358
  %v1360 = vpop.f32.mrb[0].mxu0
  %v1361 = vadd.f32 %v854, %v1360
  %v1362 = vpop.f32.mrb[0].mxu0
  %1363 = vmatprep.mubr.f32.mxu0 0.0
  %v1364 = vand.u32 %v235, 4294901760
  %1365 = vmatmul.mubr.f32.gmra.mrb[0].mxu0 %v1364
  %v1366 = vpop.f32.mrb[0].mxu0
  %v1367 = vadd.f32 %v864, %v1366
  %v1368 = vpop.f32.mrb[0].mxu0
  %1369 = vmatprep.mubr.f32.mxu0 0.0
  %v1370 = vand.u32 %v238, 4294901760
  %1371 = vmatmul.mubr.f32.gmra.mrb[0].mxu0 %v1370
  %v1372 = vpop.f32.mrb[0].mxu0
  %v1373 = vadd.f32 %v874, %v1372
  %v1374 = vpop.f32.mrb[0].mxu0
  %1375 = vmatprep.mubr.f32.mxu0 0.0
  %v1376 = vand.u32 %v241, 4294901760
  %1377 = vmatmul.mubr.f32.gmra.mrb[0].mxu0 %v1376
  %v1378 = vpop.f32.mrb[0].mxu0
  %v1379 = vadd.f32 %v884, %v1378
  %v1380 = vpop.f32.mrb[0].mxu0
  %1381 = vmatprep.mubr.f32.mxu0 0.0
  %v1382 = vand.u32 %v244, 4294901760
  %1383 = vmatmul.mubr.f32.gmra.mrb[0].mxu0 %v1382
  %v1384 = vpop.f32.mrb[0].mxu0
  %v1385 = vadd.f32 %v894, %v1384
  %v1386 = vpop.f32.mrb[0].mxu0
  %1387 = vmatprep.mubr.f32.mxu0 0.0
  %v1388 = vand.u32 %v247, 4294901760
  %1389 = vmatmul.mubr.f32.gmra.mrb[0].mxu0 %v1388
  %v1390 = vpop.f32.mrb[0].mxu0
  %v1391 = vadd.f32 %v904, %v1390
  %v1392 = vpop.f32.mrb[0].mxu0
  %1393 = vmatprep.mubr.f32.mxu0 0.0
  %v1394 = vand.u32 %v250, 4294901760
  %1395 = vmatmul.mubr.f32.gmra.mrb[0].mxu0 %v1394
  %v1396 = vpop.f32.mrb[0].mxu0
  %v1397 = vadd.f32 %v914, %v1396
  %v1398 = vpop.f32.mrb[0].mxu0
  %1399 = vmatprep.mubr.f32.mxu0 0.0
  %v1400 = vand.u32 %v253, 4294901760
  %1401 = vmatmul.mubr.f32.gmra.mrb[0].mxu0 %v1400
  %v1402 = vpop.f32.mrb[0].mxu0
  %v1403 = vadd.f32 %v924, %v1402
  %v1404 = vpop.f32.mrb[0].mxu0
  %1405 = vmatprep.mubr.f32.mxu0 0.0
  %v1406 = vand.u32 %v256, 4294901760
  %1407 = vmatmul.mubr.f32.gmra.mrb[0].mxu0 %v1406
  %v1408 = vpop.f32.mrb[0].mxu0
  %v1409 = vadd.f32 %v934, %v1408
  %v1410 = vpop.f32.mrb[0].mxu0
  %1411 = vmatprep.mubr.f32.mxu0 0.0
  %v1412 = vand.u32 %v259, 4294901760
  %1413 = vmatmul.mubr.f32.gmra.mrb[0].mxu0 %v1412
  %v1414 = vpop.f32.mrb[0].mxu0
  %v1415 = vadd.f32 %v944, %v1414
  %v1416 = vpop.f32.mrb[0].mxu0
  %1417 = vmatprep.mubr.f32.mxu0 0.0
  %v1418 = vand.u32 %v262, 4294901760
  %1419 = vmatmul.mubr.f32.gmra.mrb[0].mxu0 %v1418
  %v1420 = vpop.f32.mrb[0].mxu0
  %v1421 = vadd.f32 %v954, %v1420
  %v1422 = vpop.f32.mrb[0].mxu0
  %1423 = vmatprep.mubr.f32.mxu0 0.0
  %v1424 = vand.u32 %v265, 4294901760
  %1425 = vmatmul.mubr.f32.gmra.mrb[0].mxu0 %v1424
  %v1426 = vpop.f32.mrb[0].mxu0
  %v1427 = vadd.f32 %v964, %v1426
  %v1428 = vpop.f32.mrb[0].mxu0
  %1429 = vmatprep.mubr.f32.mxu0 0.0
  %v1430 = vand.u32 %v268, 4294901760
  %1431 = vmatmul.mubr.f32.gmra.mrb[0].mxu0 %v1430
  %v1432 = vpop.f32.mrb[0].mxu0
  %v1433 = vadd.f32 %v974, %v1432
  %v1434 = vpop.f32.mrb[0].mxu0
  %1435 = vdwg.mxu0
  %1436 = vmatprep.subr.mxu0 0.0
  %v1437 = vand.u32 %v75, 4294901760
  %v1438 = vsub.f32 %v75, %v1437
  %1439 = vmatpush1.msra.mxu0 %v1438
  %1440 = vmatprep.subr.mxu0 0.0
  %v1441 = vand.u32 %v76, 4294901760
  %v1442 = vsub.f32 %v76, %v1441
  %1443 = vmatpush1.msra.mxu0 %v1442
  %1444 = vmatprep.subr.mxu0 0.0
  %1445 = vmatpush1.msra.mxu0 0.0
  %1446 = vmatprep.subr.mxu0 0.0
  %1447 = vmatpush1.msra.mxu0 0.0
  %1448 = vmatprep.subr.mxu0 0.0
  %1449 = vmatpush1.msra.mxu0 0.0
  %1450 = vmatprep.subr.mxu0 0.0
  %1451 = vmatpush1.msra.mxu0 0.0
  %1452 = vmatprep.subr.mxu0 0.0
  %1453 = vmatpush1.msra.mxu0 0.0
  %1454 = vmatprep.subr.mxu0 0.0
  %1455 = vmatpush1.msra.mxu0 0.0
  %1456 = vmatprep.subr.mxu0 0.0
  %1457 = vmatpush1.msra.mxu0 0.0
  %1458 = vmatprep.subr.mxu0 0.0
  %1459 = vmatpush1.msra.mxu0 0.0
  %1460 = vmatprep.subr.mxu0 0.0
  %1461 = vmatpush1.msra.mxu0 0.0
  %1462 = vmatprep.subr.mxu0 0.0
  %1463 = vmatpush1.msra.mxu0 0.0
  %1464 = vmatprep.subr.mxu0 0.0
  %1465 = vmatpush1.msra.mxu0 0.0
  %1466 = vmatprep.subr.mxu0 0.0
  %1467 = vmatpush1.msra.mxu0 0.0
  %1468 = vmatprep.subr.mxu0 0.0
  %1469 = vmatpush1.msra.mxu0 0.0
  %1470 = vmatprep.subr.mxu0 0.0
  %1471 = vmatpush1.msra.mxu0 0.0
  %1472 = vmatprep.subr.mxu0 0.0
  %1473 = vmatpush1.msra.mxu0 0.0
  %1474 = vmatprep.subr.mxu0 0.0
  %1475 = vmatpush1.msra.mxu0 0.0
  %1476 = vmatprep.subr.mxu0 0.0
  %1477 = vmatpush1.msra.mxu0 0.0
  %1478 = vmatprep.subr.mxu0 0.0
  %1479 = vmatpush1.msra.mxu0 0.0
  %1480 = vmatprep.subr.mxu0 0.0
  %1481 = vmatpush1.msra.mxu0 0.0
  %1482 = vmatprep.subr.mxu0 0.0
  %1483 = vmatpush1.msra.mxu0 0.0
  %1484 = vmatprep.subr.mxu0 0.0
  %1485 = vmatpush1.msra.mxu0 0.0
  %1486 = vmatprep.subr.mxu0 0.0
  %1487 = vmatpush1.msra.mxu0 0.0
  %1488 = vmatprep.subr.mxu0 0.0
  %1489 = vmatpush1.msra.mxu0 0.0
  %1490 = vmatprep.subr.mxu0 0.0
  %1491 = vmatpush1.msra.mxu0 0.0
  %1492 = vmatprep.subr.mxu0 0.0
  %1493 = vmatpush1.msra.mxu0 0.0
  %1494 = vmatprep.subr.mxu0 0.0
  %1495 = vmatpush1.msra.mxu0 0.0
  %1496 = vmatprep.subr.mxu0 0.0
  %1497 = vmatpush1.msra.mxu0 0.0
  %1498 = vmatprep.subr.mxu0 0.0
  %1499 = vmatpush1.msra.mxu0 0.0
  %1500 = vmatprep.subr.mxu0 0.0
  %1501 = vmatpush1.msra.mxu0 0.0
  %1502 = vmatprep.subr.mxu0 0.0
  %1503 = vmatpush1.msra.mxu0 0.0
  %1504 = vmatprep.mubr.f32.mxu0 0.0
  %v1505 = vand.u32 %v79, 4294901760
  %v1506 = vsub.f32 %v79, %v1505
  %1507 = vmatmul.mubr.f32.gmra.mrb[0].mxu0 %v1506
  %v1508 = vpop.f32.mrb[0].mxu0
  %v1509 = vadd.f32 %v1055, %v1508
  %v1510 = vpop.f32.mrb[0].mxu0
  %1511 = vmatprep.mubr.f32.mxu0 0.0
  %v1512 = vand.u32 %v82, 4294901760
  %v1513 = vsub.f32 %v82, %v1512
  %1514 = vmatmul.mubr.f32.gmra.mrb[0].mxu0 %v1513
  %v1515 = vpop.f32.mrb[0].mxu0
  %v1516 = vadd.f32 %v1061, %v1515
  %v1517 = vpop.f32.mrb[0].mxu0
  %1518 = vmatprep.mubr.f32.mxu0 0.0
  %v1519 = vand.u32 %v85, 4294901760
  %v1520 = vsub.f32 %v85, %v1519
  %1521 = vmatmul.mubr.f32.gmra.mrb[0].mxu0 %v1520
  %v1522 = vpop.f32.mrb[0].mxu0
  %v1523 = vadd.f32 %v1067, %v1522
  %v1524 = vpop.f32.mrb[0].mxu0
  %1525 = vmatprep.mubr.f32.mxu0 0.0
  %v1526 = vand.u32 %v88, 4294901760
  %v1527 = vsub.f32 %v88, %v1526
  %1528 = vmatmul.mubr.f32.gmra.mrb[0].mxu0 %v1527
  %v1529 = vpop.f32.mrb[0].mxu0
  %v1530 = vadd.f32 %v1073, %v1529
  %v1531 = vpop.f32.mrb[0].mxu0
  %1532 = vmatprep.mubr.f32.mxu0 0.0
  %v1533 = vand.u32 %v91, 4294901760
  %v1534 = vsub.f32 %v91, %v1533
  %1535 = vmatmul.mubr.f32.gmra.mrb[0].mxu0 %v1534
  %v1536 = vpop.f32.mrb[0].mxu0
  %v1537 = vadd.f32 %v1079, %v1536
  %v1538 = vpop.f32.mrb[0].mxu0
  %1539 = vmatprep.mubr.f32.mxu0 0.0
  %v1540 = vand.u32 %v94, 4294901760
  %v1541 = vsub.f32 %v94, %v1540
  %1542 = vmatmul.mubr.f32.gmra.mrb[0].mxu0 %v1541
  %v1543 = vpop.f32.mrb[0].mxu0
  %v1544 = vadd.f32 %v1085, %v1543
  %v1545 = vpop.f32.mrb[0].mxu0
  %1546 = vmatprep.mubr.f32.mxu0 0.0
  %v1547 = vand.u32 %v97, 4294901760
  %v1548 = vsub.f32 %v97, %v1547
  %1549 = vmatmul.mubr.f32.gmra.mrb[0].mxu0 %v1548
  %v1550 = vpop.f32.mrb[0].mxu0
  %v1551 = vadd.f32 %v1091, %v1550
  %v1552 = vpop.f32.mrb[0].mxu0
  %1553 = vmatprep.mubr.f32.mxu0 0.0
  %v1554 = vand.u32 %v100, 4294901760
  %v1555 = vsub.f32 %v100, %v1554
  %1556 = vmatmul.mubr.f32.gmra.mrb[0].mxu0 %v1555
  %v1557 = vpop.f32.mrb[0].mxu0
  %v1558 = vadd.f32 %v1097, %v1557
  %v1559 = vpop.f32.mrb[0].mxu0
  %1560 = vmatprep.mubr.f32.mxu0 0.0
  %v1561 = vand.u32 %v103, 4294901760
  %v1562 = vsub.f32 %v103, %v1561
  %1563 = vmatmul.mubr.f32.gmra.mrb[0].mxu0 %v1562
  %v1564 = vpop.f32.mrb[0].mxu0
  %v1565 = vadd.f32 %v1103, %v1564
  %v1566 = vpop.f32.mrb[0].mxu0
  %1567 = vmatprep.mubr.f32.mxu0 0.0
  %v1568 = vand.u32 %v106, 4294901760
  %v1569 = vsub.f32 %v106, %v1568
  %1570 = vmatmul.mubr.f32.gmra.mrb[0].mxu0 %v1569
  %v1571 = vpop.f32.mrb[0].mxu0
  %v1572 = vadd.f32 %v1109, %v1571
  %v1573 = vpop.f32.mrb[0].mxu0
  %1574 = vmatprep.mubr.f32.mxu0 0.0
  %v1575 = vand.u32 %v109, 4294901760
  %v1576 = vsub.f32 %v109, %v1575
  %1577 = vmatmul.mubr.f32.gmra.mrb[0].mxu0 %v1576
  %v1578 = vpop.f32.mrb[0].mxu0
  %v1579 = vadd.f32 %v1115, %v1578
  %v1580 = vpop.f32.mrb[0].mxu0
  %1581 = vmatprep.mubr.f32.mxu0 0.0
  %v1582 = vand.u32 %v112, 4294901760
  %v1583 = vsub.f32 %v112, %v1582
  %1584 = vmatmul.mubr.f32.gmra.mrb[0].mxu0 %v1583
  %v1585 = vpop.f32.mrb[0].mxu0
  %v1586 = vadd.f32 %v1121, %v1585
  %v1587 = vpop.f32.mrb[0].mxu0
  %1588 = vmatprep.mubr.f32.mxu0 0.0
  %v1589 = vand.u32 %v115, 4294901760
  %v1590 = vsub.f32 %v115, %v1589
  %1591 = vmatmul.mubr.f32.gmra.mrb[0].mxu0 %v1590
  %v1592 = vpop.f32.mrb[0].mxu0
  %v1593 = vadd.f32 %v1127, %v1592
  %v1594 = vpop.f32.mrb[0].mxu0
  %1595 = vmatprep.mubr.f32.mxu0 0.0
  %v1596 = vand.u32 %v118, 4294901760
  %v1597 = vsub.f32 %v118, %v1596
  %1598 = vmatmul.mubr.f32.gmra.mrb[0].mxu0 %v1597
  %v1599 = vpop.f32.mrb[0].mxu0
  %v1600 = vadd.f32 %v1133, %v1599
  %v1601 = vpop.f32.mrb[0].mxu0
  %1602 = vmatprep.mubr.f32.mxu0 0.0
  %v1603 = vand.u32 %v121, 4294901760
  %v1604 = vsub.f32 %v121, %v1603
  %1605 = vmatmul.mubr.f32.gmra.mrb[0].mxu0 %v1604
  %v1606 = vpop.f32.mrb[0].mxu0
  %v1607 = vadd.f32 %v1139, %v1606
  %v1608 = vpop.f32.mrb[0].mxu0
  %1609 = vmatprep.mubr.f32.mxu0 0.0
  %v1610 = vand.u32 %v124, 4294901760
  %v1611 = vsub.f32 %v124, %v1610
  %1612 = vmatmul.mubr.f32.gmra.mrb[0].mxu0 %v1611
  %v1613 = vpop.f32.mrb[0].mxu0
  %v1614 = vadd.f32 %v1145, %v1613
  %v1615 = vpop.f32.mrb[0].mxu0
  %1616 = vmatprep.mubr.f32.mxu0 0.0
  %v1617 = vand.u32 %v127, 4294901760
  %v1618 = vsub.f32 %v127, %v1617
  %1619 = vmatmul.mubr.f32.gmra.mrb[0].mxu0 %v1618
  %v1620 = vpop.f32.mrb[0].mxu0
  %v1621 = vadd.f32 %v1151, %v1620
  %v1622 = vpop.f32.mrb[0].mxu0
  %1623 = vmatprep.mubr.f32.mxu0 0.0
  %v1624 = vand.u32 %v130, 4294901760
  %v1625 = vsub.f32 %v130, %v1624
  %1626 = vmatmul.mubr.f32.gmra.mrb[0].mxu0 %v1625
  %v1627 = vpop.f32.mrb[0].mxu0
  %v1628 = vadd.f32 %v1157, %v1627
  %v1629 = vpop.f32.mrb[0].mxu0
  %1630 = vmatprep.mubr.f32.mxu0 0.0
  %v1631 = vand.u32 %v133, 4294901760
  %v1632 = vsub.f32 %v133, %v1631
  %1633 = vmatmul.mubr.f32.gmra.mrb[0].mxu0 %v1632
  %v1634 = vpop.f32.mrb[0].mxu0
  %v1635 = vadd.f32 %v1163, %v1634
  %v1636 = vpop.f32.mrb[0].mxu0
  %1637 = vmatprep.mubr.f32.mxu0 0.0
  %v1638 = vand.u32 %v136, 4294901760
  %v1639 = vsub.f32 %v136, %v1638
  %1640 = vmatmul.mubr.f32.gmra.mrb[0].mxu0 %v1639
  %v1641 = vpop.f32.mrb[0].mxu0
  %v1642 = vadd.f32 %v1169, %v1641
  %v1643 = vpop.f32.mrb[0].mxu0
  %1644 = vmatprep.mubr.f32.mxu0 0.0
  %v1645 = vand.u32 %v139, 4294901760
  %v1646 = vsub.f32 %v139, %v1645
  %1647 = vmatmul.mubr.f32.gmra.mrb[0].mxu0 %v1646
  %v1648 = vpop.f32.mrb[0].mxu0
  %v1649 = vadd.f32 %v1175, %v1648
  %v1650 = vpop.f32.mrb[0].mxu0
  %1651 = vmatprep.mubr.f32.mxu0 0.0
  %v1652 = vand.u32 %v142, 4294901760
  %v1653 = vsub.f32 %v142, %v1652
  %1654 = vmatmul.mubr.f32.gmra.mrb[0].mxu0 %v1653
  %v1655 = vpop.f32.mrb[0].mxu0
  %v1656 = vadd.f32 %v1181, %v1655
  %v1657 = vpop.f32.mrb[0].mxu0
  %1658 = vmatprep.mubr.f32.mxu0 0.0
  %v1659 = vand.u32 %v145, 4294901760
  %v1660 = vsub.f32 %v145, %v1659
  %1661 = vmatmul.mubr.f32.gmra.mrb[0].mxu0 %v1660
  %v1662 = vpop.f32.mrb[0].mxu0
  %v1663 = vadd.f32 %v1187, %v1662
  %v1664 = vpop.f32.mrb[0].mxu0
  %1665 = vmatprep.mubr.f32.mxu0 0.0
  %v1666 = vand.u32 %v148, 4294901760
  %v1667 = vsub.f32 %v148, %v1666
  %1668 = vmatmul.mubr.f32.gmra.mrb[0].mxu0 %v1667
  %v1669 = vpop.f32.mrb[0].mxu0
  %v1670 = vadd.f32 %v1193, %v1669
  %v1671 = vpop.f32.mrb[0].mxu0
  %1672 = vmatprep.mubr.f32.mxu0 0.0
  %v1673 = vand.u32 %v151, 4294901760
  %v1674 = vsub.f32 %v151, %v1673
  %1675 = vmatmul.mubr.f32.gmra.mrb[0].mxu0 %v1674
  %v1676 = vpop.f32.mrb[0].mxu0
  %v1677 = vadd.f32 %v1199, %v1676
  %v1678 = vpop.f32.mrb[0].mxu0
  %1679 = vmatprep.mubr.f32.mxu0 0.0
  %v1680 = vand.u32 %v154, 4294901760
  %v1681 = vsub.f32 %v154, %v1680
  %1682 = vmatmul.mubr.f32.gmra.mrb[0].mxu0 %v1681
  %v1683 = vpop.f32.mrb[0].mxu0
  %v1684 = vadd.f32 %v1205, %v1683
  %v1685 = vpop.f32.mrb[0].mxu0
  %1686 = vmatprep.mubr.f32.mxu0 0.0
  %v1687 = vand.u32 %v157, 4294901760
  %v1688 = vsub.f32 %v157, %v1687
  %1689 = vmatmul.mubr.f32.gmra.mrb[0].mxu0 %v1688
  %v1690 = vpop.f32.mrb[0].mxu0
  %v1691 = vadd.f32 %v1211, %v1690
  %v1692 = vpop.f32.mrb[0].mxu0
  %1693 = vmatprep.mubr.f32.mxu0 0.0
  %v1694 = vand.u32 %v160, 4294901760
  %v1695 = vsub.f32 %v160, %v1694
  %1696 = vmatmul.mubr.f32.gmra.mrb[0].mxu0 %v1695
  %v1697 = vpop.f32.mrb[0].mxu0
  %v1698 = vadd.f32 %v1217, %v1697
  %v1699 = vpop.f32.mrb[0].mxu0
  %1700 = vmatprep.mubr.f32.mxu0 0.0
  %v1701 = vand.u32 %v163, 4294901760
  %v1702 = vsub.f32 %v163, %v1701
  %1703 = vmatmul.mubr.f32.gmra.mrb[0].mxu0 %v1702
  %v1704 = vpop.f32.mrb[0].mxu0
  %v1705 = vadd.f32 %v1223, %v1704
  %v1706 = vpop.f32.mrb[0].mxu0
  %1707 = vmatprep.mubr.f32.mxu0 0.0
  %v1708 = vand.u32 %v166, 4294901760
  %v1709 = vsub.f32 %v166, %v1708
  %1710 = vmatmul.mubr.f32.gmra.mrb[0].mxu0 %v1709
  %v1711 = vpop.f32.mrb[0].mxu0
  %v1712 = vadd.f32 %v1229, %v1711
  %v1713 = vpop.f32.mrb[0].mxu0
  %1714 = vmatprep.mubr.f32.mxu0 0.0
  %v1715 = vand.u32 %v169, 4294901760
  %v1716 = vsub.f32 %v169, %v1715
  %1717 = vmatmul.mubr.f32.gmra.mrb[0].mxu0 %v1716
  %v1718 = vpop.f32.mrb[0].mxu0
  %v1719 = vadd.f32 %v1235, %v1718
  %v1720 = vpop.f32.mrb[0].mxu0
  %1721 = vmatprep.mubr.f32.mxu0 0.0
  %v1722 = vand.u32 %v172, 4294901760
  %v1723 = vsub.f32 %v172, %v1722
  %1724 = vmatmul.mubr.f32.gmra.mrb[0].mxu0 %v1723
  %v1725 = vpop.f32.mrb[0].mxu0
  %v1726 = vadd.f32 %v1241, %v1725
  %v1727 = vpop.f32.mrb[0].mxu0
  %1728 = vmatprep.mubr.f32.mxu0 0.0
  %v1729 = vand.u32 %v175, 4294901760
  %v1730 = vsub.f32 %v175, %v1729
  %1731 = vmatmul.mubr.f32.gmra.mrb[0].mxu0 %v1730
  %v1732 = vpop.f32.mrb[0].mxu0
  %v1733 = vadd.f32 %v1247, %v1732
  %v1734 = vpop.f32.mrb[0].mxu0
  %1735 = vmatprep.mubr.f32.mxu0 0.0
  %v1736 = vand.u32 %v178, 4294901760
  %v1737 = vsub.f32 %v178, %v1736
  %1738 = vmatmul.mubr.f32.gmra.mrb[0].mxu0 %v1737
  %v1739 = vpop.f32.mrb[0].mxu0
  %v1740 = vadd.f32 %v1253, %v1739
  %v1741 = vpop.f32.mrb[0].mxu0
  %1742 = vmatprep.mubr.f32.mxu0 0.0
  %v1743 = vand.u32 %v181, 4294901760
  %v1744 = vsub.f32 %v181, %v1743
  %1745 = vmatmul.mubr.f32.gmra.mrb[0].mxu0 %v1744
  %v1746 = vpop.f32.mrb[0].mxu0
  %v1747 = vadd.f32 %v1259, %v1746
  %v1748 = vpop.f32.mrb[0].mxu0
  %1749 = vmatprep.mubr.f32.mxu0 0.0
  %v1750 = vand.u32 %v184, 4294901760
  %v1751 = vsub.f32 %v184, %v1750
  %1752 = vmatmul.mubr.f32.gmra.mrb[0].mxu0 %v1751
  %v1753 = vpop.f32.mrb[0].mxu0
  %v1754 = vadd.f32 %v1265, %v1753
  %v1755 = vpop.f32.mrb[0].mxu0
  %1756 = vmatprep.mubr.f32.mxu0 0.0
  %v1757 = vand.u32 %v187, 4294901760
  %v1758 = vsub.f32 %v187, %v1757
  %1759 = vmatmul.mubr.f32.gmra.mrb[0].mxu0 %v1758
  %v1760 = vpop.f32.mrb[0].mxu0
  %v1761 = vadd.f32 %v1271, %v1760
  %v1762 = vpop.f32.mrb[0].mxu0
  %1763 = vmatprep.mubr.f32.mxu0 0.0
  %v1764 = vand.u32 %v190, 4294901760
  %v1765 = vsub.f32 %v190, %v1764
  %1766 = vmatmul.mubr.f32.gmra.mrb[0].mxu0 %v1765
  %v1767 = vpop.f32.mrb[0].mxu0
  %v1768 = vadd.f32 %v1277, %v1767
  %v1769 = vpop.f32.mrb[0].mxu0
  %1770 = vmatprep.mubr.f32.mxu0 0.0
  %v1771 = vand.u32 %v193, 4294901760
  %v1772 = vsub.f32 %v193, %v1771
  %1773 = vmatmul.mubr.f32.gmra.mrb[0].mxu0 %v1772
  %v1774 = vpop.f32.mrb[0].mxu0
  %v1775 = vadd.f32 %v1283, %v1774
  %v1776 = vpop.f32.mrb[0].mxu0
  %1777 = vmatprep.mubr.f32.mxu0 0.0
  %v1778 = vand.u32 %v196, 4294901760
  %v1779 = vsub.f32 %v196, %v1778
  %1780 = vmatmul.mubr.f32.gmra.mrb[0].mxu0 %v1779
  %v1781 = vpop.f32.mrb[0].mxu0
  %v1782 = vadd.f32 %v1289, %v1781
  %v1783 = vpop.f32.mrb[0].mxu0
  %1784 = vmatprep.mubr.f32.mxu0 0.0
  %v1785 = vand.u32 %v199, 4294901760
  %v1786 = vsub.f32 %v199, %v1785
  %1787 = vmatmul.mubr.f32.gmra.mrb[0].mxu0 %v1786
  %v1788 = vpop.f32.mrb[0].mxu0
  %v1789 = vadd.f32 %v1295, %v1788
  %v1790 = vpop.f32.mrb[0].mxu0
  %1791 = vmatprep.mubr.f32.mxu0 0.0
  %v1792 = vand.u32 %v202, 4294901760
  %v1793 = vsub.f32 %v202, %v1792
  %1794 = vmatmul.mubr.f32.gmra.mrb[0].mxu0 %v1793
  %v1795 = vpop.f32.mrb[0].mxu0
  %v1796 = vadd.f32 %v1301, %v1795
  %v1797 = vpop.f32.mrb[0].mxu0
  %1798 = vmatprep.mubr.f32.mxu0 0.0
  %v1799 = vand.u32 %v205, 4294901760
  %v1800 = vsub.f32 %v205, %v1799
  %1801 = vmatmul.mubr.f32.gmra.mrb[0].mxu0 %v1800
  %v1802 = vpop.f32.mrb[0].mxu0
  %v1803 = vadd.f32 %v1307, %v1802
  %v1804 = vpop.f32.mrb[0].mxu0
  %1805 = vmatprep.mubr.f32.mxu0 0.0
  %v1806 = vand.u32 %v208, 4294901760
  %v1807 = vsub.f32 %v208, %v1806
  %1808 = vmatmul.mubr.f32.gmra.mrb[0].mxu0 %v1807
  %v1809 = vpop.f32.mrb[0].mxu0
  %v1810 = vadd.f32 %v1313, %v1809
  %v1811 = vpop.f32.mrb[0].mxu0
  %1812 = vmatprep.mubr.f32.mxu0 0.0
  %v1813 = vand.u32 %v211, 4294901760
  %v1814 = vsub.f32 %v211, %v1813
  %1815 = vmatmul.mubr.f32.gmra.mrb[0].mxu0 %v1814
  %v1816 = vpop.f32.mrb[0].mxu0
  %v1817 = vadd.f32 %v1319, %v1816
  %v1818 = vpop.f32.mrb[0].mxu0
  %1819 = vmatprep.mubr.f32.mxu0 0.0
  %v1820 = vand.u32 %v214, 4294901760
  %v1821 = vsub.f32 %v214, %v1820
  %1822 = vmatmul.mubr.f32.gmra.mrb[0].mxu0 %v1821
  %v1823 = vpop.f32.mrb[0].mxu0
  %v1824 = vadd.f32 %v1325, %v1823
  %v1825 = vpop.f32.mrb[0].mxu0
  %1826 = vmatprep.mubr.f32.mxu0 0.0
  %v1827 = vand.u32 %v217, 4294901760
  %v1828 = vsub.f32 %v217, %v1827
  %1829 = vmatmul.mubr.f32.gmra.mrb[0].mxu0 %v1828
  %v1830 = vpop.f32.mrb[0].mxu0
  %v1831 = vadd.f32 %v1331, %v1830
  %v1832 = vpop.f32.mrb[0].mxu0
  %1833 = vmatprep.mubr.f32.mxu0 0.0
  %v1834 = vand.u32 %v220, 4294901760
  %v1835 = vsub.f32 %v220, %v1834
  %1836 = vmatmul.mubr.f32.gmra.mrb[0].mxu0 %v1835
  %v1837 = vpop.f32.mrb[0].mxu0
  %v1838 = vadd.f32 %v1337, %v1837
  %v1839 = vpop.f32.mrb[0].mxu0
  %1840 = vmatprep.mubr.f32.mxu0 0.0
  %v1841 = vand.u32 %v223, 4294901760
  %v1842 = vsub.f32 %v223, %v1841
  %1843 = vmatmul.mubr.f32.gmra.mrb[0].mxu0 %v1842
  %v1844 = vpop.f32.mrb[0].mxu0
  %v1845 = vadd.f32 %v1343, %v1844
  %v1846 = vpop.f32.mrb[0].mxu0
  %1847 = vmatprep.mubr.f32.mxu0 0.0
  %v1848 = vand.u32 %v226, 4294901760
  %v1849 = vsub.f32 %v226, %v1848
  %1850 = vmatmul.mubr.f32.gmra.mrb[0].mxu0 %v1849
  %v1851 = vpop.f32.mrb[0].mxu0
  %v1852 = vadd.f32 %v1349, %v1851
  %v1853 = vpop.f32.mrb[0].mxu0
  %1854 = vmatprep.mubr.f32.mxu0 0.0
  %v1855 = vand.u32 %v229, 4294901760
  %v1856 = vsub.f32 %v229, %v1855
  %1857 = vmatmul.mubr.f32.gmra.mrb[0].mxu0 %v1856
  %v1858 = vpop.f32.mrb[0].mxu0
  %v1859 = vadd.f32 %v1355, %v1858
  %v1860 = vpop.f32.mrb[0].mxu0
  %1861 = vmatprep.mubr.f32.mxu0 0.0
  %v1862 = vand.u32 %v232, 4294901760
  %v1863 = vsub.f32 %v232, %v1862
  %1864 = vmatmul.mubr.f32.gmra.mrb[0].mxu0 %v1863
  %v1865 = vpop.f32.mrb[0].mxu0
  %v1866 = vadd.f32 %v1361, %v1865
  %v1867 = vpop.f32.mrb[0].mxu0
  %1868 = vmatprep.mubr.f32.mxu0 0.0
  %v1869 = vand.u32 %v235, 4294901760
  %v1870 = vsub.f32 %v235, %v1869
  %1871 = vmatmul.mubr.f32.gmra.mrb[0].mxu0 %v1870
  %v1872 = vpop.f32.mrb[0].mxu0
  %v1873 = vadd.f32 %v1367, %v1872
  %v1874 = vpop.f32.mrb[0].mxu0
  %1875 = vmatprep.mubr.f32.mxu0 0.0
  %v1876 = vand.u32 %v238, 4294901760
  %v1877 = vsub.f32 %v238, %v1876
  %1878 = vmatmul.mubr.f32.gmra.mrb[0].mxu0 %v1877
  %v1879 = vpop.f32.mrb[0].mxu0
  %v1880 = vadd.f32 %v1373, %v1879
  %v1881 = vpop.f32.mrb[0].mxu0
  %1882 = vmatprep.mubr.f32.mxu0 0.0
  %v1883 = vand.u32 %v241, 4294901760
  %v1884 = vsub.f32 %v241, %v1883
  %1885 = vmatmul.mubr.f32.gmra.mrb[0].mxu0 %v1884
  %v1886 = vpop.f32.mrb[0].mxu0
  %v1887 = vadd.f32 %v1379, %v1886
  %v1888 = vpop.f32.mrb[0].mxu0
  %1889 = vmatprep.mubr.f32.mxu0 0.0
  %v1890 = vand.u32 %v244, 4294901760
  %v1891 = vsub.f32 %v244, %v1890
  %1892 = vmatmul.mubr.f32.gmra.mrb[0].mxu0 %v1891
  %v1893 = vpop.f32.mrb[0].mxu0
  %v1894 = vadd.f32 %v1385, %v1893
  %v1895 = vpop.f32.mrb[0].mxu0
  %1896 = vmatprep.mubr.f32.mxu0 0.0
  %v1897 = vand.u32 %v247, 4294901760
  %v1898 = vsub.f32 %v247, %v1897
  %1899 = vmatmul.mubr.f32.gmra.mrb[0].mxu0 %v1898
  %v1900 = vpop.f32.mrb[0].mxu0
  %v1901 = vadd.f32 %v1391, %v1900
  %v1902 = vpop.f32.mrb[0].mxu0
  %1903 = vmatprep.mubr.f32.mxu0 0.0
  %v1904 = vand.u32 %v250, 4294901760
  %v1905 = vsub.f32 %v250, %v1904
  %1906 = vmatmul.mubr.f32.gmra.mrb[0].mxu0 %v1905
  %v1907 = vpop.f32.mrb[0].mxu0
  %v1908 = vadd.f32 %v1397, %v1907
  %v1909 = vpop.f32.mrb[0].mxu0
  %1910 = vmatprep.mubr.f32.mxu0 0.0
  %v1911 = vand.u32 %v253, 4294901760
  %v1912 = vsub.f32 %v253, %v1911
  %1913 = vmatmul.mubr.f32.gmra.mrb[0].mxu0 %v1912
  %v1914 = vpop.f32.mrb[0].mxu0
  %v1915 = vadd.f32 %v1403, %v1914
  %v1916 = vpop.f32.mrb[0].mxu0
  %1917 = vmatprep.mubr.f32.mxu0 0.0
  %v1918 = vand.u32 %v256, 4294901760
  %v1919 = vsub.f32 %v256, %v1918
  %1920 = vmatmul.mubr.f32.gmra.mrb[0].mxu0 %v1919
  %v1921 = vpop.f32.mrb[0].mxu0
  %v1922 = vadd.f32 %v1409, %v1921
  %v1923 = vpop.f32.mrb[0].mxu0
  %1924 = vmatprep.mubr.f32.mxu0 0.0
  %v1925 = vand.u32 %v259, 4294901760
  %v1926 = vsub.f32 %v259, %v1925
  %1927 = vmatmul.mubr.f32.gmra.mrb[0].mxu0 %v1926
  %v1928 = vpop.f32.mrb[0].mxu0
  %v1929 = vadd.f32 %v1415, %v1928
  %v1930 = vpop.f32.mrb[0].mxu0
  %1931 = vmatprep.mubr.f32.mxu0 0.0
  %v1932 = vand.u32 %v262, 4294901760
  %v1933 = vsub.f32 %v262, %v1932
  %1934 = vmatmul.mubr.f32.gmra.mrb[0].mxu0 %v1933
  %v1935 = vpop.f32.mrb[0].mxu0
  %v1936 = vadd.f32 %v1421, %v1935
  %v1937 = vpop.f32.mrb[0].mxu0
  %1938 = vmatprep.mubr.f32.mxu0 0.0
  %v1939 = vand.u32 %v265, 4294901760
  %v1940 = vsub.f32 %v265, %v1939
  %1941 = vmatmul.mubr.f32.gmra.mrb[0].mxu0 %v1940
  %v1942 = vpop.f32.mrb[0].mxu0
  %v1943 = vadd.f32 %v1427, %v1942
  %v1944 = vpop.f32.mrb[0].mxu0
  %1945 = vmatprep.mubr.f32.mxu0 0.0
  %v1946 = vand.u32 %v268, 4294901760
  %v1947 = vsub.f32 %v268, %v1946
  %1948 = vmatmul.mubr.f32.gmra.mrb[0].mxu0 %v1947
  %v1949 = vpop.f32.mrb[0].mxu0
  %v1950 = vadd.f32 %v1433, %v1949
  %v1951 = vpop.f32.mrb[0].mxu0
  %1952 = vdwg.mxu0
  %1953 = vmatprep.subr.mxu0 0.0
  %v1954 = vand.u32 %v75, 4294901760
  %1955 = vmatpush1.msra.mxu0 %v1954
  %1956 = vmatprep.subr.mxu0 0.0
  %v1957 = vand.u32 %v76, 4294901760
  %1958 = vmatpush1.msra.mxu0 %v1957
  %1959 = vmatprep.subr.mxu0 0.0
  %1960 = vmatpush1.msra.mxu0 0.0
  %1961 = vmatprep.subr.mxu0 0.0
  %1962 = vmatpush1.msra.mxu0 0.0
  %1963 = vmatprep.subr.mxu0 0.0
  %1964 = vmatpush1.msra.mxu0 0.0
  %1965 = vmatprep.subr.mxu0 0.0
  %1966 = vmatpush1.msra.mxu0 0.0
  %1967 = vmatprep.subr.mxu0 0.0
  %1968 = vmatpush1.msra.mxu0 0.0
  %1969 = vmatprep.subr.mxu0 0.0
  %1970 = vmatpush1.msra.mxu0 0.0
  %1971 = vmatprep.subr.mxu0 0.0
  %1972 = vmatpush1.msra.mxu0 0.0
  %1973 = vmatprep.subr.mxu0 0.0
  %1974 = vmatpush1.msra.mxu0 0.0
  %1975 = vmatprep.subr.mxu0 0.0
  %1976 = vmatpush1.msra.mxu0 0.0
  %1977 = vmatprep.subr.mxu0 0.0
  %1978 = vmatpush1.msra.mxu0 0.0
  %1979 = vmatprep.subr.mxu0 0.0
  %1980 = vmatpush1.msra.mxu0 0.0
  %1981 = vmatprep.subr.mxu0 0.0
  %1982 = vmatpush1.msra.mxu0 0.0
  %1983 = vmatprep.subr.mxu0 0.0
  %1984 = vmatpush1.msra.mxu0 0.0
  %1985 = vmatprep.subr.mxu0 0.0
  %1986 = vmatpush1.msra.mxu0 0.0
  %1987 = vmatprep.subr.mxu0 0.0
  %1988 = vmatpush1.msra.mxu0 0.0
  %1989 = vmatprep.subr.mxu0 0.0
  %1990 = vmatpush1.msra.mxu0 0.0
  %1991 = vmatprep.subr.mxu0 0.0
  %1992 = vmatpush1.msra.mxu0 0.0
  %1993 = vmatprep.subr.mxu0 0.0
  %1994 = vmatpush1.msra.mxu0 0.0
  %1995 = vmatprep.subr.mxu0 0.0
  %1996 = vmatpush1.msra.mxu0 0.0
  %1997 = vmatprep.subr.mxu0 0.0
  %1998 = vmatpush1.msra.mxu0 0.0
  %1999 = vmatprep.subr.mxu0 0.0
  %2000 = vmatpush1.msra.mxu0 0.0
  %2001 = vmatprep.subr.mxu0 0.0
  %2002 = vmatpush1.msra.mxu0 0.0
  %2003 = vmatprep.subr.mxu0 0.0
  %2004 = vmatpush1.msra.mxu0 0.0
  %2005 = vmatprep.subr.mxu0 0.0
  %2006 = vmatpush1.msra.mxu0 0.0
  %2007 = vmatprep.subr.mxu0 0.0
  %2008 = vmatpush1.msra.mxu0 0.0
  %2009 = vmatprep.subr.mxu0 0.0
  %2010 = vmatpush1.msra.mxu0 0.0
  %2011 = vmatprep.subr.mxu0 0.0
  %2012 = vmatpush1.msra.mxu0 0.0
  %2013 = vmatprep.subr.mxu0 0.0
  %2014 = vmatpush1.msra.mxu0 0.0
  %2015 = vmatprep.subr.mxu0 0.0
  %2016 = vmatpush1.msra.mxu0 0.0
  %2017 = vmatprep.subr.mxu0 0.0
  %2018 = vmatpush1.msra.mxu0 0.0
  %2019 = vmatprep.mubr.f32.mxu0 0.0
  %v2020 = vand.u32 %v79, 4294901760
  %v2021 = vsub.f32 %v79, %v2020
  %v2022 = vand.u32 %v2021, 4294901760
  %2023 = vmatmul.mubr.f32.gmra.mrb[0].mxu0 %v2022
  %v2024 = vpop.f32.mrb[0].mxu0
  %v2025 = vadd.f32 %v1509, %v2024
  %v2026 = vpop.f32.mrb[0].mxu0
  %2027 = vmatprep.mubr.f32.mxu0 0.0
  %v2028 = vand.u32 %v82, 4294901760
  %v2029 = vsub.f32 %v82, %v2028
  %v2030 = vand.u32 %v2029, 4294901760
  %2031 = vmatmul.mubr.f32.gmra.mrb[0].mxu0 %v2030
  %v2032 = vpop.f32.mrb[0].mxu0
  %v2033 = vadd.f32 %v1516, %v2032
  %v2034 = vpop.f32.mrb[0].mxu0
  %2035 = vmatprep.mubr.f32.mxu0 0.0
  %v2036 = vand.u32 %v85, 4294901760
  %v2037 = vsub.f32 %v85, %v2036
  %v2038 = vand.u32 %v2037, 4294901760
  %2039 = vmatmul.mubr.f32.gmra.mrb[0].mxu0 %v2038
  %v2040 = vpop.f32.mrb[0].mxu0
  %v2041 = vadd.f32 %v1523, %v2040
  %v2042 = vpop.f32.mrb[0].mxu0
  %2043 = vmatprep.mubr.f32.mxu0 0.0
  %v2044 = vand.u32 %v88, 4294901760
  %v2045 = vsub.f32 %v88, %v2044
  %v2046 = vand.u32 %v2045, 4294901760
  %2047 = vmatmul.mubr.f32.gmra.mrb[0].mxu0 %v2046
  %v2048 = vpop.f32.mrb[0].mxu0
  %v2049 = vadd.f32 %v1530, %v2048
  %v2050 = vpop.f32.mrb[0].mxu0
  %2051 = vmatprep.mubr.f32.mxu0 0.0
  %v2052 = vand.u32 %v91, 4294901760
  %v2053 = vsub.f32 %v91, %v2052
  %v2054 = vand.u32 %v2053, 4294901760
  %2055 = vmatmul.mubr.f32.gmra.mrb[0].mxu0 %v2054
  %v2056 = vpop.f32.mrb[0].mxu0
  %v2057 = vadd.f32 %v1537, %v2056
  %v2058 = vpop.f32.mrb[0].mxu0
  %2059 = vmatprep.mubr.f32.mxu0 0.0
  %v2060 = vand.u32 %v94, 4294901760
  %v2061 = vsub.f32 %v94, %v2060
  %v2062 = vand.u32 %v2061, 4294901760
  %2063 = vmatmul.mubr.f32.gmra.mrb[0].mxu0 %v2062
  %v2064 = vpop.f32.mrb[0].mxu0
  %v2065 = vadd.f32 %v1544, %v2064
  %v2066 = vpop.f32.mrb[0].mxu0
  %2067 = vmatprep.mubr.f32.mxu0 0.0
  %v2068 = vand.u32 %v97, 4294901760
  %v2069 = vsub.f32 %v97, %v2068
  %v2070 = vand.u32 %v2069, 4294901760
  %2071 = vmatmul.mubr.f32.gmra.mrb[0].mxu0 %v2070
  %v2072 = vpop.f32.mrb[0].mxu0
  %v2073 = vadd.f32 %v1551, %v2072
  %v2074 = vpop.f32.mrb[0].mxu0
  %2075 = vmatprep.mubr.f32.mxu0 0.0
  %v2076 = vand.u32 %v100, 4294901760
  %v2077 = vsub.f32 %v100, %v2076
  %v2078 = vand.u32 %v2077, 4294901760
  %2079 = vmatmul.mubr.f32.gmra.mrb[0].mxu0 %v2078
  %v2080 = vpop.f32.mrb[0].mxu0
  %v2081 = vadd.f32 %v1558, %v2080
  %v2082 = vpop.f32.mrb[0].mxu0
  %2083 = vmatprep.mubr.f32.mxu0 0.0
  %v2084 = vand.u32 %v103, 4294901760
  %v2085 = vsub.f32 %v103, %v2084
  %v2086 = vand.u32 %v2085, 4294901760
  %2087 = vmatmul.mubr.f32.gmra.mrb[0].mxu0 %v2086
  %v2088 = vpop.f32.mrb[0].mxu0
  %v2089 = vadd.f32 %v1565, %v2088
  %v2090 = vpop.f32.mrb[0].mxu0
  %2091 = vmatprep.mubr.f32.mxu0 0.0
  %v2092 = vand.u32 %v106, 4294901760
  %v2093 = vsub.f32 %v106, %v2092
  %v2094 = vand.u32 %v2093, 4294901760
  %2095 = vmatmul.mubr.f32.gmra.mrb[0].mxu0 %v2094
  %v2096 = vpop.f32.mrb[0].mxu0
  %v2097 = vadd.f32 %v1572, %v2096
  %v2098 = vpop.f32.mrb[0].mxu0
  %2099 = vmatprep.mubr.f32.mxu0 0.0
  %v2100 = vand.u32 %v109, 4294901760
  %v2101 = vsub.f32 %v109, %v2100
  %v2102 = vand.u32 %v2101, 4294901760
  %2103 = vmatmul.mubr.f32.gmra.mrb[0].mxu0 %v2102
  %v2104 = vpop.f32.mrb[0].mxu0
  %v2105 = vadd.f32 %v1579, %v2104
  %v2106 = vpop.f32.mrb[0].mxu0
  %2107 = vmatprep.mubr.f32.mxu0 0.0
  %v2108 = vand.u32 %v112, 4294901760
  %v2109 = vsub.f32 %v112, %v2108
  %v2110 = vand.u32 %v2109, 4294901760
  %2111 = vmatmul.mubr.f32.gmra.mrb[0].mxu0 %v2110
  %v2112 = vpop.f32.mrb[0].mxu0
  %v2113 = vadd.f32 %v1586, %v2112
  %v2114 = vpop.f32.mrb[0].mxu0
  %2115 = vmatprep.mubr.f32.mxu0 0.0
  %v2116 = vand.u32 %v115, 4294901760
  %v2117 = vsub.f32 %v115, %v2116
  %v2118 = vand.u32 %v2117, 4294901760
  %2119 = vmatmul.mubr.f32.gmra.mrb[0].mxu0 %v2118
  %v2120 = vpop.f32.mrb[0].mxu0
  %v2121 = vadd.f32 %v1593, %v2120
  %v2122 = vpop.f32.mrb[0].mxu0
  %2123 = vmatprep.mubr.f32.mxu0 0.0
  %v2124 = vand.u32 %v118, 4294901760
  %v2125 = vsub.f32 %v118, %v2124
  %v2126 = vand.u32 %v2125, 4294901760
  %2127 = vmatmul.mubr.f32.gmra.mrb[0].mxu0 %v2126
  %v2128 = vpop.f32.mrb[0].mxu0
  %v2129 = vadd.f32 %v1600, %v2128
  %v2130 = vpop.f32.mrb[0].mxu0
  %2131 = vmatprep.mubr.f32.mxu0 0.0
  %v2132 = vand.u32 %v121, 4294901760
  %v2133 = vsub.f32 %v121, %v2132
  %v2134 = vand.u32 %v2133, 4294901760
  %2135 = vmatmul.mubr.f32.gmra.mrb[0].mxu0 %v2134
  %v2136 = vpop.f32.mrb[0].mxu0
  %v2137 = vadd.f32 %v1607, %v2136
  %v2138 = vpop.f32.mrb[0].mxu0
  %2139 = vmatprep.mubr.f32.mxu0 0.0
  %v2140 = vand.u32 %v124, 4294901760
  %v2141 = vsub.f32 %v124, %v2140
  %v2142 = vand.u32 %v2141, 4294901760
  %2143 = vmatmul.mubr.f32.gmra.mrb[0].mxu0 %v2142
  %v2144 = vpop.f32.mrb[0].mxu0
  %v2145 = vadd.f32 %v1614, %v2144
  %v2146 = vpop.f32.mrb[0].mxu0
  %2147 = vmatprep.mubr.f32.mxu0 0.0
  %v2148 = vand.u32 %v127, 4294901760
  %v2149 = vsub.f32 %v127, %v2148
  %v2150 = vand.u32 %v2149, 4294901760
  %2151 = vmatmul.mubr.f32.gmra.mrb[0].mxu0 %v2150
  %v2152 = vpop.f32.mrb[0].mxu0
  %v2153 = vadd.f32 %v1621, %v2152
  %v2154 = vpop.f32.mrb[0].mxu0
  %2155 = vmatprep.mubr.f32.mxu0 0.0
  %v2156 = vand.u32 %v130, 4294901760
  %v2157 = vsub.f32 %v130, %v2156
  %v2158 = vand.u32 %v2157, 4294901760
  %2159 = vmatmul.mubr.f32.gmra.mrb[0].mxu0 %v2158
  %v2160 = vpop.f32.mrb[0].mxu0
  %v2161 = vadd.f32 %v1628, %v2160
  %v2162 = vpop.f32.mrb[0].mxu0
  %2163 = vmatprep.mubr.f32.mxu0 0.0
  %v2164 = vand.u32 %v133, 4294901760
  %v2165 = vsub.f32 %v133, %v2164
  %v2166 = vand.u32 %v2165, 4294901760
  %2167 = vmatmul.mubr.f32.gmra.mrb[0].mxu0 %v2166
  %v2168 = vpop.f32.mrb[0].mxu0
  %v2169 = vadd.f32 %v1635, %v2168
  %v2170 = vpop.f32.mrb[0].mxu0
  %2171 = vmatprep.mubr.f32.mxu0 0.0
  %v2172 = vand.u32 %v136, 4294901760
  %v2173 = vsub.f32 %v136, %v2172
  %v2174 = vand.u32 %v2173, 4294901760
  %2175 = vmatmul.mubr.f32.gmra.mrb[0].mxu0 %v2174
  %v2176 = vpop.f32.mrb[0].mxu0
  %v2177 = vadd.f32 %v1642, %v2176
  %v2178 = vpop.f32.mrb[0].mxu0
  %2179 = vmatprep.mubr.f32.mxu0 0.0
  %v2180 = vand.u32 %v139, 4294901760
  %v2181 = vsub.f32 %v139, %v2180
  %v2182 = vand.u32 %v2181, 4294901760
  %2183 = vmatmul.mubr.f32.gmra.mrb[0].mxu0 %v2182
  %v2184 = vpop.f32.mrb[0].mxu0
  %v2185 = vadd.f32 %v1649, %v2184
  %v2186 = vpop.f32.mrb[0].mxu0
  %2187 = vmatprep.mubr.f32.mxu0 0.0
  %v2188 = vand.u32 %v142, 4294901760
  %v2189 = vsub.f32 %v142, %v2188
  %v2190 = vand.u32 %v2189, 4294901760
  %2191 = vmatmul.mubr.f32.gmra.mrb[0].mxu0 %v2190
  %v2192 = vpop.f32.mrb[0].mxu0
  %v2193 = vadd.f32 %v1656, %v2192
  %v2194 = vpop.f32.mrb[0].mxu0
  %2195 = vmatprep.mubr.f32.mxu0 0.0
  %v2196 = vand.u32 %v145, 4294901760
  %v2197 = vsub.f32 %v145, %v2196
  %v2198 = vand.u32 %v2197, 4294901760
  %2199 = vmatmul.mubr.f32.gmra.mrb[0].mxu0 %v2198
  %v2200 = vpop.f32.mrb[0].mxu0
  %v2201 = vadd.f32 %v1663, %v2200
  %v2202 = vpop.f32.mrb[0].mxu0
  %2203 = vmatprep.mubr.f32.mxu0 0.0
  %v2204 = vand.u32 %v148, 4294901760
  %v2205 = vsub.f32 %v148, %v2204
  %v2206 = vand.u32 %v2205, 4294901760
  %2207 = vmatmul.mubr.f32.gmra.mrb[0].mxu0 %v2206
  %v2208 = vpop.f32.mrb[0].mxu0
  %v2209 = vadd.f32 %v1670, %v2208
  %v2210 = vpop.f32.mrb[0].mxu0
  %2211 = vmatprep.mubr.f32.mxu0 0.0
  %v2212 = vand.u32 %v151, 4294901760
  %v2213 = vsub.f32 %v151, %v2212
  %v2214 = vand.u32 %v2213, 4294901760
  %2215 = vmatmul.mubr.f32.gmra.mrb[0].mxu0 %v2214
  %v2216 = vpop.f32.mrb[0].mxu0
  %v2217 = vadd.f32 %v1677, %v2216
  %v2218 = vpop.f32.mrb[0].mxu0
  %2219 = vmatprep.mubr.f32.mxu0 0.0
  %v2220 = vand.u32 %v154, 4294901760
  %v2221 = vsub.f32 %v154, %v2220
  %v2222 = vand.u32 %v2221, 4294901760
  %2223 = vmatmul.mubr.f32.gmra.mrb[0].mxu0 %v2222
  %v2224 = vpop.f32.mrb[0].mxu0
  %v2225 = vadd.f32 %v1684, %v2224
  %v2226 = vpop.f32.mrb[0].mxu0
  %2227 = vmatprep.mubr.f32.mxu0 0.0
  %v2228 = vand.u32 %v157, 4294901760
  %v2229 = vsub.f32 %v157, %v2228
  %v2230 = vand.u32 %v2229, 4294901760
  %2231 = vmatmul.mubr.f32.gmra.mrb[0].mxu0 %v2230
  %v2232 = vpop.f32.mrb[0].mxu0
  %v2233 = vadd.f32 %v1691, %v2232
  %v2234 = vpop.f32.mrb[0].mxu0
  %2235 = vmatprep.mubr.f32.mxu0 0.0
  %v2236 = vand.u32 %v160, 4294901760
  %v2237 = vsub.f32 %v160, %v2236
  %v2238 = vand.u32 %v2237, 4294901760
  %2239 = vmatmul.mubr.f32.gmra.mrb[0].mxu0 %v2238
  %v2240 = vpop.f32.mrb[0].mxu0
  %v2241 = vadd.f32 %v1698, %v2240
  %v2242 = vpop.f32.mrb[0].mxu0
  %2243 = vmatprep.mubr.f32.mxu0 0.0
  %v2244 = vand.u32 %v163, 4294901760
  %v2245 = vsub.f32 %v163, %v2244
  %v2246 = vand.u32 %v2245, 4294901760
  %2247 = vmatmul.mubr.f32.gmra.mrb[0].mxu0 %v2246
  %v2248 = vpop.f32.mrb[0].mxu0
  %v2249 = vadd.f32 %v1705, %v2248
  %v2250 = vpop.f32.mrb[0].mxu0
  %2251 = vmatprep.mubr.f32.mxu0 0.0
  %v2252 = vand.u32 %v166, 4294901760
  %v2253 = vsub.f32 %v166, %v2252
  %v2254 = vand.u32 %v2253, 4294901760
  %2255 = vmatmul.mubr.f32.gmra.mrb[0].mxu0 %v2254
  %v2256 = vpop.f32.mrb[0].mxu0
  %v2257 = vadd.f32 %v1712, %v2256
  %v2258 = vpop.f32.mrb[0].mxu0
  %2259 = vmatprep.mubr.f32.mxu0 0.0
  %v2260 = vand.u32 %v169, 4294901760
  %v2261 = vsub.f32 %v169, %v2260
  %v2262 = vand.u32 %v2261, 4294901760
  %2263 = vmatmul.mubr.f32.gmra.mrb[0].mxu0 %v2262
  %v2264 = vpop.f32.mrb[0].mxu0
  %v2265 = vadd.f32 %v1719, %v2264
  %v2266 = vpop.f32.mrb[0].mxu0
  %2267 = vmatprep.mubr.f32.mxu0 0.0
  %v2268 = vand.u32 %v172, 4294901760
  %v2269 = vsub.f32 %v172, %v2268
  %v2270 = vand.u32 %v2269, 4294901760
  %2271 = vmatmul.mubr.f32.gmra.mrb[0].mxu0 %v2270
  %v2272 = vpop.f32.mrb[0].mxu0
  %v2273 = vadd.f32 %v1726, %v2272
  %v2274 = vpop.f32.mrb[0].mxu0
  %2275 = vmatprep.mubr.f32.mxu0 0.0
  %v2276 = vand.u32 %v175, 4294901760
  %v2277 = vsub.f32 %v175, %v2276
  %v2278 = vand.u32 %v2277, 4294901760
  %2279 = vmatmul.mubr.f32.gmra.mrb[0].mxu0 %v2278
  %v2280 = vpop.f32.mrb[0].mxu0
  %v2281 = vadd.f32 %v1733, %v2280
  %v2282 = vpop.f32.mrb[0].mxu0
  %2283 = vmatprep.mubr.f32.mxu0 0.0
  %v2284 = vand.u32 %v178, 4294901760
  %v2285 = vsub.f32 %v178, %v2284
  %v2286 = vand.u32 %v2285, 4294901760
  %2287 = vmatmul.mubr.f32.gmra.mrb[0].mxu0 %v2286
  %v2288 = vpop.f32.mrb[0].mxu0
  %v2289 = vadd.f32 %v1740, %v2288
  %v2290 = vpop.f32.mrb[0].mxu0
  %2291 = vmatprep.mubr.f32.mxu0 0.0
  %v2292 = vand.u32 %v181, 4294901760
  %v2293 = vsub.f32 %v181, %v2292
  %v2294 = vand.u32 %v2293, 4294901760
  %2295 = vmatmul.mubr.f32.gmra.mrb[0].mxu0 %v2294
  %v2296 = vpop.f32.mrb[0].mxu0
  %v2297 = vadd.f32 %v1747, %v2296
  %v2298 = vpop.f32.mrb[0].mxu0
  %2299 = vmatprep.mubr.f32.mxu0 0.0
  %v2300 = vand.u32 %v184, 4294901760
  %v2301 = vsub.f32 %v184, %v2300
  %v2302 = vand.u32 %v2301, 4294901760
  %2303 = vmatmul.mubr.f32.gmra.mrb[0].mxu0 %v2302
  %v2304 = vpop.f32.mrb[0].mxu0
  %v2305 = vadd.f32 %v1754, %v2304
  %v2306 = vpop.f32.mrb[0].mxu0
  %2307 = vmatprep.mubr.f32.mxu0 0.0
  %v2308 = vand.u32 %v187, 4294901760
  %v2309 = vsub.f32 %v187, %v2308
  %v2310 = vand.u32 %v2309, 4294901760
  %2311 = vmatmul.mubr.f32.gmra.mrb[0].mxu0 %v2310
  %v2312 = vpop.f32.mrb[0].mxu0
  %v2313 = vadd.f32 %v1761, %v2312
  %v2314 = vpop.f32.mrb[0].mxu0
  %2315 = vmatprep.mubr.f32.mxu0 0.0
  %v2316 = vand.u32 %v190, 4294901760
  %v2317 = vsub.f32 %v190, %v2316
  %v2318 = vand.u32 %v2317, 4294901760
  %2319 = vmatmul.mubr.f32.gmra.mrb[0].mxu0 %v2318
  %v2320 = vpop.f32.mrb[0].mxu0
  %v2321 = vadd.f32 %v1768, %v2320
  %v2322 = vpop.f32.mrb[0].mxu0
  %2323 = vmatprep.mubr.f32.mxu0 0.0
  %v2324 = vand.u32 %v193, 4294901760
  %v2325 = vsub.f32 %v193, %v2324
  %v2326 = vand.u32 %v2325, 4294901760
  %2327 = vmatmul.mubr.f32.gmra.mrb[0].mxu0 %v2326
  %v2328 = vpop.f32.mrb[0].mxu0
  %v2329 = vadd.f32 %v1775, %v2328
  %v2330 = vpop.f32.mrb[0].mxu0
  %2331 = vmatprep.mubr.f32.mxu0 0.0
  %v2332 = vand.u32 %v196, 4294901760
  %v2333 = vsub.f32 %v196, %v2332
  %v2334 = vand.u32 %v2333, 4294901760
  %2335 = vmatmul.mubr.f32.gmra.mrb[0].mxu0 %v2334
  %v2336 = vpop.f32.mrb[0].mxu0
  %v2337 = vadd.f32 %v1782, %v2336
  %v2338 = vpop.f32.mrb[0].mxu0
  %2339 = vmatprep.mubr.f32.mxu0 0.0
  %v2340 = vand.u32 %v199, 4294901760
  %v2341 = vsub.f32 %v199, %v2340
  %v2342 = vand.u32 %v2341, 4294901760
  %2343 = vmatmul.mubr.f32.gmra.mrb[0].mxu0 %v2342
  %v2344 = vpop.f32.mrb[0].mxu0
  %v2345 = vadd.f32 %v1789, %v2344
  %v2346 = vpop.f32.mrb[0].mxu0
  %2347 = vmatprep.mubr.f32.mxu0 0.0
  %v2348 = vand.u32 %v202, 4294901760
  %v2349 = vsub.f32 %v202, %v2348
  %v2350 = vand.u32 %v2349, 4294901760
  %2351 = vmatmul.mubr.f32.gmra.mrb[0].mxu0 %v2350
  %v2352 = vpop.f32.mrb[0].mxu0
  %v2353 = vadd.f32 %v1796, %v2352
  %v2354 = vpop.f32.mrb[0].mxu0
  %2355 = vmatprep.mubr.f32.mxu0 0.0
  %v2356 = vand.u32 %v205, 4294901760
  %v2357 = vsub.f32 %v205, %v2356
  %v2358 = vand.u32 %v2357, 4294901760
  %2359 = vmatmul.mubr.f32.gmra.mrb[0].mxu0 %v2358
  %v2360 = vpop.f32.mrb[0].mxu0
  %v2361 = vadd.f32 %v1803, %v2360
  %v2362 = vpop.f32.mrb[0].mxu0
  %2363 = vmatprep.mubr.f32.mxu0 0.0
  %v2364 = vand.u32 %v208, 4294901760
  %v2365 = vsub.f32 %v208, %v2364
  %v2366 = vand.u32 %v2365, 4294901760
  %2367 = vmatmul.mubr.f32.gmra.mrb[0].mxu0 %v2366
  %v2368 = vpop.f32.mrb[0].mxu0
  %v2369 = vadd.f32 %v1810, %v2368
  %v2370 = vpop.f32.mrb[0].mxu0
  %2371 = vmatprep.mubr.f32.mxu0 0.0
  %v2372 = vand.u32 %v211, 4294901760
  %v2373 = vsub.f32 %v211, %v2372
  %v2374 = vand.u32 %v2373, 4294901760
  %2375 = vmatmul.mubr.f32.gmra.mrb[0].mxu0 %v2374
  %v2376 = vpop.f32.mrb[0].mxu0
  %v2377 = vadd.f32 %v1817, %v2376
  %v2378 = vpop.f32.mrb[0].mxu0
  %2379 = vmatprep.mubr.f32.mxu0 0.0
  %v2380 = vand.u32 %v214, 4294901760
  %v2381 = vsub.f32 %v214, %v2380
  %v2382 = vand.u32 %v2381, 4294901760
  %2383 = vmatmul.mubr.f32.gmra.mrb[0].mxu0 %v2382
  %v2384 = vpop.f32.mrb[0].mxu0
  %v2385 = vadd.f32 %v1824, %v2384
  %v2386 = vpop.f32.mrb[0].mxu0
  %2387 = vmatprep.mubr.f32.mxu0 0.0
  %v2388 = vand.u32 %v217, 4294901760
  %v2389 = vsub.f32 %v217, %v2388
  %v2390 = vand.u32 %v2389, 4294901760
  %2391 = vmatmul.mubr.f32.gmra.mrb[0].mxu0 %v2390
  %v2392 = vpop.f32.mrb[0].mxu0
  %v2393 = vadd.f32 %v1831, %v2392
  %v2394 = vpop.f32.mrb[0].mxu0
  %2395 = vmatprep.mubr.f32.mxu0 0.0
  %v2396 = vand.u32 %v220, 4294901760
  %v2397 = vsub.f32 %v220, %v2396
  %v2398 = vand.u32 %v2397, 4294901760
  %2399 = vmatmul.mubr.f32.gmra.mrb[0].mxu0 %v2398
  %v2400 = vpop.f32.mrb[0].mxu0
  %v2401 = vadd.f32 %v1838, %v2400
  %v2402 = vpop.f32.mrb[0].mxu0
  %2403 = vmatprep.mubr.f32.mxu0 0.0
  %v2404 = vand.u32 %v223, 4294901760
  %v2405 = vsub.f32 %v223, %v2404
  %v2406 = vand.u32 %v2405, 4294901760
  %2407 = vmatmul.mubr.f32.gmra.mrb[0].mxu0 %v2406
  %v2408 = vpop.f32.mrb[0].mxu0
  %v2409 = vadd.f32 %v1845, %v2408
  %v2410 = vpop.f32.mrb[0].mxu0
  %2411 = vmatprep.mubr.f32.mxu0 0.0
  %v2412 = vand.u32 %v226, 4294901760
  %v2413 = vsub.f32 %v226, %v2412
  %v2414 = vand.u32 %v2413, 4294901760
  %2415 = vmatmul.mubr.f32.gmra.mrb[0].mxu0 %v2414
  %v2416 = vpop.f32.mrb[0].mxu0
  %v2417 = vadd.f32 %v1852, %v2416
  %v2418 = vpop.f32.mrb[0].mxu0
  %2419 = vmatprep.mubr.f32.mxu0 0.0
  %v2420 = vand.u32 %v229, 4294901760
  %v2421 = vsub.f32 %v229, %v2420
  %v2422 = vand.u32 %v2421, 4294901760
  %2423 = vmatmul.mubr.f32.gmra.mrb[0].mxu0 %v2422
  %v2424 = vpop.f32.mrb[0].mxu0
  %v2425 = vadd.f32 %v1859, %v2424
  %v2426 = vpop.f32.mrb[0].mxu0
  %2427 = vmatprep.mubr.f32.mxu0 0.0
  %v2428 = vand.u32 %v232, 4294901760
  %v2429 = vsub.f32 %v232, %v2428
  %v2430 = vand.u32 %v2429, 4294901760
  %2431 = vmatmul.mubr.f32.gmra.mrb[0].mxu0 %v2430
  %v2432 = vpop.f32.mrb[0].mxu0
  %v2433 = vadd.f32 %v1866, %v2432
  %v2434 = vpop.f32.mrb[0].mxu0
  %2435 = vmatprep.mubr.f32.mxu0 0.0
  %v2436 = vand.u32 %v235, 4294901760
  %v2437 = vsub.f32 %v235, %v2436
  %v2438 = vand.u32 %v2437, 4294901760
  %2439 = vmatmul.mubr.f32.gmra.mrb[0].mxu0 %v2438
  %v2440 = vpop.f32.mrb[0].mxu0
  %v2441 = vadd.f32 %v1873, %v2440
  %v2442 = vpop.f32.mrb[0].mxu0
  %2443 = vmatprep.mubr.f32.mxu0 0.0
  %v2444 = vand.u32 %v238, 4294901760
  %v2445 = vsub.f32 %v238, %v2444
  %v2446 = vand.u32 %v2445, 4294901760
  %2447 = vmatmul.mubr.f32.gmra.mrb[0].mxu0 %v2446
  %v2448 = vpop.f32.mrb[0].mxu0
  %v2449 = vadd.f32 %v1880, %v2448
  %v2450 = vpop.f32.mrb[0].mxu0
  %2451 = vmatprep.mubr.f32.mxu0 0.0
  %v2452 = vand.u32 %v241, 4294901760
  %v2453 = vsub.f32 %v241, %v2452
  %v2454 = vand.u32 %v2453, 4294901760
  %2455 = vmatmul.mubr.f32.gmra.mrb[0].mxu0 %v2454
  %v2456 = vpop.f32.mrb[0].mxu0
  %v2457 = vadd.f32 %v1887, %v2456
  %v2458 = vpop.f32.mrb[0].mxu0
  %2459 = vmatprep.mubr.f32.mxu0 0.0
  %v2460 = vand.u32 %v244, 4294901760
  %v2461 = vsub.f32 %v244, %v2460
  %v2462 = vand.u32 %v2461, 4294901760
  %2463 = vmatmul.mubr.f32.gmra.mrb[0].mxu0 %v2462
  %v2464 = vpop.f32.mrb[0].mxu0
  %v2465 = vadd.f32 %v1894, %v2464
  %v2466 = vpop.f32.mrb[0].mxu0
  %2467 = vmatprep.mubr.f32.mxu0 0.0
  %v2468 = vand.u32 %v247, 4294901760
  %v2469 = vsub.f32 %v247, %v2468
  %v2470 = vand.u32 %v2469, 4294901760
  %2471 = vmatmul.mubr.f32.gmra.mrb[0].mxu0 %v2470
  %v2472 = vpop.f32.mrb[0].mxu0
  %v2473 = vadd.f32 %v1901, %v2472
  %v2474 = vpop.f32.mrb[0].mxu0
  %2475 = vmatprep.mubr.f32.mxu0 0.0
  %v2476 = vand.u32 %v250, 4294901760
  %v2477 = vsub.f32 %v250, %v2476
  %v2478 = vand.u32 %v2477, 4294901760
  %2479 = vmatmul.mubr.f32.gmra.mrb[0].mxu0 %v2478
  %v2480 = vpop.f32.mrb[0].mxu0
  %v2481 = vadd.f32 %v1908, %v2480
  %v2482 = vpop.f32.mrb[0].mxu0
  %2483 = vmatprep.mubr.f32.mxu0 0.0
  %v2484 = vand.u32 %v253, 4294901760
  %v2485 = vsub.f32 %v253, %v2484
  %v2486 = vand.u32 %v2485, 4294901760
  %2487 = vmatmul.mubr.f32.gmra.mrb[0].mxu0 %v2486
  %v2488 = vpop.f32.mrb[0].mxu0
  %v2489 = vadd.f32 %v1915, %v2488
  %v2490 = vpop.f32.mrb[0].mxu0
  %2491 = vmatprep.mubr.f32.mxu0 0.0
  %v2492 = vand.u32 %v256, 4294901760
  %v2493 = vsub.f32 %v256, %v2492
  %v2494 = vand.u32 %v2493, 4294901760
  %2495 = vmatmul.mubr.f32.gmra.mrb[0].mxu0 %v2494
  %v2496 = vpop.f32.mrb[0].mxu0
  %v2497 = vadd.f32 %v1922, %v2496
  %v2498 = vpop.f32.mrb[0].mxu0
  %2499 = vmatprep.mubr.f32.mxu0 0.0
  %v2500 = vand.u32 %v259, 4294901760
  %v2501 = vsub.f32 %v259, %v2500
  %v2502 = vand.u32 %v2501, 4294901760
  %2503 = vmatmul.mubr.f32.gmra.mrb[0].mxu0 %v2502
  %v2504 = vpop.f32.mrb[0].mxu0
  %v2505 = vadd.f32 %v1929, %v2504
  %v2506 = vpop.f32.mrb[0].mxu0
  %2507 = vmatprep.mubr.f32.mxu0 0.0
  %v2508 = vand.u32 %v262, 4294901760
  %v2509 = vsub.f32 %v262, %v2508
  %v2510 = vand.u32 %v2509, 4294901760
  %2511 = vmatmul.mubr.f32.gmra.mrb[0].mxu0 %v2510
  %v2512 = vpop.f32.mrb[0].mxu0
  %v2513 = vadd.f32 %v1936, %v2512
  %v2514 = vpop.f32.mrb[0].mxu0
  %2515 = vmatprep.mubr.f32.mxu0 0.0
  %v2516 = vand.u32 %v265, 4294901760
  %v2517 = vsub.f32 %v265, %v2516
  %v2518 = vand.u32 %v2517, 4294901760
  %2519 = vmatmul.mubr.f32.gmra.mrb[0].mxu0 %v2518
  %v2520 = vpop.f32.mrb[0].mxu0
  %v2521 = vadd.f32 %v1943, %v2520
  %v2522 = vpop.f32.mrb[0].mxu0
  %2523 = vmatprep.mubr.f32.mxu0 0.0
  %v2524 = vand.u32 %v268, 4294901760
  %v2525 = vsub.f32 %v268, %v2524
  %v2526 = vand.u32 %v2525, 4294901760
  %2527 = vmatmul.mubr.f32.gmra.mrb[0].mxu0 %v2526
  %v2528 = vpop.f32.mrb[0].mxu0
  %v2529 = vadd.f32 %v1950, %v2528
  %v2530 = vpop.f32.mrb[0].mxu0
  %2531 = vdwg.mxu0
  %2532 = vmatprep.subr.mxu0 0.0
  %v2533 = vand.u32 %v75, 4294901760
  %v2534 = vsub.f32 %v75, %v2533
  %v2535 = vand.u32 %v2534, 4294901760
  %2536 = vmatpush1.msra.mxu0 %v2535
  %2537 = vmatprep.subr.mxu0 0.0
  %v2538 = vand.u32 %v76, 4294901760
  %v2539 = vsub.f32 %v76, %v2538
  %v2540 = vand.u32 %v2539, 4294901760
  %2541 = vmatpush1.msra.mxu0 %v2540
  %2542 = vmatprep.subr.mxu0 0.0
  %2543 = vmatpush1.msra.mxu0 0.0
  %2544 = vmatprep.subr.mxu0 0.0
  %2545 = vmatpush1.msra.mxu0 0.0
  %2546 = vmatprep.subr.mxu0 0.0
  %2547 = vmatpush1.msra.mxu0 0.0
  %2548 = vmatprep.subr.mxu0 0.0
  %2549 = vmatpush1.msra.mxu0 0.0
  %2550 = vmatprep.subr.mxu0 0.0
  %2551 = vmatpush1.msra.mxu0 0.0
  %2552 = vmatprep.subr.mxu0 0.0
  %2553 = vmatpush1.msra.mxu0 0.0
  %2554 = vmatprep.subr.mxu0 0.0
  %2555 = vmatpush1.msra.mxu0 0.0
  %2556 = vmatprep.subr.mxu0 0.0
  %2557 = vmatpush1.msra.mxu0 0.0
  %2558 = vmatprep.subr.mxu0 0.0
  %2559 = vmatpush1.msra.mxu0 0.0
  %2560 = vmatprep.subr.mxu0 0.0
  %2561 = vmatpush1.msra.mxu0 0.0
  %2562 = vmatprep.subr.mxu0 0.0
  %2563 = vmatpush1.msra.mxu0 0.0
  %2564 = vmatprep.subr.mxu0 0.0
  %2565 = vmatpush1.msra.mxu0 0.0
  %2566 = vmatprep.subr.mxu0 0.0
  %2567 = vmatpush1.msra.mxu0 0.0
  %2568 = vmatprep.subr.mxu0 0.0
  %2569 = vmatpush1.msra.mxu0 0.0
  %2570 = vmatprep.subr.mxu0 0.0
  %2571 = vmatpush1.msra.mxu0 0.0
  %2572 = vmatprep.subr.mxu0 0.0
  %2573 = vmatpush1.msra.mxu0 0.0
  %2574 = vmatprep.subr.mxu0 0.0
  %2575 = vmatpush1.msra.mxu0 0.0
  %2576 = vmatprep.subr.mxu0 0.0
  %2577 = vmatpush1.msra.mxu0 0.0
  %2578 = vmatprep.subr.mxu0 0.0
  %2579 = vmatpush1.msra.mxu0 0.0
  %2580 = vmatprep.subr.mxu0 0.0
  %2581 = vmatpush1.msra.mxu0 0.0
  %2582 = vmatprep.subr.mxu0 0.0
  %2583 = vmatpush1.msra.mxu0 0.0
  %2584 = vmatprep.subr.mxu0 0.0
  %2585 = vmatpush1.msra.mxu0 0.0
  %2586 = vmatprep.subr.mxu0 0.0
  %2587 = vmatpush1.msra.mxu0 0.0
  %2588 = vmatprep.subr.mxu0 0.0
  %2589 = vmatpush1.msra.mxu0 0.0
  %2590 = vmatprep.subr.mxu0 0.0
  %2591 = vmatpush1.msra.mxu0 0.0
  %2592 = vmatprep.subr.mxu0 0.0
  %2593 = vmatpush1.msra.mxu0 0.0
  %2594 = vmatprep.subr.mxu0 0.0
  %2595 = vmatpush1.msra.mxu0 0.0
  %2596 = vmatprep.subr.mxu0 0.0
  %2597 = vmatpush1.msra.mxu0 0.0
  %2598 = vmatprep.subr.mxu0 0.0
  %2599 = vmatpush1.msra.mxu0 0.0
  %2600 = vmatprep.subr.mxu0 0.0
  %2601 = vmatpush1.msra.mxu0 0.0
  %2602 = vmatprep.mubr.f32.mxu0 0.0
  %v2603 = vand.u32 %v79, 4294901760
  %2604 = vmatmul.mubr.f32.gmra.mrb[0].mxu0 %v2603
  %v2605 = vpop.f32.mrb[0].mxu0
  %v2606 = vadd.f32 %v2025, %v2605
  %v2607 = vpop.f32.mrb[0].mxu0
  %2608 = vmatprep.mubr.f32.mxu0 0.0
  %v2609 = vand.u32 %v82, 4294901760
  %2610 = vmatmul.mubr.f32.gmra.mrb[0].mxu0 %v2609
  %v2611 = vpop.f32.mrb[0].mxu0
  %v2612 = vadd.f32 %v2033, %v2611
  %v2613 = vpop.f32.mrb[0].mxu0
  %2614 = vmatprep.mubr.f32.mxu0 0.0
  %v2615 = vand.u32 %v85, 4294901760
  %2616 = vmatmul.mubr.f32.gmra.mrb[0].mxu0 %v2615
  %v2617 = vpop.f32.mrb[0].mxu0
  %v2618 = vadd.f32 %v2041, %v2617
  %v2619 = vpop.f32.mrb[0].mxu0
  %2620 = vmatprep.mubr.f32.mxu0 0.0
  %v2621 = vand.u32 %v88, 4294901760
  %2622 = vmatmul.mubr.f32.gmra.mrb[0].mxu0 %v2621
  %v2623 = vpop.f32.mrb[0].mxu0
  %v2624 = vadd.f32 %v2049, %v2623
  %v2625 = vpop.f32.mrb[0].mxu0
  %2626 = vmatprep.mubr.f32.mxu0 0.0
  %v2627 = vand.u32 %v91, 4294901760
  %2628 = vmatmul.mubr.f32.gmra.mrb[0].mxu0 %v2627
  %v2629 = vpop.f32.mrb[0].mxu0
  %v2630 = vadd.f32 %v2057, %v2629
  %v2631 = vpop.f32.mrb[0].mxu0
  %2632 = vmatprep.mubr.f32.mxu0 0.0
  %v2633 = vand.u32 %v94, 4294901760
  %2634 = vmatmul.mubr.f32.gmra.mrb[0].mxu0 %v2633
  %v2635 = vpop.f32.mrb[0].mxu0
  %v2636 = vadd.f32 %v2065, %v2635
  %v2637 = vpop.f32.mrb[0].mxu0
  %2638 = vmatprep.mubr.f32.mxu0 0.0
  %v2639 = vand.u32 %v97, 4294901760
  %2640 = vmatmul.mubr.f32.gmra.mrb[0].mxu0 %v2639
  %v2641 = vpop.f32.mrb[0].mxu0
  %v2642 = vadd.f32 %v2073, %v2641
  %v2643 = vpop.f32.mrb[0].mxu0
  %2644 = vmatprep.mubr.f32.mxu0 0.0
  %v2645 = vand.u32 %v100, 4294901760
  %2646 = vmatmul.mubr.f32.gmra.mrb[0].mxu0 %v2645
  %v2647 = vpop.f32.mrb[0].mxu0
  %v2648 = vadd.f32 %v2081, %v2647
  %v2649 = vpop.f32.mrb[0].mxu0
  %2650 = vmatprep.mubr.f32.mxu0 0.0
  %v2651 = vand.u32 %v103, 4294901760
  %2652 = vmatmul.mubr.f32.gmra.mrb[0].mxu0 %v2651
  %v2653 = vpop.f32.mrb[0].mxu0
  %v2654 = vadd.f32 %v2089, %v2653
  %v2655 = vpop.f32.mrb[0].mxu0
  %2656 = vmatprep.mubr.f32.mxu0 0.0
  %v2657 = vand.u32 %v106, 4294901760
  %2658 = vmatmul.mubr.f32.gmra.mrb[0].mxu0 %v2657
  %v2659 = vpop.f32.mrb[0].mxu0
  %v2660 = vadd.f32 %v2097, %v2659
  %v2661 = vpop.f32.mrb[0].mxu0
  %2662 = vmatprep.mubr.f32.mxu0 0.0
  %v2663 = vand.u32 %v109, 4294901760
  %2664 = vmatmul.mubr.f32.gmra.mrb[0].mxu0 %v2663
  %v2665 = vpop.f32.mrb[0].mxu0
  %v2666 = vadd.f32 %v2105, %v2665
  %v2667 = vpop.f32.mrb[0].mxu0
  %2668 = vmatprep.mubr.f32.mxu0 0.0
  %v2669 = vand.u32 %v112, 4294901760
  %2670 = vmatmul.mubr.f32.gmra.mrb[0].mxu0 %v2669
  %v2671 = vpop.f32.mrb[0].mxu0
  %v2672 = vadd.f32 %v2113, %v2671
  %v2673 = vpop.f32.mrb[0].mxu0
  %2674 = vmatprep.mubr.f32.mxu0 0.0
  %v2675 = vand.u32 %v115, 4294901760
  %2676 = vmatmul.mubr.f32.gmra.mrb[0].mxu0 %v2675
  %v2677 = vpop.f32.mrb[0].mxu0
  %v2678 = vadd.f32 %v2121, %v2677
  %v2679 = vpop.f32.mrb[0].mxu0
  %2680 = vmatprep.mubr.f32.mxu0 0.0
  %v2681 = vand.u32 %v118, 4294901760
  %2682 = vmatmul.mubr.f32.gmra.mrb[0].mxu0 %v2681
  %v2683 = vpop.f32.mrb[0].mxu0
  %v2684 = vadd.f32 %v2129, %v2683
  %v2685 = vpop.f32.mrb[0].mxu0
  %2686 = vmatprep.mubr.f32.mxu0 0.0
  %v2687 = vand.u32 %v121, 4294901760
  %2688 = vmatmul.mubr.f32.gmra.mrb[0].mxu0 %v2687
  %v2689 = vpop.f32.mrb[0].mxu0
  %v2690 = vadd.f32 %v2137, %v2689
  %v2691 = vpop.f32.mrb[0].mxu0
  %2692 = vmatprep.mubr.f32.mxu0 0.0
  %v2693 = vand.u32 %v124, 4294901760
  %2694 = vmatmul.mubr.f32.gmra.mrb[0].mxu0 %v2693
  %v2695 = vpop.f32.mrb[0].mxu0
  %v2696 = vadd.f32 %v2145, %v2695
  %v2697 = vpop.f32.mrb[0].mxu0
  %2698 = vmatprep.mubr.f32.mxu0 0.0
  %v2699 = vand.u32 %v127, 4294901760
  %2700 = vmatmul.mubr.f32.gmra.mrb[0].mxu0 %v2699
  %v2701 = vpop.f32.mrb[0].mxu0
  %v2702 = vadd.f32 %v2153, %v2701
  %v2703 = vpop.f32.mrb[0].mxu0
  %2704 = vmatprep.mubr.f32.mxu0 0.0
  %v2705 = vand.u32 %v130, 4294901760
  %2706 = vmatmul.mubr.f32.gmra.mrb[0].mxu0 %v2705
  %v2707 = vpop.f32.mrb[0].mxu0
  %v2708 = vadd.f32 %v2161, %v2707
  %v2709 = vpop.f32.mrb[0].mxu0
  %2710 = vmatprep.mubr.f32.mxu0 0.0
  %v2711 = vand.u32 %v133, 4294901760
  %2712 = vmatmul.mubr.f32.gmra.mrb[0].mxu0 %v2711
  %v2713 = vpop.f32.mrb[0].mxu0
  %v2714 = vadd.f32 %v2169, %v2713
  %v2715 = vpop.f32.mrb[0].mxu0
  %2716 = vmatprep.mubr.f32.mxu0 0.0
  %v2717 = vand.u32 %v136, 4294901760
  %2718 = vmatmul.mubr.f32.gmra.mrb[0].mxu0 %v2717
  %v2719 = vpop.f32.mrb[0].mxu0
  %v2720 = vadd.f32 %v2177, %v2719
  %v2721 = vpop.f32.mrb[0].mxu0
  %2722 = vmatprep.mubr.f32.mxu0 0.0
  %v2723 = vand.u32 %v139, 4294901760
  %2724 = vmatmul.mubr.f32.gmra.mrb[0].mxu0 %v2723
  %v2725 = vpop.f32.mrb[0].mxu0
  %v2726 = vadd.f32 %v2185, %v2725
  %v2727 = vpop.f32.mrb[0].mxu0
  %2728 = vmatprep.mubr.f32.mxu0 0.0
  %v2729 = vand.u32 %v142, 4294901760
  %2730 = vmatmul.mubr.f32.gmra.mrb[0].mxu0 %v2729
  %v2731 = vpop.f32.mrb[0].mxu0
  %v2732 = vadd.f32 %v2193, %v2731
  %v2733 = vpop.f32.mrb[0].mxu0
  %2734 = vmatprep.mubr.f32.mxu0 0.0
  %v2735 = vand.u32 %v145, 4294901760
  %2736 = vmatmul.mubr.f32.gmra.mrb[0].mxu0 %v2735
  %v2737 = vpop.f32.mrb[0].mxu0
  %v2738 = vadd.f32 %v2201, %v2737
  %v2739 = vpop.f32.mrb[0].mxu0
  %2740 = vmatprep.mubr.f32.mxu0 0.0
  %v2741 = vand.u32 %v148, 4294901760
  %2742 = vmatmul.mubr.f32.gmra.mrb[0].mxu0 %v2741
  %v2743 = vpop.f32.mrb[0].mxu0
  %v2744 = vadd.f32 %v2209, %v2743
  %v2745 = vpop.f32.mrb[0].mxu0
  %2746 = vmatprep.mubr.f32.mxu0 0.0
  %v2747 = vand.u32 %v151, 4294901760
  %2748 = vmatmul.mubr.f32.gmra.mrb[0].mxu0 %v2747
  %v2749 = vpop.f32.mrb[0].mxu0
  %v2750 = vadd.f32 %v2217, %v2749
  %v2751 = vpop.f32.mrb[0].mxu0
  %2752 = vmatprep.mubr.f32.mxu0 0.0
  %v2753 = vand.u32 %v154, 4294901760
  %2754 = vmatmul.mubr.f32.gmra.mrb[0].mxu0 %v2753
  %v2755 = vpop.f32.mrb[0].mxu0
  %v2756 = vadd.f32 %v2225, %v2755
  %v2757 = vpop.f32.mrb[0].mxu0
  %2758 = vmatprep.mubr.f32.mxu0 0.0
  %v2759 = vand.u32 %v157, 4294901760
  %2760 = vmatmul.mubr.f32.gmra.mrb[0].mxu0 %v2759
  %v2761 = vpop.f32.mrb[0].mxu0
  %v2762 = vadd.f32 %v2233, %v2761
  %v2763 = vpop.f32.mrb[0].mxu0
  %2764 = vmatprep.mubr.f32.mxu0 0.0
  %v2765 = vand.u32 %v160, 4294901760
  %2766 = vmatmul.mubr.f32.gmra.mrb[0].mxu0 %v2765
  %v2767 = vpop.f32.mrb[0].mxu0
  %v2768 = vadd.f32 %v2241, %v2767
  %v2769 = vpop.f32.mrb[0].mxu0
  %2770 = vmatprep.mubr.f32.mxu0 0.0
  %v2771 = vand.u32 %v163, 4294901760
  %2772 = vmatmul.mubr.f32.gmra.mrb[0].mxu0 %v2771
  %v2773 = vpop.f32.mrb[0].mxu0
  %v2774 = vadd.f32 %v2249, %v2773
  %v2775 = vpop.f32.mrb[0].mxu0
  %2776 = vmatprep.mubr.f32.mxu0 0.0
  %v2777 = vand.u32 %v166, 4294901760
  %2778 = vmatmul.mubr.f32.gmra.mrb[0].mxu0 %v2777
  %v2779 = vpop.f32.mrb[0].mxu0
  %v2780 = vadd.f32 %v2257, %v2779
  %v2781 = vpop.f32.mrb[0].mxu0
  %2782 = vmatprep.mubr.f32.mxu0 0.0
  %v2783 = vand.u32 %v169, 4294901760
  %2784 = vmatmul.mubr.f32.gmra.mrb[0].mxu0 %v2783
  %v2785 = vpop.f32.mrb[0].mxu0
  %v2786 = vadd.f32 %v2265, %v2785
  %v2787 = vpop.f32.mrb[0].mxu0
  %2788 = vmatprep.mubr.f32.mxu0 0.0
  %v2789 = vand.u32 %v172, 4294901760
  %2790 = vmatmul.mubr.f32.gmra.mrb[0].mxu0 %v2789
  %v2791 = vpop.f32.mrb[0].mxu0
  %v2792 = vadd.f32 %v2273, %v2791
  %v2793 = vpop.f32.mrb[0].mxu0
  %2794 = vmatprep.mubr.f32.mxu0 0.0
  %v2795 = vand.u32 %v175, 4294901760
  %2796 = vmatmul.mubr.f32.gmra.mrb[0].mxu0 %v2795
  %v2797 = vpop.f32.mrb[0].mxu0
  %v2798 = vadd.f32 %v2281, %v2797
  %v2799 = vpop.f32.mrb[0].mxu0
  %2800 = vmatprep.mubr.f32.mxu0 0.0
  %v2801 = vand.u32 %v178, 4294901760
  %2802 = vmatmul.mubr.f32.gmra.mrb[0].mxu0 %v2801
  %v2803 = vpop.f32.mrb[0].mxu0
  %v2804 = vadd.f32 %v2289, %v2803
  %v2805 = vpop.f32.mrb[0].mxu0
  %2806 = vmatprep.mubr.f32.mxu0 0.0
  %v2807 = vand.u32 %v181, 4294901760
  %2808 = vmatmul.mubr.f32.gmra.mrb[0].mxu0 %v2807
  %v2809 = vpop.f32.mrb[0].mxu0
  %v2810 = vadd.f32 %v2297, %v2809
  %v2811 = vpop.f32.mrb[0].mxu0
  %2812 = vmatprep.mubr.f32.mxu0 0.0
  %v2813 = vand.u32 %v184, 4294901760
  %2814 = vmatmul.mubr.f32.gmra.mrb[0].mxu0 %v2813
  %v2815 = vpop.f32.mrb[0].mxu0
  %v2816 = vadd.f32 %v2305, %v2815
  %v2817 = vpop.f32.mrb[0].mxu0
  %2818 = vmatprep.mubr.f32.mxu0 0.0
  %v2819 = vand.u32 %v187, 4294901760
  %2820 = vmatmul.mubr.f32.gmra.mrb[0].mxu0 %v2819
  %v2821 = vpop.f32.mrb[0].mxu0
  %v2822 = vadd.f32 %v2313, %v2821
  %v2823 = vpop.f32.mrb[0].mxu0
  %2824 = vmatprep.mubr.f32.mxu0 0.0
  %v2825 = vand.u32 %v190, 4294901760
  %2826 = vmatmul.mubr.f32.gmra.mrb[0].mxu0 %v2825
  %v2827 = vpop.f32.mrb[0].mxu0
  %v2828 = vadd.f32 %v2321, %v2827
  %v2829 = vpop.f32.mrb[0].mxu0
  %2830 = vmatprep.mubr.f32.mxu0 0.0
  %v2831 = vand.u32 %v193, 4294901760
  %2832 = vmatmul.mubr.f32.gmra.mrb[0].mxu0 %v2831
  %v2833 = vpop.f32.mrb[0].mxu0
  %v2834 = vadd.f32 %v2329, %v2833
  %v2835 = vpop.f32.mrb[0].mxu0
  %2836 = vmatprep.mubr.f32.mxu0 0.0
  %v2837 = vand.u32 %v196, 4294901760
  %2838 = vmatmul.mubr.f32.gmra.mrb[0].mxu0 %v2837
  %v2839 = vpop.f32.mrb[0].mxu0
  %v2840 = vadd.f32 %v2337, %v2839
  %v2841 = vpop.f32.mrb[0].mxu0
  %2842 = vmatprep.mubr.f32.mxu0 0.0
  %v2843 = vand.u32 %v199, 4294901760
  %2844 = vmatmul.mubr.f32.gmra.mrb[0].mxu0 %v2843
  %v2845 = vpop.f32.mrb[0].mxu0
  %v2846 = vadd.f32 %v2345, %v2845
  %v2847 = vpop.f32.mrb[0].mxu0
  %2848 = vmatprep.mubr.f32.mxu0 0.0
  %v2849 = vand.u32 %v202, 4294901760
  %2850 = vmatmul.mubr.f32.gmra.mrb[0].mxu0 %v2849
  %v2851 = vpop.f32.mrb[0].mxu0
  %v2852 = vadd.f32 %v2353, %v2851
  %v2853 = vpop.f32.mrb[0].mxu0
  %2854 = vmatprep.mubr.f32.mxu0 0.0
  %v2855 = vand.u32 %v205, 4294901760
  %2856 = vmatmul.mubr.f32.gmra.mrb[0].mxu0 %v2855
  %v2857 = vpop.f32.mrb[0].mxu0
  %v2858 = vadd.f32 %v2361, %v2857
  %v2859 = vpop.f32.mrb[0].mxu0
  %2860 = vmatprep.mubr.f32.mxu0 0.0
  %v2861 = vand.u32 %v208, 4294901760
  %2862 = vmatmul.mubr.f32.gmra.mrb[0].mxu0 %v2861
  %v2863 = vpop.f32.mrb[0].mxu0
  %v2864 = vadd.f32 %v2369, %v2863
  %v2865 = vpop.f32.mrb[0].mxu0
  %2866 = vmatprep.mubr.f32.mxu0 0.0
  %v2867 = vand.u32 %v211, 4294901760
  %2868 = vmatmul.mubr.f32.gmra.mrb[0].mxu0 %v2867
  %v2869 = vpop.f32.mrb[0].mxu0
  %v2870 = vadd.f32 %v2377, %v2869
  %v2871 = vpop.f32.mrb[0].mxu0
  %2872 = vmatprep.mubr.f32.mxu0 0.0
  %v2873 = vand.u32 %v214, 4294901760
  %2874 = vmatmul.mubr.f32.gmra.mrb[0].mxu0 %v2873
  %v2875 = vpop.f32.mrb[0].mxu0
  %v2876 = vadd.f32 %v2385, %v2875
  %v2877 = vpop.f32.mrb[0].mxu0
  %2878 = vmatprep.mubr.f32.mxu0 0.0
  %v2879 = vand.u32 %v217, 4294901760
  %2880 = vmatmul.mubr.f32.gmra.mrb[0].mxu0 %v2879
  %v2881 = vpop.f32.mrb[0].mxu0
  %v2882 = vadd.f32 %v2393, %v2881
  %v2883 = vpop.f32.mrb[0].mxu0
  %2884 = vmatprep.mubr.f32.mxu0 0.0
  %v2885 = vand.u32 %v220, 4294901760
  %2886 = vmatmul.mubr.f32.gmra.mrb[0].mxu0 %v2885
  %v2887 = vpop.f32.mrb[0].mxu0
  %v2888 = vadd.f32 %v2401, %v2887
  %v2889 = vpop.f32.mrb[0].mxu0
  %2890 = vmatprep.mubr.f32.mxu0 0.0
  %v2891 = vand.u32 %v223, 4294901760
  %2892 = vmatmul.mubr.f32.gmra.mrb[0].mxu0 %v2891
  %v2893 = vpop.f32.mrb[0].mxu0
  %v2894 = vadd.f32 %v2409, %v2893
  %v2895 = vpop.f32.mrb[0].mxu0
  %2896 = vmatprep.mubr.f32.mxu0 0.0
  %v2897 = vand.u32 %v226, 4294901760
  %2898 = vmatmul.mubr.f32.gmra.mrb[0].mxu0 %v2897
  %v2899 = vpop.f32.mrb[0].mxu0
  %v2900 = vadd.f32 %v2417, %v2899
  %v2901 = vpop.f32.mrb[0].mxu0
  %2902 = vmatprep.mubr.f32.mxu0 0.0
  %v2903 = vand.u32 %v229, 4294901760
  %2904 = vmatmul.mubr.f32.gmra.mrb[0].mxu0 %v2903
  %v2905 = vpop.f32.mrb[0].mxu0
  %v2906 = vadd.f32 %v2425, %v2905
  %v2907 = vpop.f32.mrb[0].mxu0
  %2908 = vmatprep.mubr.f32.mxu0 0.0
  %v2909 = vand.u32 %v232, 4294901760
  %2910 = vmatmul.mubr.f32.gmra.mrb[0].mxu0 %v2909
  %v2911 = vpop.f32.mrb[0].mxu0
  %v2912 = vadd.f32 %v2433, %v2911
  %v2913 = vpop.f32.mrb[0].mxu0
  %2914 = vmatprep.mubr.f32.mxu0 0.0
  %v2915 = vand.u32 %v235, 4294901760
  %2916 = vmatmul.mubr.f32.gmra.mrb[0].mxu0 %v2915
  %v2917 = vpop.f32.mrb[0].mxu0
  %v2918 = vadd.f32 %v2441, %v2917
  %v2919 = vpop.f32.mrb[0].mxu0
  %2920 = vmatprep.mubr.f32.mxu0 0.0
  %v2921 = vand.u32 %v238, 4294901760
  %2922 = vmatmul.mubr.f32.gmra.mrb[0].mxu0 %v2921
  %v2923 = vpop.f32.mrb[0].mxu0
  %v2924 = vadd.f32 %v2449, %v2923
  %v2925 = vpop.f32.mrb[0].mxu0
  %2926 = vmatprep.mubr.f32.mxu0 0.0
  %v2927 = vand.u32 %v241, 4294901760
  %2928 = vmatmul.mubr.f32.gmra.mrb[0].mxu0 %v2927
  %v2929 = vpop.f32.mrb[0].mxu0
  %v2930 = vadd.f32 %v2457, %v2929
  %v2931 = vpop.f32.mrb[0].mxu0
  %2932 = vmatprep.mubr.f32.mxu0 0.0
  %v2933 = vand.u32 %v244, 4294901760
  %2934 = vmatmul.mubr.f32.gmra.mrb[0].mxu0 %v2933
  %v2935 = vpop.f32.mrb[0].mxu0
  %v2936 = vadd.f32 %v2465, %v2935
  %v2937 = vpop.f32.mrb[0].mxu0
  %2938 = vmatprep.mubr.f32.mxu0 0.0
  %v2939 = vand.u32 %v247, 4294901760
  %2940 = vmatmul.mubr.f32.gmra.mrb[0].mxu0 %v2939
  %v2941 = vpop.f32.mrb[0].mxu0
  %v2942 = vadd.f32 %v2473, %v2941
  %v2943 = vpop.f32.mrb[0].mxu0
  %2944 = vmatprep.mubr.f32.mxu0 0.0
  %v2945 = vand.u32 %v250, 4294901760
  %2946 = vmatmul.mubr.f32.gmra.mrb[0].mxu0 %v2945
  %v2947 = vpop.f32.mrb[0].mxu0
  %v2948 = vadd.f32 %v2481, %v2947
  %v2949 = vpop.f32.mrb[0].mxu0
  %2950 = vmatprep.mubr.f32.mxu0 0.0
  %v2951 = vand.u32 %v253, 4294901760
  %2952 = vmatmul.mubr.f32.gmra.mrb[0].mxu0 %v2951
  %v2953 = vpop.f32.mrb[0].mxu0
  %v2954 = vadd.f32 %v2489, %v2953
  %v2955 = vpop.f32.mrb[0].mxu0
  %2956 = vmatprep.mubr.f32.mxu0 0.0
  %v2957 = vand.u32 %v256, 4294901760
  %2958 = vmatmul.mubr.f32.gmra.mrb[0].mxu0 %v2957
  %v2959 = vpop.f32.mrb[0].mxu0
  %v2960 = vadd.f32 %v2497, %v2959
  %v2961 = vpop.f32.mrb[0].mxu0
  %2962 = vmatprep.mubr.f32.mxu0 0.0
  %v2963 = vand.u32 %v259, 4294901760
  %2964 = vmatmul.mubr.f32.gmra.mrb[0].mxu0 %v2963
  %v2965 = vpop.f32.mrb[0].mxu0
  %v2966 = vadd.f32 %v2505, %v2965
  %v2967 = vpop.f32.mrb[0].mxu0
  %2968 = vmatprep.mubr.f32.mxu0 0.0
  %v2969 = vand.u32 %v262, 4294901760
  %2970 = vmatmul.mubr.f32.gmra.mrb[0].mxu0 %v2969
  %v2971 = vpop.f32.mrb[0].mxu0
  %v2972 = vadd.f32 %v2513, %v2971
  %v2973 = vpop.f32.mrb[0].mxu0
  %2974 = vmatprep.mubr.f32.mxu0 0.0
  %v2975 = vand.u32 %v265, 4294901760
  %2976 = vmatmul.mubr.f32.gmra.mrb[0].mxu0 %v2975
  %v2977 = vpop.f32.mrb[0].mxu0
  %v2978 = vadd.f32 %v2521, %v2977
  %v2979 = vpop.f32.mrb[0].mxu0
  %2980 = vmatprep.mubr.f32.mxu0 0.0
  %v2981 = vand.u32 %v268, 4294901760
  %2982 = vmatmul.mubr.f32.gmra.mrb[0].mxu0 %v2981
  %v2983 = vpop.f32.mrb[0].mxu0
  %v2984 = vadd.f32 %v2529, %v2983
  %v2985 = vpop.f32.mrb[0].mxu0
  %2986 = vdwg.mxu0
  %2987 = vmatprep.subr.mxu0 0.0
  %v2988 = vand.u32 %v75, 4294901760
  %2989 = vmatpush1.msra.mxu0 %v2988
  %2990 = vmatprep.subr.mxu0 0.0
  %v2991 = vand.u32 %v76, 4294901760
  %2992 = vmatpush1.msra.mxu0 %v2991
  %2993 = vmatprep.subr.mxu0 0.0
  %2994 = vmatpush1.msra.mxu0 0.0
  %2995 = vmatprep.subr.mxu0 0.0
  %2996 = vmatpush1.msra.mxu0 0.0
  %2997 = vmatprep.subr.mxu0 0.0
  %2998 = vmatpush1.msra.mxu0 0.0
  %2999 = vmatprep.subr.mxu0 0.0
  %3000 = vmatpush1.msra.mxu0 0.0
  %3001 = vmatprep.subr.mxu0 0.0
  %3002 = vmatpush1.msra.mxu0 0.0
  %3003 = vmatprep.subr.mxu0 0.0
  %3004 = vmatpush1.msra.mxu0 0.0
  %3005 = vmatprep.subr.mxu0 0.0
  %3006 = vmatpush1.msra.mxu0 0.0
  %3007 = vmatprep.subr.mxu0 0.0
  %3008 = vmatpush1.msra.mxu0 0.0
  %3009 = vmatprep.subr.mxu0 0.0
  %3010 = vmatpush1.msra.mxu0 0.0
  %3011 = vmatprep.subr.mxu0 0.0
  %3012 = vmatpush1.msra.mxu0 0.0
  %3013 = vmatprep.subr.mxu0 0.0
  %3014 = vmatpush1.msra.mxu0 0.0
  %3015 = vmatprep.subr.mxu0 0.0
  %3016 = vmatpush1.msra.mxu0 0.0
  %3017 = vmatprep.subr.mxu0 0.0
  %3018 = vmatpush1.msra.mxu0 0.0
  %3019 = vmatprep.subr.mxu0 0.0
  %3020 = vmatpush1.msra.mxu0 0.0
  %3021 = vmatprep.subr.mxu0 0.0
  %3022 = vmatpush1.msra.mxu0 0.0
  %3023 = vmatprep.subr.mxu0 0.0
  %3024 = vmatpush1.msra.mxu0 0.0
  %3025 = vmatprep.subr.mxu0 0.0
  %3026 = vmatpush1.msra.mxu0 0.0
  %3027 = vmatprep.subr.mxu0 0.0
  %3028 = vmatpush1.msra.mxu0 0.0
  %3029 = vmatprep.subr.mxu0 0.0
  %3030 = vmatpush1.msra.mxu0 0.0
  %3031 = vmatprep.subr.mxu0 0.0
  %3032 = vmatpush1.msra.mxu0 0.0
  %3033 = vmatprep.subr.mxu0 0.0
  %3034 = vmatpush1.msra.mxu0 0.0
  %3035 = vmatprep.subr.mxu0 0.0
  %3036 = vmatpush1.msra.mxu0 0.0
  %3037 = vmatprep.subr.mxu0 0.0
  %3038 = vmatpush1.msra.mxu0 0.0
  %3039 = vmatprep.subr.mxu0 0.0
  %3040 = vmatpush1.msra.mxu0 0.0
  %3041 = vmatprep.subr.mxu0 0.0
  %3042 = vmatpush1.msra.mxu0 0.0
  %3043 = vmatprep.subr.mxu0 0.0
  %3044 = vmatpush1.msra.mxu0 0.0
  %3045 = vmatprep.subr.mxu0 0.0
  %3046 = vmatpush1.msra.mxu0 0.0
  %3047 = vmatprep.subr.mxu0 0.0
  %3048 = vmatpush1.msra.mxu0 0.0
  %3049 = vmatprep.subr.mxu0 0.0
  %3050 = vmatpush1.msra.mxu0 0.0
  %3051 = vmatprep.subr.mxu0 0.0
  %3052 = vmatpush1.msra.mxu0 0.0
  %3053 = vmatprep.mubr.f32.mxu0 0.0
  %v3054 = vand.u32 %v79, 4294901760
  %3055 = vmatmul.mubr.f32.gmra.mrb[0].mxu0 %v3054
  %v3056 = vpop.f32.mrb[0].mxu0
  %v3057 = vadd.f32 %v2606, %v3056
  %v3058 = vpop.f32.mrb[0].mxu0
  %3059 = vmatprep.mubr.f32.mxu0 0.0
  %v3060 = vand.u32 %v82, 4294901760
  %3061 = vmatmul.mubr.f32.gmra.mrb[0].mxu0 %v3060
  %v3062 = vpop.f32.mrb[0].mxu0
  %v3063 = vadd.f32 %v2612, %v3062
  %v3064 = vpop.f32.mrb[0].mxu0
  %3065 = vmatprep.mubr.f32.mxu0 0.0
  %v3066 = vand.u32 %v85, 4294901760
  %3067 = vmatmul.mubr.f32.gmra.mrb[0].mxu0 %v3066
  %v3068 = vpop.f32.mrb[0].mxu0
  %v3069 = vadd.f32 %v2618, %v3068
  %v3070 = vpop.f32.mrb[0].mxu0
  %3071 = vmatprep.mubr.f32.mxu0 0.0
  %v3072 = vand.u32 %v88, 4294901760
  %3073 = vmatmul.mubr.f32.gmra.mrb[0].mxu0 %v3072
  %v3074 = vpop.f32.mrb[0].mxu0
  %v3075 = vadd.f32 %v2624, %v3074
  %v3076 = vpop.f32.mrb[0].mxu0
  %3077 = vmatprep.mubr.f32.mxu0 0.0
  %v3078 = vand.u32 %v91, 4294901760
  %3079 = vmatmul.mubr.f32.gmra.mrb[0].mxu0 %v3078
  %v3080 = vpop.f32.mrb[0].mxu0
  %v3081 = vadd.f32 %v2630, %v3080
  %v3082 = vpop.f32.mrb[0].mxu0
  %3083 = vmatprep.mubr.f32.mxu0 0.0
  %v3084 = vand.u32 %v94, 4294901760
  %3085 = vmatmul.mubr.f32.gmra.mrb[0].mxu0 %v3084
  %v3086 = vpop.f32.mrb[0].mxu0
  %v3087 = vadd.f32 %v2636, %v3086
  %v3088 = vpop.f32.mrb[0].mxu0
  %3089 = vmatprep.mubr.f32.mxu0 0.0
  %v3090 = vand.u32 %v97, 4294901760
  %3091 = vmatmul.mubr.f32.gmra.mrb[0].mxu0 %v3090
  %v3092 = vpop.f32.mrb[0].mxu0
  %v3093 = vadd.f32 %v2642, %v3092
  %v3094 = vpop.f32.mrb[0].mxu0
  %3095 = vmatprep.mubr.f32.mxu0 0.0
  %v3096 = vand.u32 %v100, 4294901760
  %3097 = vmatmul.mubr.f32.gmra.mrb[0].mxu0 %v3096
  %v3098 = vpop.f32.mrb[0].mxu0
  %v3099 = vadd.f32 %v2648, %v3098
  %v3100 = vpop.f32.mrb[0].mxu0
  %3101 = vmatprep.mubr.f32.mxu0 0.0
  %v3102 = vand.u32 %v103, 4294901760
  %3103 = vmatmul.mubr.f32.gmra.mrb[0].mxu0 %v3102
  %v3104 = vpop.f32.mrb[0].mxu0
  %v3105 = vadd.f32 %v2654, %v3104
  %v3106 = vpop.f32.mrb[0].mxu0
  %3107 = vmatprep.mubr.f32.mxu0 0.0
  %v3108 = vand.u32 %v106, 4294901760
  %3109 = vmatmul.mubr.f32.gmra.mrb[0].mxu0 %v3108
  %v3110 = vpop.f32.mrb[0].mxu0
  %v3111 = vadd.f32 %v2660, %v3110
  %v3112 = vpop.f32.mrb[0].mxu0
  %3113 = vmatprep.mubr.f32.mxu0 0.0
  %v3114 = vand.u32 %v109, 4294901760
  %3115 = vmatmul.mubr.f32.gmra.mrb[0].mxu0 %v3114
  %v3116 = vpop.f32.mrb[0].mxu0
  %v3117 = vadd.f32 %v2666, %v3116
  %v3118 = vpop.f32.mrb[0].mxu0
  %3119 = vmatprep.mubr.f32.mxu0 0.0
  %v3120 = vand.u32 %v112, 4294901760
  %3121 = vmatmul.mubr.f32.gmra.mrb[0].mxu0 %v3120
  %v3122 = vpop.f32.mrb[0].mxu0
  %v3123 = vadd.f32 %v2672, %v3122
  %v3124 = vpop.f32.mrb[0].mxu0
  %3125 = vmatprep.mubr.f32.mxu0 0.0
  %v3126 = vand.u32 %v115, 4294901760
  %3127 = vmatmul.mubr.f32.gmra.mrb[0].mxu0 %v3126
  %v3128 = vpop.f32.mrb[0].mxu0
  %v3129 = vadd.f32 %v2678, %v3128
  %v3130 = vpop.f32.mrb[0].mxu0
  %3131 = vmatprep.mubr.f32.mxu0 0.0
  %v3132 = vand.u32 %v118, 4294901760
  %3133 = vmatmul.mubr.f32.gmra.mrb[0].mxu0 %v3132
  %v3134 = vpop.f32.mrb[0].mxu0
  %v3135 = vadd.f32 %v2684, %v3134
  %v3136 = vpop.f32.mrb[0].mxu0
  %3137 = vmatprep.mubr.f32.mxu0 0.0
  %v3138 = vand.u32 %v121, 4294901760
  %3139 = vmatmul.mubr.f32.gmra.mrb[0].mxu0 %v3138
  %v3140 = vpop.f32.mrb[0].mxu0
  %v3141 = vadd.f32 %v2690, %v3140
  %v3142 = vpop.f32.mrb[0].mxu0
  %3143 = vmatprep.mubr.f32.mxu0 0.0
  %v3144 = vand.u32 %v124, 4294901760
  %3145 = vmatmul.mubr.f32.gmra.mrb[0].mxu0 %v3144
  %v3146 = vpop.f32.mrb[0].mxu0
  %v3147 = vadd.f32 %v2696, %v3146
  %v3148 = vpop.f32.mrb[0].mxu0
  %3149 = vmatprep.mubr.f32.mxu0 0.0
  %v3150 = vand.u32 %v127, 4294901760
  %3151 = vmatmul.mubr.f32.gmra.mrb[0].mxu0 %v3150
  %v3152 = vpop.f32.mrb[0].mxu0
  %v3153 = vadd.f32 %v2702, %v3152
  %v3154 = vpop.f32.mrb[0].mxu0
  %3155 = vmatprep.mubr.f32.mxu0 0.0
  %v3156 = vand.u32 %v130, 4294901760
  %3157 = vmatmul.mubr.f32.gmra.mrb[0].mxu0 %v3156
  %v3158 = vpop.f32.mrb[0].mxu0
  %v3159 = vadd.f32 %v2708, %v3158
  %v3160 = vpop.f32.mrb[0].mxu0
  %3161 = vmatprep.mubr.f32.mxu0 0.0
  %v3162 = vand.u32 %v133, 4294901760
  %3163 = vmatmul.mubr.f32.gmra.mrb[0].mxu0 %v3162
  %v3164 = vpop.f32.mrb[0].mxu0
  %v3165 = vadd.f32 %v2714, %v3164
  %v3166 = vpop.f32.mrb[0].mxu0
  %3167 = vmatprep.mubr.f32.mxu0 0.0
  %v3168 = vand.u32 %v136, 4294901760
  %3169 = vmatmul.mubr.f32.gmra.mrb[0].mxu0 %v3168
  %v3170 = vpop.f32.mrb[0].mxu0
  %v3171 = vadd.f32 %v2720, %v3170
  %v3172 = vpop.f32.mrb[0].mxu0
  %3173 = vmatprep.mubr.f32.mxu0 0.0
  %v3174 = vand.u32 %v139, 4294901760
  %3175 = vmatmul.mubr.f32.gmra.mrb[0].mxu0 %v3174
  %v3176 = vpop.f32.mrb[0].mxu0
  %v3177 = vadd.f32 %v2726, %v3176
  %v3178 = vpop.f32.mrb[0].mxu0
  %3179 = vmatprep.mubr.f32.mxu0 0.0
  %v3180 = vand.u32 %v142, 4294901760
  %3181 = vmatmul.mubr.f32.gmra.mrb[0].mxu0 %v3180
  %v3182 = vpop.f32.mrb[0].mxu0
  %v3183 = vadd.f32 %v2732, %v3182
  %v3184 = vpop.f32.mrb[0].mxu0
  %3185 = vmatprep.mubr.f32.mxu0 0.0
  %v3186 = vand.u32 %v145, 4294901760
  %3187 = vmatmul.mubr.f32.gmra.mrb[0].mxu0 %v3186
  %v3188 = vpop.f32.mrb[0].mxu0
  %v3189 = vadd.f32 %v2738, %v3188
  %v3190 = vpop.f32.mrb[0].mxu0
  %3191 = vmatprep.mubr.f32.mxu0 0.0
  %v3192 = vand.u32 %v148, 4294901760
  %3193 = vmatmul.mubr.f32.gmra.mrb[0].mxu0 %v3192
  %v3194 = vpop.f32.mrb[0].mxu0
  %v3195 = vadd.f32 %v2744, %v3194
  %v3196 = vpop.f32.mrb[0].mxu0
  %3197 = vmatprep.mubr.f32.mxu0 0.0
  %v3198 = vand.u32 %v151, 4294901760
  %3199 = vmatmul.mubr.f32.gmra.mrb[0].mxu0 %v3198
  %v3200 = vpop.f32.mrb[0].mxu0
  %v3201 = vadd.f32 %v2750, %v3200
  %v3202 = vpop.f32.mrb[0].mxu0
  %3203 = vmatprep.mubr.f32.mxu0 0.0
  %v3204 = vand.u32 %v154, 4294901760
  %3205 = vmatmul.mubr.f32.gmra.mrb[0].mxu0 %v3204
  %v3206 = vpop.f32.mrb[0].mxu0
  %v3207 = vadd.f32 %v2756, %v3206
  %v3208 = vpop.f32.mrb[0].mxu0
  %3209 = vmatprep.mubr.f32.mxu0 0.0
  %v3210 = vand.u32 %v157, 4294901760
  %3211 = vmatmul.mubr.f32.gmra.mrb[0].mxu0 %v3210
  %v3212 = vpop.f32.mrb[0].mxu0
  %v3213 = vadd.f32 %v2762, %v3212
  %v3214 = vpop.f32.mrb[0].mxu0
  %3215 = vmatprep.mubr.f32.mxu0 0.0
  %v3216 = vand.u32 %v160, 4294901760
  %3217 = vmatmul.mubr.f32.gmra.mrb[0].mxu0 %v3216
  %v3218 = vpop.f32.mrb[0].mxu0
  %v3219 = vadd.f32 %v2768, %v3218
  %v3220 = vpop.f32.mrb[0].mxu0
  %3221 = vmatprep.mubr.f32.mxu0 0.0
  %v3222 = vand.u32 %v163, 4294901760
  %3223 = vmatmul.mubr.f32.gmra.mrb[0].mxu0 %v3222
  %v3224 = vpop.f32.mrb[0].mxu0
  %v3225 = vadd.f32 %v2774, %v3224
  %v3226 = vpop.f32.mrb[0].mxu0
  %3227 = vmatprep.mubr.f32.mxu0 0.0
  %v3228 = vand.u32 %v166, 4294901760
  %3229 = vmatmul.mubr.f32.gmra.mrb[0].mxu0 %v3228
  %v3230 = vpop.f32.mrb[0].mxu0
  %v3231 = vadd.f32 %v2780, %v3230
  %v3232 = vpop.f32.mrb[0].mxu0
  %3233 = vmatprep.mubr.f32.mxu0 0.0
  %v3234 = vand.u32 %v169, 4294901760
  %3235 = vmatmul.mubr.f32.gmra.mrb[0].mxu0 %v3234
  %v3236 = vpop.f32.mrb[0].mxu0
  %v3237 = vadd.f32 %v2786, %v3236
  %v3238 = vpop.f32.mrb[0].mxu0
  %3239 = vmatprep.mubr.f32.mxu0 0.0
  %v3240 = vand.u32 %v172, 4294901760
  %3241 = vmatmul.mubr.f32.gmra.mrb[0].mxu0 %v3240
  %v3242 = vpop.f32.mrb[0].mxu0
  %v3243 = vadd.f32 %v2792, %v3242
  %v3244 = vpop.f32.mrb[0].mxu0
  %3245 = vmatprep.mubr.f32.mxu0 0.0
  %v3246 = vand.u32 %v175, 4294901760
  %3247 = vmatmul.mubr.f32.gmra.mrb[0].mxu0 %v3246
  %v3248 = vpop.f32.mrb[0].mxu0
  %v3249 = vadd.f32 %v2798, %v3248
  %v3250 = vpop.f32.mrb[0].mxu0
  %3251 = vmatprep.mubr.f32.mxu0 0.0
  %v3252 = vand.u32 %v178, 4294901760
  %3253 = vmatmul.mubr.f32.gmra.mrb[0].mxu0 %v3252
  %v3254 = vpop.f32.mrb[0].mxu0
  %v3255 = vadd.f32 %v2804, %v3254
  %v3256 = vpop.f32.mrb[0].mxu0
  %3257 = vmatprep.mubr.f32.mxu0 0.0
  %v3258 = vand.u32 %v181, 4294901760
  %3259 = vmatmul.mubr.f32.gmra.mrb[0].mxu0 %v3258
  %v3260 = vpop.f32.mrb[0].mxu0
  %v3261 = vadd.f32 %v2810, %v3260
  %v3262 = vpop.f32.mrb[0].mxu0
  %3263 = vmatprep.mubr.f32.mxu0 0.0
  %v3264 = vand.u32 %v184, 4294901760
  %3265 = vmatmul.mubr.f32.gmra.mrb[0].mxu0 %v3264
  %v3266 = vpop.f32.mrb[0].mxu0
  %v3267 = vadd.f32 %v2816, %v3266
  %v3268 = vpop.f32.mrb[0].mxu0
  %3269 = vmatprep.mubr.f32.mxu0 0.0
  %v3270 = vand.u32 %v187, 4294901760
  %3271 = vmatmul.mubr.f32.gmra.mrb[0].mxu0 %v3270
  %v3272 = vpop.f32.mrb[0].mxu0
  %v3273 = vadd.f32 %v2822, %v3272
  %v3274 = vpop.f32.mrb[0].mxu0
  %3275 = vmatprep.mubr.f32.mxu0 0.0
  %v3276 = vand.u32 %v190, 4294901760
  %3277 = vmatmul.mubr.f32.gmra.mrb[0].mxu0 %v3276
  %v3278 = vpop.f32.mrb[0].mxu0
  %v3279 = vadd.f32 %v2828, %v3278
  %v3280 = vpop.f32.mrb[0].mxu0
  %3281 = vmatprep.mubr.f32.mxu0 0.0
  %v3282 = vand.u32 %v193, 4294901760
  %3283 = vmatmul.mubr.f32.gmra.mrb[0].mxu0 %v3282
  %v3284 = vpop.f32.mrb[0].mxu0
  %v3285 = vadd.f32 %v2834, %v3284
  %v3286 = vpop.f32.mrb[0].mxu0
  %3287 = vmatprep.mubr.f32.mxu0 0.0
  %v3288 = vand.u32 %v196, 4294901760
  %3289 = vmatmul.mubr.f32.gmra.mrb[0].mxu0 %v3288
  %v3290 = vpop.f32.mrb[0].mxu0
  %v3291 = vadd.f32 %v2840, %v3290
  %v3292 = vpop.f32.mrb[0].mxu0
  %3293 = vmatprep.mubr.f32.mxu0 0.0
  %v3294 = vand.u32 %v199, 4294901760
  %3295 = vmatmul.mubr.f32.gmra.mrb[0].mxu0 %v3294
  %v3296 = vpop.f32.mrb[0].mxu0
  %v3297 = vadd.f32 %v2846, %v3296
  %v3298 = vpop.f32.mrb[0].mxu0
  %3299 = vmatprep.mubr.f32.mxu0 0.0
  %v3300 = vand.u32 %v202, 4294901760
  %3301 = vmatmul.mubr.f32.gmra.mrb[0].mxu0 %v3300
  %v3302 = vpop.f32.mrb[0].mxu0
  %v3303 = vadd.f32 %v2852, %v3302
  %v3304 = vpop.f32.mrb[0].mxu0
  %3305 = vmatprep.mubr.f32.mxu0 0.0
  %v3306 = vand.u32 %v205, 4294901760
  %3307 = vmatmul.mubr.f32.gmra.mrb[0].mxu0 %v3306
  %v3308 = vpop.f32.mrb[0].mxu0
  %v3309 = vadd.f32 %v2858, %v3308
  %v3310 = vpop.f32.mrb[0].mxu0
  %3311 = vmatprep.mubr.f32.mxu0 0.0
  %v3312 = vand.u32 %v208, 4294901760
  %3313 = vmatmul.mubr.f32.gmra.mrb[0].mxu0 %v3312
  %v3314 = vpop.f32.mrb[0].mxu0
  %v3315 = vadd.f32 %v2864, %v3314
  %v3316 = vpop.f32.mrb[0].mxu0
  %3317 = vmatprep.mubr.f32.mxu0 0.0
  %v3318 = vand.u32 %v211, 4294901760
  %3319 = vmatmul.mubr.f32.gmra.mrb[0].mxu0 %v3318
  %v3320 = vpop.f32.mrb[0].mxu0
  %v3321 = vadd.f32 %v2870, %v3320
  %v3322 = vpop.f32.mrb[0].mxu0
  %3323 = vmatprep.mubr.f32.mxu0 0.0
  %v3324 = vand.u32 %v214, 4294901760
  %3325 = vmatmul.mubr.f32.gmra.mrb[0].mxu0 %v3324
  %v3326 = vpop.f32.mrb[0].mxu0
  %v3327 = vadd.f32 %v2876, %v3326
  %v3328 = vpop.f32.mrb[0].mxu0
  %3329 = vmatprep.mubr.f32.mxu0 0.0
  %v3330 = vand.u32 %v217, 4294901760
  %3331 = vmatmul.mubr.f32.gmra.mrb[0].mxu0 %v3330
  %v3332 = vpop.f32.mrb[0].mxu0
  %v3333 = vadd.f32 %v2882, %v3332
  %v3334 = vpop.f32.mrb[0].mxu0
  %3335 = vmatprep.mubr.f32.mxu0 0.0
  %v3336 = vand.u32 %v220, 4294901760
  %3337 = vmatmul.mubr.f32.gmra.mrb[0].mxu0 %v3336
  %v3338 = vpop.f32.mrb[0].mxu0
  %v3339 = vadd.f32 %v2888, %v3338
  %v3340 = vpop.f32.mrb[0].mxu0
  %3341 = vmatprep.mubr.f32.mxu0 0.0
  %v3342 = vand.u32 %v223, 4294901760
  %3343 = vmatmul.mubr.f32.gmra.mrb[0].mxu0 %v3342
  %v3344 = vpop.f32.mrb[0].mxu0
  %v3345 = vadd.f32 %v2894, %v3344
  %v3346 = vpop.f32.mrb[0].mxu0
  %3347 = vmatprep.mubr.f32.mxu0 0.0
  %v3348 = vand.u32 %v226, 4294901760
  %3349 = vmatmul.mubr.f32.gmra.mrb[0].mxu0 %v3348
  %v3350 = vpop.f32.mrb[0].mxu0
  %v3351 = vadd.f32 %v2900, %v3350
  %v3352 = vpop.f32.mrb[0].mxu0
  %3353 = vmatprep.mubr.f32.mxu0 0.0
  %v3354 = vand.u32 %v229, 4294901760
  %3355 = vmatmul.mubr.f32.gmra.mrb[0].mxu0 %v3354
  %v3356 = vpop.f32.mrb[0].mxu0
  %v3357 = vadd.f32 %v2906, %v3356
  %v3358 = vpop.f32.mrb[0].mxu0
  %3359 = vmatprep.mubr.f32.mxu0 0.0
  %v3360 = vand.u32 %v232, 4294901760
  %3361 = vmatmul.mubr.f32.gmra.mrb[0].mxu0 %v3360
  %v3362 = vpop.f32.mrb[0].mxu0
  %v3363 = vadd.f32 %v2912, %v3362
  %v3364 = vpop.f32.mrb[0].mxu0
  %3365 = vmatprep.mubr.f32.mxu0 0.0
  %v3366 = vand.u32 %v235, 4294901760
  %3367 = vmatmul.mubr.f32.gmra.mrb[0].mxu0 %v3366
  %v3368 = vpop.f32.mrb[0].mxu0
  %v3369 = vadd.f32 %v2918, %v3368
  %v3370 = vpop.f32.mrb[0].mxu0
  %3371 = vmatprep.mubr.f32.mxu0 0.0
  %v3372 = vand.u32 %v238, 4294901760
  %3373 = vmatmul.mubr.f32.gmra.mrb[0].mxu0 %v3372
  %v3374 = vpop.f32.mrb[0].mxu0
  %v3375 = vadd.f32 %v2924, %v3374
  %v3376 = vpop.f32.mrb[0].mxu0
  %3377 = vmatprep.mubr.f32.mxu0 0.0
  %v3378 = vand.u32 %v241, 4294901760
  %3379 = vmatmul.mubr.f32.gmra.mrb[0].mxu0 %v3378
  %v3380 = vpop.f32.mrb[0].mxu0
  %v3381 = vadd.f32 %v2930, %v3380
  %v3382 = vpop.f32.mrb[0].mxu0
  %3383 = vmatprep.mubr.f32.mxu0 0.0
  %v3384 = vand.u32 %v244, 4294901760
  %3385 = vmatmul.mubr.f32.gmra.mrb[0].mxu0 %v3384
  %v3386 = vpop.f32.mrb[0].mxu0
  %v3387 = vadd.f32 %v2936, %v3386
  %v3388 = vpop.f32.mrb[0].mxu0
  %3389 = vmatprep.mubr.f32.mxu0 0.0
  %v3390 = vand.u32 %v247, 4294901760
  %3391 = vmatmul.mubr.f32.gmra.mrb[0].mxu0 %v3390
  %v3392 = vpop.f32.mrb[0].mxu0
  %v3393 = vadd.f32 %v2942, %v3392
  %v3394 = vpop.f32.mrb[0].mxu0
  %3395 = vmatprep.mubr.f32.mxu0 0.0
  %v3396 = vand.u32 %v250, 4294901760
  %3397 = vmatmul.mubr.f32.gmra.mrb[0].mxu0 %v3396
  %v3398 = vpop.f32.mrb[0].mxu0
  %v3399 = vadd.f32 %v2948, %v3398
  %v3400 = vpop.f32.mrb[0].mxu0
  %3401 = vmatprep.mubr.f32.mxu0 0.0
  %v3402 = vand.u32 %v253, 4294901760
  %3403 = vmatmul.mubr.f32.gmra.mrb[0].mxu0 %v3402
  %v3404 = vpop.f32.mrb[0].mxu0
  %v3405 = vadd.f32 %v2954, %v3404
  %v3406 = vpop.f32.mrb[0].mxu0
  %3407 = vmatprep.mubr.f32.mxu0 0.0
  %v3408 = vand.u32 %v256, 4294901760
  %3409 = vmatmul.mubr.f32.gmra.mrb[0].mxu0 %v3408
  %v3410 = vpop.f32.mrb[0].mxu0
  %v3411 = vadd.f32 %v2960, %v3410
  %v3412 = vpop.f32.mrb[0].mxu0
  %3413 = vmatprep.mubr.f32.mxu0 0.0
  %v3414 = vand.u32 %v259, 4294901760
  %3415 = vmatmul.mubr.f32.gmra.mrb[0].mxu0 %v3414
  %v3416 = vpop.f32.mrb[0].mxu0
  %v3417 = vadd.f32 %v2966, %v3416
  %v3418 = vpop.f32.mrb[0].mxu0
  %3419 = vmatprep.mubr.f32.mxu0 0.0
  %v3420 = vand.u32 %v262, 4294901760
  %3421 = vmatmul.mubr.f32.gmra.mrb[0].mxu0 %v3420
  %v3422 = vpop.f32.mrb[0].mxu0
  %v3423 = vadd.f32 %v2972, %v3422
  %v3424 = vpop.f32.mrb[0].mxu0
  %3425 = vmatprep.mubr.f32.mxu0 0.0
  %v3426 = vand.u32 %v265, 4294901760
  %3427 = vmatmul.mubr.f32.gmra.mrb[0].mxu0 %v3426
  %v3428 = vpop.f32.mrb[0].mxu0
  %v3429 = vadd.f32 %v2978, %v3428
  %v3430 = vpop.f32.mrb[0].mxu0
  %3431 = vmatprep.mubr.f32.mxu0 0.0
  %v3432 = vand.u32 %v268, 4294901760
  %3433 = vmatmul.mubr.f32.gmra.mrb[0].mxu0 %v3432
  %v3434 = vpop.f32.mrb[0].mxu0
  %v3435 = vadd.f32 %v2984, %v3434
  %v3436 = vpop.f32.mrb[0].mxu0
  %3437 = vdwg.mxu0
  %v3438 = vmax.f32 %v3057, 0.0
  %v3439 = vmax.f32 %v3063, 0.0
  %v3440 = vmax.f32 %v3069, 0.0
  %v3441 = vmax.f32 %v3075, 0.0
  %v3442 = vmax.f32 %v3081, 0.0
  %v3443 = vmax.f32 %v3087, 0.0
  %v3444 = vmax.f32 %v3093, 0.0
  %v3445 = vmax.f32 %v3099, 0.0
  %v3446 = vmax.f32 %v3105, 0.0
  %v3447 = vmax.f32 %v3111, 0.0
  %v3448 = vmax.f32 %v3117, 0.0
  %v3449 = vmax.f32 %v3123, 0.0
  %v3450 = vmax.f32 %v3129, 0.0
  %v3451 = vmax.f32 %v3135, 0.0
  %v3452 = vmax.f32 %v3141, 0.0
  %v3453 = vmax.f32 %v3147, 0.0
  %v3454 = vmax.f32 %v3153, 0.0
  %v3455 = vmax.f32 %v3159, 0.0
  %v3456 = vmax.f32 %v3165, 0.0
  %v3457 = vmax.f32 %v3171, 0.0
  %v3458 = vmax.f32 %v3177, 0.0
  %v3459 = vmax.f32 %v3183, 0.0
  %v3460 = vmax.f32 %v3189, 0.0
  %v3461 = vmax.f32 %v3195, 0.0
  %v3462 = vmax.f32 %v3201, 0.0
  %v3463 = vmax.f32 %v3207, 0.0
  %v3464 = vmax.f32 %v3213, 0.0
  %v3465 = vmax.f32 %v3219, 0.0
  %v3466 = vmax.f32 %v3225, 0.0
  %v3467 = vmax.f32 %v3231, 0.0
  %v3468 = vmax.f32 %v3237, 0.0
  %v3469 = vmax.f32 %v3243, 0.0
  %v3470 = vmax.f32 %v3249, 0.0
  %v3471 = vmax.f32 %v3255, 0.0
  %v3472 = vmax.f32 %v3261, 0.0
  %v3473 = vmax.f32 %v3267, 0.0
  %v3474 = vmax.f32 %v3273, 0.0
  %v3475 = vmax.f32 %v3279, 0.0
  %v3476 = vmax.f32 %v3285, 0.0
  %v3477 = vmax.f32 %v3291, 0.0
  %v3478 = vmax.f32 %v3297, 0.0
  %v3479 = vmax.f32 %v3303, 0.0
  %v3480 = vmax.f32 %v3309, 0.0
  %v3481 = vmax.f32 %v3315, 0.0
  %v3482 = vmax.f32 %v3321, 0.0
  %v3483 = vmax.f32 %v3327, 0.0
  %v3484 = vmax.f32 %v3333, 0.0
  %v3485 = vmax.f32 %v3339, 0.0
  %v3486 = vmax.f32 %v3345, 0.0
  %v3487 = vmax.f32 %v3351, 0.0
  %v3488 = vmax.f32 %v3357, 0.0
  %v3489 = vmax.f32 %v3363, 0.0
  %v3490 = vmax.f32 %v3369, 0.0
  %v3491 = vmax.f32 %v3375, 0.0
  %v3492 = vmax.f32 %v3381, 0.0
  %v3493 = vmax.f32 %v3387, 0.0
  %v3494 = vmax.f32 %v3393, 0.0
  %v3495 = vmax.f32 %v3399, 0.0
  %v3496 = vmax.f32 %v3405, 0.0
  %v3497 = vmax.f32 %v3411, 0.0
  %v3498 = vmax.f32 %v3417, 0.0
  %v3499 = vmax.f32 %v3423, 0.0
  %v3500 = vmax.f32 %v3429, 0.0
  %v3501 = vmax.f32 %v3435, 0.0
  %3502 = vst [vmem:[%s2] sm:$0xff] %v3438
  %3503 = vst [vmem:[%s2 + $0x8] sm:$0xff] %v3439
  %3504 = vst [vmem:[%s2 + $0x10] sm:$0xff] %v3440
  %3505 = vst [vmem:[%s2 + $0x18] sm:$0xff] %v3441
  %3506 = vst [vmem:[%s2 + $0x20] sm:$0xff] %v3442
  %3507 = vst [vmem:[%s2 + $0x28] sm:$0xff] %v3443
  %3508 = vst [vmem:[%s2 + $0x30] sm:$0xff] %v3444
  %3509 = vst [vmem:[%s2 + $0x38] sm:$0xff] %v3445
  %3510 = vst [vmem:[%s2 + $0x40] sm:$0xff] %v3446
  %3511 = vst [vmem:[%s2 + $0x48] sm:$0xff] %v3447
  %3512 = vst [vmem:[%s2 + $0x50] sm:$0xff] %v3448
  %3513 = vst [vmem:[%s2 + $0x58] sm:$0xff] %v3449
  %3514 = vst [vmem:[%s2 + $0x60] sm:$0xff] %v3450
  %3515 = vst [vmem:[%s2 + $0x68] sm:$0xff] %v3451
  %3516 = vst [vmem:[%s2 + $0x70] sm:$0xff] %v3452
  %3517 = vst [vmem:[%s2 + $0x78] sm:$0xff] %v3453
  %3518 = vst [vmem:[%s2 + $0x80] sm:$0xff] %v3454
  %3519 = vst [vmem:[%s2 + $0x88] sm:$0xff] %v3455
  %3520 = vst [vmem:[%s2 + $0x90] sm:$0xff] %v3456
  %3521 = vst [vmem:[%s2 + $0x98] sm:$0xff] %v3457
  %3522 = vst [vmem:[%s2 + $0xa0] sm:$0xff] %v3458
  %3523 = vst [vmem:[%s2 + $0xa8] sm:$0xff] %v3459
  %3524 = vst [vmem:[%s2 + $0xb0] sm:$0xff] %v3460
  %3525 = vst [vmem:[%s2 + $0xb8] sm:$0xff] %v3461
  %3526 = vst [vmem:[%s2 + $0xc0] sm:$0xff] %v3462
  %3527 = vst [vmem:[%s2 + $0xc8] sm:$0xff] %v3463
  %3528 = vst [vmem:[%s2 + $0xd0] sm:$0xff] %v3464
  %3529 = vst [vmem:[%s2 + $0xd8] sm:$0xff] %v3465
  %3530 = vst [vmem:[%s2 + $0xe0] sm:$0xff] %v3466
  %3531 = vst [vmem:[%s2 + $0xe8] sm:$0xff] %v3467
  %3532 = vst [vmem:[%s2 + $0xf0] sm:$0xff] %v3468
  %3533 = vst [vmem:[%s2 + $0xf8] sm:$0xff] %v3469
  %3534 = vst [vmem:[%s2 + $0x100] sm:$0xff] %v3470
  %3535 = vst [vmem:[%s2 + $0x108] sm:$0xff] %v3471
  %3536 = vst [vmem:[%s2 + $0x110] sm:$0xff] %v3472
  %3537 = vst [vmem:[%s2 + $0x118] sm:$0xff] %v3473
  %3538 = vst [vmem:[%s2 + $0x120] sm:$0xff] %v3474
  %3539 = vst [vmem:[%s2 + $0x128] sm:$0xff] %v3475
  %3540 = vst [vmem:[%s2 + $0x130] sm:$0xff] %v3476
  %3541 = vst [vmem:[%s2 + $0x138] sm:$0xff] %v3477
  %3542 = vst [vmem:[%s2 + $0x140] sm:$0xff] %v3478
  %3543 = vst [vmem:[%s2 + $0x148] sm:$0xff] %v3479
  %3544 = vst [vmem:[%s2 + $0x150] sm:$0xff] %v3480
  %3545 = vst [vmem:[%s2 + $0x158] sm:$0xff] %v3481
  %3546 = vst [vmem:[%s2 + $0x160] sm:$0xff] %v3482
  %3547 = vst [vmem:[%s2 + $0x168] sm:$0xff] %v3483
  %3548 = vst [vmem:[%s2 + $0x170] sm:$0xff] %v3484
  %3549 = vst [vmem:[%s2 + $0x178] sm:$0xff] %v3485
  %3550 = vst [vmem:[%s2 + $0x180] sm:$0xff] %v3486
  %3551 = vst [vmem:[%s2 + $0x188] sm:$0xff] %v3487
  %3552 = vst [vmem:[%s2 + $0x190] sm:$0xff] %v3488
  %3553 = vst [vmem:[%s2 + $0x198] sm:$0xff] %v3489
  %3554 = vst [vmem:[%s2 + $0x1a0] sm:$0xff] %v3490
  %3555 = vst [vmem:[%s2 + $0x1a8] sm:$0xff] %v3491
  %3556 = vst [vmem:[%s2 + $0x1b0] sm:$0xff] %v3492
  %3557 = vst [vmem:[%s2 + $0x1b8] sm:$0xff] %v3493
  %3558 = vst [vmem:[%s2 + $0x1c0] sm:$0xff] %v3494
  %3559 = vst [vmem:[%s2 + $0x1c8] sm:$0xff] %v3495
  %3560 = vst [vmem:[%s2 + $0x1d0] sm:$0xff] %v3496
  %3561 = vst [vmem:[%s2 + $0x1d8] sm:$0xff] %v3497
  %3562 = vst [vmem:[%s2 + $0x1e0] sm:$0xff] %v3498
  %3563 = vst [vmem:[%s2 + $0x1e8] sm:$0xff] %v3499
  %3564 = vst [vmem:[%s2 + $0x1f0] sm:$0xff] %v3500
  %3565 = vst [vmem:[%s2 + $0x1f8] sm:$0xff] %v3501
  %s3566 = scalar_lea.vmem %s0, 16
  %v3567 = vld [vmem:[%s3566] sm:$0xff]
  %v3568 = vld [vmem:[%s3566 + $0x8] sm:$0xff]
  %3569 = vmatprep.subr.mxu0 0.0
  %v3570 = vand.u32 %v3567, 4294901760
  %3571 = vmatpush1.msra.mxu0 %v3570
  %3572 = vmatprep.subr.mxu0 0.0
  %v3573 = vand.u32 %v3568, 4294901760
  %3574 = vmatpush1.msra.mxu0 %v3573
  %3575 = vmatprep.subr.mxu0 0.0
  %3576 = vmatpush1.msra.mxu0 0.0
  %3577 = vmatprep.subr.mxu0 0.0
  %3578 = vmatpush1.msra.mxu0 0.0
  %3579 = vmatprep.subr.mxu0 0.0
  %3580 = vmatpush1.msra.mxu0 0.0
  %3581 = vmatprep.subr.mxu0 0.0
  %3582 = vmatpush1.msra.mxu0 0.0
  %3583 = vmatprep.subr.mxu0 0.0
  %3584 = vmatpush1.msra.mxu0 0.0
  %3585 = vmatprep.subr.mxu0 0.0
  %3586 = vmatpush1.msra.mxu0 0.0
  %3587 = vmatprep.subr.mxu0 0.0
  %3588 = vmatpush1.msra.mxu0 0.0
  %3589 = vmatprep.subr.mxu0 0.0
  %3590 = vmatpush1.msra.mxu0 0.0
  %3591 = vmatprep.subr.mxu0 0.0
  %3592 = vmatpush1.msra.mxu0 0.0
  %3593 = vmatprep.subr.mxu0 0.0
  %3594 = vmatpush1.msra.mxu0 0.0
  %3595 = vmatprep.subr.mxu0 0.0
  %3596 = vmatpush1.msra.mxu0 0.0
  %3597 = vmatprep.subr.mxu0 0.0
  %3598 = vmatpush1.msra.mxu0 0.0
  %3599 = vmatprep.subr.mxu0 0.0
  %3600 = vmatpush1.msra.mxu0 0.0
  %3601 = vmatprep.subr.mxu0 0.0
  %3602 = vmatpush1.msra.mxu0 0.0
  %3603 = vmatprep.subr.mxu0 0.0
  %3604 = vmatpush1.msra.mxu0 0.0
  %3605 = vmatprep.subr.mxu0 0.0
  %3606 = vmatpush1.msra.mxu0 0.0
  %3607 = vmatprep.subr.mxu0 0.0
  %3608 = vmatpush1.msra.mxu0 0.0
  %3609 = vmatprep.subr.mxu0 0.0
  %3610 = vmatpush1.msra.mxu0 0.0
  %3611 = vmatprep.subr.mxu0 0.0
  %3612 = vmatpush1.msra.mxu0 0.0
  %3613 = vmatprep.subr.mxu0 0.0
  %3614 = vmatpush1.msra.mxu0 0.0
  %3615 = vmatprep.subr.mxu0 0.0
  %3616 = vmatpush1.msra.mxu0 0.0
  %3617 = vmatprep.subr.mxu0 0.0
  %3618 = vmatpush1.msra.mxu0 0.0
  %3619 = vmatprep.subr.mxu0 0.0
  %3620 = vmatpush1.msra.mxu0 0.0
  %3621 = vmatprep.subr.mxu0 0.0
  %3622 = vmatpush1.msra.mxu0 0.0
  %3623 = vmatprep.subr.mxu0 0.0
  %3624 = vmatpush1.msra.mxu0 0.0
  %3625 = vmatprep.subr.mxu0 0.0
  %3626 = vmatpush1.msra.mxu0 0.0
  %3627 = vmatprep.subr.mxu0 0.0
  %3628 = vmatpush1.msra.mxu0 0.0
  %3629 = vmatprep.subr.mxu0 0.0
  %3630 = vmatpush1.msra.mxu0 0.0
  %3631 = vmatprep.subr.mxu0 0.0
  %3632 = vmatpush1.msra.mxu0 0.0
  %3633 = vmatprep.subr.mxu0 0.0
  %3634 = vmatpush1.msra.mxu0 0.0
  %3635 = vmatprep.mubr.f32.mxu0 0.0
  %v3636 = vand.u32 %v79, 4294901760
  %v3637 = vsub.f32 %v79, %v3636
  %v3638 = vand.u32 %v3637, 4294901760
  %v3639 = vsub.f32 %v3637, %v3638
  %v3640 = vand.u32 %v3639, 4294901760
  %3641 = vmatmul.mubr.f32.gmra.mrb[0].mxu0 %v3640
  %v3642 = vpop.f32.mrb[0].mxu0
  %v3643 = vadd.f32 0.0, %v3642
  %v3644 = vpop.f32.mrb[0].mxu0
  %3645 = vmatprep.mubr.f32.mxu0 0.0
  %v3646 = vand.u32 %v82, 4294901760
  %v3647 = vsub.f32 %v82, %v3646
  %v3648 = vand.u32 %v3647, 4294901760
  %v3649 = vsub.f32 %v3647, %v3648
  %v3650 = vand.u32 %v3649, 4294901760
  %3651 = vmatmul.mubr.f32.gmra.mrb[0].mxu0 %v3650
  %v3652 = vpop.f32.mrb[0].mxu0
  %v3653 = vadd.f32 0.0, %v3652
  %v3654 = vpop.f32.mrb[0].mxu0
  %3655 = vmatprep.mubr.f32.mxu0 0.0
  %v3656 = vand.u32 %v85, 4294901760
  %v3657 = vsub.f32 %v85, %v3656
  %v3658 = vand.u32 %v3657, 4294901760
  %v3659 = vsub.f32 %v3657, %v3658
  %v3660 = vand.u32 %v3659, 4294901760
  %3661 = vmatmul.mubr.f32.gmra.mrb[0].mxu0 %v3660
  %v3662 = vpop.f32.mrb[0].mxu0
  %v3663 = vadd.f32 0.0, %v3662
  %v3664 = vpop.f32.mrb[0].mxu0
  %3665 = vmatprep.mubr.f32.mxu0 0.0
  %v3666 = vand.u32 %v88, 4294901760
  %v3667 = vsub.f32 %v88, %v3666
  %v3668 = vand.u32 %v3667, 4294901760
  %v3669 = vsub.f32 %v3667, %v3668
  %v3670 = vand.u32 %v3669, 4294901760
  %3671 = vmatmul.mubr.f32.gmra.mrb[0].mxu0 %v3670
  %v3672 = vpop.f32.mrb[0].mxu0
  %v3673 = vadd.f32 0.0, %v3672
  %v3674 = vpop.f32.mrb[0].mxu0
  %3675 = vmatprep.mubr.f32.mxu0 0.0
  %v3676 = vand.u32 %v91, 4294901760
  %v3677 = vsub.f32 %v91, %v3676
  %v3678 = vand.u32 %v3677, 4294901760
  %v3679 = vsub.f32 %v3677, %v3678
  %v3680 = vand.u32 %v3679, 4294901760
  %3681 = vmatmul.mubr.f32.gmra.mrb[0].mxu0 %v3680
  %v3682 = vpop.f32.mrb[0].mxu0
  %v3683 = vadd.f32 0.0, %v3682
  %v3684 = vpop.f32.mrb[0].mxu0
  %3685 = vmatprep.mubr.f32.mxu0 0.0
  %v3686 = vand.u32 %v94, 4294901760
  %v3687 = vsub.f32 %v94, %v3686
  %v3688 = vand.u32 %v3687, 4294901760
  %v3689 = vsub.f32 %v3687, %v3688
  %v3690 = vand.u32 %v3689, 4294901760
  %3691 = vmatmul.mubr.f32.gmra.mrb[0].mxu0 %v3690
  %v3692 = vpop.f32.mrb[0].mxu0
  %v3693 = vadd.f32 0.0, %v3692
  %v3694 = vpop.f32.mrb[0].mxu0
  %3695 = vmatprep.mubr.f32.mxu0 0.0
  %v3696 = vand.u32 %v97, 4294901760
  %v3697 = vsub.f32 %v97, %v3696
  %v3698 = vand.u32 %v3697, 4294901760
  %v3699 = vsub.f32 %v3697, %v3698
  %v3700 = vand.u32 %v3699, 4294901760
  %3701 = vmatmul.mubr.f32.gmra.mrb[0].mxu0 %v3700
  %v3702 = vpop.f32.mrb[0].mxu0
  %v3703 = vadd.f32 0.0, %v3702
  %v3704 = vpop.f32.mrb[0].mxu0
  %3705 = vmatprep.mubr.f32.mxu0 0.0
  %v3706 = vand.u32 %v100, 4294901760
  %v3707 = vsub.f32 %v100, %v3706
  %v3708 = vand.u32 %v3707, 4294901760
  %v3709 = vsub.f32 %v3707, %v3708
  %v3710 = vand.u32 %v3709, 4294901760
  %3711 = vmatmul.mubr.f32.gmra.mrb[0].mxu0 %v3710
  %v3712 = vpop.f32.mrb[0].mxu0
  %v3713 = vadd.f32 0.0, %v3712
  %v3714 = vpop.f32.mrb[0].mxu0
  %3715 = vmatprep.mubr.f32.mxu0 0.0
  %v3716 = vand.u32 %v103, 4294901760
  %v3717 = vsub.f32 %v103, %v3716
  %v3718 = vand.u32 %v3717, 4294901760
  %v3719 = vsub.f32 %v3717, %v3718
  %v3720 = vand.u32 %v3719, 4294901760
  %3721 = vmatmul.mubr.f32.gmra.mrb[0].mxu0 %v3720
  %v3722 = vpop.f32.mrb[0].mxu0
  %v3723 = vadd.f32 0.0, %v3722
  %v3724 = vpop.f32.mrb[0].mxu0
  %3725 = vmatprep.mubr.f32.mxu0 0.0
  %v3726 = vand.u32 %v106, 4294901760
  %v3727 = vsub.f32 %v106, %v3726
  %v3728 = vand.u32 %v3727, 4294901760
  %v3729 = vsub.f32 %v3727, %v3728
  %v3730 = vand.u32 %v3729, 4294901760
  %3731 = vmatmul.mubr.f32.gmra.mrb[0].mxu0 %v3730
  %v3732 = vpop.f32.mrb[0].mxu0
  %v3733 = vadd.f32 0.0, %v3732
  %v3734 = vpop.f32.mrb[0].mxu0
  %3735 = vmatprep.mubr.f32.mxu0 0.0
  %v3736 = vand.u32 %v109, 4294901760
  %v3737 = vsub.f32 %v109, %v3736
  %v3738 = vand.u32 %v3737, 4294901760
  %v3739 = vsub.f32 %v3737, %v3738
  %v3740 = vand.u32 %v3739, 4294901760
  %3741 = vmatmul.mubr.f32.gmra.mrb[0].mxu0 %v3740
  %v3742 = vpop.f32.mrb[0].mxu0
  %v3743 = vadd.f32 0.0, %v3742
  %v3744 = vpop.f32.mrb[0].mxu0
  %3745 = vmatprep.mubr.f32.mxu0 0.0
  %v3746 = vand.u32 %v112, 4294901760
  %v3747 = vsub.f32 %v112, %v3746
  %v3748 = vand.u32 %v3747, 4294901760
  %v3749 = vsub.f32 %v3747, %v3748
  %v3750 = vand.u32 %v3749, 4294901760
  %3751 = vmatmul.mubr.f32.gmra.mrb[0].mxu0 %v3750
  %v3752 = vpop.f32.mrb[0].mxu0
  %v3753 = vadd.f32 0.0, %v3752
  %v3754 = vpop.f32.mrb[0].mxu0
  %3755 = vmatprep.mubr.f32.mxu0 0.0
  %v3756 = vand.u32 %v115, 4294901760
  %v3757 = vsub.f32 %v115, %v3756
  %v3758 = vand.u32 %v3757, 4294901760
  %v3759 = vsub.f32 %v3757, %v3758
  %v3760 = vand.u32 %v3759, 4294901760
  %3761 = vmatmul.mubr.f32.gmra.mrb[0].mxu0 %v3760
  %v3762 = vpop.f32.mrb[0].mxu0
  %v3763 = vadd.f32 0.0, %v3762
  %v3764 = vpop.f32.mrb[0].mxu0
  %3765 = vmatprep.mubr.f32.mxu0 0.0
  %v3766 = vand.u32 %v118, 4294901760
  %v3767 = vsub.f32 %v118, %v3766
  %v3768 = vand.u32 %v3767, 4294901760
  %v3769 = vsub.f32 %v3767, %v3768
  %v3770 = vand.u32 %v3769, 4294901760
  %3771 = vmatmul.mubr.f32.gmra.mrb[0].mxu0 %v3770
  %v3772 = vpop.f32.mrb[0].mxu0
  %v3773 = vadd.f32 0.0, %v3772
  %v3774 = vpop.f32.mrb[0].mxu0
  %3775 = vmatprep.mubr.f32.mxu0 0.0
  %v3776 = vand.u32 %v121, 4294901760
  %v3777 = vsub.f32 %v121, %v3776
  %v3778 = vand.u32 %v3777, 4294901760
  %v3779 = vsub.f32 %v3777, %v3778
  %v3780 = vand.u32 %v3779, 4294901760
  %3781 = vmatmul.mubr.f32.gmra.mrb[0].mxu0 %v3780
  %v3782 = vpop.f32.mrb[0].mxu0
  %v3783 = vadd.f32 0.0, %v3782
  %v3784 = vpop.f32.mrb[0].mxu0
  %3785 = vmatprep.mubr.f32.mxu0 0.0
  %v3786 = vand.u32 %v124, 4294901760
  %v3787 = vsub.f32 %v124, %v3786
  %v3788 = vand.u32 %v3787, 4294901760
  %v3789 = vsub.f32 %v3787, %v3788
  %v3790 = vand.u32 %v3789, 4294901760
  %3791 = vmatmul.mubr.f32.gmra.mrb[0].mxu0 %v3790
  %v3792 = vpop.f32.mrb[0].mxu0
  %v3793 = vadd.f32 0.0, %v3792
  %v3794 = vpop.f32.mrb[0].mxu0
  %3795 = vmatprep.mubr.f32.mxu0 0.0
  %v3796 = vand.u32 %v127, 4294901760
  %v3797 = vsub.f32 %v127, %v3796
  %v3798 = vand.u32 %v3797, 4294901760
  %v3799 = vsub.f32 %v3797, %v3798
  %v3800 = vand.u32 %v3799, 4294901760
  %3801 = vmatmul.mubr.f32.gmra.mrb[0].mxu0 %v3800
  %v3802 = vpop.f32.mrb[0].mxu0
  %v3803 = vadd.f32 0.0, %v3802
  %v3804 = vpop.f32.mrb[0].mxu0
  %3805 = vmatprep.mubr.f32.mxu0 0.0
  %v3806 = vand.u32 %v130, 4294901760
  %v3807 = vsub.f32 %v130, %v3806
  %v3808 = vand.u32 %v3807, 4294901760
  %v3809 = vsub.f32 %v3807, %v3808
  %v3810 = vand.u32 %v3809, 4294901760
  %3811 = vmatmul.mubr.f32.gmra.mrb[0].mxu0 %v3810
  %v3812 = vpop.f32.mrb[0].mxu0
  %v3813 = vadd.f32 0.0, %v3812
  %v3814 = vpop.f32.mrb[0].mxu0
  %3815 = vmatprep.mubr.f32.mxu0 0.0
  %v3816 = vand.u32 %v133, 4294901760
  %v3817 = vsub.f32 %v133, %v3816
  %v3818 = vand.u32 %v3817, 4294901760
  %v3819 = vsub.f32 %v3817, %v3818
  %v3820 = vand.u32 %v3819, 4294901760
  %3821 = vmatmul.mubr.f32.gmra.mrb[0].mxu0 %v3820
  %v3822 = vpop.f32.mrb[0].mxu0
  %v3823 = vadd.f32 0.0, %v3822
  %v3824 = vpop.f32.mrb[0].mxu0
  %3825 = vmatprep.mubr.f32.mxu0 0.0
  %v3826 = vand.u32 %v136, 4294901760
  %v3827 = vsub.f32 %v136, %v3826
  %v3828 = vand.u32 %v3827, 4294901760
  %v3829 = vsub.f32 %v3827, %v3828
  %v3830 = vand.u32 %v3829, 4294901760
  %3831 = vmatmul.mubr.f32.gmra.mrb[0].mxu0 %v3830
  %v3832 = vpop.f32.mrb[0].mxu0
  %v3833 = vadd.f32 0.0, %v3832
  %v3834 = vpop.f32.mrb[0].mxu0
  %3835 = vmatprep.mubr.f32.mxu0 0.0
  %v3836 = vand.u32 %v139, 4294901760
  %v3837 = vsub.f32 %v139, %v3836
  %v3838 = vand.u32 %v3837, 4294901760
  %v3839 = vsub.f32 %v3837, %v3838
  %v3840 = vand.u32 %v3839, 4294901760
  %3841 = vmatmul.mubr.f32.gmra.mrb[0].mxu0 %v3840
  %v3842 = vpop.f32.mrb[0].mxu0
  %v3843 = vadd.f32 0.0, %v3842
  %v3844 = vpop.f32.mrb[0].mxu0
  %3845 = vmatprep.mubr.f32.mxu0 0.0
  %v3846 = vand.u32 %v142, 4294901760
  %v3847 = vsub.f32 %v142, %v3846
  %v3848 = vand.u32 %v3847, 4294901760
  %v3849 = vsub.f32 %v3847, %v3848
  %v3850 = vand.u32 %v3849, 4294901760
  %3851 = vmatmul.mubr.f32.gmra.mrb[0].mxu0 %v3850
  %v3852 = vpop.f32.mrb[0].mxu0
  %v3853 = vadd.f32 0.0, %v3852
  %v3854 = vpop.f32.mrb[0].mxu0
  %3855 = vmatprep.mubr.f32.mxu0 0.0
  %v3856 = vand.u32 %v145, 4294901760
  %v3857 = vsub.f32 %v145, %v3856
  %v3858 = vand.u32 %v3857, 4294901760
  %v3859 = vsub.f32 %v3857, %v3858
  %v3860 = vand.u32 %v3859, 4294901760
  %3861 = vmatmul.mubr.f32.gmra.mrb[0].mxu0 %v3860
  %v3862 = vpop.f32.mrb[0].mxu0
  %v3863 = vadd.f32 0.0, %v3862
  %v3864 = vpop.f32.mrb[0].mxu0
  %3865 = vmatprep.mubr.f32.mxu0 0.0
  %v3866 = vand.u32 %v148, 4294901760
  %v3867 = vsub.f32 %v148, %v3866
  %v3868 = vand.u32 %v3867, 4294901760
  %v3869 = vsub.f32 %v3867, %v3868
  %v3870 = vand.u32 %v3869, 4294901760
  %3871 = vmatmul.mubr.f32.gmra.mrb[0].mxu0 %v3870
  %v3872 = vpop.f32.mrb[0].mxu0
  %v3873 = vadd.f32 0.0, %v3872
  %v3874 = vpop.f32.mrb[0].mxu0
  %3875 = vmatprep.mubr.f32.mxu0 0.0
  %v3876 = vand.u32 %v151, 4294901760
  %v3877 = vsub.f32 %v151, %v3876
  %v3878 = vand.u32 %v3877, 4294901760
  %v3879 = vsub.f32 %v3877, %v3878
  %v3880 = vand.u32 %v3879, 4294901760
  %3881 = vmatmul.mubr.f32.gmra.mrb[0].mxu0 %v3880
  %v3882 = vpop.f32.mrb[0].mxu0
  %v3883 = vadd.f32 0.0, %v3882
  %v3884 = vpop.f32.mrb[0].mxu0
  %3885 = vmatprep.mubr.f32.mxu0 0.0
  %v3886 = vand.u32 %v154, 4294901760
  %v3887 = vsub.f32 %v154, %v3886
  %v3888 = vand.u32 %v3887, 4294901760
  %v3889 = vsub.f32 %v3887, %v3888
  %v3890 = vand.u32 %v3889, 4294901760
  %3891 = vmatmul.mubr.f32.gmra.mrb[0].mxu0 %v3890
  %v3892 = vpop.f32.mrb[0].mxu0
  %v3893 = vadd.f32 0.0, %v3892
  %v3894 = vpop.f32.mrb[0].mxu0
  %3895 = vmatprep.mubr.f32.mxu0 0.0
  %v3896 = vand.u32 %v157, 4294901760
  %v3897 = vsub.f32 %v157, %v3896
  %v3898 = vand.u32 %v3897, 4294901760
  %v3899 = vsub.f32 %v3897, %v3898
  %v3900 = vand.u32 %v3899, 4294901760
  %3901 = vmatmul.mubr.f32.gmra.mrb[0].mxu0 %v3900
  %v3902 = vpop.f32.mrb[0].mxu0
  %v3903 = vadd.f32 0.0, %v3902
  %v3904 = vpop.f32.mrb[0].mxu0
  %3905 = vmatprep.mubr.f32.mxu0 0.0
  %v3906 = vand.u32 %v160, 4294901760
  %v3907 = vsub.f32 %v160, %v3906
  %v3908 = vand.u32 %v3907, 4294901760
  %v3909 = vsub.f32 %v3907, %v3908
  %v3910 = vand.u32 %v3909, 4294901760
  %3911 = vmatmul.mubr.f32.gmra.mrb[0].mxu0 %v3910
  %v3912 = vpop.f32.mrb[0].mxu0
  %v3913 = vadd.f32 0.0, %v3912
  %v3914 = vpop.f32.mrb[0].mxu0
  %3915 = vmatprep.mubr.f32.mxu0 0.0
  %v3916 = vand.u32 %v163, 4294901760
  %v3917 = vsub.f32 %v163, %v3916
  %v3918 = vand.u32 %v3917, 4294901760
  %v3919 = vsub.f32 %v3917, %v3918
  %v3920 = vand.u32 %v3919, 4294901760
  %3921 = vmatmul.mubr.f32.gmra.mrb[0].mxu0 %v3920
  %v3922 = vpop.f32.mrb[0].mxu0
  %v3923 = vadd.f32 0.0, %v3922
  %v3924 = vpop.f32.mrb[0].mxu0
  %3925 = vmatprep.mubr.f32.mxu0 0.0
  %v3926 = vand.u32 %v166, 4294901760
  %v3927 = vsub.f32 %v166, %v3926
  %v3928 = vand.u32 %v3927, 4294901760
  %v3929 = vsub.f32 %v3927, %v3928
  %v3930 = vand.u32 %v3929, 4294901760
  %3931 = vmatmul.mubr.f32.gmra.mrb[0].mxu0 %v3930
  %v3932 = vpop.f32.mrb[0].mxu0
  %v3933 = vadd.f32 0.0, %v3932
  %v3934 = vpop.f32.mrb[0].mxu0
  %3935 = vmatprep.mubr.f32.mxu0 0.0
  %v3936 = vand.u32 %v169, 4294901760
  %v3937 = vsub.f32 %v169, %v3936
  %v3938 = vand.u32 %v3937, 4294901760
  %v3939 = vsub.f32 %v3937, %v3938
  %v3940 = vand.u32 %v3939, 4294901760
  %3941 = vmatmul.mubr.f32.gmra.mrb[0].mxu0 %v3940
  %v3942 = vpop.f32.mrb[0].mxu0
  %v3943 = vadd.f32 0.0, %v3942
  %v3944 = vpop.f32.mrb[0].mxu0
  %3945 = vmatprep.mubr.f32.mxu0 0.0
  %v3946 = vand.u32 %v172, 4294901760
  %v3947 = vsub.f32 %v172, %v3946
  %v3948 = vand.u32 %v3947, 4294901760
  %v3949 = vsub.f32 %v3947, %v3948
  %v3950 = vand.u32 %v3949, 4294901760
  %3951 = vmatmul.mubr.f32.gmra.mrb[0].mxu0 %v3950
  %v3952 = vpop.f32.mrb[0].mxu0
  %v3953 = vadd.f32 0.0, %v3952
  %v3954 = vpop.f32.mrb[0].mxu0
  %3955 = vmatprep.mubr.f32.mxu0 0.0
  %v3956 = vand.u32 %v175, 4294901760
  %v3957 = vsub.f32 %v175, %v3956
  %v3958 = vand.u32 %v3957, 4294901760
  %v3959 = vsub.f32 %v3957, %v3958
  %v3960 = vand.u32 %v3959, 4294901760
  %3961 = vmatmul.mubr.f32.gmra.mrb[0].mxu0 %v3960
  %v3962 = vpop.f32.mrb[0].mxu0
  %v3963 = vadd.f32 0.0, %v3962
  %v3964 = vpop.f32.mrb[0].mxu0
  %3965 = vmatprep.mubr.f32.mxu0 0.0
  %v3966 = vand.u32 %v178, 4294901760
  %v3967 = vsub.f32 %v178, %v3966
  %v3968 = vand.u32 %v3967, 4294901760
  %v3969 = vsub.f32 %v3967, %v3968
  %v3970 = vand.u32 %v3969, 4294901760
  %3971 = vmatmul.mubr.f32.gmra.mrb[0].mxu0 %v3970
  %v3972 = vpop.f32.mrb[0].mxu0
  %v3973 = vadd.f32 0.0, %v3972
  %v3974 = vpop.f32.mrb[0].mxu0
  %3975 = vmatprep.mubr.f32.mxu0 0.0
  %v3976 = vand.u32 %v181, 4294901760
  %v3977 = vsub.f32 %v181, %v3976
  %v3978 = vand.u32 %v3977, 4294901760
  %v3979 = vsub.f32 %v3977, %v3978
  %v3980 = vand.u32 %v3979, 4294901760
  %3981 = vmatmul.mubr.f32.gmra.mrb[0].mxu0 %v3980
  %v3982 = vpop.f32.mrb[0].mxu0
  %v3983 = vadd.f32 0.0, %v3982
  %v3984 = vpop.f32.mrb[0].mxu0
  %3985 = vmatprep.mubr.f32.mxu0 0.0
  %v3986 = vand.u32 %v184, 4294901760
  %v3987 = vsub.f32 %v184, %v3986
  %v3988 = vand.u32 %v3987, 4294901760
  %v3989 = vsub.f32 %v3987, %v3988
  %v3990 = vand.u32 %v3989, 4294901760
  %3991 = vmatmul.mubr.f32.gmra.mrb[0].mxu0 %v3990
  %v3992 = vpop.f32.mrb[0].mxu0
  %v3993 = vadd.f32 0.0, %v3992
  %v3994 = vpop.f32.mrb[0].mxu0
  %3995 = vmatprep.mubr.f32.mxu0 0.0
  %v3996 = vand.u32 %v187, 4294901760
  %v3997 = vsub.f32 %v187, %v3996
  %v3998 = vand.u32 %v3997, 4294901760
  %v3999 = vsub.f32 %v3997, %v3998
  %v4000 = vand.u32 %v3999, 4294901760
  %4001 = vmatmul.mubr.f32.gmra.mrb[0].mxu0 %v4000
  %v4002 = vpop.f32.mrb[0].mxu0
  %v4003 = vadd.f32 0.0, %v4002
  %v4004 = vpop.f32.mrb[0].mxu0
  %4005 = vmatprep.mubr.f32.mxu0 0.0
  %v4006 = vand.u32 %v190, 4294901760
  %v4007 = vsub.f32 %v190, %v4006
  %v4008 = vand.u32 %v4007, 4294901760
  %v4009 = vsub.f32 %v4007, %v4008
  %v4010 = vand.u32 %v4009, 4294901760
  %4011 = vmatmul.mubr.f32.gmra.mrb[0].mxu0 %v4010
  %v4012 = vpop.f32.mrb[0].mxu0
  %v4013 = vadd.f32 0.0, %v4012
  %v4014 = vpop.f32.mrb[0].mxu0
  %4015 = vmatprep.mubr.f32.mxu0 0.0
  %v4016 = vand.u32 %v193, 4294901760
  %v4017 = vsub.f32 %v193, %v4016
  %v4018 = vand.u32 %v4017, 4294901760
  %v4019 = vsub.f32 %v4017, %v4018
  %v4020 = vand.u32 %v4019, 4294901760
  %4021 = vmatmul.mubr.f32.gmra.mrb[0].mxu0 %v4020
  %v4022 = vpop.f32.mrb[0].mxu0
  %v4023 = vadd.f32 0.0, %v4022
  %v4024 = vpop.f32.mrb[0].mxu0
  %4025 = vmatprep.mubr.f32.mxu0 0.0
  %v4026 = vand.u32 %v196, 4294901760
  %v4027 = vsub.f32 %v196, %v4026
  %v4028 = vand.u32 %v4027, 4294901760
  %v4029 = vsub.f32 %v4027, %v4028
  %v4030 = vand.u32 %v4029, 4294901760
  %4031 = vmatmul.mubr.f32.gmra.mrb[0].mxu0 %v4030
  %v4032 = vpop.f32.mrb[0].mxu0
  %v4033 = vadd.f32 0.0, %v4032
  %v4034 = vpop.f32.mrb[0].mxu0
  %4035 = vmatprep.mubr.f32.mxu0 0.0
  %v4036 = vand.u32 %v199, 4294901760
  %v4037 = vsub.f32 %v199, %v4036
  %v4038 = vand.u32 %v4037, 4294901760
  %v4039 = vsub.f32 %v4037, %v4038
  %v4040 = vand.u32 %v4039, 4294901760
  %4041 = vmatmul.mubr.f32.gmra.mrb[0].mxu0 %v4040
  %v4042 = vpop.f32.mrb[0].mxu0
  %v4043 = vadd.f32 0.0, %v4042
  %v4044 = vpop.f32.mrb[0].mxu0
  %4045 = vmatprep.mubr.f32.mxu0 0.0
  %v4046 = vand.u32 %v202, 4294901760
  %v4047 = vsub.f32 %v202, %v4046
  %v4048 = vand.u32 %v4047, 4294901760
  %v4049 = vsub.f32 %v4047, %v4048
  %v4050 = vand.u32 %v4049, 4294901760
  %4051 = vmatmul.mubr.f32.gmra.mrb[0].mxu0 %v4050
  %v4052 = vpop.f32.mrb[0].mxu0
  %v4053 = vadd.f32 0.0, %v4052
  %v4054 = vpop.f32.mrb[0].mxu0
  %4055 = vmatprep.mubr.f32.mxu0 0.0
  %v4056 = vand.u32 %v205, 4294901760
  %v4057 = vsub.f32 %v205, %v4056
  %v4058 = vand.u32 %v4057, 4294901760
  %v4059 = vsub.f32 %v4057, %v4058
  %v4060 = vand.u32 %v4059, 4294901760
  %4061 = vmatmul.mubr.f32.gmra.mrb[0].mxu0 %v4060
  %v4062 = vpop.f32.mrb[0].mxu0
  %v4063 = vadd.f32 0.0, %v4062
  %v4064 = vpop.f32.mrb[0].mxu0
  %4065 = vmatprep.mubr.f32.mxu0 0.0
  %v4066 = vand.u32 %v208, 4294901760
  %v4067 = vsub.f32 %v208, %v4066
  %v4068 = vand.u32 %v4067, 4294901760
  %v4069 = vsub.f32 %v4067, %v4068
  %v4070 = vand.u32 %v4069, 4294901760
  %4071 = vmatmul.mubr.f32.gmra.mrb[0].mxu0 %v4070
  %v4072 = vpop.f32.mrb[0].mxu0
  %v4073 = vadd.f32 0.0, %v4072
  %v4074 = vpop.f32.mrb[0].mxu0
  %4075 = vmatprep.mubr.f32.mxu0 0.0
  %v4076 = vand.u32 %v211, 4294901760
  %v4077 = vsub.f32 %v211, %v4076
  %v4078 = vand.u32 %v4077, 4294901760
  %v4079 = vsub.f32 %v4077, %v4078
  %v4080 = vand.u32 %v4079, 4294901760
  %4081 = vmatmul.mubr.f32.gmra.mrb[0].mxu0 %v4080
  %v4082 = vpop.f32.mrb[0].mxu0
  %v4083 = vadd.f32 0.0, %v4082
  %v4084 = vpop.f32.mrb[0].mxu0
  %4085 = vmatprep.mubr.f32.mxu0 0.0
  %v4086 = vand.u32 %v214, 4294901760
  %v4087 = vsub.f32 %v214, %v4086
  %v4088 = vand.u32 %v4087, 4294901760
  %v4089 = vsub.f32 %v4087, %v4088
  %v4090 = vand.u32 %v4089, 4294901760
  %4091 = vmatmul.mubr.f32.gmra.mrb[0].mxu0 %v4090
  %v4092 = vpop.f32.mrb[0].mxu0
  %v4093 = vadd.f32 0.0, %v4092
  %v4094 = vpop.f32.mrb[0].mxu0
  %4095 = vmatprep.mubr.f32.mxu0 0.0
  %v4096 = vand.u32 %v217, 4294901760
  %v4097 = vsub.f32 %v217, %v4096
  %v4098 = vand.u32 %v4097, 4294901760
  %v4099 = vsub.f32 %v4097, %v4098
  %v4100 = vand.u32 %v4099, 4294901760
  %4101 = vmatmul.mubr.f32.gmra.mrb[0].mxu0 %v4100
  %v4102 = vpop.f32.mrb[0].mxu0
  %v4103 = vadd.f32 0.0, %v4102
  %v4104 = vpop.f32.mrb[0].mxu0
  %4105 = vmatprep.mubr.f32.mxu0 0.0
  %v4106 = vand.u32 %v220, 4294901760
  %v4107 = vsub.f32 %v220, %v4106
  %v4108 = vand.u32 %v4107, 4294901760
  %v4109 = vsub.f32 %v4107, %v4108
  %v4110 = vand.u32 %v4109, 4294901760
  %4111 = vmatmul.mubr.f32.gmra.mrb[0].mxu0 %v4110
  %v4112 = vpop.f32.mrb[0].mxu0
  %v4113 = vadd.f32 0.0, %v4112
  %v4114 = vpop.f32.mrb[0].mxu0
  %4115 = vmatprep.mubr.f32.mxu0 0.0
  %v4116 = vand.u32 %v223, 4294901760
  %v4117 = vsub.f32 %v223, %v4116
  %v4118 = vand.u32 %v4117, 4294901760
  %v4119 = vsub.f32 %v4117, %v4118
  %v4120 = vand.u32 %v4119, 4294901760
  %4121 = vmatmul.mubr.f32.gmra.mrb[0].mxu0 %v4120
  %v4122 = vpop.f32.mrb[0].mxu0
  %v4123 = vadd.f32 0.0, %v4122
  %v4124 = vpop.f32.mrb[0].mxu0
  %4125 = vmatprep.mubr.f32.mxu0 0.0
  %v4126 = vand.u32 %v226, 4294901760
  %v4127 = vsub.f32 %v226, %v4126
  %v4128 = vand.u32 %v4127, 4294901760
  %v4129 = vsub.f32 %v4127, %v4128
  %v4130 = vand.u32 %v4129, 4294901760
  %4131 = vmatmul.mubr.f32.gmra.mrb[0].mxu0 %v4130
  %v4132 = vpop.f32.mrb[0].mxu0
  %v4133 = vadd.f32 0.0, %v4132
  %v4134 = vpop.f32.mrb[0].mxu0
  %4135 = vmatprep.mubr.f32.mxu0 0.0
  %v4136 = vand.u32 %v229, 4294901760
  %v4137 = vsub.f32 %v229, %v4136
  %v4138 = vand.u32 %v4137, 4294901760
  %v4139 = vsub.f32 %v4137, %v4138
  %v4140 = vand.u32 %v4139, 4294901760
  %4141 = vmatmul.mubr.f32.gmra.mrb[0].mxu0 %v4140
  %v4142 = vpop.f32.mrb[0].mxu0
  %v4143 = vadd.f32 0.0, %v4142
  %v4144 = vpop.f32.mrb[0].mxu0
  %4145 = vmatprep.mubr.f32.mxu0 0.0
  %v4146 = vand.u32 %v232, 4294901760
  %v4147 = vsub.f32 %v232, %v4146
  %v4148 = vand.u32 %v4147, 4294901760
  %v4149 = vsub.f32 %v4147, %v4148
  %v4150 = vand.u32 %v4149, 4294901760
  %4151 = vmatmul.mubr.f32.gmra.mrb[0].mxu0 %v4150
  %v4152 = vpop.f32.mrb[0].mxu0
  %v4153 = vadd.f32 0.0, %v4152
  %v4154 = vpop.f32.mrb[0].mxu0
  %4155 = vmatprep.mubr.f32.mxu0 0.0
  %v4156 = vand.u32 %v235, 4294901760
  %v4157 = vsub.f32 %v235, %v4156
  %v4158 = vand.u32 %v4157, 4294901760
  %v4159 = vsub.f32 %v4157, %v4158
  %v4160 = vand.u32 %v4159, 4294901760
  %4161 = vmatmul.mubr.f32.gmra.mrb[0].mxu0 %v4160
  %v4162 = vpop.f32.mrb[0].mxu0
  %v4163 = vadd.f32 0.0, %v4162
  %v4164 = vpop.f32.mrb[0].mxu0
  %4165 = vmatprep.mubr.f32.mxu0 0.0
  %v4166 = vand.u32 %v238, 4294901760
  %v4167 = vsub.f32 %v238, %v4166
  %v4168 = vand.u32 %v4167, 4294901760
  %v4169 = vsub.f32 %v4167, %v4168
  %v4170 = vand.u32 %v4169, 4294901760
  %4171 = vmatmul.mubr.f32.gmra.mrb[0].mxu0 %v4170
  %v4172 = vpop.f32.mrb[0].mxu0
  %v4173 = vadd.f32 0.0, %v4172
  %v4174 = vpop.f32.mrb[0].mxu0
  %4175 = vmatprep.mubr.f32.mxu0 0.0
  %v4176 = vand.u32 %v241, 4294901760
  %v4177 = vsub.f32 %v241, %v4176
  %v4178 = vand.u32 %v4177, 4294901760
  %v4179 = vsub.f32 %v4177, %v4178
  %v4180 = vand.u32 %v4179, 4294901760
  %4181 = vmatmul.mubr.f32.gmra.mrb[0].mxu0 %v4180
  %v4182 = vpop.f32.mrb[0].mxu0
  %v4183 = vadd.f32 0.0, %v4182
  %v4184 = vpop.f32.mrb[0].mxu0
  %4185 = vmatprep.mubr.f32.mxu0 0.0
  %v4186 = vand.u32 %v244, 4294901760
  %v4187 = vsub.f32 %v244, %v4186
  %v4188 = vand.u32 %v4187, 4294901760
  %v4189 = vsub.f32 %v4187, %v4188
  %v4190 = vand.u32 %v4189, 4294901760
  %4191 = vmatmul.mubr.f32.gmra.mrb[0].mxu0 %v4190
  %v4192 = vpop.f32.mrb[0].mxu0
  %v4193 = vadd.f32 0.0, %v4192
  %v4194 = vpop.f32.mrb[0].mxu0
  %4195 = vmatprep.mubr.f32.mxu0 0.0
  %v4196 = vand.u32 %v247, 4294901760
  %v4197 = vsub.f32 %v247, %v4196
  %v4198 = vand.u32 %v4197, 4294901760
  %v4199 = vsub.f32 %v4197, %v4198
  %v4200 = vand.u32 %v4199, 4294901760
  %4201 = vmatmul.mubr.f32.gmra.mrb[0].mxu0 %v4200
  %v4202 = vpop.f32.mrb[0].mxu0
  %v4203 = vadd.f32 0.0, %v4202
  %v4204 = vpop.f32.mrb[0].mxu0
  %4205 = vmatprep.mubr.f32.mxu0 0.0
  %v4206 = vand.u32 %v250, 4294901760
  %v4207 = vsub.f32 %v250, %v4206
  %v4208 = vand.u32 %v4207, 4294901760
  %v4209 = vsub.f32 %v4207, %v4208
  %v4210 = vand.u32 %v4209, 4294901760
  %4211 = vmatmul.mubr.f32.gmra.mrb[0].mxu0 %v4210
  %v4212 = vpop.f32.mrb[0].mxu0
  %v4213 = vadd.f32 0.0, %v4212
  %v4214 = vpop.f32.mrb[0].mxu0
  %4215 = vmatprep.mubr.f32.mxu0 0.0
  %v4216 = vand.u32 %v253, 4294901760
  %v4217 = vsub.f32 %v253, %v4216
  %v4218 = vand.u32 %v4217, 4294901760
  %v4219 = vsub.f32 %v4217, %v4218
  %v4220 = vand.u32 %v4219, 4294901760
  %4221 = vmatmul.mubr.f32.gmra.mrb[0].mxu0 %v4220
  %v4222 = vpop.f32.mrb[0].mxu0
  %v4223 = vadd.f32 0.0, %v4222
  %v4224 = vpop.f32.mrb[0].mxu0
  %4225 = vmatprep.mubr.f32.mxu0 0.0
  %v4226 = vand.u32 %v256, 4294901760
  %v4227 = vsub.f32 %v256, %v4226
  %v4228 = vand.u32 %v4227, 4294901760
  %v4229 = vsub.f32 %v4227, %v4228
  %v4230 = vand.u32 %v4229, 4294901760
  %4231 = vmatmul.mubr.f32.gmra.mrb[0].mxu0 %v4230
  %v4232 = vpop.f32.mrb[0].mxu0
  %v4233 = vadd.f32 0.0, %v4232
  %v4234 = vpop.f32.mrb[0].mxu0
  %4235 = vmatprep.mubr.f32.mxu0 0.0
  %v4236 = vand.u32 %v259, 4294901760
  %v4237 = vsub.f32 %v259, %v4236
  %v4238 = vand.u32 %v4237, 4294901760
  %v4239 = vsub.f32 %v4237, %v4238
  %v4240 = vand.u32 %v4239, 4294901760
  %4241 = vmatmul.mubr.f32.gmra.mrb[0].mxu0 %v4240
  %v4242 = vpop.f32.mrb[0].mxu0
  %v4243 = vadd.f32 0.0, %v4242
  %v4244 = vpop.f32.mrb[0].mxu0
  %4245 = vmatprep.mubr.f32.mxu0 0.0
  %v4246 = vand.u32 %v262, 4294901760
  %v4247 = vsub.f32 %v262, %v4246
  %v4248 = vand.u32 %v4247, 4294901760
  %v4249 = vsub.f32 %v4247, %v4248
  %v4250 = vand.u32 %v4249, 4294901760
  %4251 = vmatmul.mubr.f32.gmra.mrb[0].mxu0 %v4250
  %v4252 = vpop.f32.mrb[0].mxu0
  %v4253 = vadd.f32 0.0, %v4252
  %v4254 = vpop.f32.mrb[0].mxu0
  %4255 = vmatprep.mubr.f32.mxu0 0.0
  %v4256 = vand.u32 %v265, 4294901760
  %v4257 = vsub.f32 %v265, %v4256
  %v4258 = vand.u32 %v4257, 4294901760
  %v4259 = vsub.f32 %v4257, %v4258
  %v4260 = vand.u32 %v4259, 4294901760
  %4261 = vmatmul.mubr.f32.gmra.mrb[0].mxu0 %v4260
  %v4262 = vpop.f32.mrb[0].mxu0
  %v4263 = vadd.f32 0.0, %v4262
  %v4264 = vpop.f32.mrb[0].mxu0
  %4265 = vmatprep.mubr.f32.mxu0 0.0
  %v4266 = vand.u32 %v268, 4294901760
  %v4267 = vsub.f32 %v268, %v4266
  %v4268 = vand.u32 %v4267, 4294901760
  %v4269 = vsub.f32 %v4267, %v4268
  %v4270 = vand.u32 %v4269, 4294901760
  %4271 = vmatmul.mubr.f32.gmra.mrb[0].mxu0 %v4270
  %v4272 = vpop.f32.mrb[0].mxu0
  %v4273 = vadd.f32 0.0, %v4272
  %v4274 = vpop.f32.mrb[0].mxu0
  %4275 = vdwg.mxu0
  %4276 = vmatprep.subr.mxu0 0.0
  %v4277 = vand.u32 %v3567, 4294901760
  %v4278 = vsub.f32 %v3567, %v4277
  %v4279 = vand.u32 %v4278, 4294901760
  %v4280 = vsub.f32 %v4278, %v4279
  %v4281 = vand.u32 %v4280, 4294901760
  %4282 = vmatpush1.msra.mxu0 %v4281
  %4283 = vmatprep.subr.mxu0 0.0
  %v4284 = vand.u32 %v3568, 4294901760
  %v4285 = vsub.f32 %v3568, %v4284
  %v4286 = vand.u32 %v4285, 4294901760
  %v4287 = vsub.f32 %v4285, %v4286
  %v4288 = vand.u32 %v4287, 4294901760
  %4289 = vmatpush1.msra.mxu0 %v4288
  %4290 = vmatprep.subr.mxu0 0.0
  %4291 = vmatpush1.msra.mxu0 0.0
  %4292 = vmatprep.subr.mxu0 0.0
  %4293 = vmatpush1.msra.mxu0 0.0
  %4294 = vmatprep.subr.mxu0 0.0
  %4295 = vmatpush1.msra.mxu0 0.0
  %4296 = vmatprep.subr.mxu0 0.0
  %4297 = vmatpush1.msra.mxu0 0.0
  %4298 = vmatprep.subr.mxu0 0.0
  %4299 = vmatpush1.msra.mxu0 0.0
  %4300 = vmatprep.subr.mxu0 0.0
  %4301 = vmatpush1.msra.mxu0 0.0
  %4302 = vmatprep.subr.mxu0 0.0
  %4303 = vmatpush1.msra.mxu0 0.0
  %4304 = vmatprep.subr.mxu0 0.0
  %4305 = vmatpush1.msra.mxu0 0.0
  %4306 = vmatprep.subr.mxu0 0.0
  %4307 = vmatpush1.msra.mxu0 0.0
  %4308 = vmatprep.subr.mxu0 0.0
  %4309 = vmatpush1.msra.mxu0 0.0
  %4310 = vmatprep.subr.mxu0 0.0
  %4311 = vmatpush1.msra.mxu0 0.0
  %4312 = vmatprep.subr.mxu0 0.0
  %4313 = vmatpush1.msra.mxu0 0.0
  %4314 = vmatprep.subr.mxu0 0.0
  %4315 = vmatpush1.msra.mxu0 0.0
  %4316 = vmatprep.subr.mxu0 0.0
  %4317 = vmatpush1.msra.mxu0 0.0
  %4318 = vmatprep.subr.mxu0 0.0
  %4319 = vmatpush1.msra.mxu0 0.0
  %4320 = vmatprep.subr.mxu0 0.0
  %4321 = vmatpush1.msra.mxu0 0.0
  %4322 = vmatprep.subr.mxu0 0.0
  %4323 = vmatpush1.msra.mxu0 0.0
  %4324 = vmatprep.subr.mxu0 0.0
  %4325 = vmatpush1.msra.mxu0 0.0
  %4326 = vmatprep.subr.mxu0 0.0
  %4327 = vmatpush1.msra.mxu0 0.0
  %4328 = vmatprep.subr.mxu0 0.0
  %4329 = vmatpush1.msra.mxu0 0.0
  %4330 = vmatprep.subr.mxu0 0.0
  %4331 = vmatpush1.msra.mxu0 0.0
  %4332 = vmatprep.subr.mxu0 0.0
  %4333 = vmatpush1.msra.mxu0 0.0
  %4334 = vmatprep.subr.mxu0 0.0
  %4335 = vmatpush1.msra.mxu0 0.0
  %4336 = vmatprep.subr.mxu0 0.0
  %4337 = vmatpush1.msra.mxu0 0.0
  %4338 = vmatprep.subr.mxu0 0.0
  %4339 = vmatpush1.msra.mxu0 0.0
  %4340 = vmatprep.subr.mxu0 0.0
  %4341 = vmatpush1.msra.mxu0 0.0
  %4342 = vmatprep.subr.mxu0 0.0
  %4343 = vmatpush1.msra.mxu0 0.0
  %4344 = vmatprep.subr.mxu0 0.0
  %4345 = vmatpush1.msra.mxu0 0.0
  %4346 = vmatprep.subr.mxu0 0.0
  %4347 = vmatpush1.msra.mxu0 0.0
  %4348 = vmatprep.subr.mxu0 0.0
  %4349 = vmatpush1.msra.mxu0 0.0
  %4350 = vmatprep.mubr.f32.mxu0 0.0
  %v4351 = vand.u32 %v79, 4294901760
  %4352 = vmatmul.mubr.f32.gmra.mrb[0].mxu0 %v4351
  %v4353 = vpop.f32.mrb[0].mxu0
  %v4354 = vadd.f32 %v3643, %v4353
  %v4355 = vpop.f32.mrb[0].mxu0
  %4356 = vmatprep.mubr.f32.mxu0 0.0
  %v4357 = vand.u32 %v82, 4294901760
  %4358 = vmatmul.mubr.f32.gmra.mrb[0].mxu0 %v4357
  %v4359 = vpop.f32.mrb[0].mxu0
  %v4360 = vadd.f32 %v3653, %v4359
  %v4361 = vpop.f32.mrb[0].mxu0
  %4362 = vmatprep.mubr.f32.mxu0 0.0
  %v4363 = vand.u32 %v85, 4294901760
  %4364 = vmatmul.mubr.f32.gmra.mrb[0].mxu0 %v4363
  %v4365 = vpop.f32.mrb[0].mxu0
  %v4366 = vadd.f32 %v3663, %v4365
  %v4367 = vpop.f32.mrb[0].mxu0
  %4368 = vmatprep.mubr.f32.mxu0 0.0
  %v4369 = vand.u32 %v88, 4294901760
  %4370 = vmatmul.mubr.f32.gmra.mrb[0].mxu0 %v4369
  %v4371 = vpop.f32.mrb[0].mxu0
  %v4372 = vadd.f32 %v3673, %v4371
  %v4373 = vpop.f32.mrb[0].mxu0
  %4374 = vmatprep.mubr.f32.mxu0 0.0
  %v4375 = vand.u32 %v91, 4294901760
  %4376 = vmatmul.mubr.f32.gmra.mrb[0].mxu0 %v4375
  %v4377 = vpop.f32.mrb[0].mxu0
  %v4378 = vadd.f32 %v3683, %v4377
  %v4379 = vpop.f32.mrb[0].mxu0
  %4380 = vmatprep.mubr.f32.mxu0 0.0
  %v4381 = vand.u32 %v94, 4294901760
  %4382 = vmatmul.mubr.f32.gmra.mrb[0].mxu0 %v4381
  %v4383 = vpop.f32.mrb[0].mxu0
  %v4384 = vadd.f32 %v3693, %v4383
  %v4385 = vpop.f32.mrb[0].mxu0
  %4386 = vmatprep.mubr.f32.mxu0 0.0
  %v4387 = vand.u32 %v97, 4294901760
  %4388 = vmatmul.mubr.f32.gmra.mrb[0].mxu0 %v4387
  %v4389 = vpop.f32.mrb[0].mxu0
  %v4390 = vadd.f32 %v3703, %v4389
  %v4391 = vpop.f32.mrb[0].mxu0
  %4392 = vmatprep.mubr.f32.mxu0 0.0
  %v4393 = vand.u32 %v100, 4294901760
  %4394 = vmatmul.mubr.f32.gmra.mrb[0].mxu0 %v4393
  %v4395 = vpop.f32.mrb[0].mxu0
  %v4396 = vadd.f32 %v3713, %v4395
  %v4397 = vpop.f32.mrb[0].mxu0
  %4398 = vmatprep.mubr.f32.mxu0 0.0
  %v4399 = vand.u32 %v103, 4294901760
  %4400 = vmatmul.mubr.f32.gmra.mrb[0].mxu0 %v4399
  %v4401 = vpop.f32.mrb[0].mxu0
  %v4402 = vadd.f32 %v3723, %v4401
  %v4403 = vpop.f32.mrb[0].mxu0
  %4404 = vmatprep.mubr.f32.mxu0 0.0
  %v4405 = vand.u32 %v106, 4294901760
  %4406 = vmatmul.mubr.f32.gmra.mrb[0].mxu0 %v4405
  %v4407 = vpop.f32.mrb[0].mxu0
  %v4408 = vadd.f32 %v3733, %v4407
  %v4409 = vpop.f32.mrb[0].mxu0
  %4410 = vmatprep.mubr.f32.mxu0 0.0
  %v4411 = vand.u32 %v109, 4294901760
  %4412 = vmatmul.mubr.f32.gmra.mrb[0].mxu0 %v4411
  %v4413 = vpop.f32.mrb[0].mxu0
  %v4414 = vadd.f32 %v3743, %v4413
  %v4415 = vpop.f32.mrb[0].mxu0
  %4416 = vmatprep.mubr.f32.mxu0 0.0
  %v4417 = vand.u32 %v112, 4294901760
  %4418 = vmatmul.mubr.f32.gmra.mrb[0].mxu0 %v4417
  %v4419 = vpop.f32.mrb[0].mxu0
  %v4420 = vadd.f32 %v3753, %v4419
  %v4421 = vpop.f32.mrb[0].mxu0
  %4422 = vmatprep.mubr.f32.mxu0 0.0
  %v4423 = vand.u32 %v115, 4294901760
  %4424 = vmatmul.mubr.f32.gmra.mrb[0].mxu0 %v4423
  %v4425 = vpop.f32.mrb[0].mxu0
  %v4426 = vadd.f32 %v3763, %v4425
  %v4427 = vpop.f32.mrb[0].mxu0
  %4428 = vmatprep.mubr.f32.mxu0 0.0
  %v4429 = vand.u32 %v118, 4294901760
  %4430 = vmatmul.mubr.f32.gmra.mrb[0].mxu0 %v4429
  %v4431 = vpop.f32.mrb[0].mxu0
  %v4432 = vadd.f32 %v3773, %v4431
  %v4433 = vpop.f32.mrb[0].mxu0
  %4434 = vmatprep.mubr.f32.mxu0 0.0
  %v4435 = vand.u32 %v121, 4294901760
  %4436 = vmatmul.mubr.f32.gmra.mrb[0].mxu0 %v4435
  %v4437 = vpop.f32.mrb[0].mxu0
  %v4438 = vadd.f32 %v3783, %v4437
  %v4439 = vpop.f32.mrb[0].mxu0
  %4440 = vmatprep.mubr.f32.mxu0 0.0
  %v4441 = vand.u32 %v124, 4294901760
  %4442 = vmatmul.mubr.f32.gmra.mrb[0].mxu0 %v4441
  %v4443 = vpop.f32.mrb[0].mxu0
  %v4444 = vadd.f32 %v3793, %v4443
  %v4445 = vpop.f32.mrb[0].mxu0
  %4446 = vmatprep.mubr.f32.mxu0 0.0
  %v4447 = vand.u32 %v127, 4294901760
  %4448 = vmatmul.mubr.f32.gmra.mrb[0].mxu0 %v4447
  %v4449 = vpop.f32.mrb[0].mxu0
  %v4450 = vadd.f32 %v3803, %v4449
  %v4451 = vpop.f32.mrb[0].mxu0
  %4452 = vmatprep.mubr.f32.mxu0 0.0
  %v4453 = vand.u32 %v130, 4294901760
  %4454 = vmatmul.mubr.f32.gmra.mrb[0].mxu0 %v4453
  %v4455 = vpop.f32.mrb[0].mxu0
  %v4456 = vadd.f32 %v3813, %v4455
  %v4457 = vpop.f32.mrb[0].mxu0
  %4458 = vmatprep.mubr.f32.mxu0 0.0
  %v4459 = vand.u32 %v133, 4294901760
  %4460 = vmatmul.mubr.f32.gmra.mrb[0].mxu0 %v4459
  %v4461 = vpop.f32.mrb[0].mxu0
  %v4462 = vadd.f32 %v3823, %v4461
  %v4463 = vpop.f32.mrb[0].mxu0
  %4464 = vmatprep.mubr.f32.mxu0 0.0
  %v4465 = vand.u32 %v136, 4294901760
  %4466 = vmatmul.mubr.f32.gmra.mrb[0].mxu0 %v4465
  %v4467 = vpop.f32.mrb[0].mxu0
  %v4468 = vadd.f32 %v3833, %v4467
  %v4469 = vpop.f32.mrb[0].mxu0
  %4470 = vmatprep.mubr.f32.mxu0 0.0
  %v4471 = vand.u32 %v139, 4294901760
  %4472 = vmatmul.mubr.f32.gmra.mrb[0].mxu0 %v4471
  %v4473 = vpop.f32.mrb[0].mxu0
  %v4474 = vadd.f32 %v3843, %v4473
  %v4475 = vpop.f32.mrb[0].mxu0
  %4476 = vmatprep.mubr.f32.mxu0 0.0
  %v4477 = vand.u32 %v142, 4294901760
  %4478 = vmatmul.mubr.f32.gmra.mrb[0].mxu0 %v4477
  %v4479 = vpop.f32.mrb[0].mxu0
  %v4480 = vadd.f32 %v3853, %v4479
  %v4481 = vpop.f32.mrb[0].mxu0
  %4482 = vmatprep.mubr.f32.mxu0 0.0
  %v4483 = vand.u32 %v145, 4294901760
  %4484 = vmatmul.mubr.f32.gmra.mrb[0].mxu0 %v4483
  %v4485 = vpop.f32.mrb[0].mxu0
  %v4486 = vadd.f32 %v3863, %v4485
  %v4487 = vpop.f32.mrb[0].mxu0
  %4488 = vmatprep.mubr.f32.mxu0 0.0
  %v4489 = vand.u32 %v148, 4294901760
  %4490 = vmatmul.mubr.f32.gmra.mrb[0].mxu0 %v4489
  %v4491 = vpop.f32.mrb[0].mxu0
  %v4492 = vadd.f32 %v3873, %v4491
  %v4493 = vpop.f32.mrb[0].mxu0
  %4494 = vmatprep.mubr.f32.mxu0 0.0
  %v4495 = vand.u32 %v151, 4294901760
  %4496 = vmatmul.mubr.f32.gmra.mrb[0].mxu0 %v4495
  %v4497 = vpop.f32.mrb[0].mxu0
  %v4498 = vadd.f32 %v3883, %v4497
  %v4499 = vpop.f32.mrb[0].mxu0
  %4500 = vmatprep.mubr.f32.mxu0 0.0
  %v4501 = vand.u32 %v154, 4294901760
  %4502 = vmatmul.mubr.f32.gmra.mrb[0].mxu0 %v4501
  %v4503 = vpop.f32.mrb[0].mxu0
  %v4504 = vadd.f32 %v3893, %v4503
  %v4505 = vpop.f32.mrb[0].mxu0
  %4506 = vmatprep.mubr.f32.mxu0 0.0
  %v4507 = vand.u32 %v157, 4294901760
  %4508 = vmatmul.mubr.f32.gmra.mrb[0].mxu0 %v4507
  %v4509 = vpop.f32.mrb[0].mxu0
  %v4510 = vadd.f32 %v3903, %v4509
  %v4511 = vpop.f32.mrb[0].mxu0
  %4512 = vmatprep.mubr.f32.mxu0 0.0
  %v4513 = vand.u32 %v160, 4294901760
  %4514 = vmatmul.mubr.f32.gmra.mrb[0].mxu0 %v4513
  %v4515 = vpop.f32.mrb[0].mxu0
  %v4516 = vadd.f32 %v3913, %v4515
  %v4517 = vpop.f32.mrb[0].mxu0
  %4518 = vmatprep.mubr.f32.mxu0 0.0
  %v4519 = vand.u32 %v163, 4294901760
  %4520 = vmatmul.mubr.f32.gmra.mrb[0].mxu0 %v4519
  %v4521 = vpop.f32.mrb[0].mxu0
  %v4522 = vadd.f32 %v3923, %v4521
  %v4523 = vpop.f32.mrb[0].mxu0
  %4524 = vmatprep.mubr.f32.mxu0 0.0
  %v4525 = vand.u32 %v166, 4294901760
  %4526 = vmatmul.mubr.f32.gmra.mrb[0].mxu0 %v4525
  %v4527 = vpop.f32.mrb[0].mxu0
  %v4528 = vadd.f32 %v3933, %v4527
  %v4529 = vpop.f32.mrb[0].mxu0
  %4530 = vmatprep.mubr.f32.mxu0 0.0
  %v4531 = vand.u32 %v169, 4294901760
  %4532 = vmatmul.mubr.f32.gmra.mrb[0].mxu0 %v4531
  %v4533 = vpop.f32.mrb[0].mxu0
  %v4534 = vadd.f32 %v3943, %v4533
  %v4535 = vpop.f32.mrb[0].mxu0
  %4536 = vmatprep.mubr.f32.mxu0 0.0
  %v4537 = vand.u32 %v172, 4294901760
  %4538 = vmatmul.mubr.f32.gmra.mrb[0].mxu0 %v4537
  %v4539 = vpop.f32.mrb[0].mxu0
  %v4540 = vadd.f32 %v3953, %v4539
  %v4541 = vpop.f32.mrb[0].mxu0
  %4542 = vmatprep.mubr.f32.mxu0 0.0
  %v4543 = vand.u32 %v175, 4294901760
  %4544 = vmatmul.mubr.f32.gmra.mrb[0].mxu0 %v4543
  %v4545 = vpop.f32.mrb[0].mxu0
  %v4546 = vadd.f32 %v3963, %v4545
  %v4547 = vpop.f32.mrb[0].mxu0
  %4548 = vmatprep.mubr.f32.mxu0 0.0
  %v4549 = vand.u32 %v178, 4294901760
  %4550 = vmatmul.mubr.f32.gmra.mrb[0].mxu0 %v4549
  %v4551 = vpop.f32.mrb[0].mxu0
  %v4552 = vadd.f32 %v3973, %v4551
  %v4553 = vpop.f32.mrb[0].mxu0
  %4554 = vmatprep.mubr.f32.mxu0 0.0
  %v4555 = vand.u32 %v181, 4294901760
  %4556 = vmatmul.mubr.f32.gmra.mrb[0].mxu0 %v4555
  %v4557 = vpop.f32.mrb[0].mxu0
  %v4558 = vadd.f32 %v3983, %v4557
  %v4559 = vpop.f32.mrb[0].mxu0
  %4560 = vmatprep.mubr.f32.mxu0 0.0
  %v4561 = vand.u32 %v184, 4294901760
  %4562 = vmatmul.mubr.f32.gmra.mrb[0].mxu0 %v4561
  %v4563 = vpop.f32.mrb[0].mxu0
  %v4564 = vadd.f32 %v3993, %v4563
  %v4565 = vpop.f32.mrb[0].mxu0
  %4566 = vmatprep.mubr.f32.mxu0 0.0
  %v4567 = vand.u32 %v187, 4294901760
  %4568 = vmatmul.mubr.f32.gmra.mrb[0].mxu0 %v4567
  %v4569 = vpop.f32.mrb[0].mxu0
  %v4570 = vadd.f32 %v4003, %v4569
  %v4571 = vpop.f32.mrb[0].mxu0
  %4572 = vmatprep.mubr.f32.mxu0 0.0
  %v4573 = vand.u32 %v190, 4294901760
  %4574 = vmatmul.mubr.f32.gmra.mrb[0].mxu0 %v4573
  %v4575 = vpop.f32.mrb[0].mxu0
  %v4576 = vadd.f32 %v4013, %v4575
  %v4577 = vpop.f32.mrb[0].mxu0
  %4578 = vmatprep.mubr.f32.mxu0 0.0
  %v4579 = vand.u32 %v193, 4294901760
  %4580 = vmatmul.mubr.f32.gmra.mrb[0].mxu0 %v4579
  %v4581 = vpop.f32.mrb[0].mxu0
  %v4582 = vadd.f32 %v4023, %v4581
  %v4583 = vpop.f32.mrb[0].mxu0
  %4584 = vmatprep.mubr.f32.mxu0 0.0
  %v4585 = vand.u32 %v196, 4294901760
  %4586 = vmatmul.mubr.f32.gmra.mrb[0].mxu0 %v4585
  %v4587 = vpop.f32.mrb[0].mxu0
  %v4588 = vadd.f32 %v4033, %v4587
  %v4589 = vpop.f32.mrb[0].mxu0
  %4590 = vmatprep.mubr.f32.mxu0 0.0
  %v4591 = vand.u32 %v199, 4294901760
  %4592 = vmatmul.mubr.f32.gmra.mrb[0].mxu0 %v4591
  %v4593 = vpop.f32.mrb[0].mxu0
  %v4594 = vadd.f32 %v4043, %v4593
  %v4595 = vpop.f32.mrb[0].mxu0
  %4596 = vmatprep.mubr.f32.mxu0 0.0
  %v4597 = vand.u32 %v202, 4294901760
  %4598 = vmatmul.mubr.f32.gmra.mrb[0].mxu0 %v4597
  %v4599 = vpop.f32.mrb[0].mxu0
  %v4600 = vadd.f32 %v4053, %v4599
  %v4601 = vpop.f32.mrb[0].mxu0
  %4602 = vmatprep.mubr.f32.mxu0 0.0
  %v4603 = vand.u32 %v205, 4294901760
  %4604 = vmatmul.mubr.f32.gmra.mrb[0].mxu0 %v4603
  %v4605 = vpop.f32.mrb[0].mxu0
  %v4606 = vadd.f32 %v4063, %v4605
  %v4607 = vpop.f32.mrb[0].mxu0
  %4608 = vmatprep.mubr.f32.mxu0 0.0
  %v4609 = vand.u32 %v208, 4294901760
  %4610 = vmatmul.mubr.f32.gmra.mrb[0].mxu0 %v4609
  %v4611 = vpop.f32.mrb[0].mxu0
  %v4612 = vadd.f32 %v4073, %v4611
  %v4613 = vpop.f32.mrb[0].mxu0
  %4614 = vmatprep.mubr.f32.mxu0 0.0
  %v4615 = vand.u32 %v211, 4294901760
  %4616 = vmatmul.mubr.f32.gmra.mrb[0].mxu0 %v4615
  %v4617 = vpop.f32.mrb[0].mxu0
  %v4618 = vadd.f32 %v4083, %v4617
  %v4619 = vpop.f32.mrb[0].mxu0
  %4620 = vmatprep.mubr.f32.mxu0 0.0
  %v4621 = vand.u32 %v214, 4294901760
  %4622 = vmatmul.mubr.f32.gmra.mrb[0].mxu0 %v4621
  %v4623 = vpop.f32.mrb[0].mxu0
  %v4624 = vadd.f32 %v4093, %v4623
  %v4625 = vpop.f32.mrb[0].mxu0
  %4626 = vmatprep.mubr.f32.mxu0 0.0
  %v4627 = vand.u32 %v217, 4294901760
  %4628 = vmatmul.mubr.f32.gmra.mrb[0].mxu0 %v4627
  %v4629 = vpop.f32.mrb[0].mxu0
  %v4630 = vadd.f32 %v4103, %v4629
  %v4631 = vpop.f32.mrb[0].mxu0
  %4632 = vmatprep.mubr.f32.mxu0 0.0
  %v4633 = vand.u32 %v220, 4294901760
  %4634 = vmatmul.mubr.f32.gmra.mrb[0].mxu0 %v4633
  %v4635 = vpop.f32.mrb[0].mxu0
  %v4636 = vadd.f32 %v4113, %v4635
  %v4637 = vpop.f32.mrb[0].mxu0
  %4638 = vmatprep.mubr.f32.mxu0 0.0
  %v4639 = vand.u32 %v223, 4294901760
  %4640 = vmatmul.mubr.f32.gmra.mrb[0].mxu0 %v4639
  %v4641 = vpop.f32.mrb[0].mxu0
  %v4642 = vadd.f32 %v4123, %v4641
  %v4643 = vpop.f32.mrb[0].mxu0
  %4644 = vmatprep.mubr.f32.mxu0 0.0
  %v4645 = vand.u32 %v226, 4294901760
  %4646 = vmatmul.mubr.f32.gmra.mrb[0].mxu0 %v4645
  %v4647 = vpop.f32.mrb[0].mxu0
  %v4648 = vadd.f32 %v4133, %v4647
  %v4649 = vpop.f32.mrb[0].mxu0
  %4650 = vmatprep.mubr.f32.mxu0 0.0
  %v4651 = vand.u32 %v229, 4294901760
  %4652 = vmatmul.mubr.f32.gmra.mrb[0].mxu0 %v4651
  %v4653 = vpop.f32.mrb[0].mxu0
  %v4654 = vadd.f32 %v4143, %v4653
  %v4655 = vpop.f32.mrb[0].mxu0
  %4656 = vmatprep.mubr.f32.mxu0 0.0
  %v4657 = vand.u32 %v232, 4294901760
  %4658 = vmatmul.mubr.f32.gmra.mrb[0].mxu0 %v4657
  %v4659 = vpop.f32.mrb[0].mxu0
  %v4660 = vadd.f32 %v4153, %v4659
  %v4661 = vpop.f32.mrb[0].mxu0
  %4662 = vmatprep.mubr.f32.mxu0 0.0
  %v4663 = vand.u32 %v235, 4294901760
  %4664 = vmatmul.mubr.f32.gmra.mrb[0].mxu0 %v4663
  %v4665 = vpop.f32.mrb[0].mxu0
  %v4666 = vadd.f32 %v4163, %v4665
  %v4667 = vpop.f32.mrb[0].mxu0
  %4668 = vmatprep.mubr.f32.mxu0 0.0
  %v4669 = vand.u32 %v238, 4294901760
  %4670 = vmatmul.mubr.f32.gmra.mrb[0].mxu0 %v4669
  %v4671 = vpop.f32.mrb[0].mxu0
  %v4672 = vadd.f32 %v4173, %v4671
  %v4673 = vpop.f32.mrb[0].mxu0
  %4674 = vmatprep.mubr.f32.mxu0 0.0
  %v4675 = vand.u32 %v241, 4294901760
  %4676 = vmatmul.mubr.f32.gmra.mrb[0].mxu0 %v4675
  %v4677 = vpop.f32.mrb[0].mxu0
  %v4678 = vadd.f32 %v4183, %v4677
  %v4679 = vpop.f32.mrb[0].mxu0
  %4680 = vmatprep.mubr.f32.mxu0 0.0
  %v4681 = vand.u32 %v244, 4294901760
  %4682 = vmatmul.mubr.f32.gmra.mrb[0].mxu0 %v4681
  %v4683 = vpop.f32.mrb[0].mxu0
  %v4684 = vadd.f32 %v4193, %v4683
  %v4685 = vpop.f32.mrb[0].mxu0
  %4686 = vmatprep.mubr.f32.mxu0 0.0
  %v4687 = vand.u32 %v247, 4294901760
  %4688 = vmatmul.mubr.f32.gmra.mrb[0].mxu0 %v4687
  %v4689 = vpop.f32.mrb[0].mxu0
  %v4690 = vadd.f32 %v4203, %v4689
  %v4691 = vpop.f32.mrb[0].mxu0
  %4692 = vmatprep.mubr.f32.mxu0 0.0
  %v4693 = vand.u32 %v250, 4294901760
  %4694 = vmatmul.mubr.f32.gmra.mrb[0].mxu0 %v4693
  %v4695 = vpop.f32.mrb[0].mxu0
  %v4696 = vadd.f32 %v4213, %v4695
  %v4697 = vpop.f32.mrb[0].mxu0
  %4698 = vmatprep.mubr.f32.mxu0 0.0
  %v4699 = vand.u32 %v253, 4294901760
  %4700 = vmatmul.mubr.f32.gmra.mrb[0].mxu0 %v4699
  %v4701 = vpop.f32.mrb[0].mxu0
  %v4702 = vadd.f32 %v4223, %v4701
  %v4703 = vpop.f32.mrb[0].mxu0
  %4704 = vmatprep.mubr.f32.mxu0 0.0
  %v4705 = vand.u32 %v256, 4294901760
  %4706 = vmatmul.mubr.f32.gmra.mrb[0].mxu0 %v4705
  %v4707 = vpop.f32.mrb[0].mxu0
  %v4708 = vadd.f32 %v4233, %v4707
  %v4709 = vpop.f32.mrb[0].mxu0
  %4710 = vmatprep.mubr.f32.mxu0 0.0
  %v4711 = vand.u32 %v259, 4294901760
  %4712 = vmatmul.mubr.f32.gmra.mrb[0].mxu0 %v4711
  %v4713 = vpop.f32.mrb[0].mxu0
  %v4714 = vadd.f32 %v4243, %v4713
  %v4715 = vpop.f32.mrb[0].mxu0
  %4716 = vmatprep.mubr.f32.mxu0 0.0
  %v4717 = vand.u32 %v262, 4294901760
  %4718 = vmatmul.mubr.f32.gmra.mrb[0].mxu0 %v4717
  %v4719 = vpop.f32.mrb[0].mxu0
  %v4720 = vadd.f32 %v4253, %v4719
  %v4721 = vpop.f32.mrb[0].mxu0
  %4722 = vmatprep.mubr.f32.mxu0 0.0
  %v4723 = vand.u32 %v265, 4294901760
  %4724 = vmatmul.mubr.f32.gmra.mrb[0].mxu0 %v4723
  %v4725 = vpop.f32.mrb[0].mxu0
  %v4726 = vadd.f32 %v4263, %v4725
  %v4727 = vpop.f32.mrb[0].mxu0
  %4728 = vmatprep.mubr.f32.mxu0 0.0
  %v4729 = vand.u32 %v268, 4294901760
  %4730 = vmatmul.mubr.f32.gmra.mrb[0].mxu0 %v4729
  %v4731 = vpop.f32.mrb[0].mxu0
  %v4732 = vadd.f32 %v4273, %v4731
  %v4733 = vpop.f32.mrb[0].mxu0
  %4734 = vdwg.mxu0
  %4735 = vmatprep.subr.mxu0 0.0
  %v4736 = vand.u32 %v3567, 4294901760
  %v4737 = vsub.f32 %v3567, %v4736
  %4738 = vmatpush1.msra.mxu0 %v4737
  %4739 = vmatprep.subr.mxu0 0.0
  %v4740 = vand.u32 %v3568, 4294901760
  %v4741 = vsub.f32 %v3568, %v4740
  %4742 = vmatpush1.msra.mxu0 %v4741
  %4743 = vmatprep.subr.mxu0 0.0
  %4744 = vmatpush1.msra.mxu0 0.0
  %4745 = vmatprep.subr.mxu0 0.0
  %4746 = vmatpush1.msra.mxu0 0.0
  %4747 = vmatprep.subr.mxu0 0.0
  %4748 = vmatpush1.msra.mxu0 0.0
  %4749 = vmatprep.subr.mxu0 0.0
  %4750 = vmatpush1.msra.mxu0 0.0
  %4751 = vmatprep.subr.mxu0 0.0
  %4752 = vmatpush1.msra.mxu0 0.0
  %4753 = vmatprep.subr.mxu0 0.0
  %4754 = vmatpush1.msra.mxu0 0.0
  %4755 = vmatprep.subr.mxu0 0.0
  %4756 = vmatpush1.msra.mxu0 0.0
  %4757 = vmatprep.subr.mxu0 0.0
  %4758 = vmatpush1.msra.mxu0 0.0
  %4759 = vmatprep.subr.mxu0 0.0
  %4760 = vmatpush1.msra.mxu0 0.0
  %4761 = vmatprep.subr.mxu0 0.0
  %4762 = vmatpush1.msra.mxu0 0.0
  %4763 = vmatprep.subr.mxu0 0.0
  %4764 = vmatpush1.msra.mxu0 0.0
  %4765 = vmatprep.subr.mxu0 0.0
  %4766 = vmatpush1.msra.mxu0 0.0
  %4767 = vmatprep.subr.mxu0 0.0
  %4768 = vmatpush1.msra.mxu0 0.0
  %4769 = vmatprep.subr.mxu0 0.0
  %4770 = vmatpush1.msra.mxu0 0.0
  %4771 = vmatprep.subr.mxu0 0.0
  %4772 = vmatpush1.msra.mxu0 0.0
  %4773 = vmatprep.subr.mxu0 0.0
  %4774 = vmatpush1.msra.mxu0 0.0
  %4775 = vmatprep.subr.mxu0 0.0
  %4776 = vmatpush1.msra.mxu0 0.0
  %4777 = vmatprep.subr.mxu0 0.0
  %4778 = vmatpush1.msra.mxu0 0.0
  %4779 = vmatprep.subr.mxu0 0.0
  %4780 = vmatpush1.msra.mxu0 0.0
  %4781 = vmatprep.subr.mxu0 0.0
  %4782 = vmatpush1.msra.mxu0 0.0
  %4783 = vmatprep.subr.mxu0 0.0
  %4784 = vmatpush1.msra.mxu0 0.0
  %4785 = vmatprep.subr.mxu0 0.0
  %4786 = vmatpush1.msra.mxu0 0.0
  %4787 = vmatprep.subr.mxu0 0.0
  %4788 = vmatpush1.msra.mxu0 0.0
  %4789 = vmatprep.subr.mxu0 0.0
  %4790 = vmatpush1.msra.mxu0 0.0
  %4791 = vmatprep.subr.mxu0 0.0
  %4792 = vmatpush1.msra.mxu0 0.0
  %4793 = vmatprep.subr.mxu0 0.0
  %4794 = vmatpush1.msra.mxu0 0.0
  %4795 = vmatprep.subr.mxu0 0.0
  %4796 = vmatpush1.msra.mxu0 0.0
  %4797 = vmatprep.subr.mxu0 0.0
  %4798 = vmatpush1.msra.mxu0 0.0
  %4799 = vmatprep.subr.mxu0 0.0
  %4800 = vmatpush1.msra.mxu0 0.0
  %4801 = vmatprep.subr.mxu0 0.0
  %4802 = vmatpush1.msra.mxu0 0.0
  %4803 = vmatprep.mubr.f32.mxu0 0.0
  %v4804 = vand.u32 %v79, 4294901760
  %v4805 = vsub.f32 %v79, %v4804
  %4806 = vmatmul.mubr.f32.gmra.mrb[0].mxu0 %v4805
  %v4807 = vpop.f32.mrb[0].mxu0
  %v4808 = vadd.f32 %v4354, %v4807
  %v4809 = vpop.f32.mrb[0].mxu0
  %4810 = vmatprep.mubr.f32.mxu0 0.0
  %v4811 = vand.u32 %v82, 4294901760
  %v4812 = vsub.f32 %v82, %v4811
  %4813 = vmatmul.mubr.f32.gmra.mrb[0].mxu0 %v4812
  %v4814 = vpop.f32.mrb[0].mxu0
  %v4815 = vadd.f32 %v4360, %v4814
  %v4816 = vpop.f32.mrb[0].mxu0
  %4817 = vmatprep.mubr.f32.mxu0 0.0
  %v4818 = vand.u32 %v85, 4294901760
  %v4819 = vsub.f32 %v85, %v4818
  %4820 = vmatmul.mubr.f32.gmra.mrb[0].mxu0 %v4819
  %v4821 = vpop.f32.mrb[0].mxu0
  %v4822 = vadd.f32 %v4366, %v4821
  %v4823 = vpop.f32.mrb[0].mxu0
  %4824 = vmatprep.mubr.f32.mxu0 0.0
  %v4825 = vand.u32 %v88, 4294901760
  %v4826 = vsub.f32 %v88, %v4825
  %4827 = vmatmul.mubr.f32.gmra.mrb[0].mxu0 %v4826
  %v4828 = vpop.f32.mrb[0].mxu0
  %v4829 = vadd.f32 %v4372, %v4828
  %v4830 = vpop.f32.mrb[0].mxu0
  %4831 = vmatprep.mubr.f32.mxu0 0.0
  %v4832 = vand.u32 %v91, 4294901760
  %v4833 = vsub.f32 %v91, %v4832
  %4834 = vmatmul.mubr.f32.gmra.mrb[0].mxu0 %v4833
  %v4835 = vpop.f32.mrb[0].mxu0
  %v4836 = vadd.f32 %v4378, %v4835
  %v4837 = vpop.f32.mrb[0].mxu0
  %4838 = vmatprep.mubr.f32.mxu0 0.0
  %v4839 = vand.u32 %v94, 4294901760
  %v4840 = vsub.f32 %v94, %v4839
  %4841 = vmatmul.mubr.f32.gmra.mrb[0].mxu0 %v4840
  %v4842 = vpop.f32.mrb[0].mxu0
  %v4843 = vadd.f32 %v4384, %v4842
  %v4844 = vpop.f32.mrb[0].mxu0
  %4845 = vmatprep.mubr.f32.mxu0 0.0
  %v4846 = vand.u32 %v97, 4294901760
  %v4847 = vsub.f32 %v97, %v4846
  %4848 = vmatmul.mubr.f32.gmra.mrb[0].mxu0 %v4847
  %v4849 = vpop.f32.mrb[0].mxu0
  %v4850 = vadd.f32 %v4390, %v4849
  %v4851 = vpop.f32.mrb[0].mxu0
  %4852 = vmatprep.mubr.f32.mxu0 0.0
  %v4853 = vand.u32 %v100, 4294901760
  %v4854 = vsub.f32 %v100, %v4853
  %4855 = vmatmul.mubr.f32.gmra.mrb[0].mxu0 %v4854
  %v4856 = vpop.f32.mrb[0].mxu0
  %v4857 = vadd.f32 %v4396, %v4856
  %v4858 = vpop.f32.mrb[0].mxu0
  %4859 = vmatprep.mubr.f32.mxu0 0.0
  %v4860 = vand.u32 %v103, 4294901760
  %v4861 = vsub.f32 %v103, %v4860
  %4862 = vmatmul.mubr.f32.gmra.mrb[0].mxu0 %v4861
  %v4863 = vpop.f32.mrb[0].mxu0
  %v4864 = vadd.f32 %v4402, %v4863
  %v4865 = vpop.f32.mrb[0].mxu0
  %4866 = vmatprep.mubr.f32.mxu0 0.0
  %v4867 = vand.u32 %v106, 4294901760
  %v4868 = vsub.f32 %v106, %v4867
  %4869 = vmatmul.mubr.f32.gmra.mrb[0].mxu0 %v4868
  %v4870 = vpop.f32.mrb[0].mxu0
  %v4871 = vadd.f32 %v4408, %v4870
  %v4872 = vpop.f32.mrb[0].mxu0
  %4873 = vmatprep.mubr.f32.mxu0 0.0
  %v4874 = vand.u32 %v109, 4294901760
  %v4875 = vsub.f32 %v109, %v4874
  %4876 = vmatmul.mubr.f32.gmra.mrb[0].mxu0 %v4875
  %v4877 = vpop.f32.mrb[0].mxu0
  %v4878 = vadd.f32 %v4414, %v4877
  %v4879 = vpop.f32.mrb[0].mxu0
  %4880 = vmatprep.mubr.f32.mxu0 0.0
  %v4881 = vand.u32 %v112, 4294901760
  %v4882 = vsub.f32 %v112, %v4881
  %4883 = vmatmul.mubr.f32.gmra.mrb[0].mxu0 %v4882
  %v4884 = vpop.f32.mrb[0].mxu0
  %v4885 = vadd.f32 %v4420, %v4884
  %v4886 = vpop.f32.mrb[0].mxu0
  %4887 = vmatprep.mubr.f32.mxu0 0.0
  %v4888 = vand.u32 %v115, 4294901760
  %v4889 = vsub.f32 %v115, %v4888
  %4890 = vmatmul.mubr.f32.gmra.mrb[0].mxu0 %v4889
  %v4891 = vpop.f32.mrb[0].mxu0
  %v4892 = vadd.f32 %v4426, %v4891
  %v4893 = vpop.f32.mrb[0].mxu0
  %4894 = vmatprep.mubr.f32.mxu0 0.0
  %v4895 = vand.u32 %v118, 4294901760
  %v4896 = vsub.f32 %v118, %v4895
  %4897 = vmatmul.mubr.f32.gmra.mrb[0].mxu0 %v4896
  %v4898 = vpop.f32.mrb[0].mxu0
  %v4899 = vadd.f32 %v4432, %v4898
  %v4900 = vpop.f32.mrb[0].mxu0
  %4901 = vmatprep.mubr.f32.mxu0 0.0
  %v4902 = vand.u32 %v121, 4294901760
  %v4903 = vsub.f32 %v121, %v4902
  %4904 = vmatmul.mubr.f32.gmra.mrb[0].mxu0 %v4903
  %v4905 = vpop.f32.mrb[0].mxu0
  %v4906 = vadd.f32 %v4438, %v4905
  %v4907 = vpop.f32.mrb[0].mxu0
  %4908 = vmatprep.mubr.f32.mxu0 0.0
  %v4909 = vand.u32 %v124, 4294901760
  %v4910 = vsub.f32 %v124, %v4909
  %4911 = vmatmul.mubr.f32.gmra.mrb[0].mxu0 %v4910
  %v4912 = vpop.f32.mrb[0].mxu0
  %v4913 = vadd.f32 %v4444, %v4912
  %v4914 = vpop.f32.mrb[0].mxu0
  %4915 = vmatprep.mubr.f32.mxu0 0.0
  %v4916 = vand.u32 %v127, 4294901760
  %v4917 = vsub.f32 %v127, %v4916
  %4918 = vmatmul.mubr.f32.gmra.mrb[0].mxu0 %v4917
  %v4919 = vpop.f32.mrb[0].mxu0
  %v4920 = vadd.f32 %v4450, %v4919
  %v4921 = vpop.f32.mrb[0].mxu0
  %4922 = vmatprep.mubr.f32.mxu0 0.0
  %v4923 = vand.u32 %v130, 4294901760
  %v4924 = vsub.f32 %v130, %v4923
  %4925 = vmatmul.mubr.f32.gmra.mrb[0].mxu0 %v4924
  %v4926 = vpop.f32.mrb[0].mxu0
  %v4927 = vadd.f32 %v4456, %v4926
  %v4928 = vpop.f32.mrb[0].mxu0
  %4929 = vmatprep.mubr.f32.mxu0 0.0
  %v4930 = vand.u32 %v133, 4294901760
  %v4931 = vsub.f32 %v133, %v4930
  %4932 = vmatmul.mubr.f32.gmra.mrb[0].mxu0 %v4931
  %v4933 = vpop.f32.mrb[0].mxu0
  %v4934 = vadd.f32 %v4462, %v4933
  %v4935 = vpop.f32.mrb[0].mxu0
  %4936 = vmatprep.mubr.f32.mxu0 0.0
  %v4937 = vand.u32 %v136, 4294901760
  %v4938 = vsub.f32 %v136, %v4937
  %4939 = vmatmul.mubr.f32.gmra.mrb[0].mxu0 %v4938
  %v4940 = vpop.f32.mrb[0].mxu0
  %v4941 = vadd.f32 %v4468, %v4940
  %v4942 = vpop.f32.mrb[0].mxu0
  %4943 = vmatprep.mubr.f32.mxu0 0.0
  %v4944 = vand.u32 %v139, 4294901760
  %v4945 = vsub.f32 %v139, %v4944
  %4946 = vmatmul.mubr.f32.gmra.mrb[0].mxu0 %v4945
  %v4947 = vpop.f32.mrb[0].mxu0
  %v4948 = vadd.f32 %v4474, %v4947
  %v4949 = vpop.f32.mrb[0].mxu0
  %4950 = vmatprep.mubr.f32.mxu0 0.0
  %v4951 = vand.u32 %v142, 4294901760
  %v4952 = vsub.f32 %v142, %v4951
  %4953 = vmatmul.mubr.f32.gmra.mrb[0].mxu0 %v4952
  %v4954 = vpop.f32.mrb[0].mxu0
  %v4955 = vadd.f32 %v4480, %v4954
  %v4956 = vpop.f32.mrb[0].mxu0
  %4957 = vmatprep.mubr.f32.mxu0 0.0
  %v4958 = vand.u32 %v145, 4294901760
  %v4959 = vsub.f32 %v145, %v4958
  %4960 = vmatmul.mubr.f32.gmra.mrb[0].mxu0 %v4959
  %v4961 = vpop.f32.mrb[0].mxu0
  %v4962 = vadd.f32 %v4486, %v4961
  %v4963 = vpop.f32.mrb[0].mxu0
  %4964 = vmatprep.mubr.f32.mxu0 0.0
  %v4965 = vand.u32 %v148, 4294901760
  %v4966 = vsub.f32 %v148, %v4965
  %4967 = vmatmul.mubr.f32.gmra.mrb[0].mxu0 %v4966
  %v4968 = vpop.f32.mrb[0].mxu0
  %v4969 = vadd.f32 %v4492, %v4968
  %v4970 = vpop.f32.mrb[0].mxu0
  %4971 = vmatprep.mubr.f32.mxu0 0.0
  %v4972 = vand.u32 %v151, 4294901760
  %v4973 = vsub.f32 %v151, %v4972
  %4974 = vmatmul.mubr.f32.gmra.mrb[0].mxu0 %v4973
  %v4975 = vpop.f32.mrb[0].mxu0
  %v4976 = vadd.f32 %v4498, %v4975
  %v4977 = vpop.f32.mrb[0].mxu0
  %4978 = vmatprep.mubr.f32.mxu0 0.0
  %v4979 = vand.u32 %v154, 4294901760
  %v4980 = vsub.f32 %v154, %v4979
  %4981 = vmatmul.mubr.f32.gmra.mrb[0].mxu0 %v4980
  %v4982 = vpop.f32.mrb[0].mxu0
  %v4983 = vadd.f32 %v4504, %v4982
  %v4984 = vpop.f32.mrb[0].mxu0
  %4985 = vmatprep.mubr.f32.mxu0 0.0
  %v4986 = vand.u32 %v157, 4294901760
  %v4987 = vsub.f32 %v157, %v4986
  %4988 = vmatmul.mubr.f32.gmra.mrb[0].mxu0 %v4987
  %v4989 = vpop.f32.mrb[0].mxu0
  %v4990 = vadd.f32 %v4510, %v4989
  %v4991 = vpop.f32.mrb[0].mxu0
  %4992 = vmatprep.mubr.f32.mxu0 0.0
  %v4993 = vand.u32 %v160, 4294901760
  %v4994 = vsub.f32 %v160, %v4993
  %4995 = vmatmul.mubr.f32.gmra.mrb[0].mxu0 %v4994
  %v4996 = vpop.f32.mrb[0].mxu0
  %v4997 = vadd.f32 %v4516, %v4996
  %v4998 = vpop.f32.mrb[0].mxu0
  %4999 = vmatprep.mubr.f32.mxu0 0.0
  %v5000 = vand.u32 %v163, 4294901760
  %v5001 = vsub.f32 %v163, %v5000
  %5002 = vmatmul.mubr.f32.gmra.mrb[0].mxu0 %v5001
  %v5003 = vpop.f32.mrb[0].mxu0
  %v5004 = vadd.f32 %v4522, %v5003
  %v5005 = vpop.f32.mrb[0].mxu0
  %5006 = vmatprep.mubr.f32.mxu0 0.0
  %v5007 = vand.u32 %v166, 4294901760
  %v5008 = vsub.f32 %v166, %v5007
  %5009 = vmatmul.mubr.f32.gmra.mrb[0].mxu0 %v5008
  %v5010 = vpop.f32.mrb[0].mxu0
  %v5011 = vadd.f32 %v4528, %v5010
  %v5012 = vpop.f32.mrb[0].mxu0
  %5013 = vmatprep.mubr.f32.mxu0 0.0
  %v5014 = vand.u32 %v169, 4294901760
  %v5015 = vsub.f32 %v169, %v5014
  %5016 = vmatmul.mubr.f32.gmra.mrb[0].mxu0 %v5015
  %v5017 = vpop.f32.mrb[0].mxu0
  %v5018 = vadd.f32 %v4534, %v5017
  %v5019 = vpop.f32.mrb[0].mxu0
  %5020 = vmatprep.mubr.f32.mxu0 0.0
  %v5021 = vand.u32 %v172, 4294901760
  %v5022 = vsub.f32 %v172, %v5021
  %5023 = vmatmul.mubr.f32.gmra.mrb[0].mxu0 %v5022
  %v5024 = vpop.f32.mrb[0].mxu0
  %v5025 = vadd.f32 %v4540, %v5024
  %v5026 = vpop.f32.mrb[0].mxu0
  %5027 = vmatprep.mubr.f32.mxu0 0.0
  %v5028 = vand.u32 %v175, 4294901760
  %v5029 = vsub.f32 %v175, %v5028
  %5030 = vmatmul.mubr.f32.gmra.mrb[0].mxu0 %v5029
  %v5031 = vpop.f32.mrb[0].mxu0
  %v5032 = vadd.f32 %v4546, %v5031
  %v5033 = vpop.f32.mrb[0].mxu0
  %5034 = vmatprep.mubr.f32.mxu0 0.0
  %v5035 = vand.u32 %v178, 4294901760
  %v5036 = vsub.f32 %v178, %v5035
  %5037 = vmatmul.mubr.f32.gmra.mrb[0].mxu0 %v5036
  %v5038 = vpop.f32.mrb[0].mxu0
  %v5039 = vadd.f32 %v4552, %v5038
  %v5040 = vpop.f32.mrb[0].mxu0
  %5041 = vmatprep.mubr.f32.mxu0 0.0
  %v5042 = vand.u32 %v181, 4294901760
  %v5043 = vsub.f32 %v181, %v5042
  %5044 = vmatmul.mubr.f32.gmra.mrb[0].mxu0 %v5043
  %v5045 = vpop.f32.mrb[0].mxu0
  %v5046 = vadd.f32 %v4558, %v5045
  %v5047 = vpop.f32.mrb[0].mxu0
  %5048 = vmatprep.mubr.f32.mxu0 0.0
  %v5049 = vand.u32 %v184, 4294901760
  %v5050 = vsub.f32 %v184, %v5049
  %5051 = vmatmul.mubr.f32.gmra.mrb[0].mxu0 %v5050
  %v5052 = vpop.f32.mrb[0].mxu0
  %v5053 = vadd.f32 %v4564, %v5052
  %v5054 = vpop.f32.mrb[0].mxu0
  %5055 = vmatprep.mubr.f32.mxu0 0.0
  %v5056 = vand.u32 %v187, 4294901760
  %v5057 = vsub.f32 %v187, %v5056
  %5058 = vmatmul.mubr.f32.gmra.mrb[0].mxu0 %v5057
  %v5059 = vpop.f32.mrb[0].mxu0
  %v5060 = vadd.f32 %v4570, %v5059
  %v5061 = vpop.f32.mrb[0].mxu0
  %5062 = vmatprep.mubr.f32.mxu0 0.0
  %v5063 = vand.u32 %v190, 4294901760
  %v5064 = vsub.f32 %v190, %v5063
  %5065 = vmatmul.mubr.f32.gmra.mrb[0].mxu0 %v5064
  %v5066 = vpop.f32.mrb[0].mxu0
  %v5067 = vadd.f32 %v4576, %v5066
  %v5068 = vpop.f32.mrb[0].mxu0
  %5069 = vmatprep.mubr.f32.mxu0 0.0
  %v5070 = vand.u32 %v193, 4294901760
  %v5071 = vsub.f32 %v193, %v5070
  %5072 = vmatmul.mubr.f32.gmra.mrb[0].mxu0 %v5071
  %v5073 = vpop.f32.mrb[0].mxu0
  %v5074 = vadd.f32 %v4582, %v5073
  %v5075 = vpop.f32.mrb[0].mxu0
  %5076 = vmatprep.mubr.f32.mxu0 0.0
  %v5077 = vand.u32 %v196, 4294901760
  %v5078 = vsub.f32 %v196, %v5077
  %5079 = vmatmul.mubr.f32.gmra.mrb[0].mxu0 %v5078
  %v5080 = vpop.f32.mrb[0].mxu0
  %v5081 = vadd.f32 %v4588, %v5080
  %v5082 = vpop.f32.mrb[0].mxu0
  %5083 = vmatprep.mubr.f32.mxu0 0.0
  %v5084 = vand.u32 %v199, 4294901760
  %v5085 = vsub.f32 %v199, %v5084
  %5086 = vmatmul.mubr.f32.gmra.mrb[0].mxu0 %v5085
  %v5087 = vpop.f32.mrb[0].mxu0
  %v5088 = vadd.f32 %v4594, %v5087
  %v5089 = vpop.f32.mrb[0].mxu0
  %5090 = vmatprep.mubr.f32.mxu0 0.0
  %v5091 = vand.u32 %v202, 4294901760
  %v5092 = vsub.f32 %v202, %v5091
  %5093 = vmatmul.mubr.f32.gmra.mrb[0].mxu0 %v5092
  %v5094 = vpop.f32.mrb[0].mxu0
  %v5095 = vadd.f32 %v4600, %v5094
  %v5096 = vpop.f32.mrb[0].mxu0
  %5097 = vmatprep.mubr.f32.mxu0 0.0
  %v5098 = vand.u32 %v205, 4294901760
  %v5099 = vsub.f32 %v205, %v5098
  %5100 = vmatmul.mubr.f32.gmra.mrb[0].mxu0 %v5099
  %v5101 = vpop.f32.mrb[0].mxu0
  %v5102 = vadd.f32 %v4606, %v5101
  %v5103 = vpop.f32.mrb[0].mxu0
  %5104 = vmatprep.mubr.f32.mxu0 0.0
  %v5105 = vand.u32 %v208, 4294901760
  %v5106 = vsub.f32 %v208, %v5105
  %5107 = vmatmul.mubr.f32.gmra.mrb[0].mxu0 %v5106
  %v5108 = vpop.f32.mrb[0].mxu0
  %v5109 = vadd.f32 %v4612, %v5108
  %v5110 = vpop.f32.mrb[0].mxu0
  %5111 = vmatprep.mubr.f32.mxu0 0.0
  %v5112 = vand.u32 %v211, 4294901760
  %v5113 = vsub.f32 %v211, %v5112
  %5114 = vmatmul.mubr.f32.gmra.mrb[0].mxu0 %v5113
  %v5115 = vpop.f32.mrb[0].mxu0
  %v5116 = vadd.f32 %v4618, %v5115
  %v5117 = vpop.f32.mrb[0].mxu0
  %5118 = vmatprep.mubr.f32.mxu0 0.0
  %v5119 = vand.u32 %v214, 4294901760
  %v5120 = vsub.f32 %v214, %v5119
  %5121 = vmatmul.mubr.f32.gmra.mrb[0].mxu0 %v5120
  %v5122 = vpop.f32.mrb[0].mxu0
  %v5123 = vadd.f32 %v4624, %v5122
  %v5124 = vpop.f32.mrb[0].mxu0
  %5125 = vmatprep.mubr.f32.mxu0 0.0
  %v5126 = vand.u32 %v217, 4294901760
  %v5127 = vsub.f32 %v217, %v5126
  %5128 = vmatmul.mubr.f32.gmra.mrb[0].mxu0 %v5127
  %v5129 = vpop.f32.mrb[0].mxu0
  %v5130 = vadd.f32 %v4630, %v5129
  %v5131 = vpop.f32.mrb[0].mxu0
  %5132 = vmatprep.mubr.f32.mxu0 0.0
  %v5133 = vand.u32 %v220, 4294901760
  %v5134 = vsub.f32 %v220, %v5133
  %5135 = vmatmul.mubr.f32.gmra.mrb[0].mxu0 %v5134
  %v5136 = vpop.f32.mrb[0].mxu0
  %v5137 = vadd.f32 %v4636, %v5136
  %v5138 = vpop.f32.mrb[0].mxu0
  %5139 = vmatprep.mubr.f32.mxu0 0.0
  %v5140 = vand.u32 %v223, 4294901760
  %v5141 = vsub.f32 %v223, %v5140
  %5142 = vmatmul.mubr.f32.gmra.mrb[0].mxu0 %v5141
  %v5143 = vpop.f32.mrb[0].mxu0
  %v5144 = vadd.f32 %v4642, %v5143
  %v5145 = vpop.f32.mrb[0].mxu0
  %5146 = vmatprep.mubr.f32.mxu0 0.0
  %v5147 = vand.u32 %v226, 4294901760
  %v5148 = vsub.f32 %v226, %v5147
  %5149 = vmatmul.mubr.f32.gmra.mrb[0].mxu0 %v5148
  %v5150 = vpop.f32.mrb[0].mxu0
  %v5151 = vadd.f32 %v4648, %v5150
  %v5152 = vpop.f32.mrb[0].mxu0
  %5153 = vmatprep.mubr.f32.mxu0 0.0
  %v5154 = vand.u32 %v229, 4294901760
  %v5155 = vsub.f32 %v229, %v5154
  %5156 = vmatmul.mubr.f32.gmra.mrb[0].mxu0 %v5155
  %v5157 = vpop.f32.mrb[0].mxu0
  %v5158 = vadd.f32 %v4654, %v5157
  %v5159 = vpop.f32.mrb[0].mxu0
  %5160 = vmatprep.mubr.f32.mxu0 0.0
  %v5161 = vand.u32 %v232, 4294901760
  %v5162 = vsub.f32 %v232, %v5161
  %5163 = vmatmul.mubr.f32.gmra.mrb[0].mxu0 %v5162
  %v5164 = vpop.f32.mrb[0].mxu0
  %v5165 = vadd.f32 %v4660, %v5164
  %v5166 = vpop.f32.mrb[0].mxu0
  %5167 = vmatprep.mubr.f32.mxu0 0.0
  %v5168 = vand.u32 %v235, 4294901760
  %v5169 = vsub.f32 %v235, %v5168
  %5170 = vmatmul.mubr.f32.gmra.mrb[0].mxu0 %v5169
  %v5171 = vpop.f32.mrb[0].mxu0
  %v5172 = vadd.f32 %v4666, %v5171
  %v5173 = vpop.f32.mrb[0].mxu0
  %5174 = vmatprep.mubr.f32.mxu0 0.0
  %v5175 = vand.u32 %v238, 4294901760
  %v5176 = vsub.f32 %v238, %v5175
  %5177 = vmatmul.mubr.f32.gmra.mrb[0].mxu0 %v5176
  %v5178 = vpop.f32.mrb[0].mxu0
  %v5179 = vadd.f32 %v4672, %v5178
  %v5180 = vpop.f32.mrb[0].mxu0
  %5181 = vmatprep.mubr.f32.mxu0 0.0
  %v5182 = vand.u32 %v241, 4294901760
  %v5183 = vsub.f32 %v241, %v5182
  %5184 = vmatmul.mubr.f32.gmra.mrb[0].mxu0 %v5183
  %v5185 = vpop.f32.mrb[0].mxu0
  %v5186 = vadd.f32 %v4678, %v5185
  %v5187 = vpop.f32.mrb[0].mxu0
  %5188 = vmatprep.mubr.f32.mxu0 0.0
  %v5189 = vand.u32 %v244, 4294901760
  %v5190 = vsub.f32 %v244, %v5189
  %5191 = vmatmul.mubr.f32.gmra.mrb[0].mxu0 %v5190
  %v5192 = vpop.f32.mrb[0].mxu0
  %v5193 = vadd.f32 %v4684, %v5192
  %v5194 = vpop.f32.mrb[0].mxu0
  %5195 = vmatprep.mubr.f32.mxu0 0.0
  %v5196 = vand.u32 %v247, 4294901760
  %v5197 = vsub.f32 %v247, %v5196
  %5198 = vmatmul.mubr.f32.gmra.mrb[0].mxu0 %v5197
  %v5199 = vpop.f32.mrb[0].mxu0
  %v5200 = vadd.f32 %v4690, %v5199
  %v5201 = vpop.f32.mrb[0].mxu0
  %5202 = vmatprep.mubr.f32.mxu0 0.0
  %v5203 = vand.u32 %v250, 4294901760
  %v5204 = vsub.f32 %v250, %v5203
  %5205 = vmatmul.mubr.f32.gmra.mrb[0].mxu0 %v5204
  %v5206 = vpop.f32.mrb[0].mxu0
  %v5207 = vadd.f32 %v4696, %v5206
  %v5208 = vpop.f32.mrb[0].mxu0
  %5209 = vmatprep.mubr.f32.mxu0 0.0
  %v5210 = vand.u32 %v253, 4294901760
  %v5211 = vsub.f32 %v253, %v5210
  %5212 = vmatmul.mubr.f32.gmra.mrb[0].mxu0 %v5211
  %v5213 = vpop.f32.mrb[0].mxu0
  %v5214 = vadd.f32 %v4702, %v5213
  %v5215 = vpop.f32.mrb[0].mxu0
  %5216 = vmatprep.mubr.f32.mxu0 0.0
  %v5217 = vand.u32 %v256, 4294901760
  %v5218 = vsub.f32 %v256, %v5217
  %5219 = vmatmul.mubr.f32.gmra.mrb[0].mxu0 %v5218
  %v5220 = vpop.f32.mrb[0].mxu0
  %v5221 = vadd.f32 %v4708, %v5220
  %v5222 = vpop.f32.mrb[0].mxu0
  %5223 = vmatprep.mubr.f32.mxu0 0.0
  %v5224 = vand.u32 %v259, 4294901760
  %v5225 = vsub.f32 %v259, %v5224
  %5226 = vmatmul.mubr.f32.gmra.mrb[0].mxu0 %v5225
  %v5227 = vpop.f32.mrb[0].mxu0
  %v5228 = vadd.f32 %v4714, %v5227
  %v5229 = vpop.f32.mrb[0].mxu0
  %5230 = vmatprep.mubr.f32.mxu0 0.0
  %v5231 = vand.u32 %v262, 4294901760
  %v5232 = vsub.f32 %v262, %v5231
  %5233 = vmatmul.mubr.f32.gmra.mrb[0].mxu0 %v5232
  %v5234 = vpop.f32.mrb[0].mxu0
  %v5235 = vadd.f32 %v4720, %v5234
  %v5236 = vpop.f32.mrb[0].mxu0
  %5237 = vmatprep.mubr.f32.mxu0 0.0
  %v5238 = vand.u32 %v265, 4294901760
  %v5239 = vsub.f32 %v265, %v5238
  %5240 = vmatmul.mubr.f32.gmra.mrb[0].mxu0 %v5239
  %v5241 = vpop.f32.mrb[0].mxu0
  %v5242 = vadd.f32 %v4726, %v5241
  %v5243 = vpop.f32.mrb[0].mxu0
  %5244 = vmatprep.mubr.f32.mxu0 0.0
  %v5245 = vand.u32 %v268, 4294901760
  %v5246 = vsub.f32 %v268, %v5245
  %5247 = vmatmul.mubr.f32.gmra.mrb[0].mxu0 %v5246
  %v5248 = vpop.f32.mrb[0].mxu0
  %v5249 = vadd.f32 %v4732, %v5248
  %v5250 = vpop.f32.mrb[0].mxu0
  %5251 = vdwg.mxu0
  %5252 = vmatprep.subr.mxu0 0.0
  %v5253 = vand.u32 %v3567, 4294901760
  %5254 = vmatpush1.msra.mxu0 %v5253
  %5255 = vmatprep.subr.mxu0 0.0
  %v5256 = vand.u32 %v3568, 4294901760
  %5257 = vmatpush1.msra.mxu0 %v5256
  %5258 = vmatprep.subr.mxu0 0.0
  %5259 = vmatpush1.msra.mxu0 0.0
  %5260 = vmatprep.subr.mxu0 0.0
  %5261 = vmatpush1.msra.mxu0 0.0
  %5262 = vmatprep.subr.mxu0 0.0
  %5263 = vmatpush1.msra.mxu0 0.0
  %5264 = vmatprep.subr.mxu0 0.0
  %5265 = vmatpush1.msra.mxu0 0.0
  %5266 = vmatprep.subr.mxu0 0.0
  %5267 = vmatpush1.msra.mxu0 0.0
  %5268 = vmatprep.subr.mxu0 0.0
  %5269 = vmatpush1.msra.mxu0 0.0
  %5270 = vmatprep.subr.mxu0 0.0
  %5271 = vmatpush1.msra.mxu0 0.0
  %5272 = vmatprep.subr.mxu0 0.0
  %5273 = vmatpush1.msra.mxu0 0.0
  %5274 = vmatprep.subr.mxu0 0.0
  %5275 = vmatpush1.msra.mxu0 0.0
  %5276 = vmatprep.subr.mxu0 0.0
  %5277 = vmatpush1.msra.mxu0 0.0
  %5278 = vmatprep.subr.mxu0 0.0
  %5279 = vmatpush1.msra.mxu0 0.0
  %5280 = vmatprep.subr.mxu0 0.0
  %5281 = vmatpush1.msra.mxu0 0.0
  %5282 = vmatprep.subr.mxu0 0.0
  %5283 = vmatpush1.msra.mxu0 0.0
  %5284 = vmatprep.subr.mxu0 0.0
  %5285 = vmatpush1.msra.mxu0 0.0
  %5286 = vmatprep.subr.mxu0 0.0
  %5287 = vmatpush1.msra.mxu0 0.0
  %5288 = vmatprep.subr.mxu0 0.0
  %5289 = vmatpush1.msra.mxu0 0.0
  %5290 = vmatprep.subr.mxu0 0.0
  %5291 = vmatpush1.msra.mxu0 0.0
  %5292 = vmatprep.subr.mxu0 0.0
  %5293 = vmatpush1.msra.mxu0 0.0
  %5294 = vmatprep.subr.mxu0 0.0
  %5295 = vmatpush1.msra.mxu0 0.0
  %5296 = vmatprep.subr.mxu0 0.0
  %5297 = vmatpush1.msra.mxu0 0.0
  %5298 = vmatprep.subr.mxu0 0.0
  %5299 = vmatpush1.msra.mxu0 0.0
  %5300 = vmatprep.subr.mxu0 0.0
  %5301 = vmatpush1.msra.mxu0 0.0
  %5302 = vmatprep.subr.mxu0 0.0
  %5303 = vmatpush1.msra.mxu0 0.0
  %5304 = vmatprep.subr.mxu0 0.0
  %5305 = vmatpush1.msra.mxu0 0.0
  %5306 = vmatprep.subr.mxu0 0.0
  %5307 = vmatpush1.msra.mxu0 0.0
  %5308 = vmatprep.subr.mxu0 0.0
  %5309 = vmatpush1.msra.mxu0 0.0
  %5310 = vmatprep.subr.mxu0 0.0
  %5311 = vmatpush1.msra.mxu0 0.0
  %5312 = vmatprep.subr.mxu0 0.0
  %5313 = vmatpush1.msra.mxu0 0.0
  %5314 = vmatprep.subr.mxu0 0.0
  %5315 = vmatpush1.msra.mxu0 0.0
  %5316 = vmatprep.subr.mxu0 0.0
  %5317 = vmatpush1.msra.mxu0 0.0
  %5318 = vmatprep.mubr.f32.mxu0 0.0
  %v5319 = vand.u32 %v79, 4294901760
  %v5320 = vsub.f32 %v79, %v5319
  %v5321 = vand.u32 %v5320, 4294901760
  %5322 = vmatmul.mubr.f32.gmra.mrb[0].mxu0 %v5321
  %v5323 = vpop.f32.mrb[0].mxu0
  %v5324 = vadd.f32 %v4808, %v5323
  %v5325 = vpop.f32.mrb[0].mxu0
  %5326 = vmatprep.mubr.f32.mxu0 0.0
  %v5327 = vand.u32 %v82, 4294901760
  %v5328 = vsub.f32 %v82, %v5327
  %v5329 = vand.u32 %v5328, 4294901760
  %5330 = vmatmul.mubr.f32.gmra.mrb[0].mxu0 %v5329
  %v5331 = vpop.f32.mrb[0].mxu0
  %v5332 = vadd.f32 %v4815, %v5331
  %v5333 = vpop.f32.mrb[0].mxu0
  %5334 = vmatprep.mubr.f32.mxu0 0.0
  %v5335 = vand.u32 %v85, 4294901760
  %v5336 = vsub.f32 %v85, %v5335
  %v5337 = vand.u32 %v5336, 4294901760
  %5338 = vmatmul.mubr.f32.gmra.mrb[0].mxu0 %v5337
  %v5339 = vpop.f32.mrb[0].mxu0
  %v5340 = vadd.f32 %v4822, %v5339
  %v5341 = vpop.f32.mrb[0].mxu0
  %5342 = vmatprep.mubr.f32.mxu0 0.0
  %v5343 = vand.u32 %v88, 4294901760
  %v5344 = vsub.f32 %v88, %v5343
  %v5345 = vand.u32 %v5344, 4294901760
  %5346 = vmatmul.mubr.f32.gmra.mrb[0].mxu0 %v5345
  %v5347 = vpop.f32.mrb[0].mxu0
  %v5348 = vadd.f32 %v4829, %v5347
  %v5349 = vpop.f32.mrb[0].mxu0
  %5350 = vmatprep.mubr.f32.mxu0 0.0
  %v5351 = vand.u32 %v91, 4294901760
  %v5352 = vsub.f32 %v91, %v5351
  %v5353 = vand.u32 %v5352, 4294901760
  %5354 = vmatmul.mubr.f32.gmra.mrb[0].mxu0 %v5353
  %v5355 = vpop.f32.mrb[0].mxu0
  %v5356 = vadd.f32 %v4836, %v5355
  %v5357 = vpop.f32.mrb[0].mxu0
  %5358 = vmatprep.mubr.f32.mxu0 0.0
  %v5359 = vand.u32 %v94, 4294901760
  %v5360 = vsub.f32 %v94, %v5359
  %v5361 = vand.u32 %v5360, 4294901760
  %5362 = vmatmul.mubr.f32.gmra.mrb[0].mxu0 %v5361
  %v5363 = vpop.f32.mrb[0].mxu0
  %v5364 = vadd.f32 %v4843, %v5363
  %v5365 = vpop.f32.mrb[0].mxu0
  %5366 = vmatprep.mubr.f32.mxu0 0.0
  %v5367 = vand.u32 %v97, 4294901760
  %v5368 = vsub.f32 %v97, %v5367
  %v5369 = vand.u32 %v5368, 4294901760
  %5370 = vmatmul.mubr.f32.gmra.mrb[0].mxu0 %v5369
  %v5371 = vpop.f32.mrb[0].mxu0
  %v5372 = vadd.f32 %v4850, %v5371
  %v5373 = vpop.f32.mrb[0].mxu0
  %5374 = vmatprep.mubr.f32.mxu0 0.0
  %v5375 = vand.u32 %v100, 4294901760
  %v5376 = vsub.f32 %v100, %v5375
  %v5377 = vand.u32 %v5376, 4294901760
  %5378 = vmatmul.mubr.f32.gmra.mrb[0].mxu0 %v5377
  %v5379 = vpop.f32.mrb[0].mxu0
  %v5380 = vadd.f32 %v4857, %v5379
  %v5381 = vpop.f32.mrb[0].mxu0
  %5382 = vmatprep.mubr.f32.mxu0 0.0
  %v5383 = vand.u32 %v103, 4294901760
  %v5384 = vsub.f32 %v103, %v5383
  %v5385 = vand.u32 %v5384, 4294901760
  %5386 = vmatmul.mubr.f32.gmra.mrb[0].mxu0 %v5385
  %v5387 = vpop.f32.mrb[0].mxu0
  %v5388 = vadd.f32 %v4864, %v5387
  %v5389 = vpop.f32.mrb[0].mxu0
  %5390 = vmatprep.mubr.f32.mxu0 0.0
  %v5391 = vand.u32 %v106, 4294901760
  %v5392 = vsub.f32 %v106, %v5391
  %v5393 = vand.u32 %v5392, 4294901760
  %5394 = vmatmul.mubr.f32.gmra.mrb[0].mxu0 %v5393
  %v5395 = vpop.f32.mrb[0].mxu0
  %v5396 = vadd.f32 %v4871, %v5395
  %v5397 = vpop.f32.mrb[0].mxu0
  %5398 = vmatprep.mubr.f32.mxu0 0.0
  %v5399 = vand.u32 %v109, 4294901760
  %v5400 = vsub.f32 %v109, %v5399
  %v5401 = vand.u32 %v5400, 4294901760
  %5402 = vmatmul.mubr.f32.gmra.mrb[0].mxu0 %v5401
  %v5403 = vpop.f32.mrb[0].mxu0
  %v5404 = vadd.f32 %v4878, %v5403
  %v5405 = vpop.f32.mrb[0].mxu0
  %5406 = vmatprep.mubr.f32.mxu0 0.0
  %v5407 = vand.u32 %v112, 4294901760
  %v5408 = vsub.f32 %v112, %v5407
  %v5409 = vand.u32 %v5408, 4294901760
  %5410 = vmatmul.mubr.f32.gmra.mrb[0].mxu0 %v5409
  %v5411 = vpop.f32.mrb[0].mxu0
  %v5412 = vadd.f32 %v4885, %v5411
  %v5413 = vpop.f32.mrb[0].mxu0
  %5414 = vmatprep.mubr.f32.mxu0 0.0
  %v5415 = vand.u32 %v115, 4294901760
  %v5416 = vsub.f32 %v115, %v5415
  %v5417 = vand.u32 %v5416, 4294901760
  %5418 = vmatmul.mubr.f32.gmra.mrb[0].mxu0 %v5417
  %v5419 = vpop.f32.mrb[0].mxu0
  %v5420 = vadd.f32 %v4892, %v5419
  %v5421 = vpop.f32.mrb[0].mxu0
  %5422 = vmatprep.mubr.f32.mxu0 0.0
  %v5423 = vand.u32 %v118, 4294901760
  %v5424 = vsub.f32 %v118, %v5423
  %v5425 = vand.u32 %v5424, 4294901760
  %5426 = vmatmul.mubr.f32.gmra.mrb[0].mxu0 %v5425
  %v5427 = vpop.f32.mrb[0].mxu0
  %v5428 = vadd.f32 %v4899, %v5427
  %v5429 = vpop.f32.mrb[0].mxu0
  %5430 = vmatprep.mubr.f32.mxu0 0.0
  %v5431 = vand.u32 %v121, 4294901760
  %v5432 = vsub.f32 %v121, %v5431
  %v5433 = vand.u32 %v5432, 4294901760
  %5434 = vmatmul.mubr.f32.gmra.mrb[0].mxu0 %v5433
  %v5435 = vpop.f32.mrb[0].mxu0
  %v5436 = vadd.f32 %v4906, %v5435
  %v5437 = vpop.f32.mrb[0].mxu0
  %5438 = vmatprep.mubr.f32.mxu0 0.0
  %v5439 = vand.u32 %v124, 4294901760
  %v5440 = vsub.f32 %v124, %v5439
  %v5441 = vand.u32 %v5440, 4294901760
  %5442 = vmatmul.mubr.f32.gmra.mrb[0].mxu0 %v5441
  %v5443 = vpop.f32.mrb[0].mxu0
  %v5444 = vadd.f32 %v4913, %v5443
  %v5445 = vpop.f32.mrb[0].mxu0
  %5446 = vmatprep.mubr.f32.mxu0 0.0
  %v5447 = vand.u32 %v127, 4294901760
  %v5448 = vsub.f32 %v127, %v5447
  %v5449 = vand.u32 %v5448, 4294901760
  %5450 = vmatmul.mubr.f32.gmra.mrb[0].mxu0 %v5449
  %v5451 = vpop.f32.mrb[0].mxu0
  %v5452 = vadd.f32 %v4920, %v5451
  %v5453 = vpop.f32.mrb[0].mxu0
  %5454 = vmatprep.mubr.f32.mxu0 0.0
  %v5455 = vand.u32 %v130, 4294901760
  %v5456 = vsub.f32 %v130, %v5455
  %v5457 = vand.u32 %v5456, 4294901760
  %5458 = vmatmul.mubr.f32.gmra.mrb[0].mxu0 %v5457
  %v5459 = vpop.f32.mrb[0].mxu0
  %v5460 = vadd.f32 %v4927, %v5459
  %v5461 = vpop.f32.mrb[0].mxu0
  %5462 = vmatprep.mubr.f32.mxu0 0.0
  %v5463 = vand.u32 %v133, 4294901760
  %v5464 = vsub.f32 %v133, %v5463
  %v5465 = vand.u32 %v5464, 4294901760
  %5466 = vmatmul.mubr.f32.gmra.mrb[0].mxu0 %v5465
  %v5467 = vpop.f32.mrb[0].mxu0
  %v5468 = vadd.f32 %v4934, %v5467
  %v5469 = vpop.f32.mrb[0].mxu0
  %5470 = vmatprep.mubr.f32.mxu0 0.0
  %v5471 = vand.u32 %v136, 4294901760
  %v5472 = vsub.f32 %v136, %v5471
  %v5473 = vand.u32 %v5472, 4294901760
  %5474 = vmatmul.mubr.f32.gmra.mrb[0].mxu0 %v5473
  %v5475 = vpop.f32.mrb[0].mxu0
  %v5476 = vadd.f32 %v4941, %v5475
  %v5477 = vpop.f32.mrb[0].mxu0
  %5478 = vmatprep.mubr.f32.mxu0 0.0
  %v5479 = vand.u32 %v139, 4294901760
  %v5480 = vsub.f32 %v139, %v5479
  %v5481 = vand.u32 %v5480, 4294901760
  %5482 = vmatmul.mubr.f32.gmra.mrb[0].mxu0 %v5481
  %v5483 = vpop.f32.mrb[0].mxu0
  %v5484 = vadd.f32 %v4948, %v5483
  %v5485 = vpop.f32.mrb[0].mxu0
  %5486 = vmatprep.mubr.f32.mxu0 0.0
  %v5487 = vand.u32 %v142, 4294901760
  %v5488 = vsub.f32 %v142, %v5487
  %v5489 = vand.u32 %v5488, 4294901760
  %5490 = vmatmul.mubr.f32.gmra.mrb[0].mxu0 %v5489
  %v5491 = vpop.f32.mrb[0].mxu0
  %v5492 = vadd.f32 %v4955, %v5491
  %v5493 = vpop.f32.mrb[0].mxu0
  %5494 = vmatprep.mubr.f32.mxu0 0.0
  %v5495 = vand.u32 %v145, 4294901760
  %v5496 = vsub.f32 %v145, %v5495
  %v5497 = vand.u32 %v5496, 4294901760
  %5498 = vmatmul.mubr.f32.gmra.mrb[0].mxu0 %v5497
  %v5499 = vpop.f32.mrb[0].mxu0
  %v5500 = vadd.f32 %v4962, %v5499
  %v5501 = vpop.f32.mrb[0].mxu0
  %5502 = vmatprep.mubr.f32.mxu0 0.0
  %v5503 = vand.u32 %v148, 4294901760
  %v5504 = vsub.f32 %v148, %v5503
  %v5505 = vand.u32 %v5504, 4294901760
  %5506 = vmatmul.mubr.f32.gmra.mrb[0].mxu0 %v5505
  %v5507 = vpop.f32.mrb[0].mxu0
  %v5508 = vadd.f32 %v4969, %v5507
  %v5509 = vpop.f32.mrb[0].mxu0
  %5510 = vmatprep.mubr.f32.mxu0 0.0
  %v5511 = vand.u32 %v151, 4294901760
  %v5512 = vsub.f32 %v151, %v5511
  %v5513 = vand.u32 %v5512, 4294901760
  %5514 = vmatmul.mubr.f32.gmra.mrb[0].mxu0 %v5513
  %v5515 = vpop.f32.mrb[0].mxu0
  %v5516 = vadd.f32 %v4976, %v5515
  %v5517 = vpop.f32.mrb[0].mxu0
  %5518 = vmatprep.mubr.f32.mxu0 0.0
  %v5519 = vand.u32 %v154, 4294901760
  %v5520 = vsub.f32 %v154, %v5519
  %v5521 = vand.u32 %v5520, 4294901760
  %5522 = vmatmul.mubr.f32.gmra.mrb[0].mxu0 %v5521
  %v5523 = vpop.f32.mrb[0].mxu0
  %v5524 = vadd.f32 %v4983, %v5523
  %v5525 = vpop.f32.mrb[0].mxu0
  %5526 = vmatprep.mubr.f32.mxu0 0.0
  %v5527 = vand.u32 %v157, 4294901760
  %v5528 = vsub.f32 %v157, %v5527
  %v5529 = vand.u32 %v5528, 4294901760
  %5530 = vmatmul.mubr.f32.gmra.mrb[0].mxu0 %v5529
  %v5531 = vpop.f32.mrb[0].mxu0
  %v5532 = vadd.f32 %v4990, %v5531
  %v5533 = vpop.f32.mrb[0].mxu0
  %5534 = vmatprep.mubr.f32.mxu0 0.0
  %v5535 = vand.u32 %v160, 4294901760
  %v5536 = vsub.f32 %v160, %v5535
  %v5537 = vand.u32 %v5536, 4294901760
  %5538 = vmatmul.mubr.f32.gmra.mrb[0].mxu0 %v5537
  %v5539 = vpop.f32.mrb[0].mxu0
  %v5540 = vadd.f32 %v4997, %v5539
  %v5541 = vpop.f32.mrb[0].mxu0
  %5542 = vmatprep.mubr.f32.mxu0 0.0
  %v5543 = vand.u32 %v163, 4294901760
  %v5544 = vsub.f32 %v163, %v5543
  %v5545 = vand.u32 %v5544, 4294901760
  %5546 = vmatmul.mubr.f32.gmra.mrb[0].mxu0 %v5545
  %v5547 = vpop.f32.mrb[0].mxu0
  %v5548 = vadd.f32 %v5004, %v5547
  %v5549 = vpop.f32.mrb[0].mxu0
  %5550 = vmatprep.mubr.f32.mxu0 0.0
  %v5551 = vand.u32 %v166, 4294901760
  %v5552 = vsub.f32 %v166, %v5551
  %v5553 = vand.u32 %v5552, 4294901760
  %5554 = vmatmul.mubr.f32.gmra.mrb[0].mxu0 %v5553
  %v5555 = vpop.f32.mrb[0].mxu0
  %v5556 = vadd.f32 %v5011, %v5555
  %v5557 = vpop.f32.mrb[0].mxu0
  %5558 = vmatprep.mubr.f32.mxu0 0.0
  %v5559 = vand.u32 %v169, 4294901760
  %v5560 = vsub.f32 %v169, %v5559
  %v5561 = vand.u32 %v5560, 4294901760
  %5562 = vmatmul.mubr.f32.gmra.mrb[0].mxu0 %v5561
  %v5563 = vpop.f32.mrb[0].mxu0
  %v5564 = vadd.f32 %v5018, %v5563
  %v5565 = vpop.f32.mrb[0].mxu0
  %5566 = vmatprep.mubr.f32.mxu0 0.0
  %v5567 = vand.u32 %v172, 4294901760
  %v5568 = vsub.f32 %v172, %v5567
  %v5569 = vand.u32 %v5568, 4294901760
  %5570 = vmatmul.mubr.f32.gmra.mrb[0].mxu0 %v5569
  %v5571 = vpop.f32.mrb[0].mxu0
  %v5572 = vadd.f32 %v5025, %v5571
  %v5573 = vpop.f32.mrb[0].mxu0
  %5574 = vmatprep.mubr.f32.mxu0 0.0
  %v5575 = vand.u32 %v175, 4294901760
  %v5576 = vsub.f32 %v175, %v5575
  %v5577 = vand.u32 %v5576, 4294901760
  %5578 = vmatmul.mubr.f32.gmra.mrb[0].mxu0 %v5577
  %v5579 = vpop.f32.mrb[0].mxu0
  %v5580 = vadd.f32 %v5032, %v5579
  %v5581 = vpop.f32.mrb[0].mxu0
  %5582 = vmatprep.mubr.f32.mxu0 0.0
  %v5583 = vand.u32 %v178, 4294901760
  %v5584 = vsub.f32 %v178, %v5583
  %v5585 = vand.u32 %v5584, 4294901760
  %5586 = vmatmul.mubr.f32.gmra.mrb[0].mxu0 %v5585
  %v5587 = vpop.f32.mrb[0].mxu0
  %v5588 = vadd.f32 %v5039, %v5587
  %v5589 = vpop.f32.mrb[0].mxu0
  %5590 = vmatprep.mubr.f32.mxu0 0.0
  %v5591 = vand.u32 %v181, 4294901760
  %v5592 = vsub.f32 %v181, %v5591
  %v5593 = vand.u32 %v5592, 4294901760
  %5594 = vmatmul.mubr.f32.gmra.mrb[0].mxu0 %v5593
  %v5595 = vpop.f32.mrb[0].mxu0
  %v5596 = vadd.f32 %v5046, %v5595
  %v5597 = vpop.f32.mrb[0].mxu0
  %5598 = vmatprep.mubr.f32.mxu0 0.0
  %v5599 = vand.u32 %v184, 4294901760
  %v5600 = vsub.f32 %v184, %v5599
  %v5601 = vand.u32 %v5600, 4294901760
  %5602 = vmatmul.mubr.f32.gmra.mrb[0].mxu0 %v5601
  %v5603 = vpop.f32.mrb[0].mxu0
  %v5604 = vadd.f32 %v5053, %v5603
  %v5605 = vpop.f32.mrb[0].mxu0
  %5606 = vmatprep.mubr.f32.mxu0 0.0
  %v5607 = vand.u32 %v187, 4294901760
  %v5608 = vsub.f32 %v187, %v5607
  %v5609 = vand.u32 %v5608, 4294901760
  %5610 = vmatmul.mubr.f32.gmra.mrb[0].mxu0 %v5609
  %v5611 = vpop.f32.mrb[0].mxu0
  %v5612 = vadd.f32 %v5060, %v5611
  %v5613 = vpop.f32.mrb[0].mxu0
  %5614 = vmatprep.mubr.f32.mxu0 0.0
  %v5615 = vand.u32 %v190, 4294901760
  %v5616 = vsub.f32 %v190, %v5615
  %v5617 = vand.u32 %v5616, 4294901760
  %5618 = vmatmul.mubr.f32.gmra.mrb[0].mxu0 %v5617
  %v5619 = vpop.f32.mrb[0].mxu0
  %v5620 = vadd.f32 %v5067, %v5619
  %v5621 = vpop.f32.mrb[0].mxu0
  %5622 = vmatprep.mubr.f32.mxu0 0.0
  %v5623 = vand.u32 %v193, 4294901760
  %v5624 = vsub.f32 %v193, %v5623
  %v5625 = vand.u32 %v5624, 4294901760
  %5626 = vmatmul.mubr.f32.gmra.mrb[0].mxu0 %v5625
  %v5627 = vpop.f32.mrb[0].mxu0
  %v5628 = vadd.f32 %v5074, %v5627
  %v5629 = vpop.f32.mrb[0].mxu0
  %5630 = vmatprep.mubr.f32.mxu0 0.0
  %v5631 = vand.u32 %v196, 4294901760
  %v5632 = vsub.f32 %v196, %v5631
  %v5633 = vand.u32 %v5632, 4294901760
  %5634 = vmatmul.mubr.f32.gmra.mrb[0].mxu0 %v5633
  %v5635 = vpop.f32.mrb[0].mxu0
  %v5636 = vadd.f32 %v5081, %v5635
  %v5637 = vpop.f32.mrb[0].mxu0
  %5638 = vmatprep.mubr.f32.mxu0 0.0
  %v5639 = vand.u32 %v199, 4294901760
  %v5640 = vsub.f32 %v199, %v5639
  %v5641 = vand.u32 %v5640, 4294901760
  %5642 = vmatmul.mubr.f32.gmra.mrb[0].mxu0 %v5641
  %v5643 = vpop.f32.mrb[0].mxu0
  %v5644 = vadd.f32 %v5088, %v5643
  %v5645 = vpop.f32.mrb[0].mxu0
  %5646 = vmatprep.mubr.f32.mxu0 0.0
  %v5647 = vand.u32 %v202, 4294901760
  %v5648 = vsub.f32 %v202, %v5647
  %v5649 = vand.u32 %v5648, 4294901760
  %5650 = vmatmul.mubr.f32.gmra.mrb[0].mxu0 %v5649
  %v5651 = vpop.f32.mrb[0].mxu0
  %v5652 = vadd.f32 %v5095, %v5651
  %v5653 = vpop.f32.mrb[0].mxu0
  %5654 = vmatprep.mubr.f32.mxu0 0.0
  %v5655 = vand.u32 %v205, 4294901760
  %v5656 = vsub.f32 %v205, %v5655
  %v5657 = vand.u32 %v5656, 4294901760
  %5658 = vmatmul.mubr.f32.gmra.mrb[0].mxu0 %v5657
  %v5659 = vpop.f32.mrb[0].mxu0
  %v5660 = vadd.f32 %v5102, %v5659
  %v5661 = vpop.f32.mrb[0].mxu0
  %5662 = vmatprep.mubr.f32.mxu0 0.0
  %v5663 = vand.u32 %v208, 4294901760
  %v5664 = vsub.f32 %v208, %v5663
  %v5665 = vand.u32 %v5664, 4294901760
  %5666 = vmatmul.mubr.f32.gmra.mrb[0].mxu0 %v5665
  %v5667 = vpop.f32.mrb[0].mxu0
  %v5668 = vadd.f32 %v5109, %v5667
  %v5669 = vpop.f32.mrb[0].mxu0
  %5670 = vmatprep.mubr.f32.mxu0 0.0
  %v5671 = vand.u32 %v211, 4294901760
  %v5672 = vsub.f32 %v211, %v5671
  %v5673 = vand.u32 %v5672, 4294901760
  %5674 = vmatmul.mubr.f32.gmra.mrb[0].mxu0 %v5673
  %v5675 = vpop.f32.mrb[0].mxu0
  %v5676 = vadd.f32 %v5116, %v5675
  %v5677 = vpop.f32.mrb[0].mxu0
  %5678 = vmatprep.mubr.f32.mxu0 0.0
  %v5679 = vand.u32 %v214, 4294901760
  %v5680 = vsub.f32 %v214, %v5679
  %v5681 = vand.u32 %v5680, 4294901760
  %5682 = vmatmul.mubr.f32.gmra.mrb[0].mxu0 %v5681
  %v5683 = vpop.f32.mrb[0].mxu0
  %v5684 = vadd.f32 %v5123, %v5683
  %v5685 = vpop.f32.mrb[0].mxu0
  %5686 = vmatprep.mubr.f32.mxu0 0.0
  %v5687 = vand.u32 %v217, 4294901760
  %v5688 = vsub.f32 %v217, %v5687
  %v5689 = vand.u32 %v5688, 4294901760
  %5690 = vmatmul.mubr.f32.gmra.mrb[0].mxu0 %v5689
  %v5691 = vpop.f32.mrb[0].mxu0
  %v5692 = vadd.f32 %v5130, %v5691
  %v5693 = vpop.f32.mrb[0].mxu0
  %5694 = vmatprep.mubr.f32.mxu0 0.0
  %v5695 = vand.u32 %v220, 4294901760
  %v5696 = vsub.f32 %v220, %v5695
  %v5697 = vand.u32 %v5696, 4294901760
  %5698 = vmatmul.mubr.f32.gmra.mrb[0].mxu0 %v5697
  %v5699 = vpop.f32.mrb[0].mxu0
  %v5700 = vadd.f32 %v5137, %v5699
  %v5701 = vpop.f32.mrb[0].mxu0
  %5702 = vmatprep.mubr.f32.mxu0 0.0
  %v5703 = vand.u32 %v223, 4294901760
  %v5704 = vsub.f32 %v223, %v5703
  %v5705 = vand.u32 %v5704, 4294901760
  %5706 = vmatmul.mubr.f32.gmra.mrb[0].mxu0 %v5705
  %v5707 = vpop.f32.mrb[0].mxu0
  %v5708 = vadd.f32 %v5144, %v5707
  %v5709 = vpop.f32.mrb[0].mxu0
  %5710 = vmatprep.mubr.f32.mxu0 0.0
  %v5711 = vand.u32 %v226, 4294901760
  %v5712 = vsub.f32 %v226, %v5711
  %v5713 = vand.u32 %v5712, 4294901760
  %5714 = vmatmul.mubr.f32.gmra.mrb[0].mxu0 %v5713
  %v5715 = vpop.f32.mrb[0].mxu0
  %v5716 = vadd.f32 %v5151, %v5715
  %v5717 = vpop.f32.mrb[0].mxu0
  %5718 = vmatprep.mubr.f32.mxu0 0.0
  %v5719 = vand.u32 %v229, 4294901760
  %v5720 = vsub.f32 %v229, %v5719
  %v5721 = vand.u32 %v5720, 4294901760
  %5722 = vmatmul.mubr.f32.gmra.mrb[0].mxu0 %v5721
  %v5723 = vpop.f32.mrb[0].mxu0
  %v5724 = vadd.f32 %v5158, %v5723
  %v5725 = vpop.f32.mrb[0].mxu0
  %5726 = vmatprep.mubr.f32.mxu0 0.0
  %v5727 = vand.u32 %v232, 4294901760
  %v5728 = vsub.f32 %v232, %v5727
  %v5729 = vand.u32 %v5728, 4294901760
  %5730 = vmatmul.mubr.f32.gmra.mrb[0].mxu0 %v5729
  %v5731 = vpop.f32.mrb[0].mxu0
  %v5732 = vadd.f32 %v5165, %v5731
  %v5733 = vpop.f32.mrb[0].mxu0
  %5734 = vmatprep.mubr.f32.mxu0 0.0
  %v5735 = vand.u32 %v235, 4294901760
  %v5736 = vsub.f32 %v235, %v5735
  %v5737 = vand.u32 %v5736, 4294901760
  %5738 = vmatmul.mubr.f32.gmra.mrb[0].mxu0 %v5737
  %v5739 = vpop.f32.mrb[0].mxu0
  %v5740 = vadd.f32 %v5172, %v5739
  %v5741 = vpop.f32.mrb[0].mxu0
  %5742 = vmatprep.mubr.f32.mxu0 0.0
  %v5743 = vand.u32 %v238, 4294901760
  %v5744 = vsub.f32 %v238, %v5743
  %v5745 = vand.u32 %v5744, 4294901760
  %5746 = vmatmul.mubr.f32.gmra.mrb[0].mxu0 %v5745
  %v5747 = vpop.f32.mrb[0].mxu0
  %v5748 = vadd.f32 %v5179, %v5747
  %v5749 = vpop.f32.mrb[0].mxu0
  %5750 = vmatprep.mubr.f32.mxu0 0.0
  %v5751 = vand.u32 %v241, 4294901760
  %v5752 = vsub.f32 %v241, %v5751
  %v5753 = vand.u32 %v5752, 4294901760
  %5754 = vmatmul.mubr.f32.gmra.mrb[0].mxu0 %v5753
  %v5755 = vpop.f32.mrb[0].mxu0
  %v5756 = vadd.f32 %v5186, %v5755
  %v5757 = vpop.f32.mrb[0].mxu0
  %5758 = vmatprep.mubr.f32.mxu0 0.0
  %v5759 = vand.u32 %v244, 4294901760
  %v5760 = vsub.f32 %v244, %v5759
  %v5761 = vand.u32 %v5760, 4294901760
  %5762 = vmatmul.mubr.f32.gmra.mrb[0].mxu0 %v5761
  %v5763 = vpop.f32.mrb[0].mxu0
  %v5764 = vadd.f32 %v5193, %v5763
  %v5765 = vpop.f32.mrb[0].mxu0
  %5766 = vmatprep.mubr.f32.mxu0 0.0
  %v5767 = vand.u32 %v247, 4294901760
  %v5768 = vsub.f32 %v247, %v5767
  %v5769 = vand.u32 %v5768, 4294901760
  %5770 = vmatmul.mubr.f32.gmra.mrb[0].mxu0 %v5769
  %v5771 = vpop.f32.mrb[0].mxu0
  %v5772 = vadd.f32 %v5200, %v5771
  %v5773 = vpop.f32.mrb[0].mxu0
  %5774 = vmatprep.mubr.f32.mxu0 0.0
  %v5775 = vand.u32 %v250, 4294901760
  %v5776 = vsub.f32 %v250, %v5775
  %v5777 = vand.u32 %v5776, 4294901760
  %5778 = vmatmul.mubr.f32.gmra.mrb[0].mxu0 %v5777
  %v5779 = vpop.f32.mrb[0].mxu0
  %v5780 = vadd.f32 %v5207, %v5779
  %v5781 = vpop.f32.mrb[0].mxu0
  %5782 = vmatprep.mubr.f32.mxu0 0.0
  %v5783 = vand.u32 %v253, 4294901760
  %v5784 = vsub.f32 %v253, %v5783
  %v5785 = vand.u32 %v5784, 4294901760
  %5786 = vmatmul.mubr.f32.gmra.mrb[0].mxu0 %v5785
  %v5787 = vpop.f32.mrb[0].mxu0
  %v5788 = vadd.f32 %v5214, %v5787
  %v5789 = vpop.f32.mrb[0].mxu0
  %5790 = vmatprep.mubr.f32.mxu0 0.0
  %v5791 = vand.u32 %v256, 4294901760
  %v5792 = vsub.f32 %v256, %v5791
  %v5793 = vand.u32 %v5792, 4294901760
  %5794 = vmatmul.mubr.f32.gmra.mrb[0].mxu0 %v5793
  %v5795 = vpop.f32.mrb[0].mxu0
  %v5796 = vadd.f32 %v5221, %v5795
  %v5797 = vpop.f32.mrb[0].mxu0
  %5798 = vmatprep.mubr.f32.mxu0 0.0
  %v5799 = vand.u32 %v259, 4294901760
  %v5800 = vsub.f32 %v259, %v5799
  %v5801 = vand.u32 %v5800, 4294901760
  %5802 = vmatmul.mubr.f32.gmra.mrb[0].mxu0 %v5801
  %v5803 = vpop.f32.mrb[0].mxu0
  %v5804 = vadd.f32 %v5228, %v5803
  %v5805 = vpop.f32.mrb[0].mxu0
  %5806 = vmatprep.mubr.f32.mxu0 0.0
  %v5807 = vand.u32 %v262, 4294901760
  %v5808 = vsub.f32 %v262, %v5807
  %v5809 = vand.u32 %v5808, 4294901760
  %5810 = vmatmul.mubr.f32.gmra.mrb[0].mxu0 %v5809
  %v5811 = vpop.f32.mrb[0].mxu0
  %v5812 = vadd.f32 %v5235, %v5811
  %v5813 = vpop.f32.mrb[0].mxu0
  %5814 = vmatprep.mubr.f32.mxu0 0.0
  %v5815 = vand.u32 %v265, 4294901760
  %v5816 = vsub.f32 %v265, %v5815
  %v5817 = vand.u32 %v5816, 4294901760
  %5818 = vmatmul.mubr.f32.gmra.mrb[0].mxu0 %v5817
  %v5819 = vpop.f32.mrb[0].mxu0
  %v5820 = vadd.f32 %v5242, %v5819
  %v5821 = vpop.f32.mrb[0].mxu0
  %5822 = vmatprep.mubr.f32.mxu0 0.0
  %v5823 = vand.u32 %v268, 4294901760
  %v5824 = vsub.f32 %v268, %v5823
  %v5825 = vand.u32 %v5824, 4294901760
  %5826 = vmatmul.mubr.f32.gmra.mrb[0].mxu0 %v5825
  %v5827 = vpop.f32.mrb[0].mxu0
  %v5828 = vadd.f32 %v5249, %v5827
  %v5829 = vpop.f32.mrb[0].mxu0
  %5830 = vdwg.mxu0
  %5831 = vmatprep.subr.mxu0 0.0
  %v5832 = vand.u32 %v3567, 4294901760
  %v5833 = vsub.f32 %v3567, %v5832
  %v5834 = vand.u32 %v5833, 4294901760
  %5835 = vmatpush1.msra.mxu0 %v5834
  %5836 = vmatprep.subr.mxu0 0.0
  %v5837 = vand.u32 %v3568, 4294901760
  %v5838 = vsub.f32 %v3568, %v5837
  %v5839 = vand.u32 %v5838, 4294901760
  %5840 = vmatpush1.msra.mxu0 %v5839
  %5841 = vmatprep.subr.mxu0 0.0
  %5842 = vmatpush1.msra.mxu0 0.0
  %5843 = vmatprep.subr.mxu0 0.0
  %5844 = vmatpush1.msra.mxu0 0.0
  %5845 = vmatprep.subr.mxu0 0.0
  %5846 = vmatpush1.msra.mxu0 0.0
  %5847 = vmatprep.subr.mxu0 0.0
  %5848 = vmatpush1.msra.mxu0 0.0
  %5849 = vmatprep.subr.mxu0 0.0
  %5850 = vmatpush1.msra.mxu0 0.0
  %5851 = vmatprep.subr.mxu0 0.0
  %5852 = vmatpush1.msra.mxu0 0.0
  %5853 = vmatprep.subr.mxu0 0.0
  %5854 = vmatpush1.msra.mxu0 0.0
  %5855 = vmatprep.subr.mxu0 0.0
  %5856 = vmatpush1.msra.mxu0 0.0
  %5857 = vmatprep.subr.mxu0 0.0
  %5858 = vmatpush1.msra.mxu0 0.0
  %5859 = vmatprep.subr.mxu0 0.0
  %5860 = vmatpush1.msra.mxu0 0.0
  %5861 = vmatprep.subr.mxu0 0.0
  %5862 = vmatpush1.msra.mxu0 0.0
  %5863 = vmatprep.subr.mxu0 0.0
  %5864 = vmatpush1.msra.mxu0 0.0
  %5865 = vmatprep.subr.mxu0 0.0
  %5866 = vmatpush1.msra.mxu0 0.0
  %5867 = vmatprep.subr.mxu0 0.0
  %5868 = vmatpush1.msra.mxu0 0.0
  %5869 = vmatprep.subr.mxu0 0.0
  %5870 = vmatpush1.msra.mxu0 0.0
  %5871 = vmatprep.subr.mxu0 0.0
  %5872 = vmatpush1.msra.mxu0 0.0
  %5873 = vmatprep.subr.mxu0 0.0
  %5874 = vmatpush1.msra.mxu0 0.0
  %5875 = vmatprep.subr.mxu0 0.0
  %5876 = vmatpush1.msra.mxu0 0.0
  %5877 = vmatprep.subr.mxu0 0.0
  %5878 = vmatpush1.msra.mxu0 0.0
  %5879 = vmatprep.subr.mxu0 0.0
  %5880 = vmatpush1.msra.mxu0 0.0
  %5881 = vmatprep.subr.mxu0 0.0
  %5882 = vmatpush1.msra.mxu0 0.0
  %5883 = vmatprep.subr.mxu0 0.0
  %5884 = vmatpush1.msra.mxu0 0.0
  %5885 = vmatprep.subr.mxu0 0.0
  %5886 = vmatpush1.msra.mxu0 0.0
  %5887 = vmatprep.subr.mxu0 0.0
  %5888 = vmatpush1.msra.mxu0 0.0
  %5889 = vmatprep.subr.mxu0 0.0
  %5890 = vmatpush1.msra.mxu0 0.0
  %5891 = vmatprep.subr.mxu0 0.0
  %5892 = vmatpush1.msra.mxu0 0.0
  %5893 = vmatprep.subr.mxu0 0.0
  %5894 = vmatpush1.msra.mxu0 0.0
  %5895 = vmatprep.subr.mxu0 0.0
  %5896 = vmatpush1.msra.mxu0 0.0
  %5897 = vmatprep.subr.mxu0 0.0
  %5898 = vmatpush1.msra.mxu0 0.0
  %5899 = vmatprep.subr.mxu0 0.0
  %5900 = vmatpush1.msra.mxu0 0.0
  %5901 = vmatprep.mubr.f32.mxu0 0.0
  %v5902 = vand.u32 %v79, 4294901760
  %5903 = vmatmul.mubr.f32.gmra.mrb[0].mxu0 %v5902
  %v5904 = vpop.f32.mrb[0].mxu0
  %v5905 = vadd.f32 %v5324, %v5904
  %v5906 = vpop.f32.mrb[0].mxu0
  %5907 = vmatprep.mubr.f32.mxu0 0.0
  %v5908 = vand.u32 %v82, 4294901760
  %5909 = vmatmul.mubr.f32.gmra.mrb[0].mxu0 %v5908
  %v5910 = vpop.f32.mrb[0].mxu0
  %v5911 = vadd.f32 %v5332, %v5910
  %v5912 = vpop.f32.mrb[0].mxu0
  %5913 = vmatprep.mubr.f32.mxu0 0.0
  %v5914 = vand.u32 %v85, 4294901760
  %5915 = vmatmul.mubr.f32.gmra.mrb[0].mxu0 %v5914
  %v5916 = vpop.f32.mrb[0].mxu0
  %v5917 = vadd.f32 %v5340, %v5916
  %v5918 = vpop.f32.mrb[0].mxu0
  %5919 = vmatprep.mubr.f32.mxu0 0.0
  %v5920 = vand.u32 %v88, 4294901760
  %5921 = vmatmul.mubr.f32.gmra.mrb[0].mxu0 %v5920
  %v5922 = vpop.f32.mrb[0].mxu0
  %v5923 = vadd.f32 %v5348, %v5922
  %v5924 = vpop.f32.mrb[0].mxu0
  %5925 = vmatprep.mubr.f32.mxu0 0.0
  %v5926 = vand.u32 %v91, 4294901760
  %5927 = vmatmul.mubr.f32.gmra.mrb[0].mxu0 %v5926
  %v5928 = vpop.f32.mrb[0].mxu0
  %v5929 = vadd.f32 %v5356, %v5928
  %v5930 = vpop.f32.mrb[0].mxu0
  %5931 = vmatprep.mubr.f32.mxu0 0.0
  %v5932 = vand.u32 %v94, 4294901760
  %5933 = vmatmul.mubr.f32.gmra.mrb[0].mxu0 %v5932
  %v5934 = vpop.f32.mrb[0].mxu0
  %v5935 = vadd.f32 %v5364, %v5934
  %v5936 = vpop.f32.mrb[0].mxu0
  %5937 = vmatprep.mubr.f32.mxu0 0.0
  %v5938 = vand.u32 %v97, 4294901760
  %5939 = vmatmul.mubr.f32.gmra.mrb[0].mxu0 %v5938
  %v5940 = vpop.f32.mrb[0].mxu0
  %v5941 = vadd.f32 %v5372, %v5940
  %v5942 = vpop.f32.mrb[0].mxu0
  %5943 = vmatprep.mubr.f32.mxu0 0.0
  %v5944 = vand.u32 %v100, 4294901760
  %5945 = vmatmul.mubr.f32.gmra.mrb[0].mxu0 %v5944
  %v5946 = vpop.f32.mrb[0].mxu0
  %v5947 = vadd.f32 %v5380, %v5946
  %v5948 = vpop.f32.mrb[0].mxu0
  %5949 = vmatprep.mubr.f32.mxu0 0.0
  %v5950 = vand.u32 %v103, 4294901760
  %5951 = vmatmul.mubr.f32.gmra.mrb[0].mxu0 %v5950
  %v5952 = vpop.f32.mrb[0].mxu0
  %v5953 = vadd.f32 %v5388, %v5952
  %v5954 = vpop.f32.mrb[0].mxu0
  %5955 = vmatprep.mubr.f32.mxu0 0.0
  %v5956 = vand.u32 %v106, 4294901760
  %5957 = vmatmul.mubr.f32.gmra.mrb[0].mxu0 %v5956
  %v5958 = vpop.f32.mrb[0].mxu0
  %v5959 = vadd.f32 %v5396, %v5958
  %v5960 = vpop.f32.mrb[0].mxu0
  %5961 = vmatprep.mubr.f32.mxu0 0.0
  %v5962 = vand.u32 %v109, 4294901760
  %5963 = vmatmul.mubr.f32.gmra.mrb[0].mxu0 %v5962
  %v5964 = vpop.f32.mrb[0].mxu0
  %v5965 = vadd.f32 %v5404, %v5964
  %v5966 = vpop.f32.mrb[0].mxu0
  %5967 = vmatprep.mubr.f32.mxu0 0.0
  %v5968 = vand.u32 %v112, 4294901760
  %5969 = vmatmul.mubr.f32.gmra.mrb[0].mxu0 %v5968
  %v5970 = vpop.f32.mrb[0].mxu0
  %v5971 = vadd.f32 %v5412, %v5970
  %v5972 = vpop.f32.mrb[0].mxu0
  %5973 = vmatprep.mubr.f32.mxu0 0.0
  %v5974 = vand.u32 %v115, 4294901760
  %5975 = vmatmul.mubr.f32.gmra.mrb[0].mxu0 %v5974
  %v5976 = vpop.f32.mrb[0].mxu0
  %v5977 = vadd.f32 %v5420, %v5976
  %v5978 = vpop.f32.mrb[0].mxu0
  %5979 = vmatprep.mubr.f32.mxu0 0.0
  %v5980 = vand.u32 %v118, 4294901760
  %5981 = vmatmul.mubr.f32.gmra.mrb[0].mxu0 %v5980
  %v5982 = vpop.f32.mrb[0].mxu0
  %v5983 = vadd.f32 %v5428, %v5982
  %v5984 = vpop.f32.mrb[0].mxu0
  %5985 = vmatprep.mubr.f32.mxu0 0.0
  %v5986 = vand.u32 %v121, 4294901760
  %5987 = vmatmul.mubr.f32.gmra.mrb[0].mxu0 %v5986
  %v5988 = vpop.f32.mrb[0].mxu0
  %v5989 = vadd.f32 %v5436, %v5988
  %v5990 = vpop.f32.mrb[0].mxu0
  %5991 = vmatprep.mubr.f32.mxu0 0.0
  %v5992 = vand.u32 %v124, 4294901760
  %5993 = vmatmul.mubr.f32.gmra.mrb[0].mxu0 %v5992
  %v5994 = vpop.f32.mrb[0].mxu0
  %v5995 = vadd.f32 %v5444, %v5994
  %v5996 = vpop.f32.mrb[0].mxu0
  %5997 = vmatprep.mubr.f32.mxu0 0.0
  %v5998 = vand.u32 %v127, 4294901760
  %5999 = vmatmul.mubr.f32.gmra.mrb[0].mxu0 %v5998
  %v6000 = vpop.f32.mrb[0].mxu0
  %v6001 = vadd.f32 %v5452, %v6000
  %v6002 = vpop.f32.mrb[0].mxu0
  %6003 = vmatprep.mubr.f32.mxu0 0.0
  %v6004 = vand.u32 %v130, 4294901760
  %6005 = vmatmul.mubr.f32.gmra.mrb[0].mxu0 %v6004
  %v6006 = vpop.f32.mrb[0].mxu0
  %v6007 = vadd.f32 %v5460, %v6006
  %v6008 = vpop.f32.mrb[0].mxu0
  %6009 = vmatprep.mubr.f32.mxu0 0.0
  %v6010 = vand.u32 %v133, 4294901760
  %6011 = vmatmul.mubr.f32.gmra.mrb[0].mxu0 %v6010
  %v6012 = vpop.f32.mrb[0].mxu0
  %v6013 = vadd.f32 %v5468, %v6012
  %v6014 = vpop.f32.mrb[0].mxu0
  %6015 = vmatprep.mubr.f32.mxu0 0.0
  %v6016 = vand.u32 %v136, 4294901760
  %6017 = vmatmul.mubr.f32.gmra.mrb[0].mxu0 %v6016
  %v6018 = vpop.f32.mrb[0].mxu0
  %v6019 = vadd.f32 %v5476, %v6018
  %v6020 = vpop.f32.mrb[0].mxu0
  %6021 = vmatprep.mubr.f32.mxu0 0.0
  %v6022 = vand.u32 %v139, 4294901760
  %6023 = vmatmul.mubr.f32.gmra.mrb[0].mxu0 %v6022
  %v6024 = vpop.f32.mrb[0].mxu0
  %v6025 = vadd.f32 %v5484, %v6024
  %v6026 = vpop.f32.mrb[0].mxu0
  %6027 = vmatprep.mubr.f32.mxu0 0.0
  %v6028 = vand.u32 %v142, 4294901760
  %6029 = vmatmul.mubr.f32.gmra.mrb[0].mxu0 %v6028
  %v6030 = vpop.f32.mrb[0].mxu0
  %v6031 = vadd.f32 %v5492, %v6030
  %v6032 = vpop.f32.mrb[0].mxu0
  %6033 = vmatprep.mubr.f32.mxu0 0.0
  %v6034 = vand.u32 %v145, 4294901760
  %6035 = vmatmul.mubr.f32.gmra.mrb[0].mxu0 %v6034
  %v6036 = vpop.f32.mrb[0].mxu0
  %v6037 = vadd.f32 %v5500, %v6036
  %v6038 = vpop.f32.mrb[0].mxu0
  %6039 = vmatprep.mubr.f32.mxu0 0.0
  %v6040 = vand.u32 %v148, 4294901760
  %6041 = vmatmul.mubr.f32.gmra.mrb[0].mxu0 %v6040
  %v6042 = vpop.f32.mrb[0].mxu0
  %v6043 = vadd.f32 %v5508, %v6042
  %v6044 = vpop.f32.mrb[0].mxu0
  %6045 = vmatprep.mubr.f32.mxu0 0.0
  %v6046 = vand.u32 %v151, 4294901760
  %6047 = vmatmul.mubr.f32.gmra.mrb[0].mxu0 %v6046
  %v6048 = vpop.f32.mrb[0].mxu0
  %v6049 = vadd.f32 %v5516, %v6048
  %v6050 = vpop.f32.mrb[0].mxu0
  %6051 = vmatprep.mubr.f32.mxu0 0.0
  %v6052 = vand.u32 %v154, 4294901760
  %6053 = vmatmul.mubr.f32.gmra.mrb[0].mxu0 %v6052
  %v6054 = vpop.f32.mrb[0].mxu0
  %v6055 = vadd.f32 %v5524, %v6054
  %v6056 = vpop.f32.mrb[0].mxu0
  %6057 = vmatprep.mubr.f32.mxu0 0.0
  %v6058 = vand.u32 %v157, 4294901760
  %6059 = vmatmul.mubr.f32.gmra.mrb[0].mxu0 %v6058
  %v6060 = vpop.f32.mrb[0].mxu0
  %v6061 = vadd.f32 %v5532, %v6060
  %v6062 = vpop.f32.mrb[0].mxu0
  %6063 = vmatprep.mubr.f32.mxu0 0.0
  %v6064 = vand.u32 %v160, 4294901760
  %6065 = vmatmul.mubr.f32.gmra.mrb[0].mxu0 %v6064
  %v6066 = vpop.f32.mrb[0].mxu0
  %v6067 = vadd.f32 %v5540, %v6066
  %v6068 = vpop.f32.mrb[0].mxu0
  %6069 = vmatprep.mubr.f32.mxu0 0.0
  %v6070 = vand.u32 %v163, 4294901760
  %6071 = vmatmul.mubr.f32.gmra.mrb[0].mxu0 %v6070
  %v6072 = vpop.f32.mrb[0].mxu0
  %v6073 = vadd.f32 %v5548, %v6072
  %v6074 = vpop.f32.mrb[0].mxu0
  %6075 = vmatprep.mubr.f32.mxu0 0.0
  %v6076 = vand.u32 %v166, 4294901760
  %6077 = vmatmul.mubr.f32.gmra.mrb[0].mxu0 %v6076
  %v6078 = vpop.f32.mrb[0].mxu0
  %v6079 = vadd.f32 %v5556, %v6078
  %v6080 = vpop.f32.mrb[0].mxu0
  %6081 = vmatprep.mubr.f32.mxu0 0.0
  %v6082 = vand.u32 %v169, 4294901760
  %6083 = vmatmul.mubr.f32.gmra.mrb[0].mxu0 %v6082
  %v6084 = vpop.f32.mrb[0].mxu0
  %v6085 = vadd.f32 %v5564, %v6084
  %v6086 = vpop.f32.mrb[0].mxu0
  %6087 = vmatprep.mubr.f32.mxu0 0.0
  %v6088 = vand.u32 %v172, 4294901760
  %6089 = vmatmul.mubr.f32.gmra.mrb[0].mxu0 %v6088
  %v6090 = vpop.f32.mrb[0].mxu0
  %v6091 = vadd.f32 %v5572, %v6090
  %v6092 = vpop.f32.mrb[0].mxu0
  %6093 = vmatprep.mubr.f32.mxu0 0.0
  %v6094 = vand.u32 %v175, 4294901760
  %6095 = vmatmul.mubr.f32.gmra.mrb[0].mxu0 %v6094
  %v6096 = vpop.f32.mrb[0].mxu0
  %v6097 = vadd.f32 %v5580, %v6096
  %v6098 = vpop.f32.mrb[0].mxu0
  %6099 = vmatprep.mubr.f32.mxu0 0.0
  %v6100 = vand.u32 %v178, 4294901760
  %6101 = vmatmul.mubr.f32.gmra.mrb[0].mxu0 %v6100
  %v6102 = vpop.f32.mrb[0].mxu0
  %v6103 = vadd.f32 %v5588, %v6102
  %v6104 = vpop.f32.mrb[0].mxu0
  %6105 = vmatprep.mubr.f32.mxu0 0.0
  %v6106 = vand.u32 %v181, 4294901760
  %6107 = vmatmul.mubr.f32.gmra.mrb[0].mxu0 %v6106
  %v6108 = vpop.f32.mrb[0].mxu0
  %v6109 = vadd.f32 %v5596, %v6108
  %v6110 = vpop.f32.mrb[0].mxu0
  %6111 = vmatprep.mubr.f32.mxu0 0.0
  %v6112 = vand.u32 %v184, 4294901760
  %6113 = vmatmul.mubr.f32.gmra.mrb[0].mxu0 %v6112
  %v6114 = vpop.f32.mrb[0].mxu0
  %v6115 = vadd.f32 %v5604, %v6114
  %v6116 = vpop.f32.mrb[0].mxu0
  %6117 = vmatprep.mubr.f32.mxu0 0.0
  %v6118 = vand.u32 %v187, 4294901760
  %6119 = vmatmul.mubr.f32.gmra.mrb[0].mxu0 %v6118
  %v6120 = vpop.f32.mrb[0].mxu0
  %v6121 = vadd.f32 %v5612, %v6120
  %v6122 = vpop.f32.mrb[0].mxu0
  %6123 = vmatprep.mubr.f32.mxu0 0.0
  %v6124 = vand.u32 %v190, 4294901760
  %6125 = vmatmul.mubr.f32.gmra.mrb[0].mxu0 %v6124
  %v6126 = vpop.f32.mrb[0].mxu0
  %v6127 = vadd.f32 %v5620, %v6126
  %v6128 = vpop.f32.mrb[0].mxu0
  %6129 = vmatprep.mubr.f32.mxu0 0.0
  %v6130 = vand.u32 %v193, 4294901760
  %6131 = vmatmul.mubr.f32.gmra.mrb[0].mxu0 %v6130
  %v6132 = vpop.f32.mrb[0].mxu0
  %v6133 = vadd.f32 %v5628, %v6132
  %v6134 = vpop.f32.mrb[0].mxu0
  %6135 = vmatprep.mubr.f32.mxu0 0.0
  %v6136 = vand.u32 %v196, 4294901760
  %6137 = vmatmul.mubr.f32.gmra.mrb[0].mxu0 %v6136
  %v6138 = vpop.f32.mrb[0].mxu0
  %v6139 = vadd.f32 %v5636, %v6138
  %v6140 = vpop.f32.mrb[0].mxu0
  %6141 = vmatprep.mubr.f32.mxu0 0.0
  %v6142 = vand.u32 %v199, 4294901760
  %6143 = vmatmul.mubr.f32.gmra.mrb[0].mxu0 %v6142
  %v6144 = vpop.f32.mrb[0].mxu0
  %v6145 = vadd.f32 %v5644, %v6144
  %v6146 = vpop.f32.mrb[0].mxu0
  %6147 = vmatprep.mubr.f32.mxu0 0.0
  %v6148 = vand.u32 %v202, 4294901760
  %6149 = vmatmul.mubr.f32.gmra.mrb[0].mxu0 %v6148
  %v6150 = vpop.f32.mrb[0].mxu0
  %v6151 = vadd.f32 %v5652, %v6150
  %v6152 = vpop.f32.mrb[0].mxu0
  %6153 = vmatprep.mubr.f32.mxu0 0.0
  %v6154 = vand.u32 %v205, 4294901760
  %6155 = vmatmul.mubr.f32.gmra.mrb[0].mxu0 %v6154
  %v6156 = vpop.f32.mrb[0].mxu0
  %v6157 = vadd.f32 %v5660, %v6156
  %v6158 = vpop.f32.mrb[0].mxu0
  %6159 = vmatprep.mubr.f32.mxu0 0.0
  %v6160 = vand.u32 %v208, 4294901760
  %6161 = vmatmul.mubr.f32.gmra.mrb[0].mxu0 %v6160
  %v6162 = vpop.f32.mrb[0].mxu0
  %v6163 = vadd.f32 %v5668, %v6162
  %v6164 = vpop.f32.mrb[0].mxu0
  %6165 = vmatprep.mubr.f32.mxu0 0.0
  %v6166 = vand.u32 %v211, 4294901760
  %6167 = vmatmul.mubr.f32.gmra.mrb[0].mxu0 %v6166
  %v6168 = vpop.f32.mrb[0].mxu0
  %v6169 = vadd.f32 %v5676, %v6168
  %v6170 = vpop.f32.mrb[0].mxu0
  %6171 = vmatprep.mubr.f32.mxu0 0.0
  %v6172 = vand.u32 %v214, 4294901760
  %6173 = vmatmul.mubr.f32.gmra.mrb[0].mxu0 %v6172
  %v6174 = vpop.f32.mrb[0].mxu0
  %v6175 = vadd.f32 %v5684, %v6174
  %v6176 = vpop.f32.mrb[0].mxu0
  %6177 = vmatprep.mubr.f32.mxu0 0.0
  %v6178 = vand.u32 %v217, 4294901760
  %6179 = vmatmul.mubr.f32.gmra.mrb[0].mxu0 %v6178
  %v6180 = vpop.f32.mrb[0].mxu0
  %v6181 = vadd.f32 %v5692, %v6180
  %v6182 = vpop.f32.mrb[0].mxu0
  %6183 = vmatprep.mubr.f32.mxu0 0.0
  %v6184 = vand.u32 %v220, 4294901760
  %6185 = vmatmul.mubr.f32.gmra.mrb[0].mxu0 %v6184
  %v6186 = vpop.f32.mrb[0].mxu0
  %v6187 = vadd.f32 %v5700, %v6186
  %v6188 = vpop.f32.mrb[0].mxu0
  %6189 = vmatprep.mubr.f32.mxu0 0.0
  %v6190 = vand.u32 %v223, 4294901760
  %6191 = vmatmul.mubr.f32.gmra.mrb[0].mxu0 %v6190
  %v6192 = vpop.f32.mrb[0].mxu0
  %v6193 = vadd.f32 %v5708, %v6192
  %v6194 = vpop.f32.mrb[0].mxu0
  %6195 = vmatprep.mubr.f32.mxu0 0.0
  %v6196 = vand.u32 %v226, 4294901760
  %6197 = vmatmul.mubr.f32.gmra.mrb[0].mxu0 %v6196
  %v6198 = vpop.f32.mrb[0].mxu0
  %v6199 = vadd.f32 %v5716, %v6198
  %v6200 = vpop.f32.mrb[0].mxu0
  %6201 = vmatprep.mubr.f32.mxu0 0.0
  %v6202 = vand.u32 %v229, 4294901760
  %6203 = vmatmul.mubr.f32.gmra.mrb[0].mxu0 %v6202
  %v6204 = vpop.f32.mrb[0].mxu0
  %v6205 = vadd.f32 %v5724, %v6204
  %v6206 = vpop.f32.mrb[0].mxu0
  %6207 = vmatprep.mubr.f32.mxu0 0.0
  %v6208 = vand.u32 %v232, 4294901760
  %6209 = vmatmul.mubr.f32.gmra.mrb[0].mxu0 %v6208
  %v6210 = vpop.f32.mrb[0].mxu0
  %v6211 = vadd.f32 %v5732, %v6210
  %v6212 = vpop.f32.mrb[0].mxu0
  %6213 = vmatprep.mubr.f32.mxu0 0.0
  %v6214 = vand.u32 %v235, 4294901760
  %6215 = vmatmul.mubr.f32.gmra.mrb[0].mxu0 %v6214
  %v6216 = vpop.f32.mrb[0].mxu0
  %v6217 = vadd.f32 %v5740, %v6216
  %v6218 = vpop.f32.mrb[0].mxu0
  %6219 = vmatprep.mubr.f32.mxu0 0.0
  %v6220 = vand.u32 %v238, 4294901760
  %6221 = vmatmul.mubr.f32.gmra.mrb[0].mxu0 %v6220
  %v6222 = vpop.f32.mrb[0].mxu0
  %v6223 = vadd.f32 %v5748, %v6222
  %v6224 = vpop.f32.mrb[0].mxu0
  %6225 = vmatprep.mubr.f32.mxu0 0.0
  %v6226 = vand.u32 %v241, 4294901760
  %6227 = vmatmul.mubr.f32.gmra.mrb[0].mxu0 %v6226
  %v6228 = vpop.f32.mrb[0].mxu0
  %v6229 = vadd.f32 %v5756, %v6228
  %v6230 = vpop.f32.mrb[0].mxu0
  %6231 = vmatprep.mubr.f32.mxu0 0.0
  %v6232 = vand.u32 %v244, 4294901760
  %6233 = vmatmul.mubr.f32.gmra.mrb[0].mxu0 %v6232
  %v6234 = vpop.f32.mrb[0].mxu0
  %v6235 = vadd.f32 %v5764, %v6234
  %v6236 = vpop.f32.mrb[0].mxu0
  %6237 = vmatprep.mubr.f32.mxu0 0.0
  %v6238 = vand.u32 %v247, 4294901760
  %6239 = vmatmul.mubr.f32.gmra.mrb[0].mxu0 %v6238
  %v6240 = vpop.f32.mrb[0].mxu0
  %v6241 = vadd.f32 %v5772, %v6240
  %v6242 = vpop.f32.mrb[0].mxu0
  %6243 = vmatprep.mubr.f32.mxu0 0.0
  %v6244 = vand.u32 %v250, 4294901760
  %6245 = vmatmul.mubr.f32.gmra.mrb[0].mxu0 %v6244
  %v6246 = vpop.f32.mrb[0].mxu0
  %v6247 = vadd.f32 %v5780, %v6246
  %v6248 = vpop.f32.mrb[0].mxu0
  %6249 = vmatprep.mubr.f32.mxu0 0.0
  %v6250 = vand.u32 %v253, 4294901760
  %6251 = vmatmul.mubr.f32.gmra.mrb[0].mxu0 %v6250
  %v6252 = vpop.f32.mrb[0].mxu0
  %v6253 = vadd.f32 %v5788, %v6252
  %v6254 = vpop.f32.mrb[0].mxu0
  %6255 = vmatprep.mubr.f32.mxu0 0.0
  %v6256 = vand.u32 %v256, 4294901760
  %6257 = vmatmul.mubr.f32.gmra.mrb[0].mxu0 %v6256
  %v6258 = vpop.f32.mrb[0].mxu0
  %v6259 = vadd.f32 %v5796, %v6258
  %v6260 = vpop.f32.mrb[0].mxu0
  %6261 = vmatprep.mubr.f32.mxu0 0.0
  %v6262 = vand.u32 %v259, 4294901760
  %6263 = vmatmul.mubr.f32.gmra.mrb[0].mxu0 %v6262
  %v6264 = vpop.f32.mrb[0].mxu0
  %v6265 = vadd.f32 %v5804, %v6264
  %v6266 = vpop.f32.mrb[0].mxu0
  %6267 = vmatprep.mubr.f32.mxu0 0.0
  %v6268 = vand.u32 %v262, 4294901760
  %6269 = vmatmul.mubr.f32.gmra.mrb[0].mxu0 %v6268
  %v6270 = vpop.f32.mrb[0].mxu0
  %v6271 = vadd.f32 %v5812, %v6270
  %v6272 = vpop.f32.mrb[0].mxu0
  %6273 = vmatprep.mubr.f32.mxu0 0.0
  %v6274 = vand.u32 %v265, 4294901760
  %6275 = vmatmul.mubr.f32.gmra.mrb[0].mxu0 %v6274
  %v6276 = vpop.f32.mrb[0].mxu0
  %v6277 = vadd.f32 %v5820, %v6276
  %v6278 = vpop.f32.mrb[0].mxu0
  %6279 = vmatprep.mubr.f32.mxu0 0.0
  %v6280 = vand.u32 %v268, 4294901760
  %6281 = vmatmul.mubr.f32.gmra.mrb[0].mxu0 %v6280
  %v6282 = vpop.f32.mrb[0].mxu0
  %v6283 = vadd.f32 %v5828, %v6282
  %v6284 = vpop.f32.mrb[0].mxu0
  %6285 = vdwg.mxu0
  %6286 = vmatprep.subr.mxu0 0.0
  %v6287 = vand.u32 %v3567, 4294901760
  %6288 = vmatpush1.msra.mxu0 %v6287
  %6289 = vmatprep.subr.mxu0 0.0
  %v6290 = vand.u32 %v3568, 4294901760
  %6291 = vmatpush1.msra.mxu0 %v6290
  %6292 = vmatprep.subr.mxu0 0.0
  %6293 = vmatpush1.msra.mxu0 0.0
  %6294 = vmatprep.subr.mxu0 0.0
  %6295 = vmatpush1.msra.mxu0 0.0
  %6296 = vmatprep.subr.mxu0 0.0
  %6297 = vmatpush1.msra.mxu0 0.0
  %6298 = vmatprep.subr.mxu0 0.0
  %6299 = vmatpush1.msra.mxu0 0.0
  %6300 = vmatprep.subr.mxu0 0.0
  %6301 = vmatpush1.msra.mxu0 0.0
  %6302 = vmatprep.subr.mxu0 0.0
  %6303 = vmatpush1.msra.mxu0 0.0
  %6304 = vmatprep.subr.mxu0 0.0
  %6305 = vmatpush1.msra.mxu0 0.0
  %6306 = vmatprep.subr.mxu0 0.0
  %6307 = vmatpush1.msra.mxu0 0.0
  %6308 = vmatprep.subr.mxu0 0.0
  %6309 = vmatpush1.msra.mxu0 0.0
  %6310 = vmatprep.subr.mxu0 0.0
  %6311 = vmatpush1.msra.mxu0 0.0
  %6312 = vmatprep.subr.mxu0 0.0
  %6313 = vmatpush1.msra.mxu0 0.0
  %6314 = vmatprep.subr.mxu0 0.0
  %6315 = vmatpush1.msra.mxu0 0.0
  %6316 = vmatprep.subr.mxu0 0.0
  %6317 = vmatpush1.msra.mxu0 0.0
  %6318 = vmatprep.subr.mxu0 0.0
  %6319 = vmatpush1.msra.mxu0 0.0
  %6320 = vmatprep.subr.mxu0 0.0
  %6321 = vmatpush1.msra.mxu0 0.0
  %6322 = vmatprep.subr.mxu0 0.0
  %6323 = vmatpush1.msra.mxu0 0.0
  %6324 = vmatprep.subr.mxu0 0.0
  %6325 = vmatpush1.msra.mxu0 0.0
  %6326 = vmatprep.subr.mxu0 0.0
  %6327 = vmatpush1.msra.mxu0 0.0
  %6328 = vmatprep.subr.mxu0 0.0
  %6329 = vmatpush1.msra.mxu0 0.0
  %6330 = vmatprep.subr.mxu0 0.0
  %6331 = vmatpush1.msra.mxu0 0.0
  %6332 = vmatprep.subr.mxu0 0.0
  %6333 = vmatpush1.msra.mxu0 0.0
  %6334 = vmatprep.subr.mxu0 0.0
  %6335 = vmatpush1.msra.mxu0 0.0
  %6336 = vmatprep.subr.mxu0 0.0
  %6337 = vmatpush1.msra.mxu0 0.0
  %6338 = vmatprep.subr.mxu0 0.0
  %6339 = vmatpush1.msra.mxu0 0.0
  %6340 = vmatprep.subr.mxu0 0.0
  %6341 = vmatpush1.msra.mxu0 0.0
  %6342 = vmatprep.subr.mxu0 0.0
  %6343 = vmatpush1.msra.mxu0 0.0
  %6344 = vmatprep.subr.mxu0 0.0
  %6345 = vmatpush1.msra.mxu0 0.0
  %6346 = vmatprep.subr.mxu0 0.0
  %6347 = vmatpush1.msra.mxu0 0.0
  %6348 = vmatprep.subr.mxu0 0.0
  %6349 = vmatpush1.msra.mxu0 0.0
  %6350 = vmatprep.subr.mxu0 0.0
  %6351 = vmatpush1.msra.mxu0 0.0
  %6352 = vmatprep.mubr.f32.mxu0 0.0
  %v6353 = vand.u32 %v79, 4294901760
  %6354 = vmatmul.mubr.f32.gmra.mrb[0].mxu0 %v6353
  %v6355 = vpop.f32.mrb[0].mxu0
  %v6356 = vadd.f32 %v5905, %v6355
  %v6357 = vpop.f32.mrb[0].mxu0
  %6358 = vmatprep.mubr.f32.mxu0 0.0
  %v6359 = vand.u32 %v82, 4294901760
  %6360 = vmatmul.mubr.f32.gmra.mrb[0].mxu0 %v6359
  %v6361 = vpop.f32.mrb[0].mxu0
  %v6362 = vadd.f32 %v5911, %v6361
  %v6363 = vpop.f32.mrb[0].mxu0
  %6364 = vmatprep.mubr.f32.mxu0 0.0
  %v6365 = vand.u32 %v85, 4294901760
  %6366 = vmatmul.mubr.f32.gmra.mrb[0].mxu0 %v6365
  %v6367 = vpop.f32.mrb[0].mxu0
  %v6368 = vadd.f32 %v5917, %v6367
  %v6369 = vpop.f32.mrb[0].mxu0
  %6370 = vmatprep.mubr.f32.mxu0 0.0
  %v6371 = vand.u32 %v88, 4294901760
  %6372 = vmatmul.mubr.f32.gmra.mrb[0].mxu0 %v6371
  %v6373 = vpop.f32.mrb[0].mxu0
  %v6374 = vadd.f32 %v5923, %v6373
  %v6375 = vpop.f32.mrb[0].mxu0
  %6376 = vmatprep.mubr.f32.mxu0 0.0
  %v6377 = vand.u32 %v91, 4294901760
  %6378 = vmatmul.mubr.f32.gmra.mrb[0].mxu0 %v6377
  %v6379 = vpop.f32.mrb[0].mxu0
  %v6380 = vadd.f32 %v5929, %v6379
  %v6381 = vpop.f32.mrb[0].mxu0
  %6382 = vmatprep.mubr.f32.mxu0 0.0
  %v6383 = vand.u32 %v94, 4294901760
  %6384 = vmatmul.mubr.f32.gmra.mrb[0].mxu0 %v6383
  %v6385 = vpop.f32.mrb[0].mxu0
  %v6386 = vadd.f32 %v5935, %v6385
  %v6387 = vpop.f32.mrb[0].mxu0
  %6388 = vmatprep.mubr.f32.mxu0 0.0
  %v6389 = vand.u32 %v97, 4294901760
  %6390 = vmatmul.mubr.f32.gmra.mrb[0].mxu0 %v6389
  %v6391 = vpop.f32.mrb[0].mxu0
  %v6392 = vadd.f32 %v5941, %v6391
  %v6393 = vpop.f32.mrb[0].mxu0
  %6394 = vmatprep.mubr.f32.mxu0 0.0
  %v6395 = vand.u32 %v100, 4294901760
  %6396 = vmatmul.mubr.f32.gmra.mrb[0].mxu0 %v6395
  %v6397 = vpop.f32.mrb[0].mxu0
  %v6398 = vadd.f32 %v5947, %v6397
  %v6399 = vpop.f32.mrb[0].mxu0
  %6400 = vmatprep.mubr.f32.mxu0 0.0
  %v6401 = vand.u32 %v103, 4294901760
  %6402 = vmatmul.mubr.f32.gmra.mrb[0].mxu0 %v6401
  %v6403 = vpop.f32.mrb[0].mxu0
  %v6404 = vadd.f32 %v5953, %v6403
  %v6405 = vpop.f32.mrb[0].mxu0
  %6406 = vmatprep.mubr.f32.mxu0 0.0
  %v6407 = vand.u32 %v106, 4294901760
  %6408 = vmatmul.mubr.f32.gmra.mrb[0].mxu0 %v6407
  %v6409 = vpop.f32.mrb[0].mxu0
  %v6410 = vadd.f32 %v5959, %v6409
  %v6411 = vpop.f32.mrb[0].mxu0
  %6412 = vmatprep.mubr.f32.mxu0 0.0
  %v6413 = vand.u32 %v109, 4294901760
  %6414 = vmatmul.mubr.f32.gmra.mrb[0].mxu0 %v6413
  %v6415 = vpop.f32.mrb[0].mxu0
  %v6416 = vadd.f32 %v5965, %v6415
  %v6417 = vpop.f32.mrb[0].mxu0
  %6418 = vmatprep.mubr.f32.mxu0 0.0
  %v6419 = vand.u32 %v112, 4294901760
  %6420 = vmatmul.mubr.f32.gmra.mrb[0].mxu0 %v6419
  %v6421 = vpop.f32.mrb[0].mxu0
  %v6422 = vadd.f32 %v5971, %v6421
  %v6423 = vpop.f32.mrb[0].mxu0
  %6424 = vmatprep.mubr.f32.mxu0 0.0
  %v6425 = vand.u32 %v115, 4294901760
  %6426 = vmatmul.mubr.f32.gmra.mrb[0].mxu0 %v6425
  %v6427 = vpop.f32.mrb[0].mxu0
  %v6428 = vadd.f32 %v5977, %v6427
  %v6429 = vpop.f32.mrb[0].mxu0
  %6430 = vmatprep.mubr.f32.mxu0 0.0
  %v6431 = vand.u32 %v118, 4294901760
  %6432 = vmatmul.mubr.f32.gmra.mrb[0].mxu0 %v6431
  %v6433 = vpop.f32.mrb[0].mxu0
  %v6434 = vadd.f32 %v5983, %v6433
  %v6435 = vpop.f32.mrb[0].mxu0
  %6436 = vmatprep.mubr.f32.mxu0 0.0
  %v6437 = vand.u32 %v121, 4294901760
  %6438 = vmatmul.mubr.f32.gmra.mrb[0].mxu0 %v6437
  %v6439 = vpop.f32.mrb[0].mxu0
  %v6440 = vadd.f32 %v5989, %v6439
  %v6441 = vpop.f32.mrb[0].mxu0
  %6442 = vmatprep.mubr.f32.mxu0 0.0
  %v6443 = vand.u32 %v124, 4294901760
  %6444 = vmatmul.mubr.f32.gmra.mrb[0].mxu0 %v6443
  %v6445 = vpop.f32.mrb[0].mxu0
  %v6446 = vadd.f32 %v5995, %v6445
  %v6447 = vpop.f32.mrb[0].mxu0
  %6448 = vmatprep.mubr.f32.mxu0 0.0
  %v6449 = vand.u32 %v127, 4294901760
  %6450 = vmatmul.mubr.f32.gmra.mrb[0].mxu0 %v6449
  %v6451 = vpop.f32.mrb[0].mxu0
  %v6452 = vadd.f32 %v6001, %v6451
  %v6453 = vpop.f32.mrb[0].mxu0
  %6454 = vmatprep.mubr.f32.mxu0 0.0
  %v6455 = vand.u32 %v130, 4294901760
  %6456 = vmatmul.mubr.f32.gmra.mrb[0].mxu0 %v6455
  %v6457 = vpop.f32.mrb[0].mxu0
  %v6458 = vadd.f32 %v6007, %v6457
  %v6459 = vpop.f32.mrb[0].mxu0
  %6460 = vmatprep.mubr.f32.mxu0 0.0
  %v6461 = vand.u32 %v133, 4294901760
  %6462 = vmatmul.mubr.f32.gmra.mrb[0].mxu0 %v6461
  %v6463 = vpop.f32.mrb[0].mxu0
  %v6464 = vadd.f32 %v6013, %v6463
  %v6465 = vpop.f32.mrb[0].mxu0
  %6466 = vmatprep.mubr.f32.mxu0 0.0
  %v6467 = vand.u32 %v136, 4294901760
  %6468 = vmatmul.mubr.f32.gmra.mrb[0].mxu0 %v6467
  %v6469 = vpop.f32.mrb[0].mxu0
  %v6470 = vadd.f32 %v6019, %v6469
  %v6471 = vpop.f32.mrb[0].mxu0
  %6472 = vmatprep.mubr.f32.mxu0 0.0
  %v6473 = vand.u32 %v139, 4294901760
  %6474 = vmatmul.mubr.f32.gmra.mrb[0].mxu0 %v6473
  %v6475 = vpop.f32.mrb[0].mxu0
  %v6476 = vadd.f32 %v6025, %v6475
  %v6477 = vpop.f32.mrb[0].mxu0
  %6478 = vmatprep.mubr.f32.mxu0 0.0
  %v6479 = vand.u32 %v142, 4294901760
  %6480 = vmatmul.mubr.f32.gmra.mrb[0].mxu0 %v6479
  %v6481 = vpop.f32.mrb[0].mxu0
  %v6482 = vadd.f32 %v6031, %v6481
  %v6483 = vpop.f32.mrb[0].mxu0
  %6484 = vmatprep.mubr.f32.mxu0 0.0
  %v6485 = vand.u32 %v145, 4294901760
  %6486 = vmatmul.mubr.f32.gmra.mrb[0].mxu0 %v6485
  %v6487 = vpop.f32.mrb[0].mxu0
  %v6488 = vadd.f32 %v6037, %v6487
  %v6489 = vpop.f32.mrb[0].mxu0
  %6490 = vmatprep.mubr.f32.mxu0 0.0
  %v6491 = vand.u32 %v148, 4294901760
  %6492 = vmatmul.mubr.f32.gmra.mrb[0].mxu0 %v6491
  %v6493 = vpop.f32.mrb[0].mxu0
  %v6494 = vadd.f32 %v6043, %v6493
  %v6495 = vpop.f32.mrb[0].mxu0
  %6496 = vmatprep.mubr.f32.mxu0 0.0
  %v6497 = vand.u32 %v151, 4294901760
  %6498 = vmatmul.mubr.f32.gmra.mrb[0].mxu0 %v6497
  %v6499 = vpop.f32.mrb[0].mxu0
  %v6500 = vadd.f32 %v6049, %v6499
  %v6501 = vpop.f32.mrb[0].mxu0
  %6502 = vmatprep.mubr.f32.mxu0 0.0
  %v6503 = vand.u32 %v154, 4294901760
  %6504 = vmatmul.mubr.f32.gmra.mrb[0].mxu0 %v6503
  %v6505 = vpop.f32.mrb[0].mxu0
  %v6506 = vadd.f32 %v6055, %v6505
  %v6507 = vpop.f32.mrb[0].mxu0
  %6508 = vmatprep.mubr.f32.mxu0 0.0
  %v6509 = vand.u32 %v157, 4294901760
  %6510 = vmatmul.mubr.f32.gmra.mrb[0].mxu0 %v6509
  %v6511 = vpop.f32.mrb[0].mxu0
  %v6512 = vadd.f32 %v6061, %v6511
  %v6513 = vpop.f32.mrb[0].mxu0
  %6514 = vmatprep.mubr.f32.mxu0 0.0
  %v6515 = vand.u32 %v160, 4294901760
  %6516 = vmatmul.mubr.f32.gmra.mrb[0].mxu0 %v6515
  %v6517 = vpop.f32.mrb[0].mxu0
  %v6518 = vadd.f32 %v6067, %v6517
  %v6519 = vpop.f32.mrb[0].mxu0
  %6520 = vmatprep.mubr.f32.mxu0 0.0
  %v6521 = vand.u32 %v163, 4294901760
  %6522 = vmatmul.mubr.f32.gmra.mrb[0].mxu0 %v6521
  %v6523 = vpop.f32.mrb[0].mxu0
  %v6524 = vadd.f32 %v6073, %v6523
  %v6525 = vpop.f32.mrb[0].mxu0
  %6526 = vmatprep.mubr.f32.mxu0 0.0
  %v6527 = vand.u32 %v166, 4294901760
  %6528 = vmatmul.mubr.f32.gmra.mrb[0].mxu0 %v6527
  %v6529 = vpop.f32.mrb[0].mxu0
  %v6530 = vadd.f32 %v6079, %v6529
  %v6531 = vpop.f32.mrb[0].mxu0
  %6532 = vmatprep.mubr.f32.mxu0 0.0
  %v6533 = vand.u32 %v169, 4294901760
  %6534 = vmatmul.mubr.f32.gmra.mrb[0].mxu0 %v6533
  %v6535 = vpop.f32.mrb[0].mxu0
  %v6536 = vadd.f32 %v6085, %v6535
  %v6537 = vpop.f32.mrb[0].mxu0
  %6538 = vmatprep.mubr.f32.mxu0 0.0
  %v6539 = vand.u32 %v172, 4294901760
  %6540 = vmatmul.mubr.f32.gmra.mrb[0].mxu0 %v6539
  %v6541 = vpop.f32.mrb[0].mxu0
  %v6542 = vadd.f32 %v6091, %v6541
  %v6543 = vpop.f32.mrb[0].mxu0
  %6544 = vmatprep.mubr.f32.mxu0 0.0
  %v6545 = vand.u32 %v175, 4294901760
  %6546 = vmatmul.mubr.f32.gmra.mrb[0].mxu0 %v6545
  %v6547 = vpop.f32.mrb[0].mxu0
  %v6548 = vadd.f32 %v6097, %v6547
  %v6549 = vpop.f32.mrb[0].mxu0
  %6550 = vmatprep.mubr.f32.mxu0 0.0
  %v6551 = vand.u32 %v178, 4294901760
  %6552 = vmatmul.mubr.f32.gmra.mrb[0].mxu0 %v6551
  %v6553 = vpop.f32.mrb[0].mxu0
  %v6554 = vadd.f32 %v6103, %v6553
  %v6555 = vpop.f32.mrb[0].mxu0
  %6556 = vmatprep.mubr.f32.mxu0 0.0
  %v6557 = vand.u32 %v181, 4294901760
  %6558 = vmatmul.mubr.f32.gmra.mrb[0].mxu0 %v6557
  %v6559 = vpop.f32.mrb[0].mxu0
  %v6560 = vadd.f32 %v6109, %v6559
  %v6561 = vpop.f32.mrb[0].mxu0
  %6562 = vmatprep.mubr.f32.mxu0 0.0
  %v6563 = vand.u32 %v184, 4294901760
  %6564 = vmatmul.mubr.f32.gmra.mrb[0].mxu0 %v6563
  %v6565 = vpop.f32.mrb[0].mxu0
  %v6566 = vadd.f32 %v6115, %v6565
  %v6567 = vpop.f32.mrb[0].mxu0
  %6568 = vmatprep.mubr.f32.mxu0 0.0
  %v6569 = vand.u32 %v187, 4294901760
  %6570 = vmatmul.mubr.f32.gmra.mrb[0].mxu0 %v6569
  %v6571 = vpop.f32.mrb[0].mxu0
  %v6572 = vadd.f32 %v6121, %v6571
  %v6573 = vpop.f32.mrb[0].mxu0
  %6574 = vmatprep.mubr.f32.mxu0 0.0
  %v6575 = vand.u32 %v190, 4294901760
  %6576 = vmatmul.mubr.f32.gmra.mrb[0].mxu0 %v6575
  %v6577 = vpop.f32.mrb[0].mxu0
  %v6578 = vadd.f32 %v6127, %v6577
  %v6579 = vpop.f32.mrb[0].mxu0
  %6580 = vmatprep.mubr.f32.mxu0 0.0
  %v6581 = vand.u32 %v193, 4294901760
  %6582 = vmatmul.mubr.f32.gmra.mrb[0].mxu0 %v6581
  %v6583 = vpop.f32.mrb[0].mxu0
  %v6584 = vadd.f32 %v6133, %v6583
  %v6585 = vpop.f32.mrb[0].mxu0
  %6586 = vmatprep.mubr.f32.mxu0 0.0
  %v6587 = vand.u32 %v196, 4294901760
  %6588 = vmatmul.mubr.f32.gmra.mrb[0].mxu0 %v6587
  %v6589 = vpop.f32.mrb[0].mxu0
  %v6590 = vadd.f32 %v6139, %v6589
  %v6591 = vpop.f32.mrb[0].mxu0
  %6592 = vmatprep.mubr.f32.mxu0 0.0
  %v6593 = vand.u32 %v199, 4294901760
  %6594 = vmatmul.mubr.f32.gmra.mrb[0].mxu0 %v6593
  %v6595 = vpop.f32.mrb[0].mxu0
  %v6596 = vadd.f32 %v6145, %v6595
  %v6597 = vpop.f32.mrb[0].mxu0
  %6598 = vmatprep.mubr.f32.mxu0 0.0
  %v6599 = vand.u32 %v202, 4294901760
  %6600 = vmatmul.mubr.f32.gmra.mrb[0].mxu0 %v6599
  %v6601 = vpop.f32.mrb[0].mxu0
  %v6602 = vadd.f32 %v6151, %v6601
  %v6603 = vpop.f32.mrb[0].mxu0
  %6604 = vmatprep.mubr.f32.mxu0 0.0
  %v6605 = vand.u32 %v205, 4294901760
  %6606 = vmatmul.mubr.f32.gmra.mrb[0].mxu0 %v6605
  %v6607 = vpop.f32.mrb[0].mxu0
  %v6608 = vadd.f32 %v6157, %v6607
  %v6609 = vpop.f32.mrb[0].mxu0
  %6610 = vmatprep.mubr.f32.mxu0 0.0
  %v6611 = vand.u32 %v208, 4294901760
  %6612 = vmatmul.mubr.f32.gmra.mrb[0].mxu0 %v6611
  %v6613 = vpop.f32.mrb[0].mxu0
  %v6614 = vadd.f32 %v6163, %v6613
  %v6615 = vpop.f32.mrb[0].mxu0
  %6616 = vmatprep.mubr.f32.mxu0 0.0
  %v6617 = vand.u32 %v211, 4294901760
  %6618 = vmatmul.mubr.f32.gmra.mrb[0].mxu0 %v6617
  %v6619 = vpop.f32.mrb[0].mxu0
  %v6620 = vadd.f32 %v6169, %v6619
  %v6621 = vpop.f32.mrb[0].mxu0
  %6622 = vmatprep.mubr.f32.mxu0 0.0
  %v6623 = vand.u32 %v214, 4294901760
  %6624 = vmatmul.mubr.f32.gmra.mrb[0].mxu0 %v6623
  %v6625 = vpop.f32.mrb[0].mxu0
  %v6626 = vadd.f32 %v6175, %v6625
  %v6627 = vpop.f32.mrb[0].mxu0
  %6628 = vmatprep.mubr.f32.mxu0 0.0
  %v6629 = vand.u32 %v217, 4294901760
  %6630 = vmatmul.mubr.f32.gmra.mrb[0].mxu0 %v6629
  %v6631 = vpop.f32.mrb[0].mxu0
  %v6632 = vadd.f32 %v6181, %v6631
  %v6633 = vpop.f32.mrb[0].mxu0
  %6634 = vmatprep.mubr.f32.mxu0 0.0
  %v6635 = vand.u32 %v220, 4294901760
  %6636 = vmatmul.mubr.f32.gmra.mrb[0].mxu0 %v6635
  %v6637 = vpop.f32.mrb[0].mxu0
  %v6638 = vadd.f32 %v6187, %v6637
  %v6639 = vpop.f32.mrb[0].mxu0
  %6640 = vmatprep.mubr.f32.mxu0 0.0
  %v6641 = vand.u32 %v223, 4294901760
  %6642 = vmatmul.mubr.f32.gmra.mrb[0].mxu0 %v6641
  %v6643 = vpop.f32.mrb[0].mxu0
  %v6644 = vadd.f32 %v6193, %v6643
  %v6645 = vpop.f32.mrb[0].mxu0
  %6646 = vmatprep.mubr.f32.mxu0 0.0
  %v6647 = vand.u32 %v226, 4294901760
  %6648 = vmatmul.mubr.f32.gmra.mrb[0].mxu0 %v6647
  %v6649 = vpop.f32.mrb[0].mxu0
  %v6650 = vadd.f32 %v6199, %v6649
  %v6651 = vpop.f32.mrb[0].mxu0
  %6652 = vmatprep.mubr.f32.mxu0 0.0
  %v6653 = vand.u32 %v229, 4294901760
  %6654 = vmatmul.mubr.f32.gmra.mrb[0].mxu0 %v6653
  %v6655 = vpop.f32.mrb[0].mxu0
  %v6656 = vadd.f32 %v6205, %v6655
  %v6657 = vpop.f32.mrb[0].mxu0
  %6658 = vmatprep.mubr.f32.mxu0 0.0
  %v6659 = vand.u32 %v232, 4294901760
  %6660 = vmatmul.mubr.f32.gmra.mrb[0].mxu0 %v6659
  %v6661 = vpop.f32.mrb[0].mxu0
  %v6662 = vadd.f32 %v6211, %v6661
  %v6663 = vpop.f32.mrb[0].mxu0
  %6664 = vmatprep.mubr.f32.mxu0 0.0
  %v6665 = vand.u32 %v235, 4294901760
  %6666 = vmatmul.mubr.f32.gmra.mrb[0].mxu0 %v6665
  %v6667 = vpop.f32.mrb[0].mxu0
  %v6668 = vadd.f32 %v6217, %v6667
  %v6669 = vpop.f32.mrb[0].mxu0
  %6670 = vmatprep.mubr.f32.mxu0 0.0
  %v6671 = vand.u32 %v238, 4294901760
  %6672 = vmatmul.mubr.f32.gmra.mrb[0].mxu0 %v6671
  %v6673 = vpop.f32.mrb[0].mxu0
  %v6674 = vadd.f32 %v6223, %v6673
  %v6675 = vpop.f32.mrb[0].mxu0
  %6676 = vmatprep.mubr.f32.mxu0 0.0
  %v6677 = vand.u32 %v241, 4294901760
  %6678 = vmatmul.mubr.f32.gmra.mrb[0].mxu0 %v6677
  %v6679 = vpop.f32.mrb[0].mxu0
  %v6680 = vadd.f32 %v6229, %v6679
  %v6681 = vpop.f32.mrb[0].mxu0
  %6682 = vmatprep.mubr.f32.mxu0 0.0
  %v6683 = vand.u32 %v244, 4294901760
  %6684 = vmatmul.mubr.f32.gmra.mrb[0].mxu0 %v6683
  %v6685 = vpop.f32.mrb[0].mxu0
  %v6686 = vadd.f32 %v6235, %v6685
  %v6687 = vpop.f32.mrb[0].mxu0
  %6688 = vmatprep.mubr.f32.mxu0 0.0
  %v6689 = vand.u32 %v247, 4294901760
  %6690 = vmatmul.mubr.f32.gmra.mrb[0].mxu0 %v6689
  %v6691 = vpop.f32.mrb[0].mxu0
  %v6692 = vadd.f32 %v6241, %v6691
  %v6693 = vpop.f32.mrb[0].mxu0
  %6694 = vmatprep.mubr.f32.mxu0 0.0
  %v6695 = vand.u32 %v250, 4294901760
  %6696 = vmatmul.mubr.f32.gmra.mrb[0].mxu0 %v6695
  %v6697 = vpop.f32.mrb[0].mxu0
  %v6698 = vadd.f32 %v6247, %v6697
  %v6699 = vpop.f32.mrb[0].mxu0
  %6700 = vmatprep.mubr.f32.mxu0 0.0
  %v6701 = vand.u32 %v253, 4294901760
  %6702 = vmatmul.mubr.f32.gmra.mrb[0].mxu0 %v6701
  %v6703 = vpop.f32.mrb[0].mxu0
  %v6704 = vadd.f32 %v6253, %v6703
  %v6705 = vpop.f32.mrb[0].mxu0
  %6706 = vmatprep.mubr.f32.mxu0 0.0
  %v6707 = vand.u32 %v256, 4294901760
  %6708 = vmatmul.mubr.f32.gmra.mrb[0].mxu0 %v6707
  %v6709 = vpop.f32.mrb[0].mxu0
  %v6710 = vadd.f32 %v6259, %v6709
  %v6711 = vpop.f32.mrb[0].mxu0
  %6712 = vmatprep.mubr.f32.mxu0 0.0
  %v6713 = vand.u32 %v259, 4294901760
  %6714 = vmatmul.mubr.f32.gmra.mrb[0].mxu0 %v6713
  %v6715 = vpop.f32.mrb[0].mxu0
  %v6716 = vadd.f32 %v6265, %v6715
  %v6717 = vpop.f32.mrb[0].mxu0
  %6718 = vmatprep.mubr.f32.mxu0 0.0
  %v6719 = vand.u32 %v262, 4294901760
  %6720 = vmatmul.mubr.f32.gmra.mrb[0].mxu0 %v6719
  %v6721 = vpop.f32.mrb[0].mxu0
  %v6722 = vadd.f32 %v6271, %v6721
  %v6723 = vpop.f32.mrb[0].mxu0
  %6724 = vmatprep.mubr.f32.mxu0 0.0
  %v6725 = vand.u32 %v265, 4294901760
  %6726 = vmatmul.mubr.f32.gmra.mrb[0].mxu0 %v6725
  %v6727 = vpop.f32.mrb[0].mxu0
  %v6728 = vadd.f32 %v6277, %v6727
  %v6729 = vpop.f32.mrb[0].mxu0
  %6730 = vmatprep.mubr.f32.mxu0 0.0
  %v6731 = vand.u32 %v268, 4294901760
  %6732 = vmatmul.mubr.f32.gmra.mrb[0].mxu0 %v6731
  %v6733 = vpop.f32.mrb[0].mxu0
  %v6734 = vadd.f32 %v6283, %v6733
  %v6735 = vpop.f32.mrb[0].mxu0
  %6736 = vdwg.mxu0
  %v6737 = vmax.f32 %v6356, 0.0
  %v6738 = vmax.f32 %v6362, 0.0
  %v6739 = vmax.f32 %v6368, 0.0
  %v6740 = vmax.f32 %v6374, 0.0
  %v6741 = vmax.f32 %v6380, 0.0
  %v6742 = vmax.f32 %v6386, 0.0
  %v6743 = vmax.f32 %v6392, 0.0
  %v6744 = vmax.f32 %v6398, 0.0
  %v6745 = vmax.f32 %v6404, 0.0
  %v6746 = vmax.f32 %v6410, 0.0
  %v6747 = vmax.f32 %v6416, 0.0
  %v6748 = vmax.f32 %v6422, 0.0
  %v6749 = vmax.f32 %v6428, 0.0
  %v6750 = vmax.f32 %v6434, 0.0
  %v6751 = vmax.f32 %v6440, 0.0
  %v6752 = vmax.f32 %v6446, 0.0
  %v6753 = vmax.f32 %v6452, 0.0
  %v6754 = vmax.f32 %v6458, 0.0
  %v6755 = vmax.f32 %v6464, 0.0
  %v6756 = vmax.f32 %v6470, 0.0
  %v6757 = vmax.f32 %v6476, 0.0
  %v6758 = vmax.f32 %v6482, 0.0
  %v6759 = vmax.f32 %v6488, 0.0
  %v6760 = vmax.f32 %v6494, 0.0
  %v6761 = vmax.f32 %v6500, 0.0
  %v6762 = vmax.f32 %v6506, 0.0
  %v6763 = vmax.f32 %v6512, 0.0
  %v6764 = vmax.f32 %v6518, 0.0
  %v6765 = vmax.f32 %v6524, 0.0
  %v6766 = vmax.f32 %v6530, 0.0
  %v6767 = vmax.f32 %v6536, 0.0
  %v6768 = vmax.f32 %v6542, 0.0
  %v6769 = vmax.f32 %v6548, 0.0
  %v6770 = vmax.f32 %v6554, 0.0
  %v6771 = vmax.f32 %v6560, 0.0
  %v6772 = vmax.f32 %v6566, 0.0
  %v6773 = vmax.f32 %v6572, 0.0
  %v6774 = vmax.f32 %v6578, 0.0
  %v6775 = vmax.f32 %v6584, 0.0
  %v6776 = vmax.f32 %v6590, 0.0
  %v6777 = vmax.f32 %v6596, 0.0
  %v6778 = vmax.f32 %v6602, 0.0
  %v6779 = vmax.f32 %v6608, 0.0
  %v6780 = vmax.f32 %v6614, 0.0
  %v6781 = vmax.f32 %v6620, 0.0
  %v6782 = vmax.f32 %v6626, 0.0
  %v6783 = vmax.f32 %v6632, 0.0
  %v6784 = vmax.f32 %v6638, 0.0
  %v6785 = vmax.f32 %v6644, 0.0
  %v6786 = vmax.f32 %v6650, 0.0
  %v6787 = vmax.f32 %v6656, 0.0
  %v6788 = vmax.f32 %v6662, 0.0
  %v6789 = vmax.f32 %v6668, 0.0
  %v6790 = vmax.f32 %v6674, 0.0
  %v6791 = vmax.f32 %v6680, 0.0
  %v6792 = vmax.f32 %v6686, 0.0
  %v6793 = vmax.f32 %v6692, 0.0
  %v6794 = vmax.f32 %v6698, 0.0
  %v6795 = vmax.f32 %v6704, 0.0
  %v6796 = vmax.f32 %v6710, 0.0
  %v6797 = vmax.f32 %v6716, 0.0
  %v6798 = vmax.f32 %v6722, 0.0
  %v6799 = vmax.f32 %v6728, 0.0
  %v6800 = vmax.f32 %v6734, 0.0
  %s6801 = scalar_lea.vmem %s2, 512
  %6802 = vst [vmem:[%s6801] sm:$0xff] %v6737
  %6803 = vst [vmem:[%s6801 + $0x8] sm:$0xff] %v6738
  %6804 = vst [vmem:[%s6801 + $0x10] sm:$0xff] %v6739
  %6805 = vst [vmem:[%s6801 + $0x18] sm:$0xff] %v6740
  %6806 = vst [vmem:[%s6801 + $0x20] sm:$0xff] %v6741
  %6807 = vst [vmem:[%s6801 + $0x28] sm:$0xff] %v6742
  %6808 = vst [vmem:[%s6801 + $0x30] sm:$0xff] %v6743
  %6809 = vst [vmem:[%s6801 + $0x38] sm:$0xff] %v6744
  %6810 = vst [vmem:[%s6801 + $0x40] sm:$0xff] %v6745
  %6811 = vst [vmem:[%s6801 + $0x48] sm:$0xff] %v6746
  %6812 = vst [vmem:[%s6801 + $0x50] sm:$0xff] %v6747
  %6813 = vst [vmem:[%s6801 + $0x58] sm:$0xff] %v6748
  %6814 = vst [vmem:[%s6801 + $0x60] sm:$0xff] %v6749
  %6815 = vst [vmem:[%s6801 + $0x68] sm:$0xff] %v6750
  %6816 = vst [vmem:[%s6801 + $0x70] sm:$0xff] %v6751
  %6817 = vst [vmem:[%s6801 + $0x78] sm:$0xff] %v6752
  %6818 = vst [vmem:[%s6801 + $0x80] sm:$0xff] %v6753
  %6819 = vst [vmem:[%s6801 + $0x88] sm:$0xff] %v6754
  %6820 = vst [vmem:[%s6801 + $0x90] sm:$0xff] %v6755
  %6821 = vst [vmem:[%s6801 + $0x98] sm:$0xff] %v6756
  %6822 = vst [vmem:[%s6801 + $0xa0] sm:$0xff] %v6757
  %6823 = vst [vmem:[%s6801 + $0xa8] sm:$0xff] %v6758
  %6824 = vst [vmem:[%s6801 + $0xb0] sm:$0xff] %v6759
  %6825 = vst [vmem:[%s6801 + $0xb8] sm:$0xff] %v6760
  %6826 = vst [vmem:[%s6801 + $0xc0] sm:$0xff] %v6761
  %6827 = vst [vmem:[%s6801 + $0xc8] sm:$0xff] %v6762
  %6828 = vst [vmem:[%s6801 + $0xd0] sm:$0xff] %v6763
  %6829 = vst [vmem:[%s6801 + $0xd8] sm:$0xff] %v6764
  %6830 = vst [vmem:[%s6801 + $0xe0] sm:$0xff] %v6765
  %6831 = vst [vmem:[%s6801 + $0xe8] sm:$0xff] %v6766
  %6832 = vst [vmem:[%s6801 + $0xf0] sm:$0xff] %v6767
  %6833 = vst [vmem:[%s6801 + $0xf8] sm:$0xff] %v6768
  %6834 = vst [vmem:[%s6801 + $0x100] sm:$0xff] %v6769
  %6835 = vst [vmem:[%s6801 + $0x108] sm:$0xff] %v6770
  %6836 = vst [vmem:[%s6801 + $0x110] sm:$0xff] %v6771
  %6837 = vst [vmem:[%s6801 + $0x118] sm:$0xff] %v6772
  %6838 = vst [vmem:[%s6801 + $0x120] sm:$0xff] %v6773
  %6839 = vst [vmem:[%s6801 + $0x128] sm:$0xff] %v6774
  %6840 = vst [vmem:[%s6801 + $0x130] sm:$0xff] %v6775
  %6841 = vst [vmem:[%s6801 + $0x138] sm:$0xff] %v6776
  %6842 = vst [vmem:[%s6801 + $0x140] sm:$0xff] %v6777
  %6843 = vst [vmem:[%s6801 + $0x148] sm:$0xff] %v6778
  %6844 = vst [vmem:[%s6801 + $0x150] sm:$0xff] %v6779
  %6845 = vst [vmem:[%s6801 + $0x158] sm:$0xff] %v6780
  %6846 = vst [vmem:[%s6801 + $0x160] sm:$0xff] %v6781
  %6847 = vst [vmem:[%s6801 + $0x168] sm:$0xff] %v6782
  %6848 = vst [vmem:[%s6801 + $0x170] sm:$0xff] %v6783
  %6849 = vst [vmem:[%s6801 + $0x178] sm:$0xff] %v6784
  %6850 = vst [vmem:[%s6801 + $0x180] sm:$0xff] %v6785
  %6851 = vst [vmem:[%s6801 + $0x188] sm:$0xff] %v6786
  %6852 = vst [vmem:[%s6801 + $0x190] sm:$0xff] %v6787
  %6853 = vst [vmem:[%s6801 + $0x198] sm:$0xff] %v6788
  %6854 = vst [vmem:[%s6801 + $0x1a0] sm:$0xff] %v6789
  %6855 = vst [vmem:[%s6801 + $0x1a8] sm:$0xff] %v6790
  %6856 = vst [vmem:[%s6801 + $0x1b0] sm:$0xff] %v6791
  %6857 = vst [vmem:[%s6801 + $0x1b8] sm:$0xff] %v6792
  %6858 = vst [vmem:[%s6801 + $0x1c0] sm:$0xff] %v6793
  %6859 = vst [vmem:[%s6801 + $0x1c8] sm:$0xff] %v6794
  %6860 = vst [vmem:[%s6801 + $0x1d0] sm:$0xff] %v6795
  %6861 = vst [vmem:[%s6801 + $0x1d8] sm:$0xff] %v6796
  %6862 = vst [vmem:[%s6801 + $0x1e0] sm:$0xff] %v6797
  %6863 = vst [vmem:[%s6801 + $0x1e8] sm:$0xff] %v6798
  %6864 = vst [vmem:[%s6801 + $0x1f0] sm:$0xff] %v6799
  %6865 = vst [vmem:[%s6801 + $0x1f8] sm:$0xff] %v6800
  // Predicated region
  $region10: #{_lambda_.1} parent=0 // pred_check
    _
  $region11: #{_lambda_.1} parent=0 // pred_check_branch
    %6867 = sbr.rel (0) target = $region13
  $region12: #{_lambda_.1} parent=0 // pred_region
    _
  $region13: #{_lambda_.1} parent=0 // pred_fallthru
    _
  // Predicated region
  $region14: #{_lambda_.1} parent=0 // pred_check
    _
  $region15: #{_lambda_.1} parent=0 // pred_check_branch
    %6869 = sbr.rel (0) target = $region17
  $region16: #{_lambda_.1} parent=0 // pred_region
    _
  $region17: #{_lambda_.1} parent=0 // pred_fallthru
    _

</llo_original>
